<compile_context>
chip_gen: v5e
topology: v5e:2x2
jax: 0.10.0
libtpu: 0.0.40
codegen_flags: <defaults>
</compile_context>

<pallas_src>
import jax
import jax.numpy as jnp
from jax.experimental import pallas as pl
from jax.experimental.pallas import tpu as pltpu


def _hardswish_gate(v1):
    # v2 = v1 * relu6(v1 + 3); v3 = v2 / 6.  The extra clamp(..., 0, 6) in the
    # PyTorch code is a no-op after relu6, so it is dropped.
    return v1 * jnp.clip(v1 + 3.0, 0.0, 6.0) * (1.0 / 6.0)


def _linear_hardswish_kernel(x_ref, w_ref, b_ref, o_ref):
    x = x_ref[...]                       # (tb, 64) f32
    w = w_ref[...]                       # (64, 1)  f32 weight column (VMEM-resident)
    b = b_ref[0]                         # scalar bias from SMEM

    # v1 = Linear(x): contraction on the MXU.  Inputs stay f32 and HIGHEST
    # precision keeps the 64-element dot at full f32 accuracy.
    v1 = jnp.dot(x, w,
                 precision=jax.lax.Precision.HIGHEST,
                 preferred_element_type=jnp.float32) + b          # (tb, 1)

    o_ref[...] = _hardswish_gate(v1).astype(o_ref.dtype)


def _round_up(x, m):
    return ((x + m - 1) // m) * m


def linear_hardswish(x, w_row, b, *, max_tb=16384, min_pallas_rows=512):
    """x: (B, 64) f32, w_row: (1, 64) f32 (PyTorch (out, in) layout), b: (1,) f32.

    Returns (B, 1) f32 = hardswish-style activation of Linear(x).
    """
    B, K = x.shape

    # Tiny-batch fast path: a pallas_call costs ~1-2 us dispatch plus ~0.35 us
    # per grid step -- for a few hundred rows that is 100% overhead, so let XLA
    # compute/fuse it directly (exact f32 elementwise + reduce).
    if B < min_pallas_rows:
        v1 = jnp.sum(x * w_row, axis=-1, keepdims=True) + b
        return _hardswish_gate(v1)

    # Tile selection:
    #  * multiple of 8 rows (sublane divisibility),
    #  * capped at max_tb (16384 -> 4 MiB x tile, 8 MiB double-buffered: fits
    #    v5e's 16 MiB scoped-VMEM default and v7x's smaller VMEM),
    #  * >= 2 grid steps so the "parallel" axis can shard across v7x's 2 TCs.
    tb = min(_round_up(max_tb, 8), _round_up(pl.cdiv(B, 2), 8))
    grid = (pl.cdiv(B, tb),)

    w_col = w_row.T                       # (64, 1) column for the MXU RHS

    return pl.pallas_call(
        _linear_hardswish_kernel,
        out_shape=jax.ShapeDtypeStruct((B, 1), jnp.float32),
        grid=grid,
        in_specs=[
            pl.BlockSpec((tb, K), lambda i: (i, 0)),              # x row tile
            pl.BlockSpec((K, 1), lambda i: (0, 0)),               # weight column (resident)
            pl.BlockSpec(memory_space=pltpu.MemorySpace.SMEM),    # bias scalar in SMEM
        ],
        out_specs=pl.BlockSpec((tb, 1), lambda i: (i, 0)),
        compiler_params=pltpu.CompilerParams(
            dimension_semantics=("parallel",)),
    )(x, w_col, b)


if __name__ == "__main__":
    key = jax.random.PRNGKey(0)
    kx, kw, kb, kxb = jax.random.split(key, 4)

    # Module spec: x2 = torch.randn(1, 64); Linear(64, 1) with PyTorch-style
    # uniform init.
    bound = 1.0 / jnp.sqrt(64.0)
    w = jax.random.uniform(kw, (1, 64), minval=-bound, maxval=bound,
                           dtype=jnp.float32)     # PyTorch weight shape (out, in)
    b = jax.random.uniform(kb, (1,), minval=-bound, maxval=bound,
                           dtype=jnp.float32)

    def ref_fn(x):
        v1 = jnp.sum(x * w, axis=-1, keepdims=True) + b     # exact f32 reference
        return v1 * jnp.clip(v1 + 3.0, 0.0, 6.0) / 6.0

    # 1) Module-spec shape (B=1): goes through the tiny-batch fast path.
    x_small = jax.random.normal(kx, (1, 64), dtype=jnp.float32)
    out_small = jax.block_until_ready(linear_hardswish(x_small, w, b))
    assert out_small.shape == (1, 1)
    assert jnp.allclose(out_small, ref_fn(x_small), atol=1e-5, rtol=1e-5), \
        (out_small, ref_fn(x_small))

    # 2) Larger batch to exercise the Pallas kernel path (2 "parallel" grid
    #    steps of 2048 rows; MXU contraction + SMEM bias).
    x_big = jax.random.normal(kxb, (4096, 64), dtype=jnp.float32)
    out_big = jax.block_until_ready(linear_hardswish(x_big, w, b))
    assert out_big.shape == (4096, 1)
    assert jnp.allclose(out_big, ref_fn(x_big), atol=1e-5, rtol=1e-5)

    print("KERNEL_OK")
</pallas_src>

<mosaic_0001>
module attributes {stable_mosaic.version = 11 : i64} {
  func.func @_linear_hardswish_kernel(%arg0: i32, %arg1: memref<2048x64xf32, #tpu.memory_space<vmem>>, %arg2: memref<64x1xf32, #tpu.memory_space<vmem>>, %arg3: memref<1xf32, #tpu.memory_space<smem>>, %arg4: memref<2048x1xf32, #tpu.memory_space<vmem>>) attributes {dimension_semantics = [#tpu.dimension_semantics<parallel>], iteration_bounds = array<i64: 2>, scalar_prefetch = 0 : i64, scratch_operands = 0 : i64, tpu.core_type = #tpu.core_type<tc>, window_params = [{transform_indices = @transform_0, window_bounds = array<i64: 2048, 64>}, {pipeline_mode = #tpu.pipeline_mode<synchronous>, transform_indices = @transform_1, window_bounds = array<i64: 64, 1>}, {transform_indices = @transform_2, window_bounds = array<i64: 1>}, {transform_indices = @transform_3, window_bounds = array<i64: 2048, 1>}]} {
    %c0 = arith.constant 0 : index
    %c0_0 = arith.constant 0 : index
    %0 = vector.load %arg1[%c0, %c0_0] : memref<2048x64xf32, #tpu.memory_space<vmem>>, vector<2048x64xf32>
    %c0_1 = arith.constant 0 : index
    %c0_2 = arith.constant 0 : index
    %1 = vector.load %arg2[%c0_1, %c0_2] : memref<64x1xf32, #tpu.memory_space<vmem>>, vector<64x1xf32>
    %c0_3 = arith.constant 0 : index
    %2 = memref.load %arg3[%c0_3] : memref<1xf32, #tpu.memory_space<smem>>
    %cst = arith.constant dense<0.000000e+00> : vector<2048x1xf32>
    %3 = tpu.matmul %0, %1, %cst {dimension_numbers = #tpu.dot_dimension_numbers<[1], [0], [0], [1], [0, 0, 1, 1], [], []>, precision = #tpu.contract_precision<fp32>} : vector<2048x64xf32>, vector<64x1xf32>, vector<2048x1xf32> -> vector<2048x1xf32>
    %4 = vector.broadcast %2 : f32 to vector<2048x1xf32>
    %5 = arith.addf %3, %4 : vector<2048x1xf32>
    %cst_4 = arith.constant 3.000000e+00 : f32
    %6 = vector.broadcast %cst_4 : f32 to vector<2048x1xf32>
    %7 = arith.addf %5, %6 : vector<2048x1xf32>
    %cst_5 = arith.constant 0.000000e+00 : f32
    %cst_6 = arith.constant 6.000000e+00 : f32
    %8 = vector.broadcast %cst_5 : f32 to vector<2048x1xf32>
    %9 = arith.maximumf %8, %7 : vector<2048x1xf32>
    %10 = vector.broadcast %cst_6 : f32 to vector<2048x1xf32>
    %11 = arith.minimumf %10, %9 : vector<2048x1xf32>
    %12 = arith.mulf %5, %11 : vector<2048x1xf32>
    %cst_7 = arith.constant 0.166666672 : f32
    %13 = vector.broadcast %cst_7 : f32 to vector<2048x1xf32>
    %14 = arith.mulf %12, %13 : vector<2048x1xf32>
    %c0_8 = arith.constant 0 : index
    %c0_9 = arith.constant 0 : index
    %15 = vector.load %arg4[%c0_8, %c0_9] : memref<2048x1xf32, #tpu.memory_space<vmem>>, vector<2048x1xf32>
    tpu.vector_store %arg4[%c0_8, %c0_9], %14 {strides = array<i32>} : memref<2048x1xf32, #tpu.memory_space<vmem>>, vector<2048x1xf32>,
    return
  }
  func.func @transform_0(%arg0: i32) -> (i32, i32) {
    %c0_i32 = arith.constant 0 : i32
    %c0_i32_0 = arith.constant 0 : i32
    return %arg0, %c0_i32 : i32, i32
  }
  func.func @transform_1(%arg0: i32) -> (i32, i32) {
    %c0_i32 = arith.constant 0 : i32
    %c0_i32_0 = arith.constant 0 : i32
    %c0_i32_1 = arith.constant 0 : i32
    return %c0_i32, %c0_i32_0 : i32, i32
  }
  func.func @transform_2(%arg0: i32) -> i32 {
    %c0_i32 = arith.constant 0 : i32
    %c0_i32_0 = arith.constant 0 : i32
    return %c0_i32 : i32
  }
  func.func @transform_3(%arg0: i32) -> (i32, i32) {
    %c0_i32 = arith.constant 0 : i32
    %c0_i32_0 = arith.constant 0 : i32
    return %arg0, %c0_i32 : i32, i32
  }
}

</mosaic_0001>

<llo_original>
// kernel: tpu_custom_call.1
$region0: #{tpu_custom_call.1}
  #allocation0 [shape = 'u32[]', space=smem, size = 0x4, offset = 0x4, fixed_abs, tag = 'smem constant byte address 0x4 - core index']
  #allocation1 [shape = 'u32[72,128]{1,0:T(1,128)}', space=vmem, size = 0x9000, scoped, tag = 'internal scratch']
  #allocation2 [shape = 'f32[1]{0:T(128)S(6)}', space=smem, size = 0x200, scoped, tag = 'scoped memory for tpu_custom_call.1']
  %s0 = inlined_call_operand.vmem [shape: f32[4096,64], index: 0, kind: input, shape index: {}]
  %s1 = inlined_call_operand.vmem [shape: f32[64,1], index: 1, kind: input, shape index: {}]
  %s2 = inlined_call_operand.<no memory space> [shape: f32[1], index: 2, kind: input, shape index: {}]
  %s3 = inlined_call_operand.vmem [shape: f32[4096,1], index: 3, kind: output, shape index: {}]
  %s4 = sld [smem:[#allocation0]]
  $region45: #{tpu_custom_call.1} parent=0
    _
  %s6 = ssub.s32 1, %s4
  %s7 = scalar_select 0, %s6, %s4
  %8 = sst [smem:[#allocation2]] %s2
  loop: start=0, step=1, limit=4
  $region2: #{tpu_custom_call.1} parent=0 // loop_pre_header
    _
  $region3: #{tpu_custom_call.1} parent=0 // loop_header
    %s10 = sphi 0, %s14
    %p11 = scmp.ge.s32.totalorder %s10, 4
    %s20 = sphi 0, %s22
    %s23 = sphi 0, %s20
    %s24 = sphi 0, %s23
    %s40 = sphi 0, %s24
    %s44 = sphi 0, %s44
    %s46 = sphi 0, %s44
    %s47 = sphi 0, %s46
    %s61 = sphi 0, %s47
    %s65 = sphi 0, %s65
    %s67 = sphi 0, %s65
    %s68 = sphi 0, %s67
    %s82 = sphi 0, %s68
    %s88 = sphi 0, %s90
    %s91 = sphi 0, %s88
    %s92 = sphi 0, %s91
    %s108 = sphi 0, %s92
  $region4: #{tpu_custom_call.1} parent=0 // loop_header_branch
    %13 = sbr.rel (%p11) target = $region8
  $region5: #{tpu_custom_call.1} parent=0 // loop_body
    %s15 = ssub.s32 %s10, 1
    %s16 = ssub.s32 %s10, 2
    %s17 = sadd.s32 %s10, 1
    %s18 = ssub.s32 %s10, %s17
    %p19 = scmp.eq.s32.totalorder %s18, 0
    %s21 = sadd.s32 %s20, 1
    %s22 = scalar_select %p19, %s20, %s21
    %p25 = pneg %p19
    %p26 = scmp.eq.s32.totalorder %s10, 1
    %p27 = por %p25, %p26
    %p28 = scmp.ne.s32.totalorder %s20, %s23
    %p29 = scmp.eq.s32.totalorder %s10, 0
    %p30 = por %p28, %p29
    %p31 = scmp.ne.s32.totalorder %s20, %s23
    %p32 = scmp.eq.s32.totalorder %s15, 1
    %p33 = por %p31, %p32
    %p34 = scmp.ne.s32.totalorder %s23, %s24
    %p35 = scmp.eq.s32.totalorder %s15, 0
    %p36 = por %p34, %p35
    %p37 = scmp.ne.s32.totalorder %s23, %s24
    %p38 = scmp.eq.s32.totalorder %s16, 1
    %p39 = por %p37, %p38
    %p41 = scmp.ne.s32.totalorder %s24, %s40
    %p42 = scmp.eq.s32.totalorder %s16, 0
    %p43 = por %p41, %p42
    %s45 = sadd.s32 %s44, 1
    %p48 = scmp.eq.s32.totalorder %s10, 1
    %p49 = scmp.ne.s32.totalorder %s44, %s46
    %p50 = scmp.eq.s32.totalorder %s10, 0
    %p51 = por %p49, %p50
    %p52 = scmp.ne.s32.totalorder %s44, %s46
    %p53 = scmp.eq.s32.totalorder %s15, 1
    %p54 = por %p52, %p53
    %p55 = scmp.ne.s32.totalorder %s46, %s47
    %p56 = scmp.eq.s32.totalorder %s15, 0
    %p57 = por %p55, %p56
    %p58 = scmp.ne.s32.totalorder %s46, %s47
    %p59 = scmp.eq.s32.totalorder %s16, 1
    %p60 = por %p58, %p59
    %p62 = scmp.ne.s32.totalorder %s47, %s61
    %p63 = scmp.eq.s32.totalorder %s16, 0
    %p64 = por %p62, %p63
    %s66 = sadd.s32 %s65, 1
    %p69 = scmp.eq.s32.totalorder %s10, 1
    %p70 = scmp.ne.s32.totalorder %s65, %s67
    %p71 = scmp.eq.s32.totalorder %s10, 0
    %p72 = por %p70, %p71
    %p73 = scmp.ne.s32.totalorder %s65, %s67
    %p74 = scmp.eq.s32.totalorder %s15, 1
    %p75 = por %p73, %p74
    %p76 = scmp.ne.s32.totalorder %s67, %s68
    %p77 = scmp.eq.s32.totalorder %s15, 0
    %p78 = por %p76, %p77
    %p79 = scmp.ne.s32.totalorder %s67, %s68
    %p80 = scmp.eq.s32.totalorder %s16, 1
    %p81 = por %p79, %p80
    %p83 = scmp.ne.s32.totalorder %s68, %s82
    %p84 = scmp.eq.s32.totalorder %s16, 0
    %p85 = por %p83, %p84
    %s86 = ssub.s32 %s10, %s17
    %p87 = scmp.eq.s32.totalorder %s86, 0
    %s89 = sadd.s32 %s88, 1
    %s90 = scalar_select %p87, %s88, %s89
    %p93 = pneg %p87
    %p94 = scmp.eq.s32.totalorder %s10, 1
    %p95 = por %p93, %p94
    %p96 = scmp.ne.s32.totalorder %s88, %s91
    %p97 = scmp.eq.s32.totalorder %s10, 0
    %p98 = por %p96, %p97
    %p99 = scmp.ne.s32.totalorder %s88, %s91
    %p100 = scmp.eq.s32.totalorder %s15, 1
    %p101 = por %p99, %p100
    %p102 = scmp.ne.s32.totalorder %s91, %s92
    %p103 = scmp.eq.s32.totalorder %s15, 0
    %p104 = por %p102, %p103
    %p105 = scmp.ne.s32.totalorder %s91, %s92
    %p106 = scmp.eq.s32.totalorder %s16, 1
    %p107 = por %p105, %p106
    %p109 = scmp.ne.s32.totalorder %s92, %s108
    %p110 = scmp.eq.s32.totalorder %s16, 0
    %p111 = por %p109, %p110
    %p112 = scmp.le.s32.totalorder 1, %s10
    %p113 = scmp.lt.s32.totalorder %s10, 3
    %p114 = pnand %p112, %p113
    %p115 = pneg %p114
    // Predicated region
    $region9: #{tpu_custom_call.1} parent=5 // pred_check
      _
    $region10: #{tpu_custom_call.1} parent=5 // pred_check_branch
      %117 = sbr.rel (%p114) target = $region12
    $region11: #{tpu_custom_call.1} parent=5 // pred_region
      %s118 = ssub.s32 %s10, 1
      // Predicated region
      $region13: #{tpu_custom_call.1} parent=11 // pred_check
        %p119 = pneg %p57
      $region14: #{tpu_custom_call.1} parent=11 // pred_check_branch
        %121 = sbr.rel (%p119) target = $region16
      $region15: #{tpu_custom_call.1} parent=11 // pred_region
        _
      $region16: #{tpu_custom_call.1} parent=11 // pred_fallthru
        _
      // Predicated region
      $region17: #{tpu_custom_call.1} parent=11 // pred_check
        %p122 = pneg %p78
      $region18: #{tpu_custom_call.1} parent=11 // pred_check_branch
        %124 = sbr.rel (%p122) target = $region20
      $region19: #{tpu_custom_call.1} parent=11 // pred_region
        _
      $region20: #{tpu_custom_call.1} parent=11 // pred_fallthru
        _
    $region12: #{tpu_custom_call.1} parent=5 // pred_fallthru
      _
    %p125 = scmp.lt.s32.totalorder %s10, 2
    // Predicated region
    $region21: #{tpu_custom_call.1} parent=5 // pred_check
      %p126 = pneg %p125
    $region22: #{tpu_custom_call.1} parent=5 // pred_check_branch
      %128 = sbr.rel (%p126) target = $region24
    $region23: #{tpu_custom_call.1} parent=5 // pred_region
      // Predicated region
      $region25: #{tpu_custom_call.1} parent=23 // pred_check
        %p129 = pneg %p30
      $region26: #{tpu_custom_call.1} parent=23 // pred_check_branch
        %131 = sbr.rel (%p129) target = $region28
      $region27: #{tpu_custom_call.1} parent=23 // pred_region
        %s132 = smul.u32 256, %s10
        %p133 = scmp.lt.s32.totalorder %s132, 511
        %s134 = scalar_select %p133, %s132, 511
        %s135 = smul.addr %s134, 8
        %s136 = scalar_lea.vmem %s0, %s135
        %s137 = smul.u32 256, %s10
      $region28: #{tpu_custom_call.1} parent=23 // pred_fallthru
        _
    $region24: #{tpu_custom_call.1} parent=5 // pred_fallthru
      _
    %p138 = scmp.le.s32.totalorder 1, %s10
    %p139 = scmp.lt.s32.totalorder %s10, 3
    %p140 = pnand %p138, %p139
    %p141 = pneg %p140
    // Predicated region
    $region29: #{tpu_custom_call.1} parent=5 // pred_check
      _
    $region30: #{tpu_custom_call.1} parent=5 // pred_check_branch
      %143 = sbr.rel (%p140) target = $region32
    $region31: #{tpu_custom_call.1} parent=5 // pred_region
      %s144 = ssub.s32 %s10, 1
      %s145 = smul.u32 256, %s15
      %p146 = scmp.lt.s32.totalorder %s145, 511
      %s147 = scalar_select %p146, %s145, 511
      %s148 = smul.addr %s147, 8
      %s149 = scalar_lea.vmem %s0, %s148
      %p150 = pneg %p36
      %p151 = pneg %p33
      %p152 = pneg %p57
      %p153 = pneg %p54
      %p154 = pneg %p78
      %p155 = pneg %p75
      %p156 = pneg %p104
      %p157 = pneg %p101
      %s158 = smul.u32 256, %s15
      %p159 = scmp.lt.s32.totalorder %s158, 511
      %s160 = scalar_select %p159, %s158, 511
      %s161 = smul.addr %s160, 8
      %s162 = scalar_lea.vmem %s3, %s161
      %s163 = smul.u32 256, %s15
      %p164 = scmp.lt.s32.totalorder %s163, 511
      %s165 = scalar_select %p164, %s163, 511
      %s166 = smul.addr %s165, 8
      %s167 = scalar_lea.vmem %s0, %s166
      %s168 = smul.u32 256, %s15
      %s169 = smul.u32 256, %s15
      %p170 = scmp.lt.s32.totalorder %s169, 511
      %s171 = scalar_select %p170, %s169, 511
      %s172 = smul.addr %s171, 8
      %s173 = scalar_lea.vmem %s3, %s172
      %s174 = smul.u32 256, %s15
      %v175 = vld [vmem:[%s167] sm:$0xff]
      %v176 = vld [vmem:[%s167 + $0x8] sm:$0xff]
      %v177 = vld [vmem:[%s167 + $0x10] sm:$0xff]
      %v178 = vld [vmem:[%s167 + $0x18] sm:$0xff]
      %v179 = vld [vmem:[%s167 + $0x20] sm:$0xff]
      %v180 = vld [vmem:[%s167 + $0x28] sm:$0xff]
      %v181 = vld [vmem:[%s167 + $0x30] sm:$0xff]
      %v182 = vld [vmem:[%s167 + $0x38] sm:$0xff]
      %v183 = vld [vmem:[%s167 + $0x40] sm:$0xff]
      %v184 = vld [vmem:[%s167 + $0x48] sm:$0xff]
      %v185 = vld [vmem:[%s167 + $0x50] sm:$0xff]
      %v186 = vld [vmem:[%s167 + $0x58] sm:$0xff]
      %v187 = vld [vmem:[%s167 + $0x60] sm:$0xff]
      %v188 = vld [vmem:[%s167 + $0x68] sm:$0xff]
      %v189 = vld [vmem:[%s167 + $0x70] sm:$0xff]
      %v190 = vld [vmem:[%s167 + $0x78] sm:$0xff]
      %v191 = vld [vmem:[%s167 + $0x80] sm:$0xff]
      %v192 = vld [vmem:[%s167 + $0x88] sm:$0xff]
      %v193 = vld [vmem:[%s167 + $0x90] sm:$0xff]
      %v194 = vld [vmem:[%s167 + $0x98] sm:$0xff]
      %v195 = vld [vmem:[%s167 + $0xa0] sm:$0xff]
      %v196 = vld [vmem:[%s167 + $0xa8] sm:$0xff]
      %v197 = vld [vmem:[%s167 + $0xb0] sm:$0xff]
      %v198 = vld [vmem:[%s167 + $0xb8] sm:$0xff]
      %v199 = vld [vmem:[%s167 + $0xc0] sm:$0xff]
      %v200 = vld [vmem:[%s167 + $0xc8] sm:$0xff]
      %v201 = vld [vmem:[%s167 + $0xd0] sm:$0xff]
      %v202 = vld [vmem:[%s167 + $0xd8] sm:$0xff]
      %v203 = vld [vmem:[%s167 + $0xe0] sm:$0xff]
      %v204 = vld [vmem:[%s167 + $0xe8] sm:$0xff]
      %v205 = vld [vmem:[%s167 + $0xf0] sm:$0xff]
      %v206 = vld [vmem:[%s167 + $0xf8] sm:$0xff]
      %v207 = vld [vmem:[%s167 + $0x100] sm:$0xff]
      %v208 = vld [vmem:[%s167 + $0x108] sm:$0xff]
      %v209 = vld [vmem:[%s167 + $0x110] sm:$0xff]
      %v210 = vld [vmem:[%s167 + $0x118] sm:$0xff]
      %v211 = vld [vmem:[%s167 + $0x120] sm:$0xff]
      %v212 = vld [vmem:[%s167 + $0x128] sm:$0xff]
      %v213 = vld [vmem:[%s167 + $0x130] sm:$0xff]
      %v214 = vld [vmem:[%s167 + $0x138] sm:$0xff]
      %v215 = vld [vmem:[%s167 + $0x140] sm:$0xff]
      %v216 = vld [vmem:[%s167 + $0x148] sm:$0xff]
      %v217 = vld [vmem:[%s167 + $0x150] sm:$0xff]
      %v218 = vld [vmem:[%s167 + $0x158] sm:$0xff]
      %v219 = vld [vmem:[%s167 + $0x160] sm:$0xff]
      %v220 = vld [vmem:[%s167 + $0x168] sm:$0xff]
      %v221 = vld [vmem:[%s167 + $0x170] sm:$0xff]
      %v222 = vld [vmem:[%s167 + $0x178] sm:$0xff]
      %v223 = vld [vmem:[%s167 + $0x180] sm:$0xff]
      %v224 = vld [vmem:[%s167 + $0x188] sm:$0xff]
      %v225 = vld [vmem:[%s167 + $0x190] sm:$0xff]
      %v226 = vld [vmem:[%s167 + $0x198] sm:$0xff]
      %v227 = vld [vmem:[%s167 + $0x1a0] sm:$0xff]
      %v228 = vld [vmem:[%s167 + $0x1a8] sm:$0xff]
      %v229 = vld [vmem:[%s167 + $0x1b0] sm:$0xff]
      %v230 = vld [vmem:[%s167 + $0x1b8] sm:$0xff]
      %v231 = vld [vmem:[%s167 + $0x1c0] sm:$0xff]
      %v232 = vld [vmem:[%s167 + $0x1c8] sm:$0xff]
      %v233 = vld [vmem:[%s167 + $0x1d0] sm:$0xff]
      %v234 = vld [vmem:[%s167 + $0x1d8] sm:$0xff]
      %v235 = vld [vmem:[%s167 + $0x1e0] sm:$0xff]
      %v236 = vld [vmem:[%s167 + $0x1e8] sm:$0xff]
      %v237 = vld [vmem:[%s167 + $0x1f0] sm:$0xff]
      %v238 = vld [vmem:[%s167 + $0x1f8] sm:$0xff]
      %v239 = vld [vmem:[%s167 + $0x200] sm:$0xff]
      %v240 = vld [vmem:[%s167 + $0x208] sm:$0xff]
      %v241 = vld [vmem:[%s167 + $0x210] sm:$0xff]
      %v242 = vld [vmem:[%s167 + $0x218] sm:$0xff]
      %v243 = vld [vmem:[%s167 + $0x220] sm:$0xff]
      %v244 = vld [vmem:[%s167 + $0x228] sm:$0xff]
      %v245 = vld [vmem:[%s167 + $0x230] sm:$0xff]
      %v246 = vld [vmem:[%s167 + $0x238] sm:$0xff]
      %v247 = vld [vmem:[%s167 + $0x240] sm:$0xff]
      %v248 = vld [vmem:[%s167 + $0x248] sm:$0xff]
      %v249 = vld [vmem:[%s167 + $0x250] sm:$0xff]
      %v250 = vld [vmem:[%s167 + $0x258] sm:$0xff]
      %v251 = vld [vmem:[%s167 + $0x260] sm:$0xff]
      %v252 = vld [vmem:[%s167 + $0x268] sm:$0xff]
      %v253 = vld [vmem:[%s167 + $0x270] sm:$0xff]
      %v254 = vld [vmem:[%s167 + $0x278] sm:$0xff]
      %v255 = vld [vmem:[%s167 + $0x280] sm:$0xff]
      %v256 = vld [vmem:[%s167 + $0x288] sm:$0xff]
      %v257 = vld [vmem:[%s167 + $0x290] sm:$0xff]
      %v258 = vld [vmem:[%s167 + $0x298] sm:$0xff]
      %v259 = vld [vmem:[%s167 + $0x2a0] sm:$0xff]
      %v260 = vld [vmem:[%s167 + $0x2a8] sm:$0xff]
      %v261 = vld [vmem:[%s167 + $0x2b0] sm:$0xff]
      %v262 = vld [vmem:[%s167 + $0x2b8] sm:$0xff]
      %v263 = vld [vmem:[%s167 + $0x2c0] sm:$0xff]
      %v264 = vld [vmem:[%s167 + $0x2c8] sm:$0xff]
      %v265 = vld [vmem:[%s167 + $0x2d0] sm:$0xff]
      %v266 = vld [vmem:[%s167 + $0x2d8] sm:$0xff]
      %v267 = vld [vmem:[%s167 + $0x2e0] sm:$0xff]
      %v268 = vld [vmem:[%s167 + $0x2e8] sm:$0xff]
      %v269 = vld [vmem:[%s167 + $0x2f0] sm:$0xff]
      %v270 = vld [vmem:[%s167 + $0x2f8] sm:$0xff]
      %v271 = vld [vmem:[%s167 + $0x300] sm:$0xff]
      %v272 = vld [vmem:[%s167 + $0x308] sm:$0xff]
      %v273 = vld [vmem:[%s167 + $0x310] sm:$0xff]
      %v274 = vld [vmem:[%s167 + $0x318] sm:$0xff]
      %v275 = vld [vmem:[%s167 + $0x320] sm:$0xff]
      %v276 = vld [vmem:[%s167 + $0x328] sm:$0xff]
      %v277 = vld [vmem:[%s167 + $0x330] sm:$0xff]
      %v278 = vld [vmem:[%s167 + $0x338] sm:$0xff]
      %v279 = vld [vmem:[%s167 + $0x340] sm:$0xff]
      %v280 = vld [vmem:[%s167 + $0x348] sm:$0xff]
      %v281 = vld [vmem:[%s167 + $0x350] sm:$0xff]
      %v282 = vld [vmem:[%s167 + $0x358] sm:$0xff]
      %v283 = vld [vmem:[%s167 + $0x360] sm:$0xff]
      %v284 = vld [vmem:[%s167 + $0x368] sm:$0xff]
      %v285 = vld [vmem:[%s167 + $0x370] sm:$0xff]
      %v286 = vld [vmem:[%s167 + $0x378] sm:$0xff]
      %v287 = vld [vmem:[%s167 + $0x380] sm:$0xff]
      %v288 = vld [vmem:[%s167 + $0x388] sm:$0xff]
      %v289 = vld [vmem:[%s167 + $0x390] sm:$0xff]
      %v290 = vld [vmem:[%s167 + $0x398] sm:$0xff]
      %v291 = vld [vmem:[%s167 + $0x3a0] sm:$0xff]
      %v292 = vld [vmem:[%s167 + $0x3a8] sm:$0xff]
      %v293 = vld [vmem:[%s167 + $0x3b0] sm:$0xff]
      %v294 = vld [vmem:[%s167 + $0x3b8] sm:$0xff]
      %v295 = vld [vmem:[%s167 + $0x3c0] sm:$0xff]
      %v296 = vld [vmem:[%s167 + $0x3c8] sm:$0xff]
      %v297 = vld [vmem:[%s167 + $0x3d0] sm:$0xff]
      %v298 = vld [vmem:[%s167 + $0x3d8] sm:$0xff]
      %v299 = vld [vmem:[%s167 + $0x3e0] sm:$0xff]
      %v300 = vld [vmem:[%s167 + $0x3e8] sm:$0xff]
      %v301 = vld [vmem:[%s167 + $0x3f0] sm:$0xff]
      %v302 = vld [vmem:[%s167 + $0x3f8] sm:$0xff]
      %v303 = vld [vmem:[%s167 + $0x400] sm:$0xff]
      %v304 = vld [vmem:[%s167 + $0x408] sm:$0xff]
      %v305 = vld [vmem:[%s167 + $0x410] sm:$0xff]
      %v306 = vld [vmem:[%s167 + $0x418] sm:$0xff]
      %v307 = vld [vmem:[%s167 + $0x420] sm:$0xff]
      %v308 = vld [vmem:[%s167 + $0x428] sm:$0xff]
      %v309 = vld [vmem:[%s167 + $0x430] sm:$0xff]
      %v310 = vld [vmem:[%s167 + $0x438] sm:$0xff]
      %v311 = vld [vmem:[%s167 + $0x440] sm:$0xff]
      %v312 = vld [vmem:[%s167 + $0x448] sm:$0xff]
      %v313 = vld [vmem:[%s167 + $0x450] sm:$0xff]
      %v314 = vld [vmem:[%s167 + $0x458] sm:$0xff]
      %v315 = vld [vmem:[%s167 + $0x460] sm:$0xff]
      %v316 = vld [vmem:[%s167 + $0x468] sm:$0xff]
      %v317 = vld [vmem:[%s167 + $0x470] sm:$0xff]
      %v318 = vld [vmem:[%s167 + $0x478] sm:$0xff]
      %v319 = vld [vmem:[%s167 + $0x480] sm:$0xff]
      %v320 = vld [vmem:[%s167 + $0x488] sm:$0xff]
      %v321 = vld [vmem:[%s167 + $0x490] sm:$0xff]
      %v322 = vld [vmem:[%s167 + $0x498] sm:$0xff]
      %v323 = vld [vmem:[%s167 + $0x4a0] sm:$0xff]
      %v324 = vld [vmem:[%s167 + $0x4a8] sm:$0xff]
      %v325 = vld [vmem:[%s167 + $0x4b0] sm:$0xff]
      %v326 = vld [vmem:[%s167 + $0x4b8] sm:$0xff]
      %v327 = vld [vmem:[%s167 + $0x4c0] sm:$0xff]
      %v328 = vld [vmem:[%s167 + $0x4c8] sm:$0xff]
      %v329 = vld [vmem:[%s167 + $0x4d0] sm:$0xff]
      %v330 = vld [vmem:[%s167 + $0x4d8] sm:$0xff]
      %v331 = vld [vmem:[%s167 + $0x4e0] sm:$0xff]
      %v332 = vld [vmem:[%s167 + $0x4e8] sm:$0xff]
      %v333 = vld [vmem:[%s167 + $0x4f0] sm:$0xff]
      %v334 = vld [vmem:[%s167 + $0x4f8] sm:$0xff]
      %v335 = vld [vmem:[%s167 + $0x500] sm:$0xff]
      %v336 = vld [vmem:[%s167 + $0x508] sm:$0xff]
      %v337 = vld [vmem:[%s167 + $0x510] sm:$0xff]
      %v338 = vld [vmem:[%s167 + $0x518] sm:$0xff]
      %v339 = vld [vmem:[%s167 + $0x520] sm:$0xff]
      %v340 = vld [vmem:[%s167 + $0x528] sm:$0xff]
      %v341 = vld [vmem:[%s167 + $0x530] sm:$0xff]
      %v342 = vld [vmem:[%s167 + $0x538] sm:$0xff]
      %v343 = vld [vmem:[%s167 + $0x540] sm:$0xff]
      %v344 = vld [vmem:[%s167 + $0x548] sm:$0xff]
      %v345 = vld [vmem:[%s167 + $0x550] sm:$0xff]
      %v346 = vld [vmem:[%s167 + $0x558] sm:$0xff]
      %v347 = vld [vmem:[%s167 + $0x560] sm:$0xff]
      %v348 = vld [vmem:[%s167 + $0x568] sm:$0xff]
      %v349 = vld [vmem:[%s167 + $0x570] sm:$0xff]
      %v350 = vld [vmem:[%s167 + $0x578] sm:$0xff]
      %v351 = vld [vmem:[%s167 + $0x580] sm:$0xff]
      %v352 = vld [vmem:[%s167 + $0x588] sm:$0xff]
      %v353 = vld [vmem:[%s167 + $0x590] sm:$0xff]
      %v354 = vld [vmem:[%s167 + $0x598] sm:$0xff]
      %v355 = vld [vmem:[%s167 + $0x5a0] sm:$0xff]
      %v356 = vld [vmem:[%s167 + $0x5a8] sm:$0xff]
      %v357 = vld [vmem:[%s167 + $0x5b0] sm:$0xff]
      %v358 = vld [vmem:[%s167 + $0x5b8] sm:$0xff]
      %v359 = vld [vmem:[%s167 + $0x5c0] sm:$0xff]
      %v360 = vld [vmem:[%s167 + $0x5c8] sm:$0xff]
      %v361 = vld [vmem:[%s167 + $0x5d0] sm:$0xff]
      %v362 = vld [vmem:[%s167 + $0x5d8] sm:$0xff]
      %v363 = vld [vmem:[%s167 + $0x5e0] sm:$0xff]
      %v364 = vld [vmem:[%s167 + $0x5e8] sm:$0xff]
      %v365 = vld [vmem:[%s167 + $0x5f0] sm:$0xff]
      %v366 = vld [vmem:[%s167 + $0x5f8] sm:$0xff]
      %v367 = vld [vmem:[%s167 + $0x600] sm:$0xff]
      %v368 = vld [vmem:[%s167 + $0x608] sm:$0xff]
      %v369 = vld [vmem:[%s167 + $0x610] sm:$0xff]
      %v370 = vld [vmem:[%s167 + $0x618] sm:$0xff]
      %v371 = vld [vmem:[%s167 + $0x620] sm:$0xff]
      %v372 = vld [vmem:[%s167 + $0x628] sm:$0xff]
      %v373 = vld [vmem:[%s167 + $0x630] sm:$0xff]
      %v374 = vld [vmem:[%s167 + $0x638] sm:$0xff]
      %v375 = vld [vmem:[%s167 + $0x640] sm:$0xff]
      %v376 = vld [vmem:[%s167 + $0x648] sm:$0xff]
      %v377 = vld [vmem:[%s167 + $0x650] sm:$0xff]
      %v378 = vld [vmem:[%s167 + $0x658] sm:$0xff]
      %v379 = vld [vmem:[%s167 + $0x660] sm:$0xff]
      %v380 = vld [vmem:[%s167 + $0x668] sm:$0xff]
      %v381 = vld [vmem:[%s167 + $0x670] sm:$0xff]
      %v382 = vld [vmem:[%s167 + $0x678] sm:$0xff]
      %v383 = vld [vmem:[%s167 + $0x680] sm:$0xff]
      %v384 = vld [vmem:[%s167 + $0x688] sm:$0xff]
      %v385 = vld [vmem:[%s167 + $0x690] sm:$0xff]
      %v386 = vld [vmem:[%s167 + $0x698] sm:$0xff]
      %v387 = vld [vmem:[%s167 + $0x6a0] sm:$0xff]
      %v388 = vld [vmem:[%s167 + $0x6a8] sm:$0xff]
      %v389 = vld [vmem:[%s167 + $0x6b0] sm:$0xff]
      %v390 = vld [vmem:[%s167 + $0x6b8] sm:$0xff]
      %v391 = vld [vmem:[%s167 + $0x6c0] sm:$0xff]
      %v392 = vld [vmem:[%s167 + $0x6c8] sm:$0xff]
      %v393 = vld [vmem:[%s167 + $0x6d0] sm:$0xff]
      %v394 = vld [vmem:[%s167 + $0x6d8] sm:$0xff]
      %v395 = vld [vmem:[%s167 + $0x6e0] sm:$0xff]
      %v396 = vld [vmem:[%s167 + $0x6e8] sm:$0xff]
      %v397 = vld [vmem:[%s167 + $0x6f0] sm:$0xff]
      %v398 = vld [vmem:[%s167 + $0x6f8] sm:$0xff]
      %v399 = vld [vmem:[%s167 + $0x700] sm:$0xff]
      %v400 = vld [vmem:[%s167 + $0x708] sm:$0xff]
      %v401 = vld [vmem:[%s167 + $0x710] sm:$0xff]
      %v402 = vld [vmem:[%s167 + $0x718] sm:$0xff]
      %v403 = vld [vmem:[%s167 + $0x720] sm:$0xff]
      %v404 = vld [vmem:[%s167 + $0x728] sm:$0xff]
      %v405 = vld [vmem:[%s167 + $0x730] sm:$0xff]
      %v406 = vld [vmem:[%s167 + $0x738] sm:$0xff]
      %v407 = vld [vmem:[%s167 + $0x740] sm:$0xff]
      %v408 = vld [vmem:[%s167 + $0x748] sm:$0xff]
      %v409 = vld [vmem:[%s167 + $0x750] sm:$0xff]
      %v410 = vld [vmem:[%s167 + $0x758] sm:$0xff]
      %v411 = vld [vmem:[%s167 + $0x760] sm:$0xff]
      %v412 = vld [vmem:[%s167 + $0x768] sm:$0xff]
      %v413 = vld [vmem:[%s167 + $0x770] sm:$0xff]
      %v414 = vld [vmem:[%s167 + $0x778] sm:$0xff]
      %v415 = vld [vmem:[%s167 + $0x780] sm:$0xff]
      %v416 = vld [vmem:[%s167 + $0x788] sm:$0xff]
      %v417 = vld [vmem:[%s167 + $0x790] sm:$0xff]
      %v418 = vld [vmem:[%s167 + $0x798] sm:$0xff]
      %v419 = vld [vmem:[%s167 + $0x7a0] sm:$0xff]
      %v420 = vld [vmem:[%s167 + $0x7a8] sm:$0xff]
      %v421 = vld [vmem:[%s167 + $0x7b0] sm:$0xff]
      %v422 = vld [vmem:[%s167 + $0x7b8] sm:$0xff]
      %v423 = vld [vmem:[%s167 + $0x7c0] sm:$0xff]
      %v424 = vld [vmem:[%s167 + $0x7c8] sm:$0xff]
      %v425 = vld [vmem:[%s167 + $0x7d0] sm:$0xff]
      %v426 = vld [vmem:[%s167 + $0x7d8] sm:$0xff]
      %v427 = vld [vmem:[%s167 + $0x7e0] sm:$0xff]
      %v428 = vld [vmem:[%s167 + $0x7e8] sm:$0xff]
      %v429 = vld [vmem:[%s167 + $0x7f0] sm:$0xff]
      %v430 = vld [vmem:[%s167 + $0x7f8] sm:$0xff]
      %v431 = vld [vmem:[%s1] sm:$0xff]
      %v432 = vld [vmem:[%s1 + $0x8] sm:$0xff]
      %v433 = vld [vmem:[%s1 + $0x10] sm:$0xff]
      %v434 = vld [vmem:[%s1 + $0x18] sm:$0xff]
      %v435 = vld [vmem:[%s1 + $0x20] sm:$0xff]
      %v436 = vld [vmem:[%s1 + $0x28] sm:$0xff]
      %v437 = vld [vmem:[%s1 + $0x30] sm:$0xff]
      %v438 = vld [vmem:[%s1 + $0x38] sm:$0xff]
      %s439 = sld [smem:[#allocation2]]
      %v440 = vstv %s439
      %vm441 = vcmask 523264
      %v443 = vsel %vm441, %v175, 0
      %v446 = vsel %vm441, %v176, 0
      %v449 = vsel %vm441, %v177, 0
      %v452 = vsel %vm441, %v178, 0
      %v455 = vsel %vm441, %v179, 0
      %v458 = vsel %vm441, %v180, 0
      %v461 = vsel %vm441, %v181, 0
      %v464 = vsel %vm441, %v182, 0
      %v467 = vsel %vm441, %v183, 0
      %v470 = vsel %vm441, %v184, 0
      %v473 = vsel %vm441, %v185, 0
      %v476 = vsel %vm441, %v186, 0
      %v479 = vsel %vm441, %v187, 0
      %v482 = vsel %vm441, %v188, 0
      %v485 = vsel %vm441, %v189, 0
      %v488 = vsel %vm441, %v190, 0
      %v491 = vsel %vm441, %v191, 0
      %v494 = vsel %vm441, %v192, 0
      %v497 = vsel %vm441, %v193, 0
      %v500 = vsel %vm441, %v194, 0
      %v503 = vsel %vm441, %v195, 0
      %v506 = vsel %vm441, %v196, 0
      %v509 = vsel %vm441, %v197, 0
      %v512 = vsel %vm441, %v198, 0
      %v515 = vsel %vm441, %v199, 0
      %v518 = vsel %vm441, %v200, 0
      %v521 = vsel %vm441, %v201, 0
      %v524 = vsel %vm441, %v202, 0
      %v527 = vsel %vm441, %v203, 0
      %v530 = vsel %vm441, %v204, 0
      %v533 = vsel %vm441, %v205, 0
      %v536 = vsel %vm441, %v206, 0
      %v539 = vsel %vm441, %v207, 0
      %v542 = vsel %vm441, %v208, 0
      %v545 = vsel %vm441, %v209, 0
      %v548 = vsel %vm441, %v210, 0
      %v551 = vsel %vm441, %v211, 0
      %v554 = vsel %vm441, %v212, 0
      %v557 = vsel %vm441, %v213, 0
      %v560 = vsel %vm441, %v214, 0
      %v563 = vsel %vm441, %v215, 0
      %v566 = vsel %vm441, %v216, 0
      %v569 = vsel %vm441, %v217, 0
      %v572 = vsel %vm441, %v218, 0
      %v575 = vsel %vm441, %v219, 0
      %v578 = vsel %vm441, %v220, 0
      %v581 = vsel %vm441, %v221, 0
      %v584 = vsel %vm441, %v222, 0
      %v587 = vsel %vm441, %v223, 0
      %v590 = vsel %vm441, %v224, 0
      %v593 = vsel %vm441, %v225, 0
      %v596 = vsel %vm441, %v226, 0
      %v599 = vsel %vm441, %v227, 0
      %v602 = vsel %vm441, %v228, 0
      %v605 = vsel %vm441, %v229, 0
      %v608 = vsel %vm441, %v230, 0
      %v611 = vsel %vm441, %v231, 0
      %v614 = vsel %vm441, %v232, 0
      %v617 = vsel %vm441, %v233, 0
      %v620 = vsel %vm441, %v234, 0
      %v623 = vsel %vm441, %v235, 0
      %v626 = vsel %vm441, %v236, 0
      %v629 = vsel %vm441, %v237, 0
      %v632 = vsel %vm441, %v238, 0
      %v635 = vsel %vm441, %v239, 0
      %v638 = vsel %vm441, %v240, 0
      %v641 = vsel %vm441, %v241, 0
      %v644 = vsel %vm441, %v242, 0
      %v647 = vsel %vm441, %v243, 0
      %v650 = vsel %vm441, %v244, 0
      %v653 = vsel %vm441, %v245, 0
      %v656 = vsel %vm441, %v246, 0
      %v659 = vsel %vm441, %v247, 0
      %v662 = vsel %vm441, %v248, 0
      %v665 = vsel %vm441, %v249, 0
      %v668 = vsel %vm441, %v250, 0
      %v671 = vsel %vm441, %v251, 0
      %v674 = vsel %vm441, %v252, 0
      %v677 = vsel %vm441, %v253, 0
      %v680 = vsel %vm441, %v254, 0
      %v683 = vsel %vm441, %v255, 0
      %v686 = vsel %vm441, %v256, 0
      %v689 = vsel %vm441, %v257, 0
      %v692 = vsel %vm441, %v258, 0
      %v695 = vsel %vm441, %v259, 0
      %v698 = vsel %vm441, %v260, 0
      %v701 = vsel %vm441, %v261, 0
      %v704 = vsel %vm441, %v262, 0
      %v707 = vsel %vm441, %v263, 0
      %v710 = vsel %vm441, %v264, 0
      %v713 = vsel %vm441, %v265, 0
      %v716 = vsel %vm441, %v266, 0
      %v719 = vsel %vm441, %v267, 0
      %v722 = vsel %vm441, %v268, 0
      %v725 = vsel %vm441, %v269, 0
      %v728 = vsel %vm441, %v270, 0
      %v731 = vsel %vm441, %v271, 0
      %v734 = vsel %vm441, %v272, 0
      %v737 = vsel %vm441, %v273, 0
      %v740 = vsel %vm441, %v274, 0
      %v743 = vsel %vm441, %v275, 0
      %v746 = vsel %vm441, %v276, 0
      %v749 = vsel %vm441, %v277, 0
      %v752 = vsel %vm441, %v278, 0
      %v755 = vsel %vm441, %v279, 0
      %v758 = vsel %vm441, %v280, 0
      %v761 = vsel %vm441, %v281, 0
      %v764 = vsel %vm441, %v282, 0
      %v767 = vsel %vm441, %v283, 0
      %v770 = vsel %vm441, %v284, 0
      %v773 = vsel %vm441, %v285, 0
      %v776 = vsel %vm441, %v286, 0
      %v779 = vsel %vm441, %v287, 0
      %v782 = vsel %vm441, %v288, 0
      %v785 = vsel %vm441, %v289, 0
      %v788 = vsel %vm441, %v290, 0
      %v791 = vsel %vm441, %v291, 0
      %v794 = vsel %vm441, %v292, 0
      %v797 = vsel %vm441, %v293, 0
      %v800 = vsel %vm441, %v294, 0
      %v803 = vsel %vm441, %v295, 0
      %v806 = vsel %vm441, %v296, 0
      %v809 = vsel %vm441, %v297, 0
      %v812 = vsel %vm441, %v298, 0
      %v815 = vsel %vm441, %v299, 0
      %v818 = vsel %vm441, %v300, 0
      %v821 = vsel %vm441, %v301, 0
      %v824 = vsel %vm441, %v302, 0
      %v827 = vsel %vm441, %v303, 0
      %v830 = vsel %vm441, %v304, 0
      %v833 = vsel %vm441, %v305, 0
      %v836 = vsel %vm441, %v306, 0
      %v839 = vsel %vm441, %v307, 0
      %v842 = vsel %vm441, %v308, 0
      %v845 = vsel %vm441, %v309, 0
      %v848 = vsel %vm441, %v310, 0
      %v851 = vsel %vm441, %v311, 0
      %v854 = vsel %vm441, %v312, 0
      %v857 = vsel %vm441, %v313, 0
      %v860 = vsel %vm441, %v314, 0
      %v863 = vsel %vm441, %v315, 0
      %v866 = vsel %vm441, %v316, 0
      %v869 = vsel %vm441, %v317, 0
      %v872 = vsel %vm441, %v318, 0
      %v875 = vsel %vm441, %v319, 0
      %v878 = vsel %vm441, %v320, 0
      %v881 = vsel %vm441, %v321, 0
      %v884 = vsel %vm441, %v322, 0
      %v887 = vsel %vm441, %v323, 0
      %v890 = vsel %vm441, %v324, 0
      %v893 = vsel %vm441, %v325, 0
      %v896 = vsel %vm441, %v326, 0
      %v899 = vsel %vm441, %v327, 0
      %v902 = vsel %vm441, %v328, 0
      %v905 = vsel %vm441, %v329, 0
      %v908 = vsel %vm441, %v330, 0
      %v911 = vsel %vm441, %v331, 0
      %v914 = vsel %vm441, %v332, 0
      %v917 = vsel %vm441, %v333, 0
      %v920 = vsel %vm441, %v334, 0
      %v923 = vsel %vm441, %v335, 0
      %v926 = vsel %vm441, %v336, 0
      %v929 = vsel %vm441, %v337, 0
      %v932 = vsel %vm441, %v338, 0
      %v935 = vsel %vm441, %v339, 0
      %v938 = vsel %vm441, %v340, 0
      %v941 = vsel %vm441, %v341, 0
      %v944 = vsel %vm441, %v342, 0
      %v947 = vsel %vm441, %v343, 0
      %v950 = vsel %vm441, %v344, 0
      %v953 = vsel %vm441, %v345, 0
      %v956 = vsel %vm441, %v346, 0
      %v959 = vsel %vm441, %v347, 0
      %v962 = vsel %vm441, %v348, 0
      %v965 = vsel %vm441, %v349, 0
      %v968 = vsel %vm441, %v350, 0
      %v971 = vsel %vm441, %v351, 0
      %v974 = vsel %vm441, %v352, 0
      %v977 = vsel %vm441, %v353, 0
      %v980 = vsel %vm441, %v354, 0
      %v983 = vsel %vm441, %v355, 0
      %v986 = vsel %vm441, %v356, 0
      %v989 = vsel %vm441, %v357, 0
      %v992 = vsel %vm441, %v358, 0
      %v995 = vsel %vm441, %v359, 0
      %v998 = vsel %vm441, %v360, 0
      %v1001 = vsel %vm441, %v361, 0
      %v1004 = vsel %vm441, %v362, 0
      %v1007 = vsel %vm441, %v363, 0
      %v1010 = vsel %vm441, %v364, 0
      %v1013 = vsel %vm441, %v365, 0
      %v1016 = vsel %vm441, %v366, 0
      %v1019 = vsel %vm441, %v367, 0
      %v1022 = vsel %vm441, %v368, 0
      %v1025 = vsel %vm441, %v369, 0
      %v1028 = vsel %vm441, %v370, 0
      %v1031 = vsel %vm441, %v371, 0
      %v1034 = vsel %vm441, %v372, 0
      %v1037 = vsel %vm441, %v373, 0
      %v1040 = vsel %vm441, %v374, 0
      %v1043 = vsel %vm441, %v375, 0
      %v1046 = vsel %vm441, %v376, 0
      %v1049 = vsel %vm441, %v377, 0
      %v1052 = vsel %vm441, %v378, 0
      %v1055 = vsel %vm441, %v379, 0
      %v1058 = vsel %vm441, %v380, 0
      %v1061 = vsel %vm441, %v381, 0
      %v1064 = vsel %vm441, %v382, 0
      %v1067 = vsel %vm441, %v383, 0
      %v1070 = vsel %vm441, %v384, 0
      %v1073 = vsel %vm441, %v385, 0
      %v1076 = vsel %vm441, %v386, 0
      %v1079 = vsel %vm441, %v387, 0
      %v1082 = vsel %vm441, %v388, 0
      %v1085 = vsel %vm441, %v389, 0
      %v1088 = vsel %vm441, %v390, 0
      %v1091 = vsel %vm441, %v391, 0
      %v1094 = vsel %vm441, %v392, 0
      %v1097 = vsel %vm441, %v393, 0
      %v1100 = vsel %vm441, %v394, 0
      %v1103 = vsel %vm441, %v395, 0
      %v1106 = vsel %vm441, %v396, 0
      %v1109 = vsel %vm441, %v397, 0
      %v1112 = vsel %vm441, %v398, 0
      %v1115 = vsel %vm441, %v399, 0
      %v1118 = vsel %vm441, %v400, 0
      %v1121 = vsel %vm441, %v401, 0
      %v1124 = vsel %vm441, %v402, 0
      %v1127 = vsel %vm441, %v403, 0
      %v1130 = vsel %vm441, %v404, 0
      %v1133 = vsel %vm441, %v405, 0
      %v1136 = vsel %vm441, %v406, 0
      %v1139 = vsel %vm441, %v407, 0
      %v1142 = vsel %vm441, %v408, 0
      %v1145 = vsel %vm441, %v409, 0
      %v1148 = vsel %vm441, %v410, 0
      %v1151 = vsel %vm441, %v411, 0
      %v1154 = vsel %vm441, %v412, 0
      %v1157 = vsel %vm441, %v413, 0
      %v1160 = vsel %vm441, %v414, 0
      %v1163 = vsel %vm441, %v415, 0
      %v1166 = vsel %vm441, %v416, 0
      %v1169 = vsel %vm441, %v417, 0
      %v1172 = vsel %vm441, %v418, 0
      %v1175 = vsel %vm441, %v419, 0
      %v1178 = vsel %vm441, %v420, 0
      %v1181 = vsel %vm441, %v421, 0
      %v1184 = vsel %vm441, %v422, 0
      %v1187 = vsel %vm441, %v423, 0
      %v1190 = vsel %vm441, %v424, 0
      %v1193 = vsel %vm441, %v425, 0
      %v1196 = vsel %vm441, %v426, 0
      %v1199 = vsel %vm441, %v427, 0
      %v1202 = vsel %vm441, %v428, 0
      %v1205 = vsel %vm441, %v429, 0
      %v1208 = vsel %vm441, %v430, 0
      %1210 = vmatpush.msra.mxu0 0.0
      %1211 = vmatpush.msra.mxu0 0.0
      %1212 = vmatpush.msra.mxu0 0.0
      %1213 = vmatpush.msra.mxu0 0.0
      %1214 = vmatpush.msra.mxu0 0.0
      %1215 = vmatpush.msra.mxu0 0.0
      %1216 = vmatpush.msra.mxu0 0.0
      %1217 = vmatpush.msra.mxu0 0.0
      %v1218 = vand.u32 %v438, 4294901760
      %1219 = vmatpush.msra.mxu0 %v1218
      %v1220 = vand.u32 %v437, 4294901760
      %1221 = vmatpush.msra.mxu0 %v1220
      %v1222 = vand.u32 %v436, 4294901760
      %1223 = vmatpush.msra.mxu0 %v1222
      %v1224 = vand.u32 %v435, 4294901760
      %1225 = vmatpush.msra.mxu0 %v1224
      %v1226 = vand.u32 %v434, 4294901760
      %1227 = vmatpush.msra.mxu0 %v1226
      %v1228 = vand.u32 %v433, 4294901760
      %1229 = vmatpush.msra.mxu0 %v1228
      %v1230 = vand.u32 %v432, 4294901760
      %1231 = vmatpush.msra.mxu0 %v1230
      %v1232 = vand.u32 %v431, 4294901760
      %1233 = vmatpush.msra.mxu0 %v1232
      %v1234 = vand.u32 %v443, 4294901760
      %v1235 = vsub.f32 %v443, %v1234
      %v1236 = vand.u32 %v1235, 4294901760
      %v1237 = vsub.f32 %v1235, %v1236
      %v1238 = vand.u32 %v1237, 4294901760
      %1239 = vmatmul.f32.gmra.mxu0 %v1238
      %v1240 = vpop.f32.mrf.mxu0
      %v1241 = vadd.f32 %v440, %v1240
      %v1242 = vand.u32 %v446, 4294901760
      %v1243 = vsub.f32 %v446, %v1242
      %v1244 = vand.u32 %v1243, 4294901760
      %v1245 = vsub.f32 %v1243, %v1244
      %v1246 = vand.u32 %v1245, 4294901760
      %1247 = vmatmul.f32.gmra.mxu0 %v1246
      %v1248 = vpop.f32.mrf.mxu0
      %v1249 = vadd.f32 %v440, %v1248
      %v1250 = vand.u32 %v449, 4294901760
      %v1251 = vsub.f32 %v449, %v1250
      %v1252 = vand.u32 %v1251, 4294901760
      %v1253 = vsub.f32 %v1251, %v1252
      %v1254 = vand.u32 %v1253, 4294901760
      %1255 = vmatmul.f32.gmra.mxu0 %v1254
      %v1256 = vpop.f32.mrf.mxu0
      %v1257 = vadd.f32 %v440, %v1256
      %v1258 = vand.u32 %v452, 4294901760
      %v1259 = vsub.f32 %v452, %v1258
      %v1260 = vand.u32 %v1259, 4294901760
      %v1261 = vsub.f32 %v1259, %v1260
      %v1262 = vand.u32 %v1261, 4294901760
      %1263 = vmatmul.f32.gmra.mxu0 %v1262
      %v1264 = vpop.f32.mrf.mxu0
      %v1265 = vadd.f32 %v440, %v1264
      %v1266 = vand.u32 %v455, 4294901760
      %v1267 = vsub.f32 %v455, %v1266
      %v1268 = vand.u32 %v1267, 4294901760
      %v1269 = vsub.f32 %v1267, %v1268
      %v1270 = vand.u32 %v1269, 4294901760
      %1271 = vmatmul.f32.gmra.mxu0 %v1270
      %v1272 = vpop.f32.mrf.mxu0
      %v1273 = vadd.f32 %v440, %v1272
      %v1274 = vand.u32 %v458, 4294901760
      %v1275 = vsub.f32 %v458, %v1274
      %v1276 = vand.u32 %v1275, 4294901760
      %v1277 = vsub.f32 %v1275, %v1276
      %v1278 = vand.u32 %v1277, 4294901760
      %1279 = vmatmul.f32.gmra.mxu0 %v1278
      %v1280 = vpop.f32.mrf.mxu0
      %v1281 = vadd.f32 %v440, %v1280
      %v1282 = vand.u32 %v461, 4294901760
      %v1283 = vsub.f32 %v461, %v1282
      %v1284 = vand.u32 %v1283, 4294901760
      %v1285 = vsub.f32 %v1283, %v1284
      %v1286 = vand.u32 %v1285, 4294901760
      %1287 = vmatmul.f32.gmra.mxu0 %v1286
      %v1288 = vpop.f32.mrf.mxu0
      %v1289 = vadd.f32 %v440, %v1288
      %v1290 = vand.u32 %v464, 4294901760
      %v1291 = vsub.f32 %v464, %v1290
      %v1292 = vand.u32 %v1291, 4294901760
      %v1293 = vsub.f32 %v1291, %v1292
      %v1294 = vand.u32 %v1293, 4294901760
      %1295 = vmatmul.f32.gmra.mxu0 %v1294
      %v1296 = vpop.f32.mrf.mxu0
      %v1297 = vadd.f32 %v440, %v1296
      %v1298 = vand.u32 %v467, 4294901760
      %v1299 = vsub.f32 %v467, %v1298
      %v1300 = vand.u32 %v1299, 4294901760
      %v1301 = vsub.f32 %v1299, %v1300
      %v1302 = vand.u32 %v1301, 4294901760
      %1303 = vmatmul.f32.gmra.mxu0 %v1302
      %v1304 = vpop.f32.mrf.mxu0
      %v1305 = vadd.f32 %v440, %v1304
      %v1306 = vand.u32 %v470, 4294901760
      %v1307 = vsub.f32 %v470, %v1306
      %v1308 = vand.u32 %v1307, 4294901760
      %v1309 = vsub.f32 %v1307, %v1308
      %v1310 = vand.u32 %v1309, 4294901760
      %1311 = vmatmul.f32.gmra.mxu0 %v1310
      %v1312 = vpop.f32.mrf.mxu0
      %v1313 = vadd.f32 %v440, %v1312
      %v1314 = vand.u32 %v473, 4294901760
      %v1315 = vsub.f32 %v473, %v1314
      %v1316 = vand.u32 %v1315, 4294901760
      %v1317 = vsub.f32 %v1315, %v1316
      %v1318 = vand.u32 %v1317, 4294901760
      %1319 = vmatmul.f32.gmra.mxu0 %v1318
      %v1320 = vpop.f32.mrf.mxu0
      %v1321 = vadd.f32 %v440, %v1320
      %v1322 = vand.u32 %v476, 4294901760
      %v1323 = vsub.f32 %v476, %v1322
      %v1324 = vand.u32 %v1323, 4294901760
      %v1325 = vsub.f32 %v1323, %v1324
      %v1326 = vand.u32 %v1325, 4294901760
      %1327 = vmatmul.f32.gmra.mxu0 %v1326
      %v1328 = vpop.f32.mrf.mxu0
      %v1329 = vadd.f32 %v440, %v1328
      %v1330 = vand.u32 %v479, 4294901760
      %v1331 = vsub.f32 %v479, %v1330
      %v1332 = vand.u32 %v1331, 4294901760
      %v1333 = vsub.f32 %v1331, %v1332
      %v1334 = vand.u32 %v1333, 4294901760
      %1335 = vmatmul.f32.gmra.mxu0 %v1334
      %v1336 = vpop.f32.mrf.mxu0
      %v1337 = vadd.f32 %v440, %v1336
      %v1338 = vand.u32 %v482, 4294901760
      %v1339 = vsub.f32 %v482, %v1338
      %v1340 = vand.u32 %v1339, 4294901760
      %v1341 = vsub.f32 %v1339, %v1340
      %v1342 = vand.u32 %v1341, 4294901760
      %1343 = vmatmul.f32.gmra.mxu0 %v1342
      %v1344 = vpop.f32.mrf.mxu0
      %v1345 = vadd.f32 %v440, %v1344
      %v1346 = vand.u32 %v485, 4294901760
      %v1347 = vsub.f32 %v485, %v1346
      %v1348 = vand.u32 %v1347, 4294901760
      %v1349 = vsub.f32 %v1347, %v1348
      %v1350 = vand.u32 %v1349, 4294901760
      %1351 = vmatmul.f32.gmra.mxu0 %v1350
      %v1352 = vpop.f32.mrf.mxu0
      %v1353 = vadd.f32 %v440, %v1352
      %v1354 = vand.u32 %v488, 4294901760
      %v1355 = vsub.f32 %v488, %v1354
      %v1356 = vand.u32 %v1355, 4294901760
      %v1357 = vsub.f32 %v1355, %v1356
      %v1358 = vand.u32 %v1357, 4294901760
      %1359 = vmatmul.f32.gmra.mxu0 %v1358
      %v1360 = vpop.f32.mrf.mxu0
      %v1361 = vadd.f32 %v440, %v1360
      %v1362 = vand.u32 %v491, 4294901760
      %v1363 = vsub.f32 %v491, %v1362
      %v1364 = vand.u32 %v1363, 4294901760
      %v1365 = vsub.f32 %v1363, %v1364
      %v1366 = vand.u32 %v1365, 4294901760
      %1367 = vmatmul.f32.gmra.mxu0 %v1366
      %v1368 = vpop.f32.mrf.mxu0
      %v1369 = vadd.f32 %v440, %v1368
      %v1370 = vand.u32 %v494, 4294901760
      %v1371 = vsub.f32 %v494, %v1370
      %v1372 = vand.u32 %v1371, 4294901760
      %v1373 = vsub.f32 %v1371, %v1372
      %v1374 = vand.u32 %v1373, 4294901760
      %1375 = vmatmul.f32.gmra.mxu0 %v1374
      %v1376 = vpop.f32.mrf.mxu0
      %v1377 = vadd.f32 %v440, %v1376
      %v1378 = vand.u32 %v497, 4294901760
      %v1379 = vsub.f32 %v497, %v1378
      %v1380 = vand.u32 %v1379, 4294901760
      %v1381 = vsub.f32 %v1379, %v1380
      %v1382 = vand.u32 %v1381, 4294901760
      %1383 = vmatmul.f32.gmra.mxu0 %v1382
      %v1384 = vpop.f32.mrf.mxu0
      %v1385 = vadd.f32 %v440, %v1384
      %v1386 = vand.u32 %v500, 4294901760
      %v1387 = vsub.f32 %v500, %v1386
      %v1388 = vand.u32 %v1387, 4294901760
      %v1389 = vsub.f32 %v1387, %v1388
      %v1390 = vand.u32 %v1389, 4294901760
      %1391 = vmatmul.f32.gmra.mxu0 %v1390
      %v1392 = vpop.f32.mrf.mxu0
      %v1393 = vadd.f32 %v440, %v1392
      %v1394 = vand.u32 %v503, 4294901760
      %v1395 = vsub.f32 %v503, %v1394
      %v1396 = vand.u32 %v1395, 4294901760
      %v1397 = vsub.f32 %v1395, %v1396
      %v1398 = vand.u32 %v1397, 4294901760
      %1399 = vmatmul.f32.gmra.mxu0 %v1398
      %v1400 = vpop.f32.mrf.mxu0
      %v1401 = vadd.f32 %v440, %v1400
      %v1402 = vand.u32 %v506, 4294901760
      %v1403 = vsub.f32 %v506, %v1402
      %v1404 = vand.u32 %v1403, 4294901760
      %v1405 = vsub.f32 %v1403, %v1404
      %v1406 = vand.u32 %v1405, 4294901760
      %1407 = vmatmul.f32.gmra.mxu0 %v1406
      %v1408 = vpop.f32.mrf.mxu0
      %v1409 = vadd.f32 %v440, %v1408
      %v1410 = vand.u32 %v509, 4294901760
      %v1411 = vsub.f32 %v509, %v1410
      %v1412 = vand.u32 %v1411, 4294901760
      %v1413 = vsub.f32 %v1411, %v1412
      %v1414 = vand.u32 %v1413, 4294901760
      %1415 = vmatmul.f32.gmra.mxu0 %v1414
      %v1416 = vpop.f32.mrf.mxu0
      %v1417 = vadd.f32 %v440, %v1416
      %v1418 = vand.u32 %v512, 4294901760
      %v1419 = vsub.f32 %v512, %v1418
      %v1420 = vand.u32 %v1419, 4294901760
      %v1421 = vsub.f32 %v1419, %v1420
      %v1422 = vand.u32 %v1421, 4294901760
      %1423 = vmatmul.f32.gmra.mxu0 %v1422
      %v1424 = vpop.f32.mrf.mxu0
      %v1425 = vadd.f32 %v440, %v1424
      %v1426 = vand.u32 %v515, 4294901760
      %v1427 = vsub.f32 %v515, %v1426
      %v1428 = vand.u32 %v1427, 4294901760
      %v1429 = vsub.f32 %v1427, %v1428
      %v1430 = vand.u32 %v1429, 4294901760
      %1431 = vmatmul.f32.gmra.mxu0 %v1430
      %v1432 = vpop.f32.mrf.mxu0
      %v1433 = vadd.f32 %v440, %v1432
      %v1434 = vand.u32 %v518, 4294901760
      %v1435 = vsub.f32 %v518, %v1434
      %v1436 = vand.u32 %v1435, 4294901760
      %v1437 = vsub.f32 %v1435, %v1436
      %v1438 = vand.u32 %v1437, 4294901760
      %1439 = vmatmul.f32.gmra.mxu0 %v1438
      %v1440 = vpop.f32.mrf.mxu0
      %v1441 = vadd.f32 %v440, %v1440
      %v1442 = vand.u32 %v521, 4294901760
      %v1443 = vsub.f32 %v521, %v1442
      %v1444 = vand.u32 %v1443, 4294901760
      %v1445 = vsub.f32 %v1443, %v1444
      %v1446 = vand.u32 %v1445, 4294901760
      %1447 = vmatmul.f32.gmra.mxu0 %v1446
      %v1448 = vpop.f32.mrf.mxu0
      %v1449 = vadd.f32 %v440, %v1448
      %v1450 = vand.u32 %v524, 4294901760
      %v1451 = vsub.f32 %v524, %v1450
      %v1452 = vand.u32 %v1451, 4294901760
      %v1453 = vsub.f32 %v1451, %v1452
      %v1454 = vand.u32 %v1453, 4294901760
      %1455 = vmatmul.f32.gmra.mxu0 %v1454
      %v1456 = vpop.f32.mrf.mxu0
      %v1457 = vadd.f32 %v440, %v1456
      %v1458 = vand.u32 %v527, 4294901760
      %v1459 = vsub.f32 %v527, %v1458
      %v1460 = vand.u32 %v1459, 4294901760
      %v1461 = vsub.f32 %v1459, %v1460
      %v1462 = vand.u32 %v1461, 4294901760
      %1463 = vmatmul.f32.gmra.mxu0 %v1462
      %v1464 = vpop.f32.mrf.mxu0
      %v1465 = vadd.f32 %v440, %v1464
      %v1466 = vand.u32 %v530, 4294901760
      %v1467 = vsub.f32 %v530, %v1466
      %v1468 = vand.u32 %v1467, 4294901760
      %v1469 = vsub.f32 %v1467, %v1468
      %v1470 = vand.u32 %v1469, 4294901760
      %1471 = vmatmul.f32.gmra.mxu0 %v1470
      %v1472 = vpop.f32.mrf.mxu0
      %v1473 = vadd.f32 %v440, %v1472
      %v1474 = vand.u32 %v533, 4294901760
      %v1475 = vsub.f32 %v533, %v1474
      %v1476 = vand.u32 %v1475, 4294901760
      %v1477 = vsub.f32 %v1475, %v1476
      %v1478 = vand.u32 %v1477, 4294901760
      %1479 = vmatmul.f32.gmra.mxu0 %v1478
      %v1480 = vpop.f32.mrf.mxu0
      %v1481 = vadd.f32 %v440, %v1480
      %v1482 = vand.u32 %v536, 4294901760
      %v1483 = vsub.f32 %v536, %v1482
      %v1484 = vand.u32 %v1483, 4294901760
      %v1485 = vsub.f32 %v1483, %v1484
      %v1486 = vand.u32 %v1485, 4294901760
      %1487 = vmatmul.f32.gmra.mxu0 %v1486
      %v1488 = vpop.f32.mrf.mxu0
      %v1489 = vadd.f32 %v440, %v1488
      %v1490 = vand.u32 %v539, 4294901760
      %v1491 = vsub.f32 %v539, %v1490
      %v1492 = vand.u32 %v1491, 4294901760
      %v1493 = vsub.f32 %v1491, %v1492
      %v1494 = vand.u32 %v1493, 4294901760
      %1495 = vmatmul.f32.gmra.mxu0 %v1494
      %v1496 = vpop.f32.mrf.mxu0
      %v1497 = vadd.f32 %v440, %v1496
      %v1498 = vand.u32 %v542, 4294901760
      %v1499 = vsub.f32 %v542, %v1498
      %v1500 = vand.u32 %v1499, 4294901760
      %v1501 = vsub.f32 %v1499, %v1500
      %v1502 = vand.u32 %v1501, 4294901760
      %1503 = vmatmul.f32.gmra.mxu0 %v1502
      %v1504 = vpop.f32.mrf.mxu0
      %v1505 = vadd.f32 %v440, %v1504
      %v1506 = vand.u32 %v545, 4294901760
      %v1507 = vsub.f32 %v545, %v1506
      %v1508 = vand.u32 %v1507, 4294901760
      %v1509 = vsub.f32 %v1507, %v1508
      %v1510 = vand.u32 %v1509, 4294901760
      %1511 = vmatmul.f32.gmra.mxu0 %v1510
      %v1512 = vpop.f32.mrf.mxu0
      %v1513 = vadd.f32 %v440, %v1512
      %v1514 = vand.u32 %v548, 4294901760
      %v1515 = vsub.f32 %v548, %v1514
      %v1516 = vand.u32 %v1515, 4294901760
      %v1517 = vsub.f32 %v1515, %v1516
      %v1518 = vand.u32 %v1517, 4294901760
      %1519 = vmatmul.f32.gmra.mxu0 %v1518
      %v1520 = vpop.f32.mrf.mxu0
      %v1521 = vadd.f32 %v440, %v1520
      %v1522 = vand.u32 %v551, 4294901760
      %v1523 = vsub.f32 %v551, %v1522
      %v1524 = vand.u32 %v1523, 4294901760
      %v1525 = vsub.f32 %v1523, %v1524
      %v1526 = vand.u32 %v1525, 4294901760
      %1527 = vmatmul.f32.gmra.mxu0 %v1526
      %v1528 = vpop.f32.mrf.mxu0
      %v1529 = vadd.f32 %v440, %v1528
      %v1530 = vand.u32 %v554, 4294901760
      %v1531 = vsub.f32 %v554, %v1530
      %v1532 = vand.u32 %v1531, 4294901760
      %v1533 = vsub.f32 %v1531, %v1532
      %v1534 = vand.u32 %v1533, 4294901760
      %1535 = vmatmul.f32.gmra.mxu0 %v1534
      %v1536 = vpop.f32.mrf.mxu0
      %v1537 = vadd.f32 %v440, %v1536
      %v1538 = vand.u32 %v557, 4294901760
      %v1539 = vsub.f32 %v557, %v1538
      %v1540 = vand.u32 %v1539, 4294901760
      %v1541 = vsub.f32 %v1539, %v1540
      %v1542 = vand.u32 %v1541, 4294901760
      %1543 = vmatmul.f32.gmra.mxu0 %v1542
      %v1544 = vpop.f32.mrf.mxu0
      %v1545 = vadd.f32 %v440, %v1544
      %v1546 = vand.u32 %v560, 4294901760
      %v1547 = vsub.f32 %v560, %v1546
      %v1548 = vand.u32 %v1547, 4294901760
      %v1549 = vsub.f32 %v1547, %v1548
      %v1550 = vand.u32 %v1549, 4294901760
      %1551 = vmatmul.f32.gmra.mxu0 %v1550
      %v1552 = vpop.f32.mrf.mxu0
      %v1553 = vadd.f32 %v440, %v1552
      %v1554 = vand.u32 %v563, 4294901760
      %v1555 = vsub.f32 %v563, %v1554
      %v1556 = vand.u32 %v1555, 4294901760
      %v1557 = vsub.f32 %v1555, %v1556
      %v1558 = vand.u32 %v1557, 4294901760
      %1559 = vmatmul.f32.gmra.mxu0 %v1558
      %v1560 = vpop.f32.mrf.mxu0
      %v1561 = vadd.f32 %v440, %v1560
      %v1562 = vand.u32 %v566, 4294901760
      %v1563 = vsub.f32 %v566, %v1562
      %v1564 = vand.u32 %v1563, 4294901760
      %v1565 = vsub.f32 %v1563, %v1564
      %v1566 = vand.u32 %v1565, 4294901760
      %1567 = vmatmul.f32.gmra.mxu0 %v1566
      %v1568 = vpop.f32.mrf.mxu0
      %v1569 = vadd.f32 %v440, %v1568
      %v1570 = vand.u32 %v569, 4294901760
      %v1571 = vsub.f32 %v569, %v1570
      %v1572 = vand.u32 %v1571, 4294901760
      %v1573 = vsub.f32 %v1571, %v1572
      %v1574 = vand.u32 %v1573, 4294901760
      %1575 = vmatmul.f32.gmra.mxu0 %v1574
      %v1576 = vpop.f32.mrf.mxu0
      %v1577 = vadd.f32 %v440, %v1576
      %v1578 = vand.u32 %v572, 4294901760
      %v1579 = vsub.f32 %v572, %v1578
      %v1580 = vand.u32 %v1579, 4294901760
      %v1581 = vsub.f32 %v1579, %v1580
      %v1582 = vand.u32 %v1581, 4294901760
      %1583 = vmatmul.f32.gmra.mxu0 %v1582
      %v1584 = vpop.f32.mrf.mxu0
      %v1585 = vadd.f32 %v440, %v1584
      %v1586 = vand.u32 %v575, 4294901760
      %v1587 = vsub.f32 %v575, %v1586
      %v1588 = vand.u32 %v1587, 4294901760
      %v1589 = vsub.f32 %v1587, %v1588
      %v1590 = vand.u32 %v1589, 4294901760
      %1591 = vmatmul.f32.gmra.mxu0 %v1590
      %v1592 = vpop.f32.mrf.mxu0
      %v1593 = vadd.f32 %v440, %v1592
      %v1594 = vand.u32 %v578, 4294901760
      %v1595 = vsub.f32 %v578, %v1594
      %v1596 = vand.u32 %v1595, 4294901760
      %v1597 = vsub.f32 %v1595, %v1596
      %v1598 = vand.u32 %v1597, 4294901760
      %1599 = vmatmul.f32.gmra.mxu0 %v1598
      %v1600 = vpop.f32.mrf.mxu0
      %v1601 = vadd.f32 %v440, %v1600
      %v1602 = vand.u32 %v581, 4294901760
      %v1603 = vsub.f32 %v581, %v1602
      %v1604 = vand.u32 %v1603, 4294901760
      %v1605 = vsub.f32 %v1603, %v1604
      %v1606 = vand.u32 %v1605, 4294901760
      %1607 = vmatmul.f32.gmra.mxu0 %v1606
      %v1608 = vpop.f32.mrf.mxu0
      %v1609 = vadd.f32 %v440, %v1608
      %v1610 = vand.u32 %v584, 4294901760
      %v1611 = vsub.f32 %v584, %v1610
      %v1612 = vand.u32 %v1611, 4294901760
      %v1613 = vsub.f32 %v1611, %v1612
      %v1614 = vand.u32 %v1613, 4294901760
      %1615 = vmatmul.f32.gmra.mxu0 %v1614
      %v1616 = vpop.f32.mrf.mxu0
      %v1617 = vadd.f32 %v440, %v1616
      %v1618 = vand.u32 %v587, 4294901760
      %v1619 = vsub.f32 %v587, %v1618
      %v1620 = vand.u32 %v1619, 4294901760
      %v1621 = vsub.f32 %v1619, %v1620
      %v1622 = vand.u32 %v1621, 4294901760
      %1623 = vmatmul.f32.gmra.mxu0 %v1622
      %v1624 = vpop.f32.mrf.mxu0
      %v1625 = vadd.f32 %v440, %v1624
      %v1626 = vand.u32 %v590, 4294901760
      %v1627 = vsub.f32 %v590, %v1626
      %v1628 = vand.u32 %v1627, 4294901760
      %v1629 = vsub.f32 %v1627, %v1628
      %v1630 = vand.u32 %v1629, 4294901760
      %1631 = vmatmul.f32.gmra.mxu0 %v1630
      %v1632 = vpop.f32.mrf.mxu0
      %v1633 = vadd.f32 %v440, %v1632
      %v1634 = vand.u32 %v593, 4294901760
      %v1635 = vsub.f32 %v593, %v1634
      %v1636 = vand.u32 %v1635, 4294901760
      %v1637 = vsub.f32 %v1635, %v1636
      %v1638 = vand.u32 %v1637, 4294901760
      %1639 = vmatmul.f32.gmra.mxu0 %v1638
      %v1640 = vpop.f32.mrf.mxu0
      %v1641 = vadd.f32 %v440, %v1640
      %v1642 = vand.u32 %v596, 4294901760
      %v1643 = vsub.f32 %v596, %v1642
      %v1644 = vand.u32 %v1643, 4294901760
      %v1645 = vsub.f32 %v1643, %v1644
      %v1646 = vand.u32 %v1645, 4294901760
      %1647 = vmatmul.f32.gmra.mxu0 %v1646
      %v1648 = vpop.f32.mrf.mxu0
      %v1649 = vadd.f32 %v440, %v1648
      %v1650 = vand.u32 %v599, 4294901760
      %v1651 = vsub.f32 %v599, %v1650
      %v1652 = vand.u32 %v1651, 4294901760
      %v1653 = vsub.f32 %v1651, %v1652
      %v1654 = vand.u32 %v1653, 4294901760
      %1655 = vmatmul.f32.gmra.mxu0 %v1654
      %v1656 = vpop.f32.mrf.mxu0
      %v1657 = vadd.f32 %v440, %v1656
      %v1658 = vand.u32 %v602, 4294901760
      %v1659 = vsub.f32 %v602, %v1658
      %v1660 = vand.u32 %v1659, 4294901760
      %v1661 = vsub.f32 %v1659, %v1660
      %v1662 = vand.u32 %v1661, 4294901760
      %1663 = vmatmul.f32.gmra.mxu0 %v1662
      %v1664 = vpop.f32.mrf.mxu0
      %v1665 = vadd.f32 %v440, %v1664
      %v1666 = vand.u32 %v605, 4294901760
      %v1667 = vsub.f32 %v605, %v1666
      %v1668 = vand.u32 %v1667, 4294901760
      %v1669 = vsub.f32 %v1667, %v1668
      %v1670 = vand.u32 %v1669, 4294901760
      %1671 = vmatmul.f32.gmra.mxu0 %v1670
      %v1672 = vpop.f32.mrf.mxu0
      %v1673 = vadd.f32 %v440, %v1672
      %v1674 = vand.u32 %v608, 4294901760
      %v1675 = vsub.f32 %v608, %v1674
      %v1676 = vand.u32 %v1675, 4294901760
      %v1677 = vsub.f32 %v1675, %v1676
      %v1678 = vand.u32 %v1677, 4294901760
      %1679 = vmatmul.f32.gmra.mxu0 %v1678
      %v1680 = vpop.f32.mrf.mxu0
      %v1681 = vadd.f32 %v440, %v1680
      %v1682 = vand.u32 %v611, 4294901760
      %v1683 = vsub.f32 %v611, %v1682
      %v1684 = vand.u32 %v1683, 4294901760
      %v1685 = vsub.f32 %v1683, %v1684
      %v1686 = vand.u32 %v1685, 4294901760
      %1687 = vmatmul.f32.gmra.mxu0 %v1686
      %v1688 = vpop.f32.mrf.mxu0
      %v1689 = vadd.f32 %v440, %v1688
      %v1690 = vand.u32 %v614, 4294901760
      %v1691 = vsub.f32 %v614, %v1690
      %v1692 = vand.u32 %v1691, 4294901760
      %v1693 = vsub.f32 %v1691, %v1692
      %v1694 = vand.u32 %v1693, 4294901760
      %1695 = vmatmul.f32.gmra.mxu0 %v1694
      %v1696 = vpop.f32.mrf.mxu0
      %v1697 = vadd.f32 %v440, %v1696
      %v1698 = vand.u32 %v617, 4294901760
      %v1699 = vsub.f32 %v617, %v1698
      %v1700 = vand.u32 %v1699, 4294901760
      %v1701 = vsub.f32 %v1699, %v1700
      %v1702 = vand.u32 %v1701, 4294901760
      %1703 = vmatmul.f32.gmra.mxu0 %v1702
      %v1704 = vpop.f32.mrf.mxu0
      %v1705 = vadd.f32 %v440, %v1704
      %v1706 = vand.u32 %v620, 4294901760
      %v1707 = vsub.f32 %v620, %v1706
      %v1708 = vand.u32 %v1707, 4294901760
      %v1709 = vsub.f32 %v1707, %v1708
      %v1710 = vand.u32 %v1709, 4294901760
      %1711 = vmatmul.f32.gmra.mxu0 %v1710
      %v1712 = vpop.f32.mrf.mxu0
      %v1713 = vadd.f32 %v440, %v1712
      %v1714 = vand.u32 %v623, 4294901760
      %v1715 = vsub.f32 %v623, %v1714
      %v1716 = vand.u32 %v1715, 4294901760
      %v1717 = vsub.f32 %v1715, %v1716
      %v1718 = vand.u32 %v1717, 4294901760
      %1719 = vmatmul.f32.gmra.mxu0 %v1718
      %v1720 = vpop.f32.mrf.mxu0
      %v1721 = vadd.f32 %v440, %v1720
      %v1722 = vand.u32 %v626, 4294901760
      %v1723 = vsub.f32 %v626, %v1722
      %v1724 = vand.u32 %v1723, 4294901760
      %v1725 = vsub.f32 %v1723, %v1724
      %v1726 = vand.u32 %v1725, 4294901760
      %1727 = vmatmul.f32.gmra.mxu0 %v1726
      %v1728 = vpop.f32.mrf.mxu0
      %v1729 = vadd.f32 %v440, %v1728
      %v1730 = vand.u32 %v629, 4294901760
      %v1731 = vsub.f32 %v629, %v1730
      %v1732 = vand.u32 %v1731, 4294901760
      %v1733 = vsub.f32 %v1731, %v1732
      %v1734 = vand.u32 %v1733, 4294901760
      %1735 = vmatmul.f32.gmra.mxu0 %v1734
      %v1736 = vpop.f32.mrf.mxu0
      %v1737 = vadd.f32 %v440, %v1736
      %v1738 = vand.u32 %v632, 4294901760
      %v1739 = vsub.f32 %v632, %v1738
      %v1740 = vand.u32 %v1739, 4294901760
      %v1741 = vsub.f32 %v1739, %v1740
      %v1742 = vand.u32 %v1741, 4294901760
      %1743 = vmatmul.f32.gmra.mxu0 %v1742
      %v1744 = vpop.f32.mrf.mxu0
      %v1745 = vadd.f32 %v440, %v1744
      %v1746 = vand.u32 %v635, 4294901760
      %v1747 = vsub.f32 %v635, %v1746
      %v1748 = vand.u32 %v1747, 4294901760
      %v1749 = vsub.f32 %v1747, %v1748
      %v1750 = vand.u32 %v1749, 4294901760
      %1751 = vmatmul.f32.gmra.mxu0 %v1750
      %v1752 = vpop.f32.mrf.mxu0
      %v1753 = vadd.f32 %v440, %v1752
      %v1754 = vand.u32 %v638, 4294901760
      %v1755 = vsub.f32 %v638, %v1754
      %v1756 = vand.u32 %v1755, 4294901760
      %v1757 = vsub.f32 %v1755, %v1756
      %v1758 = vand.u32 %v1757, 4294901760
      %1759 = vmatmul.f32.gmra.mxu0 %v1758
      %v1760 = vpop.f32.mrf.mxu0
      %v1761 = vadd.f32 %v440, %v1760
      %v1762 = vand.u32 %v641, 4294901760
      %v1763 = vsub.f32 %v641, %v1762
      %v1764 = vand.u32 %v1763, 4294901760
      %v1765 = vsub.f32 %v1763, %v1764
      %v1766 = vand.u32 %v1765, 4294901760
      %1767 = vmatmul.f32.gmra.mxu0 %v1766
      %v1768 = vpop.f32.mrf.mxu0
      %v1769 = vadd.f32 %v440, %v1768
      %v1770 = vand.u32 %v644, 4294901760
      %v1771 = vsub.f32 %v644, %v1770
      %v1772 = vand.u32 %v1771, 4294901760
      %v1773 = vsub.f32 %v1771, %v1772
      %v1774 = vand.u32 %v1773, 4294901760
      %1775 = vmatmul.f32.gmra.mxu0 %v1774
      %v1776 = vpop.f32.mrf.mxu0
      %v1777 = vadd.f32 %v440, %v1776
      %v1778 = vand.u32 %v647, 4294901760
      %v1779 = vsub.f32 %v647, %v1778
      %v1780 = vand.u32 %v1779, 4294901760
      %v1781 = vsub.f32 %v1779, %v1780
      %v1782 = vand.u32 %v1781, 4294901760
      %1783 = vmatmul.f32.gmra.mxu0 %v1782
      %v1784 = vpop.f32.mrf.mxu0
      %v1785 = vadd.f32 %v440, %v1784
      %v1786 = vand.u32 %v650, 4294901760
      %v1787 = vsub.f32 %v650, %v1786
      %v1788 = vand.u32 %v1787, 4294901760
      %v1789 = vsub.f32 %v1787, %v1788
      %v1790 = vand.u32 %v1789, 4294901760
      %1791 = vmatmul.f32.gmra.mxu0 %v1790
      %v1792 = vpop.f32.mrf.mxu0
      %v1793 = vadd.f32 %v440, %v1792
      %v1794 = vand.u32 %v653, 4294901760
      %v1795 = vsub.f32 %v653, %v1794
      %v1796 = vand.u32 %v1795, 4294901760
      %v1797 = vsub.f32 %v1795, %v1796
      %v1798 = vand.u32 %v1797, 4294901760
      %1799 = vmatmul.f32.gmra.mxu0 %v1798
      %v1800 = vpop.f32.mrf.mxu0
      %v1801 = vadd.f32 %v440, %v1800
      %v1802 = vand.u32 %v656, 4294901760
      %v1803 = vsub.f32 %v656, %v1802
      %v1804 = vand.u32 %v1803, 4294901760
      %v1805 = vsub.f32 %v1803, %v1804
      %v1806 = vand.u32 %v1805, 4294901760
      %1807 = vmatmul.f32.gmra.mxu0 %v1806
      %v1808 = vpop.f32.mrf.mxu0
      %v1809 = vadd.f32 %v440, %v1808
      %v1810 = vand.u32 %v659, 4294901760
      %v1811 = vsub.f32 %v659, %v1810
      %v1812 = vand.u32 %v1811, 4294901760
      %v1813 = vsub.f32 %v1811, %v1812
      %v1814 = vand.u32 %v1813, 4294901760
      %1815 = vmatmul.f32.gmra.mxu0 %v1814
      %v1816 = vpop.f32.mrf.mxu0
      %v1817 = vadd.f32 %v440, %v1816
      %v1818 = vand.u32 %v662, 4294901760
      %v1819 = vsub.f32 %v662, %v1818
      %v1820 = vand.u32 %v1819, 4294901760
      %v1821 = vsub.f32 %v1819, %v1820
      %v1822 = vand.u32 %v1821, 4294901760
      %1823 = vmatmul.f32.gmra.mxu0 %v1822
      %v1824 = vpop.f32.mrf.mxu0
      %v1825 = vadd.f32 %v440, %v1824
      %v1826 = vand.u32 %v665, 4294901760
      %v1827 = vsub.f32 %v665, %v1826
      %v1828 = vand.u32 %v1827, 4294901760
      %v1829 = vsub.f32 %v1827, %v1828
      %v1830 = vand.u32 %v1829, 4294901760
      %1831 = vmatmul.f32.gmra.mxu0 %v1830
      %v1832 = vpop.f32.mrf.mxu0
      %v1833 = vadd.f32 %v440, %v1832
      %v1834 = vand.u32 %v668, 4294901760
      %v1835 = vsub.f32 %v668, %v1834
      %v1836 = vand.u32 %v1835, 4294901760
      %v1837 = vsub.f32 %v1835, %v1836
      %v1838 = vand.u32 %v1837, 4294901760
      %1839 = vmatmul.f32.gmra.mxu0 %v1838
      %v1840 = vpop.f32.mrf.mxu0
      %v1841 = vadd.f32 %v440, %v1840
      %v1842 = vand.u32 %v671, 4294901760
      %v1843 = vsub.f32 %v671, %v1842
      %v1844 = vand.u32 %v1843, 4294901760
      %v1845 = vsub.f32 %v1843, %v1844
      %v1846 = vand.u32 %v1845, 4294901760
      %1847 = vmatmul.f32.gmra.mxu0 %v1846
      %v1848 = vpop.f32.mrf.mxu0
      %v1849 = vadd.f32 %v440, %v1848
      %v1850 = vand.u32 %v674, 4294901760
      %v1851 = vsub.f32 %v674, %v1850
      %v1852 = vand.u32 %v1851, 4294901760
      %v1853 = vsub.f32 %v1851, %v1852
      %v1854 = vand.u32 %v1853, 4294901760
      %1855 = vmatmul.f32.gmra.mxu0 %v1854
      %v1856 = vpop.f32.mrf.mxu0
      %v1857 = vadd.f32 %v440, %v1856
      %v1858 = vand.u32 %v677, 4294901760
      %v1859 = vsub.f32 %v677, %v1858
      %v1860 = vand.u32 %v1859, 4294901760
      %v1861 = vsub.f32 %v1859, %v1860
      %v1862 = vand.u32 %v1861, 4294901760
      %1863 = vmatmul.f32.gmra.mxu0 %v1862
      %v1864 = vpop.f32.mrf.mxu0
      %v1865 = vadd.f32 %v440, %v1864
      %v1866 = vand.u32 %v680, 4294901760
      %v1867 = vsub.f32 %v680, %v1866
      %v1868 = vand.u32 %v1867, 4294901760
      %v1869 = vsub.f32 %v1867, %v1868
      %v1870 = vand.u32 %v1869, 4294901760
      %1871 = vmatmul.f32.gmra.mxu0 %v1870
      %v1872 = vpop.f32.mrf.mxu0
      %v1873 = vadd.f32 %v440, %v1872
      %v1874 = vand.u32 %v683, 4294901760
      %v1875 = vsub.f32 %v683, %v1874
      %v1876 = vand.u32 %v1875, 4294901760
      %v1877 = vsub.f32 %v1875, %v1876
      %v1878 = vand.u32 %v1877, 4294901760
      %1879 = vmatmul.f32.gmra.mxu0 %v1878
      %v1880 = vpop.f32.mrf.mxu0
      %v1881 = vadd.f32 %v440, %v1880
      %v1882 = vand.u32 %v686, 4294901760
      %v1883 = vsub.f32 %v686, %v1882
      %v1884 = vand.u32 %v1883, 4294901760
      %v1885 = vsub.f32 %v1883, %v1884
      %v1886 = vand.u32 %v1885, 4294901760
      %1887 = vmatmul.f32.gmra.mxu0 %v1886
      %v1888 = vpop.f32.mrf.mxu0
      %v1889 = vadd.f32 %v440, %v1888
      %v1890 = vand.u32 %v689, 4294901760
      %v1891 = vsub.f32 %v689, %v1890
      %v1892 = vand.u32 %v1891, 4294901760
      %v1893 = vsub.f32 %v1891, %v1892
      %v1894 = vand.u32 %v1893, 4294901760
      %1895 = vmatmul.f32.gmra.mxu0 %v1894
      %v1896 = vpop.f32.mrf.mxu0
      %v1897 = vadd.f32 %v440, %v1896
      %v1898 = vand.u32 %v692, 4294901760
      %v1899 = vsub.f32 %v692, %v1898
      %v1900 = vand.u32 %v1899, 4294901760
      %v1901 = vsub.f32 %v1899, %v1900
      %v1902 = vand.u32 %v1901, 4294901760
      %1903 = vmatmul.f32.gmra.mxu0 %v1902
      %v1904 = vpop.f32.mrf.mxu0
      %v1905 = vadd.f32 %v440, %v1904
      %v1906 = vand.u32 %v695, 4294901760
      %v1907 = vsub.f32 %v695, %v1906
      %v1908 = vand.u32 %v1907, 4294901760
      %v1909 = vsub.f32 %v1907, %v1908
      %v1910 = vand.u32 %v1909, 4294901760
      %1911 = vmatmul.f32.gmra.mxu0 %v1910
      %v1912 = vpop.f32.mrf.mxu0
      %v1913 = vadd.f32 %v440, %v1912
      %v1914 = vand.u32 %v698, 4294901760
      %v1915 = vsub.f32 %v698, %v1914
      %v1916 = vand.u32 %v1915, 4294901760
      %v1917 = vsub.f32 %v1915, %v1916
      %v1918 = vand.u32 %v1917, 4294901760
      %1919 = vmatmul.f32.gmra.mxu0 %v1918
      %v1920 = vpop.f32.mrf.mxu0
      %v1921 = vadd.f32 %v440, %v1920
      %v1922 = vand.u32 %v701, 4294901760
      %v1923 = vsub.f32 %v701, %v1922
      %v1924 = vand.u32 %v1923, 4294901760
      %v1925 = vsub.f32 %v1923, %v1924
      %v1926 = vand.u32 %v1925, 4294901760
      %1927 = vmatmul.f32.gmra.mxu0 %v1926
      %v1928 = vpop.f32.mrf.mxu0
      %v1929 = vadd.f32 %v440, %v1928
      %v1930 = vand.u32 %v704, 4294901760
      %v1931 = vsub.f32 %v704, %v1930
      %v1932 = vand.u32 %v1931, 4294901760
      %v1933 = vsub.f32 %v1931, %v1932
      %v1934 = vand.u32 %v1933, 4294901760
      %1935 = vmatmul.f32.gmra.mxu0 %v1934
      %v1936 = vpop.f32.mrf.mxu0
      %v1937 = vadd.f32 %v440, %v1936
      %v1938 = vand.u32 %v707, 4294901760
      %v1939 = vsub.f32 %v707, %v1938
      %v1940 = vand.u32 %v1939, 4294901760
      %v1941 = vsub.f32 %v1939, %v1940
      %v1942 = vand.u32 %v1941, 4294901760
      %1943 = vmatmul.f32.gmra.mxu0 %v1942
      %v1944 = vpop.f32.mrf.mxu0
      %v1945 = vadd.f32 %v440, %v1944
      %v1946 = vand.u32 %v710, 4294901760
      %v1947 = vsub.f32 %v710, %v1946
      %v1948 = vand.u32 %v1947, 4294901760
      %v1949 = vsub.f32 %v1947, %v1948
      %v1950 = vand.u32 %v1949, 4294901760
      %1951 = vmatmul.f32.gmra.mxu0 %v1950
      %v1952 = vpop.f32.mrf.mxu0
      %v1953 = vadd.f32 %v440, %v1952
      %v1954 = vand.u32 %v713, 4294901760
      %v1955 = vsub.f32 %v713, %v1954
      %v1956 = vand.u32 %v1955, 4294901760
      %v1957 = vsub.f32 %v1955, %v1956
      %v1958 = vand.u32 %v1957, 4294901760
      %1959 = vmatmul.f32.gmra.mxu0 %v1958
      %v1960 = vpop.f32.mrf.mxu0
      %v1961 = vadd.f32 %v440, %v1960
      %v1962 = vand.u32 %v716, 4294901760
      %v1963 = vsub.f32 %v716, %v1962
      %v1964 = vand.u32 %v1963, 4294901760
      %v1965 = vsub.f32 %v1963, %v1964
      %v1966 = vand.u32 %v1965, 4294901760
      %1967 = vmatmul.f32.gmra.mxu0 %v1966
      %v1968 = vpop.f32.mrf.mxu0
      %v1969 = vadd.f32 %v440, %v1968
      %v1970 = vand.u32 %v719, 4294901760
      %v1971 = vsub.f32 %v719, %v1970
      %v1972 = vand.u32 %v1971, 4294901760
      %v1973 = vsub.f32 %v1971, %v1972
      %v1974 = vand.u32 %v1973, 4294901760
      %1975 = vmatmul.f32.gmra.mxu0 %v1974
      %v1976 = vpop.f32.mrf.mxu0
      %v1977 = vadd.f32 %v440, %v1976
      %v1978 = vand.u32 %v722, 4294901760
      %v1979 = vsub.f32 %v722, %v1978
      %v1980 = vand.u32 %v1979, 4294901760
      %v1981 = vsub.f32 %v1979, %v1980
      %v1982 = vand.u32 %v1981, 4294901760
      %1983 = vmatmul.f32.gmra.mxu0 %v1982
      %v1984 = vpop.f32.mrf.mxu0
      %v1985 = vadd.f32 %v440, %v1984
      %v1986 = vand.u32 %v725, 4294901760
      %v1987 = vsub.f32 %v725, %v1986
      %v1988 = vand.u32 %v1987, 4294901760
      %v1989 = vsub.f32 %v1987, %v1988
      %v1990 = vand.u32 %v1989, 4294901760
      %1991 = vmatmul.f32.gmra.mxu0 %v1990
      %v1992 = vpop.f32.mrf.mxu0
      %v1993 = vadd.f32 %v440, %v1992
      %v1994 = vand.u32 %v728, 4294901760
      %v1995 = vsub.f32 %v728, %v1994
      %v1996 = vand.u32 %v1995, 4294901760
      %v1997 = vsub.f32 %v1995, %v1996
      %v1998 = vand.u32 %v1997, 4294901760
      %1999 = vmatmul.f32.gmra.mxu0 %v1998
      %v2000 = vpop.f32.mrf.mxu0
      %v2001 = vadd.f32 %v440, %v2000
      %v2002 = vand.u32 %v731, 4294901760
      %v2003 = vsub.f32 %v731, %v2002
      %v2004 = vand.u32 %v2003, 4294901760
      %v2005 = vsub.f32 %v2003, %v2004
      %v2006 = vand.u32 %v2005, 4294901760
      %2007 = vmatmul.f32.gmra.mxu0 %v2006
      %v2008 = vpop.f32.mrf.mxu0
      %v2009 = vadd.f32 %v440, %v2008
      %v2010 = vand.u32 %v734, 4294901760
      %v2011 = vsub.f32 %v734, %v2010
      %v2012 = vand.u32 %v2011, 4294901760
      %v2013 = vsub.f32 %v2011, %v2012
      %v2014 = vand.u32 %v2013, 4294901760
      %2015 = vmatmul.f32.gmra.mxu0 %v2014
      %v2016 = vpop.f32.mrf.mxu0
      %v2017 = vadd.f32 %v440, %v2016
      %v2018 = vand.u32 %v737, 4294901760
      %v2019 = vsub.f32 %v737, %v2018
      %v2020 = vand.u32 %v2019, 4294901760
      %v2021 = vsub.f32 %v2019, %v2020
      %v2022 = vand.u32 %v2021, 4294901760
      %2023 = vmatmul.f32.gmra.mxu0 %v2022
      %v2024 = vpop.f32.mrf.mxu0
      %v2025 = vadd.f32 %v440, %v2024
      %v2026 = vand.u32 %v740, 4294901760
      %v2027 = vsub.f32 %v740, %v2026
      %v2028 = vand.u32 %v2027, 4294901760
      %v2029 = vsub.f32 %v2027, %v2028
      %v2030 = vand.u32 %v2029, 4294901760
      %2031 = vmatmul.f32.gmra.mxu0 %v2030
      %v2032 = vpop.f32.mrf.mxu0
      %v2033 = vadd.f32 %v440, %v2032
      %v2034 = vand.u32 %v743, 4294901760
      %v2035 = vsub.f32 %v743, %v2034
      %v2036 = vand.u32 %v2035, 4294901760
      %v2037 = vsub.f32 %v2035, %v2036
      %v2038 = vand.u32 %v2037, 4294901760
      %2039 = vmatmul.f32.gmra.mxu0 %v2038
      %v2040 = vpop.f32.mrf.mxu0
      %v2041 = vadd.f32 %v440, %v2040
      %v2042 = vand.u32 %v746, 4294901760
      %v2043 = vsub.f32 %v746, %v2042
      %v2044 = vand.u32 %v2043, 4294901760
      %v2045 = vsub.f32 %v2043, %v2044
      %v2046 = vand.u32 %v2045, 4294901760
      %2047 = vmatmul.f32.gmra.mxu0 %v2046
      %v2048 = vpop.f32.mrf.mxu0
      %v2049 = vadd.f32 %v440, %v2048
      %v2050 = vand.u32 %v749, 4294901760
      %v2051 = vsub.f32 %v749, %v2050
      %v2052 = vand.u32 %v2051, 4294901760
      %v2053 = vsub.f32 %v2051, %v2052
      %v2054 = vand.u32 %v2053, 4294901760
      %2055 = vmatmul.f32.gmra.mxu0 %v2054
      %v2056 = vpop.f32.mrf.mxu0
      %v2057 = vadd.f32 %v440, %v2056
      %v2058 = vand.u32 %v752, 4294901760
      %v2059 = vsub.f32 %v752, %v2058
      %v2060 = vand.u32 %v2059, 4294901760
      %v2061 = vsub.f32 %v2059, %v2060
      %v2062 = vand.u32 %v2061, 4294901760
      %2063 = vmatmul.f32.gmra.mxu0 %v2062
      %v2064 = vpop.f32.mrf.mxu0
      %v2065 = vadd.f32 %v440, %v2064
      %v2066 = vand.u32 %v755, 4294901760
      %v2067 = vsub.f32 %v755, %v2066
      %v2068 = vand.u32 %v2067, 4294901760
      %v2069 = vsub.f32 %v2067, %v2068
      %v2070 = vand.u32 %v2069, 4294901760
      %2071 = vmatmul.f32.gmra.mxu0 %v2070
      %v2072 = vpop.f32.mrf.mxu0
      %v2073 = vadd.f32 %v440, %v2072
      %v2074 = vand.u32 %v758, 4294901760
      %v2075 = vsub.f32 %v758, %v2074
      %v2076 = vand.u32 %v2075, 4294901760
      %v2077 = vsub.f32 %v2075, %v2076
      %v2078 = vand.u32 %v2077, 4294901760
      %2079 = vmatmul.f32.gmra.mxu0 %v2078
      %v2080 = vpop.f32.mrf.mxu0
      %v2081 = vadd.f32 %v440, %v2080
      %v2082 = vand.u32 %v761, 4294901760
      %v2083 = vsub.f32 %v761, %v2082
      %v2084 = vand.u32 %v2083, 4294901760
      %v2085 = vsub.f32 %v2083, %v2084
      %v2086 = vand.u32 %v2085, 4294901760
      %2087 = vmatmul.f32.gmra.mxu0 %v2086
      %v2088 = vpop.f32.mrf.mxu0
      %v2089 = vadd.f32 %v440, %v2088
      %v2090 = vand.u32 %v764, 4294901760
      %v2091 = vsub.f32 %v764, %v2090
      %v2092 = vand.u32 %v2091, 4294901760
      %v2093 = vsub.f32 %v2091, %v2092
      %v2094 = vand.u32 %v2093, 4294901760
      %2095 = vmatmul.f32.gmra.mxu0 %v2094
      %v2096 = vpop.f32.mrf.mxu0
      %v2097 = vadd.f32 %v440, %v2096
      %v2098 = vand.u32 %v767, 4294901760
      %v2099 = vsub.f32 %v767, %v2098
      %v2100 = vand.u32 %v2099, 4294901760
      %v2101 = vsub.f32 %v2099, %v2100
      %v2102 = vand.u32 %v2101, 4294901760
      %2103 = vmatmul.f32.gmra.mxu0 %v2102
      %v2104 = vpop.f32.mrf.mxu0
      %v2105 = vadd.f32 %v440, %v2104
      %v2106 = vand.u32 %v770, 4294901760
      %v2107 = vsub.f32 %v770, %v2106
      %v2108 = vand.u32 %v2107, 4294901760
      %v2109 = vsub.f32 %v2107, %v2108
      %v2110 = vand.u32 %v2109, 4294901760
      %2111 = vmatmul.f32.gmra.mxu0 %v2110
      %v2112 = vpop.f32.mrf.mxu0
      %v2113 = vadd.f32 %v440, %v2112
      %v2114 = vand.u32 %v773, 4294901760
      %v2115 = vsub.f32 %v773, %v2114
      %v2116 = vand.u32 %v2115, 4294901760
      %v2117 = vsub.f32 %v2115, %v2116
      %v2118 = vand.u32 %v2117, 4294901760
      %2119 = vmatmul.f32.gmra.mxu0 %v2118
      %v2120 = vpop.f32.mrf.mxu0
      %v2121 = vadd.f32 %v440, %v2120
      %v2122 = vand.u32 %v776, 4294901760
      %v2123 = vsub.f32 %v776, %v2122
      %v2124 = vand.u32 %v2123, 4294901760
      %v2125 = vsub.f32 %v2123, %v2124
      %v2126 = vand.u32 %v2125, 4294901760
      %2127 = vmatmul.f32.gmra.mxu0 %v2126
      %v2128 = vpop.f32.mrf.mxu0
      %v2129 = vadd.f32 %v440, %v2128
      %v2130 = vand.u32 %v779, 4294901760
      %v2131 = vsub.f32 %v779, %v2130
      %v2132 = vand.u32 %v2131, 4294901760
      %v2133 = vsub.f32 %v2131, %v2132
      %v2134 = vand.u32 %v2133, 4294901760
      %2135 = vmatmul.f32.gmra.mxu0 %v2134
      %v2136 = vpop.f32.mrf.mxu0
      %v2137 = vadd.f32 %v440, %v2136
      %v2138 = vand.u32 %v782, 4294901760
      %v2139 = vsub.f32 %v782, %v2138
      %v2140 = vand.u32 %v2139, 4294901760
      %v2141 = vsub.f32 %v2139, %v2140
      %v2142 = vand.u32 %v2141, 4294901760
      %2143 = vmatmul.f32.gmra.mxu0 %v2142
      %v2144 = vpop.f32.mrf.mxu0
      %v2145 = vadd.f32 %v440, %v2144
      %v2146 = vand.u32 %v785, 4294901760
      %v2147 = vsub.f32 %v785, %v2146
      %v2148 = vand.u32 %v2147, 4294901760
      %v2149 = vsub.f32 %v2147, %v2148
      %v2150 = vand.u32 %v2149, 4294901760
      %2151 = vmatmul.f32.gmra.mxu0 %v2150
      %v2152 = vpop.f32.mrf.mxu0
      %v2153 = vadd.f32 %v440, %v2152
      %v2154 = vand.u32 %v788, 4294901760
      %v2155 = vsub.f32 %v788, %v2154
      %v2156 = vand.u32 %v2155, 4294901760
      %v2157 = vsub.f32 %v2155, %v2156
      %v2158 = vand.u32 %v2157, 4294901760
      %2159 = vmatmul.f32.gmra.mxu0 %v2158
      %v2160 = vpop.f32.mrf.mxu0
      %v2161 = vadd.f32 %v440, %v2160
      %v2162 = vand.u32 %v791, 4294901760
      %v2163 = vsub.f32 %v791, %v2162
      %v2164 = vand.u32 %v2163, 4294901760
      %v2165 = vsub.f32 %v2163, %v2164
      %v2166 = vand.u32 %v2165, 4294901760
      %2167 = vmatmul.f32.gmra.mxu0 %v2166
      %v2168 = vpop.f32.mrf.mxu0
      %v2169 = vadd.f32 %v440, %v2168
      %v2170 = vand.u32 %v794, 4294901760
      %v2171 = vsub.f32 %v794, %v2170
      %v2172 = vand.u32 %v2171, 4294901760
      %v2173 = vsub.f32 %v2171, %v2172
      %v2174 = vand.u32 %v2173, 4294901760
      %2175 = vmatmul.f32.gmra.mxu0 %v2174
      %v2176 = vpop.f32.mrf.mxu0
      %v2177 = vadd.f32 %v440, %v2176
      %v2178 = vand.u32 %v797, 4294901760
      %v2179 = vsub.f32 %v797, %v2178
      %v2180 = vand.u32 %v2179, 4294901760
      %v2181 = vsub.f32 %v2179, %v2180
      %v2182 = vand.u32 %v2181, 4294901760
      %2183 = vmatmul.f32.gmra.mxu0 %v2182
      %v2184 = vpop.f32.mrf.mxu0
      %v2185 = vadd.f32 %v440, %v2184
      %v2186 = vand.u32 %v800, 4294901760
      %v2187 = vsub.f32 %v800, %v2186
      %v2188 = vand.u32 %v2187, 4294901760
      %v2189 = vsub.f32 %v2187, %v2188
      %v2190 = vand.u32 %v2189, 4294901760
      %2191 = vmatmul.f32.gmra.mxu0 %v2190
      %v2192 = vpop.f32.mrf.mxu0
      %v2193 = vadd.f32 %v440, %v2192
      %v2194 = vand.u32 %v803, 4294901760
      %v2195 = vsub.f32 %v803, %v2194
      %v2196 = vand.u32 %v2195, 4294901760
      %v2197 = vsub.f32 %v2195, %v2196
      %v2198 = vand.u32 %v2197, 4294901760
      %2199 = vmatmul.f32.gmra.mxu0 %v2198
      %v2200 = vpop.f32.mrf.mxu0
      %v2201 = vadd.f32 %v440, %v2200
      %v2202 = vand.u32 %v806, 4294901760
      %v2203 = vsub.f32 %v806, %v2202
      %v2204 = vand.u32 %v2203, 4294901760
      %v2205 = vsub.f32 %v2203, %v2204
      %v2206 = vand.u32 %v2205, 4294901760
      %2207 = vmatmul.f32.gmra.mxu0 %v2206
      %v2208 = vpop.f32.mrf.mxu0
      %v2209 = vadd.f32 %v440, %v2208
      %v2210 = vand.u32 %v809, 4294901760
      %v2211 = vsub.f32 %v809, %v2210
      %v2212 = vand.u32 %v2211, 4294901760
      %v2213 = vsub.f32 %v2211, %v2212
      %v2214 = vand.u32 %v2213, 4294901760
      %2215 = vmatmul.f32.gmra.mxu0 %v2214
      %v2216 = vpop.f32.mrf.mxu0
      %v2217 = vadd.f32 %v440, %v2216
      %v2218 = vand.u32 %v812, 4294901760
      %v2219 = vsub.f32 %v812, %v2218
      %v2220 = vand.u32 %v2219, 4294901760
      %v2221 = vsub.f32 %v2219, %v2220
      %v2222 = vand.u32 %v2221, 4294901760
      %2223 = vmatmul.f32.gmra.mxu0 %v2222
      %v2224 = vpop.f32.mrf.mxu0
      %v2225 = vadd.f32 %v440, %v2224
      %v2226 = vand.u32 %v815, 4294901760
      %v2227 = vsub.f32 %v815, %v2226
      %v2228 = vand.u32 %v2227, 4294901760
      %v2229 = vsub.f32 %v2227, %v2228
      %v2230 = vand.u32 %v2229, 4294901760
      %2231 = vmatmul.f32.gmra.mxu0 %v2230
      %v2232 = vpop.f32.mrf.mxu0
      %v2233 = vadd.f32 %v440, %v2232
      %v2234 = vand.u32 %v818, 4294901760
      %v2235 = vsub.f32 %v818, %v2234
      %v2236 = vand.u32 %v2235, 4294901760
      %v2237 = vsub.f32 %v2235, %v2236
      %v2238 = vand.u32 %v2237, 4294901760
      %2239 = vmatmul.f32.gmra.mxu0 %v2238
      %v2240 = vpop.f32.mrf.mxu0
      %v2241 = vadd.f32 %v440, %v2240
      %v2242 = vand.u32 %v821, 4294901760
      %v2243 = vsub.f32 %v821, %v2242
      %v2244 = vand.u32 %v2243, 4294901760
      %v2245 = vsub.f32 %v2243, %v2244
      %v2246 = vand.u32 %v2245, 4294901760
      %2247 = vmatmul.f32.gmra.mxu0 %v2246
      %v2248 = vpop.f32.mrf.mxu0
      %v2249 = vadd.f32 %v440, %v2248
      %v2250 = vand.u32 %v824, 4294901760
      %v2251 = vsub.f32 %v824, %v2250
      %v2252 = vand.u32 %v2251, 4294901760
      %v2253 = vsub.f32 %v2251, %v2252
      %v2254 = vand.u32 %v2253, 4294901760
      %2255 = vmatmul.f32.gmra.mxu0 %v2254
      %v2256 = vpop.f32.mrf.mxu0
      %v2257 = vadd.f32 %v440, %v2256
      %v2258 = vand.u32 %v827, 4294901760
      %v2259 = vsub.f32 %v827, %v2258
      %v2260 = vand.u32 %v2259, 4294901760
      %v2261 = vsub.f32 %v2259, %v2260
      %v2262 = vand.u32 %v2261, 4294901760
      %2263 = vmatmul.f32.gmra.mxu0 %v2262
      %v2264 = vpop.f32.mrf.mxu0
      %v2265 = vadd.f32 %v440, %v2264
      %v2266 = vand.u32 %v830, 4294901760
      %v2267 = vsub.f32 %v830, %v2266
      %v2268 = vand.u32 %v2267, 4294901760
      %v2269 = vsub.f32 %v2267, %v2268
      %v2270 = vand.u32 %v2269, 4294901760
      %2271 = vmatmul.f32.gmra.mxu0 %v2270
      %v2272 = vpop.f32.mrf.mxu0
      %v2273 = vadd.f32 %v440, %v2272
      %v2274 = vand.u32 %v833, 4294901760
      %v2275 = vsub.f32 %v833, %v2274
      %v2276 = vand.u32 %v2275, 4294901760
      %v2277 = vsub.f32 %v2275, %v2276
      %v2278 = vand.u32 %v2277, 4294901760
      %2279 = vmatmul.f32.gmra.mxu0 %v2278
      %v2280 = vpop.f32.mrf.mxu0
      %v2281 = vadd.f32 %v440, %v2280
      %v2282 = vand.u32 %v836, 4294901760
      %v2283 = vsub.f32 %v836, %v2282
      %v2284 = vand.u32 %v2283, 4294901760
      %v2285 = vsub.f32 %v2283, %v2284
      %v2286 = vand.u32 %v2285, 4294901760
      %2287 = vmatmul.f32.gmra.mxu0 %v2286
      %v2288 = vpop.f32.mrf.mxu0
      %v2289 = vadd.f32 %v440, %v2288
      %v2290 = vand.u32 %v839, 4294901760
      %v2291 = vsub.f32 %v839, %v2290
      %v2292 = vand.u32 %v2291, 4294901760
      %v2293 = vsub.f32 %v2291, %v2292
      %v2294 = vand.u32 %v2293, 4294901760
      %2295 = vmatmul.f32.gmra.mxu0 %v2294
      %v2296 = vpop.f32.mrf.mxu0
      %v2297 = vadd.f32 %v440, %v2296
      %v2298 = vand.u32 %v842, 4294901760
      %v2299 = vsub.f32 %v842, %v2298
      %v2300 = vand.u32 %v2299, 4294901760
      %v2301 = vsub.f32 %v2299, %v2300
      %v2302 = vand.u32 %v2301, 4294901760
      %2303 = vmatmul.f32.gmra.mxu0 %v2302
      %v2304 = vpop.f32.mrf.mxu0
      %v2305 = vadd.f32 %v440, %v2304
      %v2306 = vand.u32 %v845, 4294901760
      %v2307 = vsub.f32 %v845, %v2306
      %v2308 = vand.u32 %v2307, 4294901760
      %v2309 = vsub.f32 %v2307, %v2308
      %v2310 = vand.u32 %v2309, 4294901760
      %2311 = vmatmul.f32.gmra.mxu0 %v2310
      %v2312 = vpop.f32.mrf.mxu0
      %v2313 = vadd.f32 %v440, %v2312
      %v2314 = vand.u32 %v848, 4294901760
      %v2315 = vsub.f32 %v848, %v2314
      %v2316 = vand.u32 %v2315, 4294901760
      %v2317 = vsub.f32 %v2315, %v2316
      %v2318 = vand.u32 %v2317, 4294901760
      %2319 = vmatmul.f32.gmra.mxu0 %v2318
      %v2320 = vpop.f32.mrf.mxu0
      %v2321 = vadd.f32 %v440, %v2320
      %v2322 = vand.u32 %v851, 4294901760
      %v2323 = vsub.f32 %v851, %v2322
      %v2324 = vand.u32 %v2323, 4294901760
      %v2325 = vsub.f32 %v2323, %v2324
      %v2326 = vand.u32 %v2325, 4294901760
      %2327 = vmatmul.f32.gmra.mxu0 %v2326
      %v2328 = vpop.f32.mrf.mxu0
      %v2329 = vadd.f32 %v440, %v2328
      %v2330 = vand.u32 %v854, 4294901760
      %v2331 = vsub.f32 %v854, %v2330
      %v2332 = vand.u32 %v2331, 4294901760
      %v2333 = vsub.f32 %v2331, %v2332
      %v2334 = vand.u32 %v2333, 4294901760
      %2335 = vmatmul.f32.gmra.mxu0 %v2334
      %v2336 = vpop.f32.mrf.mxu0
      %v2337 = vadd.f32 %v440, %v2336
      %v2338 = vand.u32 %v857, 4294901760
      %v2339 = vsub.f32 %v857, %v2338
      %v2340 = vand.u32 %v2339, 4294901760
      %v2341 = vsub.f32 %v2339, %v2340
      %v2342 = vand.u32 %v2341, 4294901760
      %2343 = vmatmul.f32.gmra.mxu0 %v2342
      %v2344 = vpop.f32.mrf.mxu0
      %v2345 = vadd.f32 %v440, %v2344
      %v2346 = vand.u32 %v860, 4294901760
      %v2347 = vsub.f32 %v860, %v2346
      %v2348 = vand.u32 %v2347, 4294901760
      %v2349 = vsub.f32 %v2347, %v2348
      %v2350 = vand.u32 %v2349, 4294901760
      %2351 = vmatmul.f32.gmra.mxu0 %v2350
      %v2352 = vpop.f32.mrf.mxu0
      %v2353 = vadd.f32 %v440, %v2352
      %v2354 = vand.u32 %v863, 4294901760
      %v2355 = vsub.f32 %v863, %v2354
      %v2356 = vand.u32 %v2355, 4294901760
      %v2357 = vsub.f32 %v2355, %v2356
      %v2358 = vand.u32 %v2357, 4294901760
      %2359 = vmatmul.f32.gmra.mxu0 %v2358
      %v2360 = vpop.f32.mrf.mxu0
      %v2361 = vadd.f32 %v440, %v2360
      %v2362 = vand.u32 %v866, 4294901760
      %v2363 = vsub.f32 %v866, %v2362
      %v2364 = vand.u32 %v2363, 4294901760
      %v2365 = vsub.f32 %v2363, %v2364
      %v2366 = vand.u32 %v2365, 4294901760
      %2367 = vmatmul.f32.gmra.mxu0 %v2366
      %v2368 = vpop.f32.mrf.mxu0
      %v2369 = vadd.f32 %v440, %v2368
      %v2370 = vand.u32 %v869, 4294901760
      %v2371 = vsub.f32 %v869, %v2370
      %v2372 = vand.u32 %v2371, 4294901760
      %v2373 = vsub.f32 %v2371, %v2372
      %v2374 = vand.u32 %v2373, 4294901760
      %2375 = vmatmul.f32.gmra.mxu0 %v2374
      %v2376 = vpop.f32.mrf.mxu0
      %v2377 = vadd.f32 %v440, %v2376
      %v2378 = vand.u32 %v872, 4294901760
      %v2379 = vsub.f32 %v872, %v2378
      %v2380 = vand.u32 %v2379, 4294901760
      %v2381 = vsub.f32 %v2379, %v2380
      %v2382 = vand.u32 %v2381, 4294901760
      %2383 = vmatmul.f32.gmra.mxu0 %v2382
      %v2384 = vpop.f32.mrf.mxu0
      %v2385 = vadd.f32 %v440, %v2384
      %v2386 = vand.u32 %v875, 4294901760
      %v2387 = vsub.f32 %v875, %v2386
      %v2388 = vand.u32 %v2387, 4294901760
      %v2389 = vsub.f32 %v2387, %v2388
      %v2390 = vand.u32 %v2389, 4294901760
      %2391 = vmatmul.f32.gmra.mxu0 %v2390
      %v2392 = vpop.f32.mrf.mxu0
      %v2393 = vadd.f32 %v440, %v2392
      %v2394 = vand.u32 %v878, 4294901760
      %v2395 = vsub.f32 %v878, %v2394
      %v2396 = vand.u32 %v2395, 4294901760
      %v2397 = vsub.f32 %v2395, %v2396
      %v2398 = vand.u32 %v2397, 4294901760
      %2399 = vmatmul.f32.gmra.mxu0 %v2398
      %v2400 = vpop.f32.mrf.mxu0
      %v2401 = vadd.f32 %v440, %v2400
      %v2402 = vand.u32 %v881, 4294901760
      %v2403 = vsub.f32 %v881, %v2402
      %v2404 = vand.u32 %v2403, 4294901760
      %v2405 = vsub.f32 %v2403, %v2404
      %v2406 = vand.u32 %v2405, 4294901760
      %2407 = vmatmul.f32.gmra.mxu0 %v2406
      %v2408 = vpop.f32.mrf.mxu0
      %v2409 = vadd.f32 %v440, %v2408
      %v2410 = vand.u32 %v884, 4294901760
      %v2411 = vsub.f32 %v884, %v2410
      %v2412 = vand.u32 %v2411, 4294901760
      %v2413 = vsub.f32 %v2411, %v2412
      %v2414 = vand.u32 %v2413, 4294901760
      %2415 = vmatmul.f32.gmra.mxu0 %v2414
      %v2416 = vpop.f32.mrf.mxu0
      %v2417 = vadd.f32 %v440, %v2416
      %v2418 = vand.u32 %v887, 4294901760
      %v2419 = vsub.f32 %v887, %v2418
      %v2420 = vand.u32 %v2419, 4294901760
      %v2421 = vsub.f32 %v2419, %v2420
      %v2422 = vand.u32 %v2421, 4294901760
      %2423 = vmatmul.f32.gmra.mxu0 %v2422
      %v2424 = vpop.f32.mrf.mxu0
      %v2425 = vadd.f32 %v440, %v2424
      %v2426 = vand.u32 %v890, 4294901760
      %v2427 = vsub.f32 %v890, %v2426
      %v2428 = vand.u32 %v2427, 4294901760
      %v2429 = vsub.f32 %v2427, %v2428
      %v2430 = vand.u32 %v2429, 4294901760
      %2431 = vmatmul.f32.gmra.mxu0 %v2430
      %v2432 = vpop.f32.mrf.mxu0
      %v2433 = vadd.f32 %v440, %v2432
      %v2434 = vand.u32 %v893, 4294901760
      %v2435 = vsub.f32 %v893, %v2434
      %v2436 = vand.u32 %v2435, 4294901760
      %v2437 = vsub.f32 %v2435, %v2436
      %v2438 = vand.u32 %v2437, 4294901760
      %2439 = vmatmul.f32.gmra.mxu0 %v2438
      %v2440 = vpop.f32.mrf.mxu0
      %v2441 = vadd.f32 %v440, %v2440
      %v2442 = vand.u32 %v896, 4294901760
      %v2443 = vsub.f32 %v896, %v2442
      %v2444 = vand.u32 %v2443, 4294901760
      %v2445 = vsub.f32 %v2443, %v2444
      %v2446 = vand.u32 %v2445, 4294901760
      %2447 = vmatmul.f32.gmra.mxu0 %v2446
      %v2448 = vpop.f32.mrf.mxu0
      %v2449 = vadd.f32 %v440, %v2448
      %v2450 = vand.u32 %v899, 4294901760
      %v2451 = vsub.f32 %v899, %v2450
      %v2452 = vand.u32 %v2451, 4294901760
      %v2453 = vsub.f32 %v2451, %v2452
      %v2454 = vand.u32 %v2453, 4294901760
      %2455 = vmatmul.f32.gmra.mxu0 %v2454
      %v2456 = vpop.f32.mrf.mxu0
      %v2457 = vadd.f32 %v440, %v2456
      %v2458 = vand.u32 %v902, 4294901760
      %v2459 = vsub.f32 %v902, %v2458
      %v2460 = vand.u32 %v2459, 4294901760
      %v2461 = vsub.f32 %v2459, %v2460
      %v2462 = vand.u32 %v2461, 4294901760
      %2463 = vmatmul.f32.gmra.mxu0 %v2462
      %v2464 = vpop.f32.mrf.mxu0
      %v2465 = vadd.f32 %v440, %v2464
      %v2466 = vand.u32 %v905, 4294901760
      %v2467 = vsub.f32 %v905, %v2466
      %v2468 = vand.u32 %v2467, 4294901760
      %v2469 = vsub.f32 %v2467, %v2468
      %v2470 = vand.u32 %v2469, 4294901760
      %2471 = vmatmul.f32.gmra.mxu0 %v2470
      %v2472 = vpop.f32.mrf.mxu0
      %v2473 = vadd.f32 %v440, %v2472
      %v2474 = vand.u32 %v908, 4294901760
      %v2475 = vsub.f32 %v908, %v2474
      %v2476 = vand.u32 %v2475, 4294901760
      %v2477 = vsub.f32 %v2475, %v2476
      %v2478 = vand.u32 %v2477, 4294901760
      %2479 = vmatmul.f32.gmra.mxu0 %v2478
      %v2480 = vpop.f32.mrf.mxu0
      %v2481 = vadd.f32 %v440, %v2480
      %v2482 = vand.u32 %v911, 4294901760
      %v2483 = vsub.f32 %v911, %v2482
      %v2484 = vand.u32 %v2483, 4294901760
      %v2485 = vsub.f32 %v2483, %v2484
      %v2486 = vand.u32 %v2485, 4294901760
      %2487 = vmatmul.f32.gmra.mxu0 %v2486
      %v2488 = vpop.f32.mrf.mxu0
      %v2489 = vadd.f32 %v440, %v2488
      %v2490 = vand.u32 %v914, 4294901760
      %v2491 = vsub.f32 %v914, %v2490
      %v2492 = vand.u32 %v2491, 4294901760
      %v2493 = vsub.f32 %v2491, %v2492
      %v2494 = vand.u32 %v2493, 4294901760
      %2495 = vmatmul.f32.gmra.mxu0 %v2494
      %v2496 = vpop.f32.mrf.mxu0
      %v2497 = vadd.f32 %v440, %v2496
      %v2498 = vand.u32 %v917, 4294901760
      %v2499 = vsub.f32 %v917, %v2498
      %v2500 = vand.u32 %v2499, 4294901760
      %v2501 = vsub.f32 %v2499, %v2500
      %v2502 = vand.u32 %v2501, 4294901760
      %2503 = vmatmul.f32.gmra.mxu0 %v2502
      %v2504 = vpop.f32.mrf.mxu0
      %v2505 = vadd.f32 %v440, %v2504
      %v2506 = vand.u32 %v920, 4294901760
      %v2507 = vsub.f32 %v920, %v2506
      %v2508 = vand.u32 %v2507, 4294901760
      %v2509 = vsub.f32 %v2507, %v2508
      %v2510 = vand.u32 %v2509, 4294901760
      %2511 = vmatmul.f32.gmra.mxu0 %v2510
      %v2512 = vpop.f32.mrf.mxu0
      %v2513 = vadd.f32 %v440, %v2512
      %v2514 = vand.u32 %v923, 4294901760
      %v2515 = vsub.f32 %v923, %v2514
      %v2516 = vand.u32 %v2515, 4294901760
      %v2517 = vsub.f32 %v2515, %v2516
      %v2518 = vand.u32 %v2517, 4294901760
      %2519 = vmatmul.f32.gmra.mxu0 %v2518
      %v2520 = vpop.f32.mrf.mxu0
      %v2521 = vadd.f32 %v440, %v2520
      %v2522 = vand.u32 %v926, 4294901760
      %v2523 = vsub.f32 %v926, %v2522
      %v2524 = vand.u32 %v2523, 4294901760
      %v2525 = vsub.f32 %v2523, %v2524
      %v2526 = vand.u32 %v2525, 4294901760
      %2527 = vmatmul.f32.gmra.mxu0 %v2526
      %v2528 = vpop.f32.mrf.mxu0
      %v2529 = vadd.f32 %v440, %v2528
      %v2530 = vand.u32 %v929, 4294901760
      %v2531 = vsub.f32 %v929, %v2530
      %v2532 = vand.u32 %v2531, 4294901760
      %v2533 = vsub.f32 %v2531, %v2532
      %v2534 = vand.u32 %v2533, 4294901760
      %2535 = vmatmul.f32.gmra.mxu0 %v2534
      %v2536 = vpop.f32.mrf.mxu0
      %v2537 = vadd.f32 %v440, %v2536
      %v2538 = vand.u32 %v932, 4294901760
      %v2539 = vsub.f32 %v932, %v2538
      %v2540 = vand.u32 %v2539, 4294901760
      %v2541 = vsub.f32 %v2539, %v2540
      %v2542 = vand.u32 %v2541, 4294901760
      %2543 = vmatmul.f32.gmra.mxu0 %v2542
      %v2544 = vpop.f32.mrf.mxu0
      %v2545 = vadd.f32 %v440, %v2544
      %v2546 = vand.u32 %v935, 4294901760
      %v2547 = vsub.f32 %v935, %v2546
      %v2548 = vand.u32 %v2547, 4294901760
      %v2549 = vsub.f32 %v2547, %v2548
      %v2550 = vand.u32 %v2549, 4294901760
      %2551 = vmatmul.f32.gmra.mxu0 %v2550
      %v2552 = vpop.f32.mrf.mxu0
      %v2553 = vadd.f32 %v440, %v2552
      %v2554 = vand.u32 %v938, 4294901760
      %v2555 = vsub.f32 %v938, %v2554
      %v2556 = vand.u32 %v2555, 4294901760
      %v2557 = vsub.f32 %v2555, %v2556
      %v2558 = vand.u32 %v2557, 4294901760
      %2559 = vmatmul.f32.gmra.mxu0 %v2558
      %v2560 = vpop.f32.mrf.mxu0
      %v2561 = vadd.f32 %v440, %v2560
      %v2562 = vand.u32 %v941, 4294901760
      %v2563 = vsub.f32 %v941, %v2562
      %v2564 = vand.u32 %v2563, 4294901760
      %v2565 = vsub.f32 %v2563, %v2564
      %v2566 = vand.u32 %v2565, 4294901760
      %2567 = vmatmul.f32.gmra.mxu0 %v2566
      %v2568 = vpop.f32.mrf.mxu0
      %v2569 = vadd.f32 %v440, %v2568
      %v2570 = vand.u32 %v944, 4294901760
      %v2571 = vsub.f32 %v944, %v2570
      %v2572 = vand.u32 %v2571, 4294901760
      %v2573 = vsub.f32 %v2571, %v2572
      %v2574 = vand.u32 %v2573, 4294901760
      %2575 = vmatmul.f32.gmra.mxu0 %v2574
      %v2576 = vpop.f32.mrf.mxu0
      %v2577 = vadd.f32 %v440, %v2576
      %v2578 = vand.u32 %v947, 4294901760
      %v2579 = vsub.f32 %v947, %v2578
      %v2580 = vand.u32 %v2579, 4294901760
      %v2581 = vsub.f32 %v2579, %v2580
      %v2582 = vand.u32 %v2581, 4294901760
      %2583 = vmatmul.f32.gmra.mxu0 %v2582
      %v2584 = vpop.f32.mrf.mxu0
      %v2585 = vadd.f32 %v440, %v2584
      %v2586 = vand.u32 %v950, 4294901760
      %v2587 = vsub.f32 %v950, %v2586
      %v2588 = vand.u32 %v2587, 4294901760
      %v2589 = vsub.f32 %v2587, %v2588
      %v2590 = vand.u32 %v2589, 4294901760
      %2591 = vmatmul.f32.gmra.mxu0 %v2590
      %v2592 = vpop.f32.mrf.mxu0
      %v2593 = vadd.f32 %v440, %v2592
      %v2594 = vand.u32 %v953, 4294901760
      %v2595 = vsub.f32 %v953, %v2594
      %v2596 = vand.u32 %v2595, 4294901760
      %v2597 = vsub.f32 %v2595, %v2596
      %v2598 = vand.u32 %v2597, 4294901760
      %2599 = vmatmul.f32.gmra.mxu0 %v2598
      %v2600 = vpop.f32.mrf.mxu0
      %v2601 = vadd.f32 %v440, %v2600
      %v2602 = vand.u32 %v956, 4294901760
      %v2603 = vsub.f32 %v956, %v2602
      %v2604 = vand.u32 %v2603, 4294901760
      %v2605 = vsub.f32 %v2603, %v2604
      %v2606 = vand.u32 %v2605, 4294901760
      %2607 = vmatmul.f32.gmra.mxu0 %v2606
      %v2608 = vpop.f32.mrf.mxu0
      %v2609 = vadd.f32 %v440, %v2608
      %v2610 = vand.u32 %v959, 4294901760
      %v2611 = vsub.f32 %v959, %v2610
      %v2612 = vand.u32 %v2611, 4294901760
      %v2613 = vsub.f32 %v2611, %v2612
      %v2614 = vand.u32 %v2613, 4294901760
      %2615 = vmatmul.f32.gmra.mxu0 %v2614
      %v2616 = vpop.f32.mrf.mxu0
      %v2617 = vadd.f32 %v440, %v2616
      %v2618 = vand.u32 %v962, 4294901760
      %v2619 = vsub.f32 %v962, %v2618
      %v2620 = vand.u32 %v2619, 4294901760
      %v2621 = vsub.f32 %v2619, %v2620
      %v2622 = vand.u32 %v2621, 4294901760
      %2623 = vmatmul.f32.gmra.mxu0 %v2622
      %v2624 = vpop.f32.mrf.mxu0
      %v2625 = vadd.f32 %v440, %v2624
      %v2626 = vand.u32 %v965, 4294901760
      %v2627 = vsub.f32 %v965, %v2626
      %v2628 = vand.u32 %v2627, 4294901760
      %v2629 = vsub.f32 %v2627, %v2628
      %v2630 = vand.u32 %v2629, 4294901760
      %2631 = vmatmul.f32.gmra.mxu0 %v2630
      %v2632 = vpop.f32.mrf.mxu0
      %v2633 = vadd.f32 %v440, %v2632
      %v2634 = vand.u32 %v968, 4294901760
      %v2635 = vsub.f32 %v968, %v2634
      %v2636 = vand.u32 %v2635, 4294901760
      %v2637 = vsub.f32 %v2635, %v2636
      %v2638 = vand.u32 %v2637, 4294901760
      %2639 = vmatmul.f32.gmra.mxu0 %v2638
      %v2640 = vpop.f32.mrf.mxu0
      %v2641 = vadd.f32 %v440, %v2640
      %v2642 = vand.u32 %v971, 4294901760
      %v2643 = vsub.f32 %v971, %v2642
      %v2644 = vand.u32 %v2643, 4294901760
      %v2645 = vsub.f32 %v2643, %v2644
      %v2646 = vand.u32 %v2645, 4294901760
      %2647 = vmatmul.f32.gmra.mxu0 %v2646
      %v2648 = vpop.f32.mrf.mxu0
      %v2649 = vadd.f32 %v440, %v2648
      %v2650 = vand.u32 %v974, 4294901760
      %v2651 = vsub.f32 %v974, %v2650
      %v2652 = vand.u32 %v2651, 4294901760
      %v2653 = vsub.f32 %v2651, %v2652
      %v2654 = vand.u32 %v2653, 4294901760
      %2655 = vmatmul.f32.gmra.mxu0 %v2654
      %v2656 = vpop.f32.mrf.mxu0
      %v2657 = vadd.f32 %v440, %v2656
      %v2658 = vand.u32 %v977, 4294901760
      %v2659 = vsub.f32 %v977, %v2658
      %v2660 = vand.u32 %v2659, 4294901760
      %v2661 = vsub.f32 %v2659, %v2660
      %v2662 = vand.u32 %v2661, 4294901760
      %2663 = vmatmul.f32.gmra.mxu0 %v2662
      %v2664 = vpop.f32.mrf.mxu0
      %v2665 = vadd.f32 %v440, %v2664
      %v2666 = vand.u32 %v980, 4294901760
      %v2667 = vsub.f32 %v980, %v2666
      %v2668 = vand.u32 %v2667, 4294901760
      %v2669 = vsub.f32 %v2667, %v2668
      %v2670 = vand.u32 %v2669, 4294901760
      %2671 = vmatmul.f32.gmra.mxu0 %v2670
      %v2672 = vpop.f32.mrf.mxu0
      %v2673 = vadd.f32 %v440, %v2672
      %v2674 = vand.u32 %v983, 4294901760
      %v2675 = vsub.f32 %v983, %v2674
      %v2676 = vand.u32 %v2675, 4294901760
      %v2677 = vsub.f32 %v2675, %v2676
      %v2678 = vand.u32 %v2677, 4294901760
      %2679 = vmatmul.f32.gmra.mxu0 %v2678
      %v2680 = vpop.f32.mrf.mxu0
      %v2681 = vadd.f32 %v440, %v2680
      %v2682 = vand.u32 %v986, 4294901760
      %v2683 = vsub.f32 %v986, %v2682
      %v2684 = vand.u32 %v2683, 4294901760
      %v2685 = vsub.f32 %v2683, %v2684
      %v2686 = vand.u32 %v2685, 4294901760
      %2687 = vmatmul.f32.gmra.mxu0 %v2686
      %v2688 = vpop.f32.mrf.mxu0
      %v2689 = vadd.f32 %v440, %v2688
      %v2690 = vand.u32 %v989, 4294901760
      %v2691 = vsub.f32 %v989, %v2690
      %v2692 = vand.u32 %v2691, 4294901760
      %v2693 = vsub.f32 %v2691, %v2692
      %v2694 = vand.u32 %v2693, 4294901760
      %2695 = vmatmul.f32.gmra.mxu0 %v2694
      %v2696 = vpop.f32.mrf.mxu0
      %v2697 = vadd.f32 %v440, %v2696
      %v2698 = vand.u32 %v992, 4294901760
      %v2699 = vsub.f32 %v992, %v2698
      %v2700 = vand.u32 %v2699, 4294901760
      %v2701 = vsub.f32 %v2699, %v2700
      %v2702 = vand.u32 %v2701, 4294901760
      %2703 = vmatmul.f32.gmra.mxu0 %v2702
      %v2704 = vpop.f32.mrf.mxu0
      %v2705 = vadd.f32 %v440, %v2704
      %v2706 = vand.u32 %v995, 4294901760
      %v2707 = vsub.f32 %v995, %v2706
      %v2708 = vand.u32 %v2707, 4294901760
      %v2709 = vsub.f32 %v2707, %v2708
      %v2710 = vand.u32 %v2709, 4294901760
      %2711 = vmatmul.f32.gmra.mxu0 %v2710
      %v2712 = vpop.f32.mrf.mxu0
      %v2713 = vadd.f32 %v440, %v2712
      %v2714 = vand.u32 %v998, 4294901760
      %v2715 = vsub.f32 %v998, %v2714
      %v2716 = vand.u32 %v2715, 4294901760
      %v2717 = vsub.f32 %v2715, %v2716
      %v2718 = vand.u32 %v2717, 4294901760
      %2719 = vmatmul.f32.gmra.mxu0 %v2718
      %v2720 = vpop.f32.mrf.mxu0
      %v2721 = vadd.f32 %v440, %v2720
      %v2722 = vand.u32 %v1001, 4294901760
      %v2723 = vsub.f32 %v1001, %v2722
      %v2724 = vand.u32 %v2723, 4294901760
      %v2725 = vsub.f32 %v2723, %v2724
      %v2726 = vand.u32 %v2725, 4294901760
      %2727 = vmatmul.f32.gmra.mxu0 %v2726
      %v2728 = vpop.f32.mrf.mxu0
      %v2729 = vadd.f32 %v440, %v2728
      %v2730 = vand.u32 %v1004, 4294901760
      %v2731 = vsub.f32 %v1004, %v2730
      %v2732 = vand.u32 %v2731, 4294901760
      %v2733 = vsub.f32 %v2731, %v2732
      %v2734 = vand.u32 %v2733, 4294901760
      %2735 = vmatmul.f32.gmra.mxu0 %v2734
      %v2736 = vpop.f32.mrf.mxu0
      %v2737 = vadd.f32 %v440, %v2736
      %v2738 = vand.u32 %v1007, 4294901760
      %v2739 = vsub.f32 %v1007, %v2738
      %v2740 = vand.u32 %v2739, 4294901760
      %v2741 = vsub.f32 %v2739, %v2740
      %v2742 = vand.u32 %v2741, 4294901760
      %2743 = vmatmul.f32.gmra.mxu0 %v2742
      %v2744 = vpop.f32.mrf.mxu0
      %v2745 = vadd.f32 %v440, %v2744
      %v2746 = vand.u32 %v1010, 4294901760
      %v2747 = vsub.f32 %v1010, %v2746
      %v2748 = vand.u32 %v2747, 4294901760
      %v2749 = vsub.f32 %v2747, %v2748
      %v2750 = vand.u32 %v2749, 4294901760
      %2751 = vmatmul.f32.gmra.mxu0 %v2750
      %v2752 = vpop.f32.mrf.mxu0
      %v2753 = vadd.f32 %v440, %v2752
      %v2754 = vand.u32 %v1013, 4294901760
      %v2755 = vsub.f32 %v1013, %v2754
      %v2756 = vand.u32 %v2755, 4294901760
      %v2757 = vsub.f32 %v2755, %v2756
      %v2758 = vand.u32 %v2757, 4294901760
      %2759 = vmatmul.f32.gmra.mxu0 %v2758
      %v2760 = vpop.f32.mrf.mxu0
      %v2761 = vadd.f32 %v440, %v2760
      %v2762 = vand.u32 %v1016, 4294901760
      %v2763 = vsub.f32 %v1016, %v2762
      %v2764 = vand.u32 %v2763, 4294901760
      %v2765 = vsub.f32 %v2763, %v2764
      %v2766 = vand.u32 %v2765, 4294901760
      %2767 = vmatmul.f32.gmra.mxu0 %v2766
      %v2768 = vpop.f32.mrf.mxu0
      %v2769 = vadd.f32 %v440, %v2768
      %v2770 = vand.u32 %v1019, 4294901760
      %v2771 = vsub.f32 %v1019, %v2770
      %v2772 = vand.u32 %v2771, 4294901760
      %v2773 = vsub.f32 %v2771, %v2772
      %v2774 = vand.u32 %v2773, 4294901760
      %2775 = vmatmul.f32.gmra.mxu0 %v2774
      %v2776 = vpop.f32.mrf.mxu0
      %v2777 = vadd.f32 %v440, %v2776
      %v2778 = vand.u32 %v1022, 4294901760
      %v2779 = vsub.f32 %v1022, %v2778
      %v2780 = vand.u32 %v2779, 4294901760
      %v2781 = vsub.f32 %v2779, %v2780
      %v2782 = vand.u32 %v2781, 4294901760
      %2783 = vmatmul.f32.gmra.mxu0 %v2782
      %v2784 = vpop.f32.mrf.mxu0
      %v2785 = vadd.f32 %v440, %v2784
      %v2786 = vand.u32 %v1025, 4294901760
      %v2787 = vsub.f32 %v1025, %v2786
      %v2788 = vand.u32 %v2787, 4294901760
      %v2789 = vsub.f32 %v2787, %v2788
      %v2790 = vand.u32 %v2789, 4294901760
      %2791 = vmatmul.f32.gmra.mxu0 %v2790
      %v2792 = vpop.f32.mrf.mxu0
      %v2793 = vadd.f32 %v440, %v2792
      %v2794 = vand.u32 %v1028, 4294901760
      %v2795 = vsub.f32 %v1028, %v2794
      %v2796 = vand.u32 %v2795, 4294901760
      %v2797 = vsub.f32 %v2795, %v2796
      %v2798 = vand.u32 %v2797, 4294901760
      %2799 = vmatmul.f32.gmra.mxu0 %v2798
      %v2800 = vpop.f32.mrf.mxu0
      %v2801 = vadd.f32 %v440, %v2800
      %v2802 = vand.u32 %v1031, 4294901760
      %v2803 = vsub.f32 %v1031, %v2802
      %v2804 = vand.u32 %v2803, 4294901760
      %v2805 = vsub.f32 %v2803, %v2804
      %v2806 = vand.u32 %v2805, 4294901760
      %2807 = vmatmul.f32.gmra.mxu0 %v2806
      %v2808 = vpop.f32.mrf.mxu0
      %v2809 = vadd.f32 %v440, %v2808
      %v2810 = vand.u32 %v1034, 4294901760
      %v2811 = vsub.f32 %v1034, %v2810
      %v2812 = vand.u32 %v2811, 4294901760
      %v2813 = vsub.f32 %v2811, %v2812
      %v2814 = vand.u32 %v2813, 4294901760
      %2815 = vmatmul.f32.gmra.mxu0 %v2814
      %v2816 = vpop.f32.mrf.mxu0
      %v2817 = vadd.f32 %v440, %v2816
      %v2818 = vand.u32 %v1037, 4294901760
      %v2819 = vsub.f32 %v1037, %v2818
      %v2820 = vand.u32 %v2819, 4294901760
      %v2821 = vsub.f32 %v2819, %v2820
      %v2822 = vand.u32 %v2821, 4294901760
      %2823 = vmatmul.f32.gmra.mxu0 %v2822
      %v2824 = vpop.f32.mrf.mxu0
      %v2825 = vadd.f32 %v440, %v2824
      %v2826 = vand.u32 %v1040, 4294901760
      %v2827 = vsub.f32 %v1040, %v2826
      %v2828 = vand.u32 %v2827, 4294901760
      %v2829 = vsub.f32 %v2827, %v2828
      %v2830 = vand.u32 %v2829, 4294901760
      %2831 = vmatmul.f32.gmra.mxu0 %v2830
      %v2832 = vpop.f32.mrf.mxu0
      %v2833 = vadd.f32 %v440, %v2832
      %v2834 = vand.u32 %v1043, 4294901760
      %v2835 = vsub.f32 %v1043, %v2834
      %v2836 = vand.u32 %v2835, 4294901760
      %v2837 = vsub.f32 %v2835, %v2836
      %v2838 = vand.u32 %v2837, 4294901760
      %2839 = vmatmul.f32.gmra.mxu0 %v2838
      %v2840 = vpop.f32.mrf.mxu0
      %v2841 = vadd.f32 %v440, %v2840
      %v2842 = vand.u32 %v1046, 4294901760
      %v2843 = vsub.f32 %v1046, %v2842
      %v2844 = vand.u32 %v2843, 4294901760
      %v2845 = vsub.f32 %v2843, %v2844
      %v2846 = vand.u32 %v2845, 4294901760
      %2847 = vmatmul.f32.gmra.mxu0 %v2846
      %v2848 = vpop.f32.mrf.mxu0
      %v2849 = vadd.f32 %v440, %v2848
      %v2850 = vand.u32 %v1049, 4294901760
      %v2851 = vsub.f32 %v1049, %v2850
      %v2852 = vand.u32 %v2851, 4294901760
      %v2853 = vsub.f32 %v2851, %v2852
      %v2854 = vand.u32 %v2853, 4294901760
      %2855 = vmatmul.f32.gmra.mxu0 %v2854
      %v2856 = vpop.f32.mrf.mxu0
      %v2857 = vadd.f32 %v440, %v2856
      %v2858 = vand.u32 %v1052, 4294901760
      %v2859 = vsub.f32 %v1052, %v2858
      %v2860 = vand.u32 %v2859, 4294901760
      %v2861 = vsub.f32 %v2859, %v2860
      %v2862 = vand.u32 %v2861, 4294901760
      %2863 = vmatmul.f32.gmra.mxu0 %v2862
      %v2864 = vpop.f32.mrf.mxu0
      %v2865 = vadd.f32 %v440, %v2864
      %v2866 = vand.u32 %v1055, 4294901760
      %v2867 = vsub.f32 %v1055, %v2866
      %v2868 = vand.u32 %v2867, 4294901760
      %v2869 = vsub.f32 %v2867, %v2868
      %v2870 = vand.u32 %v2869, 4294901760
      %2871 = vmatmul.f32.gmra.mxu0 %v2870
      %v2872 = vpop.f32.mrf.mxu0
      %v2873 = vadd.f32 %v440, %v2872
      %v2874 = vand.u32 %v1058, 4294901760
      %v2875 = vsub.f32 %v1058, %v2874
      %v2876 = vand.u32 %v2875, 4294901760
      %v2877 = vsub.f32 %v2875, %v2876
      %v2878 = vand.u32 %v2877, 4294901760
      %2879 = vmatmul.f32.gmra.mxu0 %v2878
      %v2880 = vpop.f32.mrf.mxu0
      %v2881 = vadd.f32 %v440, %v2880
      %v2882 = vand.u32 %v1061, 4294901760
      %v2883 = vsub.f32 %v1061, %v2882
      %v2884 = vand.u32 %v2883, 4294901760
      %v2885 = vsub.f32 %v2883, %v2884
      %v2886 = vand.u32 %v2885, 4294901760
      %2887 = vmatmul.f32.gmra.mxu0 %v2886
      %v2888 = vpop.f32.mrf.mxu0
      %v2889 = vadd.f32 %v440, %v2888
      %v2890 = vand.u32 %v1064, 4294901760
      %v2891 = vsub.f32 %v1064, %v2890
      %v2892 = vand.u32 %v2891, 4294901760
      %v2893 = vsub.f32 %v2891, %v2892
      %v2894 = vand.u32 %v2893, 4294901760
      %2895 = vmatmul.f32.gmra.mxu0 %v2894
      %v2896 = vpop.f32.mrf.mxu0
      %v2897 = vadd.f32 %v440, %v2896
      %v2898 = vand.u32 %v1067, 4294901760
      %v2899 = vsub.f32 %v1067, %v2898
      %v2900 = vand.u32 %v2899, 4294901760
      %v2901 = vsub.f32 %v2899, %v2900
      %v2902 = vand.u32 %v2901, 4294901760
      %2903 = vmatmul.f32.gmra.mxu0 %v2902
      %v2904 = vpop.f32.mrf.mxu0
      %v2905 = vadd.f32 %v440, %v2904
      %v2906 = vand.u32 %v1070, 4294901760
      %v2907 = vsub.f32 %v1070, %v2906
      %v2908 = vand.u32 %v2907, 4294901760
      %v2909 = vsub.f32 %v2907, %v2908
      %v2910 = vand.u32 %v2909, 4294901760
      %2911 = vmatmul.f32.gmra.mxu0 %v2910
      %v2912 = vpop.f32.mrf.mxu0
      %v2913 = vadd.f32 %v440, %v2912
      %v2914 = vand.u32 %v1073, 4294901760
      %v2915 = vsub.f32 %v1073, %v2914
      %v2916 = vand.u32 %v2915, 4294901760
      %v2917 = vsub.f32 %v2915, %v2916
      %v2918 = vand.u32 %v2917, 4294901760
      %2919 = vmatmul.f32.gmra.mxu0 %v2918
      %v2920 = vpop.f32.mrf.mxu0
      %v2921 = vadd.f32 %v440, %v2920
      %v2922 = vand.u32 %v1076, 4294901760
      %v2923 = vsub.f32 %v1076, %v2922
      %v2924 = vand.u32 %v2923, 4294901760
      %v2925 = vsub.f32 %v2923, %v2924
      %v2926 = vand.u32 %v2925, 4294901760
      %2927 = vmatmul.f32.gmra.mxu0 %v2926
      %v2928 = vpop.f32.mrf.mxu0
      %v2929 = vadd.f32 %v440, %v2928
      %v2930 = vand.u32 %v1079, 4294901760
      %v2931 = vsub.f32 %v1079, %v2930
      %v2932 = vand.u32 %v2931, 4294901760
      %v2933 = vsub.f32 %v2931, %v2932
      %v2934 = vand.u32 %v2933, 4294901760
      %2935 = vmatmul.f32.gmra.mxu0 %v2934
      %v2936 = vpop.f32.mrf.mxu0
      %v2937 = vadd.f32 %v440, %v2936
      %v2938 = vand.u32 %v1082, 4294901760
      %v2939 = vsub.f32 %v1082, %v2938
      %v2940 = vand.u32 %v2939, 4294901760
      %v2941 = vsub.f32 %v2939, %v2940
      %v2942 = vand.u32 %v2941, 4294901760
      %2943 = vmatmul.f32.gmra.mxu0 %v2942
      %v2944 = vpop.f32.mrf.mxu0
      %v2945 = vadd.f32 %v440, %v2944
      %v2946 = vand.u32 %v1085, 4294901760
      %v2947 = vsub.f32 %v1085, %v2946
      %v2948 = vand.u32 %v2947, 4294901760
      %v2949 = vsub.f32 %v2947, %v2948
      %v2950 = vand.u32 %v2949, 4294901760
      %2951 = vmatmul.f32.gmra.mxu0 %v2950
      %v2952 = vpop.f32.mrf.mxu0
      %v2953 = vadd.f32 %v440, %v2952
      %v2954 = vand.u32 %v1088, 4294901760
      %v2955 = vsub.f32 %v1088, %v2954
      %v2956 = vand.u32 %v2955, 4294901760
      %v2957 = vsub.f32 %v2955, %v2956
      %v2958 = vand.u32 %v2957, 4294901760
      %2959 = vmatmul.f32.gmra.mxu0 %v2958
      %v2960 = vpop.f32.mrf.mxu0
      %v2961 = vadd.f32 %v440, %v2960
      %v2962 = vand.u32 %v1091, 4294901760
      %v2963 = vsub.f32 %v1091, %v2962
      %v2964 = vand.u32 %v2963, 4294901760
      %v2965 = vsub.f32 %v2963, %v2964
      %v2966 = vand.u32 %v2965, 4294901760
      %2967 = vmatmul.f32.gmra.mxu0 %v2966
      %v2968 = vpop.f32.mrf.mxu0
      %v2969 = vadd.f32 %v440, %v2968
      %v2970 = vand.u32 %v1094, 4294901760
      %v2971 = vsub.f32 %v1094, %v2970
      %v2972 = vand.u32 %v2971, 4294901760
      %v2973 = vsub.f32 %v2971, %v2972
      %v2974 = vand.u32 %v2973, 4294901760
      %2975 = vmatmul.f32.gmra.mxu0 %v2974
      %v2976 = vpop.f32.mrf.mxu0
      %v2977 = vadd.f32 %v440, %v2976
      %v2978 = vand.u32 %v1097, 4294901760
      %v2979 = vsub.f32 %v1097, %v2978
      %v2980 = vand.u32 %v2979, 4294901760
      %v2981 = vsub.f32 %v2979, %v2980
      %v2982 = vand.u32 %v2981, 4294901760
      %2983 = vmatmul.f32.gmra.mxu0 %v2982
      %v2984 = vpop.f32.mrf.mxu0
      %v2985 = vadd.f32 %v440, %v2984
      %v2986 = vand.u32 %v1100, 4294901760
      %v2987 = vsub.f32 %v1100, %v2986
      %v2988 = vand.u32 %v2987, 4294901760
      %v2989 = vsub.f32 %v2987, %v2988
      %v2990 = vand.u32 %v2989, 4294901760
      %2991 = vmatmul.f32.gmra.mxu0 %v2990
      %v2992 = vpop.f32.mrf.mxu0
      %v2993 = vadd.f32 %v440, %v2992
      %v2994 = vand.u32 %v1103, 4294901760
      %v2995 = vsub.f32 %v1103, %v2994
      %v2996 = vand.u32 %v2995, 4294901760
      %v2997 = vsub.f32 %v2995, %v2996
      %v2998 = vand.u32 %v2997, 4294901760
      %2999 = vmatmul.f32.gmra.mxu0 %v2998
      %v3000 = vpop.f32.mrf.mxu0
      %v3001 = vadd.f32 %v440, %v3000
      %v3002 = vand.u32 %v1106, 4294901760
      %v3003 = vsub.f32 %v1106, %v3002
      %v3004 = vand.u32 %v3003, 4294901760
      %v3005 = vsub.f32 %v3003, %v3004
      %v3006 = vand.u32 %v3005, 4294901760
      %3007 = vmatmul.f32.gmra.mxu0 %v3006
      %v3008 = vpop.f32.mrf.mxu0
      %v3009 = vadd.f32 %v440, %v3008
      %v3010 = vand.u32 %v1109, 4294901760
      %v3011 = vsub.f32 %v1109, %v3010
      %v3012 = vand.u32 %v3011, 4294901760
      %v3013 = vsub.f32 %v3011, %v3012
      %v3014 = vand.u32 %v3013, 4294901760
      %3015 = vmatmul.f32.gmra.mxu0 %v3014
      %v3016 = vpop.f32.mrf.mxu0
      %v3017 = vadd.f32 %v440, %v3016
      %v3018 = vand.u32 %v1112, 4294901760
      %v3019 = vsub.f32 %v1112, %v3018
      %v3020 = vand.u32 %v3019, 4294901760
      %v3021 = vsub.f32 %v3019, %v3020
      %v3022 = vand.u32 %v3021, 4294901760
      %3023 = vmatmul.f32.gmra.mxu0 %v3022
      %v3024 = vpop.f32.mrf.mxu0
      %v3025 = vadd.f32 %v440, %v3024
      %v3026 = vand.u32 %v1115, 4294901760
      %v3027 = vsub.f32 %v1115, %v3026
      %v3028 = vand.u32 %v3027, 4294901760
      %v3029 = vsub.f32 %v3027, %v3028
      %v3030 = vand.u32 %v3029, 4294901760
      %3031 = vmatmul.f32.gmra.mxu0 %v3030
      %v3032 = vpop.f32.mrf.mxu0
      %v3033 = vadd.f32 %v440, %v3032
      %v3034 = vand.u32 %v1118, 4294901760
      %v3035 = vsub.f32 %v1118, %v3034
      %v3036 = vand.u32 %v3035, 4294901760
      %v3037 = vsub.f32 %v3035, %v3036
      %v3038 = vand.u32 %v3037, 4294901760
      %3039 = vmatmul.f32.gmra.mxu0 %v3038
      %v3040 = vpop.f32.mrf.mxu0
      %v3041 = vadd.f32 %v440, %v3040
      %v3042 = vand.u32 %v1121, 4294901760
      %v3043 = vsub.f32 %v1121, %v3042
      %v3044 = vand.u32 %v3043, 4294901760
      %v3045 = vsub.f32 %v3043, %v3044
      %v3046 = vand.u32 %v3045, 4294901760
      %3047 = vmatmul.f32.gmra.mxu0 %v3046
      %v3048 = vpop.f32.mrf.mxu0
      %v3049 = vadd.f32 %v440, %v3048
      %v3050 = vand.u32 %v1124, 4294901760
      %v3051 = vsub.f32 %v1124, %v3050
      %v3052 = vand.u32 %v3051, 4294901760
      %v3053 = vsub.f32 %v3051, %v3052
      %v3054 = vand.u32 %v3053, 4294901760
      %3055 = vmatmul.f32.gmra.mxu0 %v3054
      %v3056 = vpop.f32.mrf.mxu0
      %v3057 = vadd.f32 %v440, %v3056
      %v3058 = vand.u32 %v1127, 4294901760
      %v3059 = vsub.f32 %v1127, %v3058
      %v3060 = vand.u32 %v3059, 4294901760
      %v3061 = vsub.f32 %v3059, %v3060
      %v3062 = vand.u32 %v3061, 4294901760
      %3063 = vmatmul.f32.gmra.mxu0 %v3062
      %v3064 = vpop.f32.mrf.mxu0
      %v3065 = vadd.f32 %v440, %v3064
      %v3066 = vand.u32 %v1130, 4294901760
      %v3067 = vsub.f32 %v1130, %v3066
      %v3068 = vand.u32 %v3067, 4294901760
      %v3069 = vsub.f32 %v3067, %v3068
      %v3070 = vand.u32 %v3069, 4294901760
      %3071 = vmatmul.f32.gmra.mxu0 %v3070
      %v3072 = vpop.f32.mrf.mxu0
      %v3073 = vadd.f32 %v440, %v3072
      %v3074 = vand.u32 %v1133, 4294901760
      %v3075 = vsub.f32 %v1133, %v3074
      %v3076 = vand.u32 %v3075, 4294901760
      %v3077 = vsub.f32 %v3075, %v3076
      %v3078 = vand.u32 %v3077, 4294901760
      %3079 = vmatmul.f32.gmra.mxu0 %v3078
      %v3080 = vpop.f32.mrf.mxu0
      %v3081 = vadd.f32 %v440, %v3080
      %v3082 = vand.u32 %v1136, 4294901760
      %v3083 = vsub.f32 %v1136, %v3082
      %v3084 = vand.u32 %v3083, 4294901760
      %v3085 = vsub.f32 %v3083, %v3084
      %v3086 = vand.u32 %v3085, 4294901760
      %3087 = vmatmul.f32.gmra.mxu0 %v3086
      %v3088 = vpop.f32.mrf.mxu0
      %v3089 = vadd.f32 %v440, %v3088
      %v3090 = vand.u32 %v1139, 4294901760
      %v3091 = vsub.f32 %v1139, %v3090
      %v3092 = vand.u32 %v3091, 4294901760
      %v3093 = vsub.f32 %v3091, %v3092
      %v3094 = vand.u32 %v3093, 4294901760
      %3095 = vmatmul.f32.gmra.mxu0 %v3094
      %v3096 = vpop.f32.mrf.mxu0
      %v3097 = vadd.f32 %v440, %v3096
      %v3098 = vand.u32 %v1142, 4294901760
      %v3099 = vsub.f32 %v1142, %v3098
      %v3100 = vand.u32 %v3099, 4294901760
      %v3101 = vsub.f32 %v3099, %v3100
      %v3102 = vand.u32 %v3101, 4294901760
      %3103 = vmatmul.f32.gmra.mxu0 %v3102
      %v3104 = vpop.f32.mrf.mxu0
      %v3105 = vadd.f32 %v440, %v3104
      %v3106 = vand.u32 %v1145, 4294901760
      %v3107 = vsub.f32 %v1145, %v3106
      %v3108 = vand.u32 %v3107, 4294901760
      %v3109 = vsub.f32 %v3107, %v3108
      %v3110 = vand.u32 %v3109, 4294901760
      %3111 = vmatmul.f32.gmra.mxu0 %v3110
      %v3112 = vpop.f32.mrf.mxu0
      %v3113 = vadd.f32 %v440, %v3112
      %v3114 = vand.u32 %v1148, 4294901760
      %v3115 = vsub.f32 %v1148, %v3114
      %v3116 = vand.u32 %v3115, 4294901760
      %v3117 = vsub.f32 %v3115, %v3116
      %v3118 = vand.u32 %v3117, 4294901760
      %3119 = vmatmul.f32.gmra.mxu0 %v3118
      %v3120 = vpop.f32.mrf.mxu0
      %v3121 = vadd.f32 %v440, %v3120
      %v3122 = vand.u32 %v1151, 4294901760
      %v3123 = vsub.f32 %v1151, %v3122
      %v3124 = vand.u32 %v3123, 4294901760
      %v3125 = vsub.f32 %v3123, %v3124
      %v3126 = vand.u32 %v3125, 4294901760
      %3127 = vmatmul.f32.gmra.mxu0 %v3126
      %v3128 = vpop.f32.mrf.mxu0
      %v3129 = vadd.f32 %v440, %v3128
      %v3130 = vand.u32 %v1154, 4294901760
      %v3131 = vsub.f32 %v1154, %v3130
      %v3132 = vand.u32 %v3131, 4294901760
      %v3133 = vsub.f32 %v3131, %v3132
      %v3134 = vand.u32 %v3133, 4294901760
      %3135 = vmatmul.f32.gmra.mxu0 %v3134
      %v3136 = vpop.f32.mrf.mxu0
      %v3137 = vadd.f32 %v440, %v3136
      %v3138 = vand.u32 %v1157, 4294901760
      %v3139 = vsub.f32 %v1157, %v3138
      %v3140 = vand.u32 %v3139, 4294901760
      %v3141 = vsub.f32 %v3139, %v3140
      %v3142 = vand.u32 %v3141, 4294901760
      %3143 = vmatmul.f32.gmra.mxu0 %v3142
      %v3144 = vpop.f32.mrf.mxu0
      %v3145 = vadd.f32 %v440, %v3144
      %v3146 = vand.u32 %v1160, 4294901760
      %v3147 = vsub.f32 %v1160, %v3146
      %v3148 = vand.u32 %v3147, 4294901760
      %v3149 = vsub.f32 %v3147, %v3148
      %v3150 = vand.u32 %v3149, 4294901760
      %3151 = vmatmul.f32.gmra.mxu0 %v3150
      %v3152 = vpop.f32.mrf.mxu0
      %v3153 = vadd.f32 %v440, %v3152
      %v3154 = vand.u32 %v1163, 4294901760
      %v3155 = vsub.f32 %v1163, %v3154
      %v3156 = vand.u32 %v3155, 4294901760
      %v3157 = vsub.f32 %v3155, %v3156
      %v3158 = vand.u32 %v3157, 4294901760
      %3159 = vmatmul.f32.gmra.mxu0 %v3158
      %v3160 = vpop.f32.mrf.mxu0
      %v3161 = vadd.f32 %v440, %v3160
      %v3162 = vand.u32 %v1166, 4294901760
      %v3163 = vsub.f32 %v1166, %v3162
      %v3164 = vand.u32 %v3163, 4294901760
      %v3165 = vsub.f32 %v3163, %v3164
      %v3166 = vand.u32 %v3165, 4294901760
      %3167 = vmatmul.f32.gmra.mxu0 %v3166
      %v3168 = vpop.f32.mrf.mxu0
      %v3169 = vadd.f32 %v440, %v3168
      %v3170 = vand.u32 %v1169, 4294901760
      %v3171 = vsub.f32 %v1169, %v3170
      %v3172 = vand.u32 %v3171, 4294901760
      %v3173 = vsub.f32 %v3171, %v3172
      %v3174 = vand.u32 %v3173, 4294901760
      %3175 = vmatmul.f32.gmra.mxu0 %v3174
      %v3176 = vpop.f32.mrf.mxu0
      %v3177 = vadd.f32 %v440, %v3176
      %v3178 = vand.u32 %v1172, 4294901760
      %v3179 = vsub.f32 %v1172, %v3178
      %v3180 = vand.u32 %v3179, 4294901760
      %v3181 = vsub.f32 %v3179, %v3180
      %v3182 = vand.u32 %v3181, 4294901760
      %3183 = vmatmul.f32.gmra.mxu0 %v3182
      %v3184 = vpop.f32.mrf.mxu0
      %v3185 = vadd.f32 %v440, %v3184
      %v3186 = vand.u32 %v1175, 4294901760
      %v3187 = vsub.f32 %v1175, %v3186
      %v3188 = vand.u32 %v3187, 4294901760
      %v3189 = vsub.f32 %v3187, %v3188
      %v3190 = vand.u32 %v3189, 4294901760
      %3191 = vmatmul.f32.gmra.mxu0 %v3190
      %v3192 = vpop.f32.mrf.mxu0
      %v3193 = vadd.f32 %v440, %v3192
      %v3194 = vand.u32 %v1178, 4294901760
      %v3195 = vsub.f32 %v1178, %v3194
      %v3196 = vand.u32 %v3195, 4294901760
      %v3197 = vsub.f32 %v3195, %v3196
      %v3198 = vand.u32 %v3197, 4294901760
      %3199 = vmatmul.f32.gmra.mxu0 %v3198
      %v3200 = vpop.f32.mrf.mxu0
      %v3201 = vadd.f32 %v440, %v3200
      %v3202 = vand.u32 %v1181, 4294901760
      %v3203 = vsub.f32 %v1181, %v3202
      %v3204 = vand.u32 %v3203, 4294901760
      %v3205 = vsub.f32 %v3203, %v3204
      %v3206 = vand.u32 %v3205, 4294901760
      %3207 = vmatmul.f32.gmra.mxu0 %v3206
      %v3208 = vpop.f32.mrf.mxu0
      %v3209 = vadd.f32 %v440, %v3208
      %v3210 = vand.u32 %v1184, 4294901760
      %v3211 = vsub.f32 %v1184, %v3210
      %v3212 = vand.u32 %v3211, 4294901760
      %v3213 = vsub.f32 %v3211, %v3212
      %v3214 = vand.u32 %v3213, 4294901760
      %3215 = vmatmul.f32.gmra.mxu0 %v3214
      %v3216 = vpop.f32.mrf.mxu0
      %v3217 = vadd.f32 %v440, %v3216
      %v3218 = vand.u32 %v1187, 4294901760
      %v3219 = vsub.f32 %v1187, %v3218
      %v3220 = vand.u32 %v3219, 4294901760
      %v3221 = vsub.f32 %v3219, %v3220
      %v3222 = vand.u32 %v3221, 4294901760
      %3223 = vmatmul.f32.gmra.mxu0 %v3222
      %v3224 = vpop.f32.mrf.mxu0
      %v3225 = vadd.f32 %v440, %v3224
      %v3226 = vand.u32 %v1190, 4294901760
      %v3227 = vsub.f32 %v1190, %v3226
      %v3228 = vand.u32 %v3227, 4294901760
      %v3229 = vsub.f32 %v3227, %v3228
      %v3230 = vand.u32 %v3229, 4294901760
      %3231 = vmatmul.f32.gmra.mxu0 %v3230
      %v3232 = vpop.f32.mrf.mxu0
      %v3233 = vadd.f32 %v440, %v3232
      %v3234 = vand.u32 %v1193, 4294901760
      %v3235 = vsub.f32 %v1193, %v3234
      %v3236 = vand.u32 %v3235, 4294901760
      %v3237 = vsub.f32 %v3235, %v3236
      %v3238 = vand.u32 %v3237, 4294901760
      %3239 = vmatmul.f32.gmra.mxu0 %v3238
      %v3240 = vpop.f32.mrf.mxu0
      %v3241 = vadd.f32 %v440, %v3240
      %v3242 = vand.u32 %v1196, 4294901760
      %v3243 = vsub.f32 %v1196, %v3242
      %v3244 = vand.u32 %v3243, 4294901760
      %v3245 = vsub.f32 %v3243, %v3244
      %v3246 = vand.u32 %v3245, 4294901760
      %3247 = vmatmul.f32.gmra.mxu0 %v3246
      %v3248 = vpop.f32.mrf.mxu0
      %v3249 = vadd.f32 %v440, %v3248
      %v3250 = vand.u32 %v1199, 4294901760
      %v3251 = vsub.f32 %v1199, %v3250
      %v3252 = vand.u32 %v3251, 4294901760
      %v3253 = vsub.f32 %v3251, %v3252
      %v3254 = vand.u32 %v3253, 4294901760
      %3255 = vmatmul.f32.gmra.mxu0 %v3254
      %v3256 = vpop.f32.mrf.mxu0
      %v3257 = vadd.f32 %v440, %v3256
      %v3258 = vand.u32 %v1202, 4294901760
      %v3259 = vsub.f32 %v1202, %v3258
      %v3260 = vand.u32 %v3259, 4294901760
      %v3261 = vsub.f32 %v3259, %v3260
      %v3262 = vand.u32 %v3261, 4294901760
      %3263 = vmatmul.f32.gmra.mxu0 %v3262
      %v3264 = vpop.f32.mrf.mxu0
      %v3265 = vadd.f32 %v440, %v3264
      %v3266 = vand.u32 %v1205, 4294901760
      %v3267 = vsub.f32 %v1205, %v3266
      %v3268 = vand.u32 %v3267, 4294901760
      %v3269 = vsub.f32 %v3267, %v3268
      %v3270 = vand.u32 %v3269, 4294901760
      %3271 = vmatmul.f32.gmra.mxu0 %v3270
      %v3272 = vpop.f32.mrf.mxu0
      %v3273 = vadd.f32 %v440, %v3272
      %v3274 = vand.u32 %v1208, 4294901760
      %v3275 = vsub.f32 %v1208, %v3274
      %v3276 = vand.u32 %v3275, 4294901760
      %v3277 = vsub.f32 %v3275, %v3276
      %v3278 = vand.u32 %v3277, 4294901760
      %3279 = vmatmul.f32.gmra.mxu0 %v3278
      %v3280 = vpop.f32.mrf.mxu0
      %v3281 = vadd.f32 %v440, %v3280
      %3282 = vdwg.mxu0
      %3283 = vmatpush.msra.mxu0 0.0
      %3284 = vmatpush.msra.mxu0 0.0
      %3285 = vmatpush.msra.mxu0 0.0
      %3286 = vmatpush.msra.mxu0 0.0
      %3287 = vmatpush.msra.mxu0 0.0
      %3288 = vmatpush.msra.mxu0 0.0
      %3289 = vmatpush.msra.mxu0 0.0
      %3290 = vmatpush.msra.mxu0 0.0
      %v3291 = vand.u32 %v438, 4294901760
      %v3292 = vsub.f32 %v438, %v3291
      %v3293 = vand.u32 %v3292, 4294901760
      %v3294 = vsub.f32 %v3292, %v3293
      %v3295 = vand.u32 %v3294, 4294901760
      %3296 = vmatpush.msra.mxu0 %v3295
      %v3297 = vand.u32 %v437, 4294901760
      %v3298 = vsub.f32 %v437, %v3297
      %v3299 = vand.u32 %v3298, 4294901760
      %v3300 = vsub.f32 %v3298, %v3299
      %v3301 = vand.u32 %v3300, 4294901760
      %3302 = vmatpush.msra.mxu0 %v3301
      %v3303 = vand.u32 %v436, 4294901760
      %v3304 = vsub.f32 %v436, %v3303
      %v3305 = vand.u32 %v3304, 4294901760
      %v3306 = vsub.f32 %v3304, %v3305
      %v3307 = vand.u32 %v3306, 4294901760
      %3308 = vmatpush.msra.mxu0 %v3307
      %v3309 = vand.u32 %v435, 4294901760
      %v3310 = vsub.f32 %v435, %v3309
      %v3311 = vand.u32 %v3310, 4294901760
      %v3312 = vsub.f32 %v3310, %v3311
      %v3313 = vand.u32 %v3312, 4294901760
      %3314 = vmatpush.msra.mxu0 %v3313
      %v3315 = vand.u32 %v434, 4294901760
      %v3316 = vsub.f32 %v434, %v3315
      %v3317 = vand.u32 %v3316, 4294901760
      %v3318 = vsub.f32 %v3316, %v3317
      %v3319 = vand.u32 %v3318, 4294901760
      %3320 = vmatpush.msra.mxu0 %v3319
      %v3321 = vand.u32 %v433, 4294901760
      %v3322 = vsub.f32 %v433, %v3321
      %v3323 = vand.u32 %v3322, 4294901760
      %v3324 = vsub.f32 %v3322, %v3323
      %v3325 = vand.u32 %v3324, 4294901760
      %3326 = vmatpush.msra.mxu0 %v3325
      %v3327 = vand.u32 %v432, 4294901760
      %v3328 = vsub.f32 %v432, %v3327
      %v3329 = vand.u32 %v3328, 4294901760
      %v3330 = vsub.f32 %v3328, %v3329
      %v3331 = vand.u32 %v3330, 4294901760
      %3332 = vmatpush.msra.mxu0 %v3331
      %v3333 = vand.u32 %v431, 4294901760
      %v3334 = vsub.f32 %v431, %v3333
      %v3335 = vand.u32 %v3334, 4294901760
      %v3336 = vsub.f32 %v3334, %v3335
      %v3337 = vand.u32 %v3336, 4294901760
      %3338 = vmatpush.msra.mxu0 %v3337
      %v3339 = vand.u32 %v443, 4294901760
      %3340 = vmatmul.f32.gmra.mxu0 %v3339
      %v3341 = vpop.f32.mrf.mxu0
      %v3342 = vadd.f32 %v1241, %v3341
      %v3343 = vand.u32 %v446, 4294901760
      %3344 = vmatmul.f32.gmra.mxu0 %v3343
      %v3345 = vpop.f32.mrf.mxu0
      %v3346 = vadd.f32 %v1249, %v3345
      %v3347 = vand.u32 %v449, 4294901760
      %3348 = vmatmul.f32.gmra.mxu0 %v3347
      %v3349 = vpop.f32.mrf.mxu0
      %v3350 = vadd.f32 %v1257, %v3349
      %v3351 = vand.u32 %v452, 4294901760
      %3352 = vmatmul.f32.gmra.mxu0 %v3351
      %v3353 = vpop.f32.mrf.mxu0
      %v3354 = vadd.f32 %v1265, %v3353
      %v3355 = vand.u32 %v455, 4294901760
      %3356 = vmatmul.f32.gmra.mxu0 %v3355
      %v3357 = vpop.f32.mrf.mxu0
      %v3358 = vadd.f32 %v1273, %v3357
      %v3359 = vand.u32 %v458, 4294901760
      %3360 = vmatmul.f32.gmra.mxu0 %v3359
      %v3361 = vpop.f32.mrf.mxu0
      %v3362 = vadd.f32 %v1281, %v3361
      %v3363 = vand.u32 %v461, 4294901760
      %3364 = vmatmul.f32.gmra.mxu0 %v3363
      %v3365 = vpop.f32.mrf.mxu0
      %v3366 = vadd.f32 %v1289, %v3365
      %v3367 = vand.u32 %v464, 4294901760
      %3368 = vmatmul.f32.gmra.mxu0 %v3367
      %v3369 = vpop.f32.mrf.mxu0
      %v3370 = vadd.f32 %v1297, %v3369
      %v3371 = vand.u32 %v467, 4294901760
      %3372 = vmatmul.f32.gmra.mxu0 %v3371
      %v3373 = vpop.f32.mrf.mxu0
      %v3374 = vadd.f32 %v1305, %v3373
      %v3375 = vand.u32 %v470, 4294901760
      %3376 = vmatmul.f32.gmra.mxu0 %v3375
      %v3377 = vpop.f32.mrf.mxu0
      %v3378 = vadd.f32 %v1313, %v3377
      %v3379 = vand.u32 %v473, 4294901760
      %3380 = vmatmul.f32.gmra.mxu0 %v3379
      %v3381 = vpop.f32.mrf.mxu0
      %v3382 = vadd.f32 %v1321, %v3381
      %v3383 = vand.u32 %v476, 4294901760
      %3384 = vmatmul.f32.gmra.mxu0 %v3383
      %v3385 = vpop.f32.mrf.mxu0
      %v3386 = vadd.f32 %v1329, %v3385
      %v3387 = vand.u32 %v479, 4294901760
      %3388 = vmatmul.f32.gmra.mxu0 %v3387
      %v3389 = vpop.f32.mrf.mxu0
      %v3390 = vadd.f32 %v1337, %v3389
      %v3391 = vand.u32 %v482, 4294901760
      %3392 = vmatmul.f32.gmra.mxu0 %v3391
      %v3393 = vpop.f32.mrf.mxu0
      %v3394 = vadd.f32 %v1345, %v3393
      %v3395 = vand.u32 %v485, 4294901760
      %3396 = vmatmul.f32.gmra.mxu0 %v3395
      %v3397 = vpop.f32.mrf.mxu0
      %v3398 = vadd.f32 %v1353, %v3397
      %v3399 = vand.u32 %v488, 4294901760
      %3400 = vmatmul.f32.gmra.mxu0 %v3399
      %v3401 = vpop.f32.mrf.mxu0
      %v3402 = vadd.f32 %v1361, %v3401
      %v3403 = vand.u32 %v491, 4294901760
      %3404 = vmatmul.f32.gmra.mxu0 %v3403
      %v3405 = vpop.f32.mrf.mxu0
      %v3406 = vadd.f32 %v1369, %v3405
      %v3407 = vand.u32 %v494, 4294901760
      %3408 = vmatmul.f32.gmra.mxu0 %v3407
      %v3409 = vpop.f32.mrf.mxu0
      %v3410 = vadd.f32 %v1377, %v3409
      %v3411 = vand.u32 %v497, 4294901760
      %3412 = vmatmul.f32.gmra.mxu0 %v3411
      %v3413 = vpop.f32.mrf.mxu0
      %v3414 = vadd.f32 %v1385, %v3413
      %v3415 = vand.u32 %v500, 4294901760
      %3416 = vmatmul.f32.gmra.mxu0 %v3415
      %v3417 = vpop.f32.mrf.mxu0
      %v3418 = vadd.f32 %v1393, %v3417
      %v3419 = vand.u32 %v503, 4294901760
      %3420 = vmatmul.f32.gmra.mxu0 %v3419
      %v3421 = vpop.f32.mrf.mxu0
      %v3422 = vadd.f32 %v1401, %v3421
      %v3423 = vand.u32 %v506, 4294901760
      %3424 = vmatmul.f32.gmra.mxu0 %v3423
      %v3425 = vpop.f32.mrf.mxu0
      %v3426 = vadd.f32 %v1409, %v3425
      %v3427 = vand.u32 %v509, 4294901760
      %3428 = vmatmul.f32.gmra.mxu0 %v3427
      %v3429 = vpop.f32.mrf.mxu0
      %v3430 = vadd.f32 %v1417, %v3429
      %v3431 = vand.u32 %v512, 4294901760
      %3432 = vmatmul.f32.gmra.mxu0 %v3431
      %v3433 = vpop.f32.mrf.mxu0
      %v3434 = vadd.f32 %v1425, %v3433
      %v3435 = vand.u32 %v515, 4294901760
      %3436 = vmatmul.f32.gmra.mxu0 %v3435
      %v3437 = vpop.f32.mrf.mxu0
      %v3438 = vadd.f32 %v1433, %v3437
      %v3439 = vand.u32 %v518, 4294901760
      %3440 = vmatmul.f32.gmra.mxu0 %v3439
      %v3441 = vpop.f32.mrf.mxu0
      %v3442 = vadd.f32 %v1441, %v3441
      %v3443 = vand.u32 %v521, 4294901760
      %3444 = vmatmul.f32.gmra.mxu0 %v3443
      %v3445 = vpop.f32.mrf.mxu0
      %v3446 = vadd.f32 %v1449, %v3445
      %v3447 = vand.u32 %v524, 4294901760
      %3448 = vmatmul.f32.gmra.mxu0 %v3447
      %v3449 = vpop.f32.mrf.mxu0
      %v3450 = vadd.f32 %v1457, %v3449
      %v3451 = vand.u32 %v527, 4294901760
      %3452 = vmatmul.f32.gmra.mxu0 %v3451
      %v3453 = vpop.f32.mrf.mxu0
      %v3454 = vadd.f32 %v1465, %v3453
      %v3455 = vand.u32 %v530, 4294901760
      %3456 = vmatmul.f32.gmra.mxu0 %v3455
      %v3457 = vpop.f32.mrf.mxu0
      %v3458 = vadd.f32 %v1473, %v3457
      %v3459 = vand.u32 %v533, 4294901760
      %3460 = vmatmul.f32.gmra.mxu0 %v3459
      %v3461 = vpop.f32.mrf.mxu0
      %v3462 = vadd.f32 %v1481, %v3461
      %v3463 = vand.u32 %v536, 4294901760
      %3464 = vmatmul.f32.gmra.mxu0 %v3463
      %v3465 = vpop.f32.mrf.mxu0
      %v3466 = vadd.f32 %v1489, %v3465
      %v3467 = vand.u32 %v539, 4294901760
      %3468 = vmatmul.f32.gmra.mxu0 %v3467
      %v3469 = vpop.f32.mrf.mxu0
      %v3470 = vadd.f32 %v1497, %v3469
      %v3471 = vand.u32 %v542, 4294901760
      %3472 = vmatmul.f32.gmra.mxu0 %v3471
      %v3473 = vpop.f32.mrf.mxu0
      %v3474 = vadd.f32 %v1505, %v3473
      %v3475 = vand.u32 %v545, 4294901760
      %3476 = vmatmul.f32.gmra.mxu0 %v3475
      %v3477 = vpop.f32.mrf.mxu0
      %v3478 = vadd.f32 %v1513, %v3477
      %v3479 = vand.u32 %v548, 4294901760
      %3480 = vmatmul.f32.gmra.mxu0 %v3479
      %v3481 = vpop.f32.mrf.mxu0
      %v3482 = vadd.f32 %v1521, %v3481
      %v3483 = vand.u32 %v551, 4294901760
      %3484 = vmatmul.f32.gmra.mxu0 %v3483
      %v3485 = vpop.f32.mrf.mxu0
      %v3486 = vadd.f32 %v1529, %v3485
      %v3487 = vand.u32 %v554, 4294901760
      %3488 = vmatmul.f32.gmra.mxu0 %v3487
      %v3489 = vpop.f32.mrf.mxu0
      %v3490 = vadd.f32 %v1537, %v3489
      %v3491 = vand.u32 %v557, 4294901760
      %3492 = vmatmul.f32.gmra.mxu0 %v3491
      %v3493 = vpop.f32.mrf.mxu0
      %v3494 = vadd.f32 %v1545, %v3493
      %v3495 = vand.u32 %v560, 4294901760
      %3496 = vmatmul.f32.gmra.mxu0 %v3495
      %v3497 = vpop.f32.mrf.mxu0
      %v3498 = vadd.f32 %v1553, %v3497
      %v3499 = vand.u32 %v563, 4294901760
      %3500 = vmatmul.f32.gmra.mxu0 %v3499
      %v3501 = vpop.f32.mrf.mxu0
      %v3502 = vadd.f32 %v1561, %v3501
      %v3503 = vand.u32 %v566, 4294901760
      %3504 = vmatmul.f32.gmra.mxu0 %v3503
      %v3505 = vpop.f32.mrf.mxu0
      %v3506 = vadd.f32 %v1569, %v3505
      %v3507 = vand.u32 %v569, 4294901760
      %3508 = vmatmul.f32.gmra.mxu0 %v3507
      %v3509 = vpop.f32.mrf.mxu0
      %v3510 = vadd.f32 %v1577, %v3509
      %v3511 = vand.u32 %v572, 4294901760
      %3512 = vmatmul.f32.gmra.mxu0 %v3511
      %v3513 = vpop.f32.mrf.mxu0
      %v3514 = vadd.f32 %v1585, %v3513
      %v3515 = vand.u32 %v575, 4294901760
      %3516 = vmatmul.f32.gmra.mxu0 %v3515
      %v3517 = vpop.f32.mrf.mxu0
      %v3518 = vadd.f32 %v1593, %v3517
      %v3519 = vand.u32 %v578, 4294901760
      %3520 = vmatmul.f32.gmra.mxu0 %v3519
      %v3521 = vpop.f32.mrf.mxu0
      %v3522 = vadd.f32 %v1601, %v3521
      %v3523 = vand.u32 %v581, 4294901760
      %3524 = vmatmul.f32.gmra.mxu0 %v3523
      %v3525 = vpop.f32.mrf.mxu0
      %v3526 = vadd.f32 %v1609, %v3525
      %v3527 = vand.u32 %v584, 4294901760
      %3528 = vmatmul.f32.gmra.mxu0 %v3527
      %v3529 = vpop.f32.mrf.mxu0
      %v3530 = vadd.f32 %v1617, %v3529
      %v3531 = vand.u32 %v587, 4294901760
      %3532 = vmatmul.f32.gmra.mxu0 %v3531
      %v3533 = vpop.f32.mrf.mxu0
      %v3534 = vadd.f32 %v1625, %v3533
      %v3535 = vand.u32 %v590, 4294901760
      %3536 = vmatmul.f32.gmra.mxu0 %v3535
      %v3537 = vpop.f32.mrf.mxu0
      %v3538 = vadd.f32 %v1633, %v3537
      %v3539 = vand.u32 %v593, 4294901760
      %3540 = vmatmul.f32.gmra.mxu0 %v3539
      %v3541 = vpop.f32.mrf.mxu0
      %v3542 = vadd.f32 %v1641, %v3541
      %v3543 = vand.u32 %v596, 4294901760
      %3544 = vmatmul.f32.gmra.mxu0 %v3543
      %v3545 = vpop.f32.mrf.mxu0
      %v3546 = vadd.f32 %v1649, %v3545
      %v3547 = vand.u32 %v599, 4294901760
      %3548 = vmatmul.f32.gmra.mxu0 %v3547
      %v3549 = vpop.f32.mrf.mxu0
      %v3550 = vadd.f32 %v1657, %v3549
      %v3551 = vand.u32 %v602, 4294901760
      %3552 = vmatmul.f32.gmra.mxu0 %v3551
      %v3553 = vpop.f32.mrf.mxu0
      %v3554 = vadd.f32 %v1665, %v3553
      %v3555 = vand.u32 %v605, 4294901760
      %3556 = vmatmul.f32.gmra.mxu0 %v3555
      %v3557 = vpop.f32.mrf.mxu0
      %v3558 = vadd.f32 %v1673, %v3557
      %v3559 = vand.u32 %v608, 4294901760
      %3560 = vmatmul.f32.gmra.mxu0 %v3559
      %v3561 = vpop.f32.mrf.mxu0
      %v3562 = vadd.f32 %v1681, %v3561
      %v3563 = vand.u32 %v611, 4294901760
      %3564 = vmatmul.f32.gmra.mxu0 %v3563
      %v3565 = vpop.f32.mrf.mxu0
      %v3566 = vadd.f32 %v1689, %v3565
      %v3567 = vand.u32 %v614, 4294901760
      %3568 = vmatmul.f32.gmra.mxu0 %v3567
      %v3569 = vpop.f32.mrf.mxu0
      %v3570 = vadd.f32 %v1697, %v3569
      %v3571 = vand.u32 %v617, 4294901760
      %3572 = vmatmul.f32.gmra.mxu0 %v3571
      %v3573 = vpop.f32.mrf.mxu0
      %v3574 = vadd.f32 %v1705, %v3573
      %v3575 = vand.u32 %v620, 4294901760
      %3576 = vmatmul.f32.gmra.mxu0 %v3575
      %v3577 = vpop.f32.mrf.mxu0
      %v3578 = vadd.f32 %v1713, %v3577
      %v3579 = vand.u32 %v623, 4294901760
      %3580 = vmatmul.f32.gmra.mxu0 %v3579
      %v3581 = vpop.f32.mrf.mxu0
      %v3582 = vadd.f32 %v1721, %v3581
      %v3583 = vand.u32 %v626, 4294901760
      %3584 = vmatmul.f32.gmra.mxu0 %v3583
      %v3585 = vpop.f32.mrf.mxu0
      %v3586 = vadd.f32 %v1729, %v3585
      %v3587 = vand.u32 %v629, 4294901760
      %3588 = vmatmul.f32.gmra.mxu0 %v3587
      %v3589 = vpop.f32.mrf.mxu0
      %v3590 = vadd.f32 %v1737, %v3589
      %v3591 = vand.u32 %v632, 4294901760
      %3592 = vmatmul.f32.gmra.mxu0 %v3591
      %v3593 = vpop.f32.mrf.mxu0
      %v3594 = vadd.f32 %v1745, %v3593
      %v3595 = vand.u32 %v635, 4294901760
      %3596 = vmatmul.f32.gmra.mxu0 %v3595
      %v3597 = vpop.f32.mrf.mxu0
      %v3598 = vadd.f32 %v1753, %v3597
      %v3599 = vand.u32 %v638, 4294901760
      %3600 = vmatmul.f32.gmra.mxu0 %v3599
      %v3601 = vpop.f32.mrf.mxu0
      %v3602 = vadd.f32 %v1761, %v3601
      %v3603 = vand.u32 %v641, 4294901760
      %3604 = vmatmul.f32.gmra.mxu0 %v3603
      %v3605 = vpop.f32.mrf.mxu0
      %v3606 = vadd.f32 %v1769, %v3605
      %v3607 = vand.u32 %v644, 4294901760
      %3608 = vmatmul.f32.gmra.mxu0 %v3607
      %v3609 = vpop.f32.mrf.mxu0
      %v3610 = vadd.f32 %v1777, %v3609
      %v3611 = vand.u32 %v647, 4294901760
      %3612 = vmatmul.f32.gmra.mxu0 %v3611
      %v3613 = vpop.f32.mrf.mxu0
      %v3614 = vadd.f32 %v1785, %v3613
      %v3615 = vand.u32 %v650, 4294901760
      %3616 = vmatmul.f32.gmra.mxu0 %v3615
      %v3617 = vpop.f32.mrf.mxu0
      %v3618 = vadd.f32 %v1793, %v3617
      %v3619 = vand.u32 %v653, 4294901760
      %3620 = vmatmul.f32.gmra.mxu0 %v3619
      %v3621 = vpop.f32.mrf.mxu0
      %v3622 = vadd.f32 %v1801, %v3621
      %v3623 = vand.u32 %v656, 4294901760
      %3624 = vmatmul.f32.gmra.mxu0 %v3623
      %v3625 = vpop.f32.mrf.mxu0
      %v3626 = vadd.f32 %v1809, %v3625
      %v3627 = vand.u32 %v659, 4294901760
      %3628 = vmatmul.f32.gmra.mxu0 %v3627
      %v3629 = vpop.f32.mrf.mxu0
      %v3630 = vadd.f32 %v1817, %v3629
      %v3631 = vand.u32 %v662, 4294901760
      %3632 = vmatmul.f32.gmra.mxu0 %v3631
      %v3633 = vpop.f32.mrf.mxu0
      %v3634 = vadd.f32 %v1825, %v3633
      %v3635 = vand.u32 %v665, 4294901760
      %3636 = vmatmul.f32.gmra.mxu0 %v3635
      %v3637 = vpop.f32.mrf.mxu0
      %v3638 = vadd.f32 %v1833, %v3637
      %v3639 = vand.u32 %v668, 4294901760
      %3640 = vmatmul.f32.gmra.mxu0 %v3639
      %v3641 = vpop.f32.mrf.mxu0
      %v3642 = vadd.f32 %v1841, %v3641
      %v3643 = vand.u32 %v671, 4294901760
      %3644 = vmatmul.f32.gmra.mxu0 %v3643
      %v3645 = vpop.f32.mrf.mxu0
      %v3646 = vadd.f32 %v1849, %v3645
      %v3647 = vand.u32 %v674, 4294901760
      %3648 = vmatmul.f32.gmra.mxu0 %v3647
      %v3649 = vpop.f32.mrf.mxu0
      %v3650 = vadd.f32 %v1857, %v3649
      %v3651 = vand.u32 %v677, 4294901760
      %3652 = vmatmul.f32.gmra.mxu0 %v3651
      %v3653 = vpop.f32.mrf.mxu0
      %v3654 = vadd.f32 %v1865, %v3653
      %v3655 = vand.u32 %v680, 4294901760
      %3656 = vmatmul.f32.gmra.mxu0 %v3655
      %v3657 = vpop.f32.mrf.mxu0
      %v3658 = vadd.f32 %v1873, %v3657
      %v3659 = vand.u32 %v683, 4294901760
      %3660 = vmatmul.f32.gmra.mxu0 %v3659
      %v3661 = vpop.f32.mrf.mxu0
      %v3662 = vadd.f32 %v1881, %v3661
      %v3663 = vand.u32 %v686, 4294901760
      %3664 = vmatmul.f32.gmra.mxu0 %v3663
      %v3665 = vpop.f32.mrf.mxu0
      %v3666 = vadd.f32 %v1889, %v3665
      %v3667 = vand.u32 %v689, 4294901760
      %3668 = vmatmul.f32.gmra.mxu0 %v3667
      %v3669 = vpop.f32.mrf.mxu0
      %v3670 = vadd.f32 %v1897, %v3669
      %v3671 = vand.u32 %v692, 4294901760
      %3672 = vmatmul.f32.gmra.mxu0 %v3671
      %v3673 = vpop.f32.mrf.mxu0
      %v3674 = vadd.f32 %v1905, %v3673
      %v3675 = vand.u32 %v695, 4294901760
      %3676 = vmatmul.f32.gmra.mxu0 %v3675
      %v3677 = vpop.f32.mrf.mxu0
      %v3678 = vadd.f32 %v1913, %v3677
      %v3679 = vand.u32 %v698, 4294901760
      %3680 = vmatmul.f32.gmra.mxu0 %v3679
      %v3681 = vpop.f32.mrf.mxu0
      %v3682 = vadd.f32 %v1921, %v3681
      %v3683 = vand.u32 %v701, 4294901760
      %3684 = vmatmul.f32.gmra.mxu0 %v3683
      %v3685 = vpop.f32.mrf.mxu0
      %v3686 = vadd.f32 %v1929, %v3685
      %v3687 = vand.u32 %v704, 4294901760
      %3688 = vmatmul.f32.gmra.mxu0 %v3687
      %v3689 = vpop.f32.mrf.mxu0
      %v3690 = vadd.f32 %v1937, %v3689
      %v3691 = vand.u32 %v707, 4294901760
      %3692 = vmatmul.f32.gmra.mxu0 %v3691
      %v3693 = vpop.f32.mrf.mxu0
      %v3694 = vadd.f32 %v1945, %v3693
      %v3695 = vand.u32 %v710, 4294901760
      %3696 = vmatmul.f32.gmra.mxu0 %v3695
      %v3697 = vpop.f32.mrf.mxu0
      %v3698 = vadd.f32 %v1953, %v3697
      %v3699 = vand.u32 %v713, 4294901760
      %3700 = vmatmul.f32.gmra.mxu0 %v3699
      %v3701 = vpop.f32.mrf.mxu0
      %v3702 = vadd.f32 %v1961, %v3701
      %v3703 = vand.u32 %v716, 4294901760
      %3704 = vmatmul.f32.gmra.mxu0 %v3703
      %v3705 = vpop.f32.mrf.mxu0
      %v3706 = vadd.f32 %v1969, %v3705
      %v3707 = vand.u32 %v719, 4294901760
      %3708 = vmatmul.f32.gmra.mxu0 %v3707
      %v3709 = vpop.f32.mrf.mxu0
      %v3710 = vadd.f32 %v1977, %v3709
      %v3711 = vand.u32 %v722, 4294901760
      %3712 = vmatmul.f32.gmra.mxu0 %v3711
      %v3713 = vpop.f32.mrf.mxu0
      %v3714 = vadd.f32 %v1985, %v3713
      %v3715 = vand.u32 %v725, 4294901760
      %3716 = vmatmul.f32.gmra.mxu0 %v3715
      %v3717 = vpop.f32.mrf.mxu0
      %v3718 = vadd.f32 %v1993, %v3717
      %v3719 = vand.u32 %v728, 4294901760
      %3720 = vmatmul.f32.gmra.mxu0 %v3719
      %v3721 = vpop.f32.mrf.mxu0
      %v3722 = vadd.f32 %v2001, %v3721
      %v3723 = vand.u32 %v731, 4294901760
      %3724 = vmatmul.f32.gmra.mxu0 %v3723
      %v3725 = vpop.f32.mrf.mxu0
      %v3726 = vadd.f32 %v2009, %v3725
      %v3727 = vand.u32 %v734, 4294901760
      %3728 = vmatmul.f32.gmra.mxu0 %v3727
      %v3729 = vpop.f32.mrf.mxu0
      %v3730 = vadd.f32 %v2017, %v3729
      %v3731 = vand.u32 %v737, 4294901760
      %3732 = vmatmul.f32.gmra.mxu0 %v3731
      %v3733 = vpop.f32.mrf.mxu0
      %v3734 = vadd.f32 %v2025, %v3733
      %v3735 = vand.u32 %v740, 4294901760
      %3736 = vmatmul.f32.gmra.mxu0 %v3735
      %v3737 = vpop.f32.mrf.mxu0
      %v3738 = vadd.f32 %v2033, %v3737
      %v3739 = vand.u32 %v743, 4294901760
      %3740 = vmatmul.f32.gmra.mxu0 %v3739
      %v3741 = vpop.f32.mrf.mxu0
      %v3742 = vadd.f32 %v2041, %v3741
      %v3743 = vand.u32 %v746, 4294901760
      %3744 = vmatmul.f32.gmra.mxu0 %v3743
      %v3745 = vpop.f32.mrf.mxu0
      %v3746 = vadd.f32 %v2049, %v3745
      %v3747 = vand.u32 %v749, 4294901760
      %3748 = vmatmul.f32.gmra.mxu0 %v3747
      %v3749 = vpop.f32.mrf.mxu0
      %v3750 = vadd.f32 %v2057, %v3749
      %v3751 = vand.u32 %v752, 4294901760
      %3752 = vmatmul.f32.gmra.mxu0 %v3751
      %v3753 = vpop.f32.mrf.mxu0
      %v3754 = vadd.f32 %v2065, %v3753
      %v3755 = vand.u32 %v755, 4294901760
      %3756 = vmatmul.f32.gmra.mxu0 %v3755
      %v3757 = vpop.f32.mrf.mxu0
      %v3758 = vadd.f32 %v2073, %v3757
      %v3759 = vand.u32 %v758, 4294901760
      %3760 = vmatmul.f32.gmra.mxu0 %v3759
      %v3761 = vpop.f32.mrf.mxu0
      %v3762 = vadd.f32 %v2081, %v3761
      %v3763 = vand.u32 %v761, 4294901760
      %3764 = vmatmul.f32.gmra.mxu0 %v3763
      %v3765 = vpop.f32.mrf.mxu0
      %v3766 = vadd.f32 %v2089, %v3765
      %v3767 = vand.u32 %v764, 4294901760
      %3768 = vmatmul.f32.gmra.mxu0 %v3767
      %v3769 = vpop.f32.mrf.mxu0
      %v3770 = vadd.f32 %v2097, %v3769
      %v3771 = vand.u32 %v767, 4294901760
      %3772 = vmatmul.f32.gmra.mxu0 %v3771
      %v3773 = vpop.f32.mrf.mxu0
      %v3774 = vadd.f32 %v2105, %v3773
      %v3775 = vand.u32 %v770, 4294901760
      %3776 = vmatmul.f32.gmra.mxu0 %v3775
      %v3777 = vpop.f32.mrf.mxu0
      %v3778 = vadd.f32 %v2113, %v3777
      %v3779 = vand.u32 %v773, 4294901760
      %3780 = vmatmul.f32.gmra.mxu0 %v3779
      %v3781 = vpop.f32.mrf.mxu0
      %v3782 = vadd.f32 %v2121, %v3781
      %v3783 = vand.u32 %v776, 4294901760
      %3784 = vmatmul.f32.gmra.mxu0 %v3783
      %v3785 = vpop.f32.mrf.mxu0
      %v3786 = vadd.f32 %v2129, %v3785
      %v3787 = vand.u32 %v779, 4294901760
      %3788 = vmatmul.f32.gmra.mxu0 %v3787
      %v3789 = vpop.f32.mrf.mxu0
      %v3790 = vadd.f32 %v2137, %v3789
      %v3791 = vand.u32 %v782, 4294901760
      %3792 = vmatmul.f32.gmra.mxu0 %v3791
      %v3793 = vpop.f32.mrf.mxu0
      %v3794 = vadd.f32 %v2145, %v3793
      %v3795 = vand.u32 %v785, 4294901760
      %3796 = vmatmul.f32.gmra.mxu0 %v3795
      %v3797 = vpop.f32.mrf.mxu0
      %v3798 = vadd.f32 %v2153, %v3797
      %v3799 = vand.u32 %v788, 4294901760
      %3800 = vmatmul.f32.gmra.mxu0 %v3799
      %v3801 = vpop.f32.mrf.mxu0
      %v3802 = vadd.f32 %v2161, %v3801
      %v3803 = vand.u32 %v791, 4294901760
      %3804 = vmatmul.f32.gmra.mxu0 %v3803
      %v3805 = vpop.f32.mrf.mxu0
      %v3806 = vadd.f32 %v2169, %v3805
      %v3807 = vand.u32 %v794, 4294901760
      %3808 = vmatmul.f32.gmra.mxu0 %v3807
      %v3809 = vpop.f32.mrf.mxu0
      %v3810 = vadd.f32 %v2177, %v3809
      %v3811 = vand.u32 %v797, 4294901760
      %3812 = vmatmul.f32.gmra.mxu0 %v3811
      %v3813 = vpop.f32.mrf.mxu0
      %v3814 = vadd.f32 %v2185, %v3813
      %v3815 = vand.u32 %v800, 4294901760
      %3816 = vmatmul.f32.gmra.mxu0 %v3815
      %v3817 = vpop.f32.mrf.mxu0
      %v3818 = vadd.f32 %v2193, %v3817
      %v3819 = vand.u32 %v803, 4294901760
      %3820 = vmatmul.f32.gmra.mxu0 %v3819
      %v3821 = vpop.f32.mrf.mxu0
      %v3822 = vadd.f32 %v2201, %v3821
      %v3823 = vand.u32 %v806, 4294901760
      %3824 = vmatmul.f32.gmra.mxu0 %v3823
      %v3825 = vpop.f32.mrf.mxu0
      %v3826 = vadd.f32 %v2209, %v3825
      %v3827 = vand.u32 %v809, 4294901760
      %3828 = vmatmul.f32.gmra.mxu0 %v3827
      %v3829 = vpop.f32.mrf.mxu0
      %v3830 = vadd.f32 %v2217, %v3829
      %v3831 = vand.u32 %v812, 4294901760
      %3832 = vmatmul.f32.gmra.mxu0 %v3831
      %v3833 = vpop.f32.mrf.mxu0
      %v3834 = vadd.f32 %v2225, %v3833
      %v3835 = vand.u32 %v815, 4294901760
      %3836 = vmatmul.f32.gmra.mxu0 %v3835
      %v3837 = vpop.f32.mrf.mxu0
      %v3838 = vadd.f32 %v2233, %v3837
      %v3839 = vand.u32 %v818, 4294901760
      %3840 = vmatmul.f32.gmra.mxu0 %v3839
      %v3841 = vpop.f32.mrf.mxu0
      %v3842 = vadd.f32 %v2241, %v3841
      %v3843 = vand.u32 %v821, 4294901760
      %3844 = vmatmul.f32.gmra.mxu0 %v3843
      %v3845 = vpop.f32.mrf.mxu0
      %v3846 = vadd.f32 %v2249, %v3845
      %v3847 = vand.u32 %v824, 4294901760
      %3848 = vmatmul.f32.gmra.mxu0 %v3847
      %v3849 = vpop.f32.mrf.mxu0
      %v3850 = vadd.f32 %v2257, %v3849
      %v3851 = vand.u32 %v827, 4294901760
      %3852 = vmatmul.f32.gmra.mxu0 %v3851
      %v3853 = vpop.f32.mrf.mxu0
      %v3854 = vadd.f32 %v2265, %v3853
      %v3855 = vand.u32 %v830, 4294901760
      %3856 = vmatmul.f32.gmra.mxu0 %v3855
      %v3857 = vpop.f32.mrf.mxu0
      %v3858 = vadd.f32 %v2273, %v3857
      %v3859 = vand.u32 %v833, 4294901760
      %3860 = vmatmul.f32.gmra.mxu0 %v3859
      %v3861 = vpop.f32.mrf.mxu0
      %v3862 = vadd.f32 %v2281, %v3861
      %v3863 = vand.u32 %v836, 4294901760
      %3864 = vmatmul.f32.gmra.mxu0 %v3863
      %v3865 = vpop.f32.mrf.mxu0
      %v3866 = vadd.f32 %v2289, %v3865
      %v3867 = vand.u32 %v839, 4294901760
      %3868 = vmatmul.f32.gmra.mxu0 %v3867
      %v3869 = vpop.f32.mrf.mxu0
      %v3870 = vadd.f32 %v2297, %v3869
      %v3871 = vand.u32 %v842, 4294901760
      %3872 = vmatmul.f32.gmra.mxu0 %v3871
      %v3873 = vpop.f32.mrf.mxu0
      %v3874 = vadd.f32 %v2305, %v3873
      %v3875 = vand.u32 %v845, 4294901760
      %3876 = vmatmul.f32.gmra.mxu0 %v3875
      %v3877 = vpop.f32.mrf.mxu0
      %v3878 = vadd.f32 %v2313, %v3877
      %v3879 = vand.u32 %v848, 4294901760
      %3880 = vmatmul.f32.gmra.mxu0 %v3879
      %v3881 = vpop.f32.mrf.mxu0
      %v3882 = vadd.f32 %v2321, %v3881
      %v3883 = vand.u32 %v851, 4294901760
      %3884 = vmatmul.f32.gmra.mxu0 %v3883
      %v3885 = vpop.f32.mrf.mxu0
      %v3886 = vadd.f32 %v2329, %v3885
      %v3887 = vand.u32 %v854, 4294901760
      %3888 = vmatmul.f32.gmra.mxu0 %v3887
      %v3889 = vpop.f32.mrf.mxu0
      %v3890 = vadd.f32 %v2337, %v3889
      %v3891 = vand.u32 %v857, 4294901760
      %3892 = vmatmul.f32.gmra.mxu0 %v3891
      %v3893 = vpop.f32.mrf.mxu0
      %v3894 = vadd.f32 %v2345, %v3893
      %v3895 = vand.u32 %v860, 4294901760
      %3896 = vmatmul.f32.gmra.mxu0 %v3895
      %v3897 = vpop.f32.mrf.mxu0
      %v3898 = vadd.f32 %v2353, %v3897
      %v3899 = vand.u32 %v863, 4294901760
      %3900 = vmatmul.f32.gmra.mxu0 %v3899
      %v3901 = vpop.f32.mrf.mxu0
      %v3902 = vadd.f32 %v2361, %v3901
      %v3903 = vand.u32 %v866, 4294901760
      %3904 = vmatmul.f32.gmra.mxu0 %v3903
      %v3905 = vpop.f32.mrf.mxu0
      %v3906 = vadd.f32 %v2369, %v3905
      %v3907 = vand.u32 %v869, 4294901760
      %3908 = vmatmul.f32.gmra.mxu0 %v3907
      %v3909 = vpop.f32.mrf.mxu0
      %v3910 = vadd.f32 %v2377, %v3909
      %v3911 = vand.u32 %v872, 4294901760
      %3912 = vmatmul.f32.gmra.mxu0 %v3911
      %v3913 = vpop.f32.mrf.mxu0
      %v3914 = vadd.f32 %v2385, %v3913
      %v3915 = vand.u32 %v875, 4294901760
      %3916 = vmatmul.f32.gmra.mxu0 %v3915
      %v3917 = vpop.f32.mrf.mxu0
      %v3918 = vadd.f32 %v2393, %v3917
      %v3919 = vand.u32 %v878, 4294901760
      %3920 = vmatmul.f32.gmra.mxu0 %v3919
      %v3921 = vpop.f32.mrf.mxu0
      %v3922 = vadd.f32 %v2401, %v3921
      %v3923 = vand.u32 %v881, 4294901760
      %3924 = vmatmul.f32.gmra.mxu0 %v3923
      %v3925 = vpop.f32.mrf.mxu0
      %v3926 = vadd.f32 %v2409, %v3925
      %v3927 = vand.u32 %v884, 4294901760
      %3928 = vmatmul.f32.gmra.mxu0 %v3927
      %v3929 = vpop.f32.mrf.mxu0
      %v3930 = vadd.f32 %v2417, %v3929
      %v3931 = vand.u32 %v887, 4294901760
      %3932 = vmatmul.f32.gmra.mxu0 %v3931
      %v3933 = vpop.f32.mrf.mxu0
      %v3934 = vadd.f32 %v2425, %v3933
      %v3935 = vand.u32 %v890, 4294901760
      %3936 = vmatmul.f32.gmra.mxu0 %v3935
      %v3937 = vpop.f32.mrf.mxu0
      %v3938 = vadd.f32 %v2433, %v3937
      %v3939 = vand.u32 %v893, 4294901760
      %3940 = vmatmul.f32.gmra.mxu0 %v3939
      %v3941 = vpop.f32.mrf.mxu0
      %v3942 = vadd.f32 %v2441, %v3941
      %v3943 = vand.u32 %v896, 4294901760
      %3944 = vmatmul.f32.gmra.mxu0 %v3943
      %v3945 = vpop.f32.mrf.mxu0
      %v3946 = vadd.f32 %v2449, %v3945
      %v3947 = vand.u32 %v899, 4294901760
      %3948 = vmatmul.f32.gmra.mxu0 %v3947
      %v3949 = vpop.f32.mrf.mxu0
      %v3950 = vadd.f32 %v2457, %v3949
      %v3951 = vand.u32 %v902, 4294901760
      %3952 = vmatmul.f32.gmra.mxu0 %v3951
      %v3953 = vpop.f32.mrf.mxu0
      %v3954 = vadd.f32 %v2465, %v3953
      %v3955 = vand.u32 %v905, 4294901760
      %3956 = vmatmul.f32.gmra.mxu0 %v3955
      %v3957 = vpop.f32.mrf.mxu0
      %v3958 = vadd.f32 %v2473, %v3957
      %v3959 = vand.u32 %v908, 4294901760
      %3960 = vmatmul.f32.gmra.mxu0 %v3959
      %v3961 = vpop.f32.mrf.mxu0
      %v3962 = vadd.f32 %v2481, %v3961
      %v3963 = vand.u32 %v911, 4294901760
      %3964 = vmatmul.f32.gmra.mxu0 %v3963
      %v3965 = vpop.f32.mrf.mxu0
      %v3966 = vadd.f32 %v2489, %v3965
      %v3967 = vand.u32 %v914, 4294901760
      %3968 = vmatmul.f32.gmra.mxu0 %v3967
      %v3969 = vpop.f32.mrf.mxu0
      %v3970 = vadd.f32 %v2497, %v3969
      %v3971 = vand.u32 %v917, 4294901760
      %3972 = vmatmul.f32.gmra.mxu0 %v3971
      %v3973 = vpop.f32.mrf.mxu0
      %v3974 = vadd.f32 %v2505, %v3973
      %v3975 = vand.u32 %v920, 4294901760
      %3976 = vmatmul.f32.gmra.mxu0 %v3975
      %v3977 = vpop.f32.mrf.mxu0
      %v3978 = vadd.f32 %v2513, %v3977
      %v3979 = vand.u32 %v923, 4294901760
      %3980 = vmatmul.f32.gmra.mxu0 %v3979
      %v3981 = vpop.f32.mrf.mxu0
      %v3982 = vadd.f32 %v2521, %v3981
      %v3983 = vand.u32 %v926, 4294901760
      %3984 = vmatmul.f32.gmra.mxu0 %v3983
      %v3985 = vpop.f32.mrf.mxu0
      %v3986 = vadd.f32 %v2529, %v3985
      %v3987 = vand.u32 %v929, 4294901760
      %3988 = vmatmul.f32.gmra.mxu0 %v3987
      %v3989 = vpop.f32.mrf.mxu0
      %v3990 = vadd.f32 %v2537, %v3989
      %v3991 = vand.u32 %v932, 4294901760
      %3992 = vmatmul.f32.gmra.mxu0 %v3991
      %v3993 = vpop.f32.mrf.mxu0
      %v3994 = vadd.f32 %v2545, %v3993
      %v3995 = vand.u32 %v935, 4294901760
      %3996 = vmatmul.f32.gmra.mxu0 %v3995
      %v3997 = vpop.f32.mrf.mxu0
      %v3998 = vadd.f32 %v2553, %v3997
      %v3999 = vand.u32 %v938, 4294901760
      %4000 = vmatmul.f32.gmra.mxu0 %v3999
      %v4001 = vpop.f32.mrf.mxu0
      %v4002 = vadd.f32 %v2561, %v4001
      %v4003 = vand.u32 %v941, 4294901760
      %4004 = vmatmul.f32.gmra.mxu0 %v4003
      %v4005 = vpop.f32.mrf.mxu0
      %v4006 = vadd.f32 %v2569, %v4005
      %v4007 = vand.u32 %v944, 4294901760
      %4008 = vmatmul.f32.gmra.mxu0 %v4007
      %v4009 = vpop.f32.mrf.mxu0
      %v4010 = vadd.f32 %v2577, %v4009
      %v4011 = vand.u32 %v947, 4294901760
      %4012 = vmatmul.f32.gmra.mxu0 %v4011
      %v4013 = vpop.f32.mrf.mxu0
      %v4014 = vadd.f32 %v2585, %v4013
      %v4015 = vand.u32 %v950, 4294901760
      %4016 = vmatmul.f32.gmra.mxu0 %v4015
      %v4017 = vpop.f32.mrf.mxu0
      %v4018 = vadd.f32 %v2593, %v4017
      %v4019 = vand.u32 %v953, 4294901760
      %4020 = vmatmul.f32.gmra.mxu0 %v4019
      %v4021 = vpop.f32.mrf.mxu0
      %v4022 = vadd.f32 %v2601, %v4021
      %v4023 = vand.u32 %v956, 4294901760
      %4024 = vmatmul.f32.gmra.mxu0 %v4023
      %v4025 = vpop.f32.mrf.mxu0
      %v4026 = vadd.f32 %v2609, %v4025
      %v4027 = vand.u32 %v959, 4294901760
      %4028 = vmatmul.f32.gmra.mxu0 %v4027
      %v4029 = vpop.f32.mrf.mxu0
      %v4030 = vadd.f32 %v2617, %v4029
      %v4031 = vand.u32 %v962, 4294901760
      %4032 = vmatmul.f32.gmra.mxu0 %v4031
      %v4033 = vpop.f32.mrf.mxu0
      %v4034 = vadd.f32 %v2625, %v4033
      %v4035 = vand.u32 %v965, 4294901760
      %4036 = vmatmul.f32.gmra.mxu0 %v4035
      %v4037 = vpop.f32.mrf.mxu0
      %v4038 = vadd.f32 %v2633, %v4037
      %v4039 = vand.u32 %v968, 4294901760
      %4040 = vmatmul.f32.gmra.mxu0 %v4039
      %v4041 = vpop.f32.mrf.mxu0
      %v4042 = vadd.f32 %v2641, %v4041
      %v4043 = vand.u32 %v971, 4294901760
      %4044 = vmatmul.f32.gmra.mxu0 %v4043
      %v4045 = vpop.f32.mrf.mxu0
      %v4046 = vadd.f32 %v2649, %v4045
      %v4047 = vand.u32 %v974, 4294901760
      %4048 = vmatmul.f32.gmra.mxu0 %v4047
      %v4049 = vpop.f32.mrf.mxu0
      %v4050 = vadd.f32 %v2657, %v4049
      %v4051 = vand.u32 %v977, 4294901760
      %4052 = vmatmul.f32.gmra.mxu0 %v4051
      %v4053 = vpop.f32.mrf.mxu0
      %v4054 = vadd.f32 %v2665, %v4053
      %v4055 = vand.u32 %v980, 4294901760
      %4056 = vmatmul.f32.gmra.mxu0 %v4055
      %v4057 = vpop.f32.mrf.mxu0
      %v4058 = vadd.f32 %v2673, %v4057
      %v4059 = vand.u32 %v983, 4294901760
      %4060 = vmatmul.f32.gmra.mxu0 %v4059
      %v4061 = vpop.f32.mrf.mxu0
      %v4062 = vadd.f32 %v2681, %v4061
      %v4063 = vand.u32 %v986, 4294901760
      %4064 = vmatmul.f32.gmra.mxu0 %v4063
      %v4065 = vpop.f32.mrf.mxu0
      %v4066 = vadd.f32 %v2689, %v4065
      %v4067 = vand.u32 %v989, 4294901760
      %4068 = vmatmul.f32.gmra.mxu0 %v4067
      %v4069 = vpop.f32.mrf.mxu0
      %v4070 = vadd.f32 %v2697, %v4069
      %v4071 = vand.u32 %v992, 4294901760
      %4072 = vmatmul.f32.gmra.mxu0 %v4071
      %v4073 = vpop.f32.mrf.mxu0
      %v4074 = vadd.f32 %v2705, %v4073
      %v4075 = vand.u32 %v995, 4294901760
      %4076 = vmatmul.f32.gmra.mxu0 %v4075
      %v4077 = vpop.f32.mrf.mxu0
      %v4078 = vadd.f32 %v2713, %v4077
      %v4079 = vand.u32 %v998, 4294901760
      %4080 = vmatmul.f32.gmra.mxu0 %v4079
      %v4081 = vpop.f32.mrf.mxu0
      %v4082 = vadd.f32 %v2721, %v4081
      %v4083 = vand.u32 %v1001, 4294901760
      %4084 = vmatmul.f32.gmra.mxu0 %v4083
      %v4085 = vpop.f32.mrf.mxu0
      %v4086 = vadd.f32 %v2729, %v4085
      %v4087 = vand.u32 %v1004, 4294901760
      %4088 = vmatmul.f32.gmra.mxu0 %v4087
      %v4089 = vpop.f32.mrf.mxu0
      %v4090 = vadd.f32 %v2737, %v4089
      %v4091 = vand.u32 %v1007, 4294901760
      %4092 = vmatmul.f32.gmra.mxu0 %v4091
      %v4093 = vpop.f32.mrf.mxu0
      %v4094 = vadd.f32 %v2745, %v4093
      %v4095 = vand.u32 %v1010, 4294901760
      %4096 = vmatmul.f32.gmra.mxu0 %v4095
      %v4097 = vpop.f32.mrf.mxu0
      %v4098 = vadd.f32 %v2753, %v4097
      %v4099 = vand.u32 %v1013, 4294901760
      %4100 = vmatmul.f32.gmra.mxu0 %v4099
      %v4101 = vpop.f32.mrf.mxu0
      %v4102 = vadd.f32 %v2761, %v4101
      %v4103 = vand.u32 %v1016, 4294901760
      %4104 = vmatmul.f32.gmra.mxu0 %v4103
      %v4105 = vpop.f32.mrf.mxu0
      %v4106 = vadd.f32 %v2769, %v4105
      %v4107 = vand.u32 %v1019, 4294901760
      %4108 = vmatmul.f32.gmra.mxu0 %v4107
      %v4109 = vpop.f32.mrf.mxu0
      %v4110 = vadd.f32 %v2777, %v4109
      %v4111 = vand.u32 %v1022, 4294901760
      %4112 = vmatmul.f32.gmra.mxu0 %v4111
      %v4113 = vpop.f32.mrf.mxu0
      %v4114 = vadd.f32 %v2785, %v4113
      %v4115 = vand.u32 %v1025, 4294901760
      %4116 = vmatmul.f32.gmra.mxu0 %v4115
      %v4117 = vpop.f32.mrf.mxu0
      %v4118 = vadd.f32 %v2793, %v4117
      %v4119 = vand.u32 %v1028, 4294901760
      %4120 = vmatmul.f32.gmra.mxu0 %v4119
      %v4121 = vpop.f32.mrf.mxu0
      %v4122 = vadd.f32 %v2801, %v4121
      %v4123 = vand.u32 %v1031, 4294901760
      %4124 = vmatmul.f32.gmra.mxu0 %v4123
      %v4125 = vpop.f32.mrf.mxu0
      %v4126 = vadd.f32 %v2809, %v4125
      %v4127 = vand.u32 %v1034, 4294901760
      %4128 = vmatmul.f32.gmra.mxu0 %v4127
      %v4129 = vpop.f32.mrf.mxu0
      %v4130 = vadd.f32 %v2817, %v4129
      %v4131 = vand.u32 %v1037, 4294901760
      %4132 = vmatmul.f32.gmra.mxu0 %v4131
      %v4133 = vpop.f32.mrf.mxu0
      %v4134 = vadd.f32 %v2825, %v4133
      %v4135 = vand.u32 %v1040, 4294901760
      %4136 = vmatmul.f32.gmra.mxu0 %v4135
      %v4137 = vpop.f32.mrf.mxu0
      %v4138 = vadd.f32 %v2833, %v4137
      %v4139 = vand.u32 %v1043, 4294901760
      %4140 = vmatmul.f32.gmra.mxu0 %v4139
      %v4141 = vpop.f32.mrf.mxu0
      %v4142 = vadd.f32 %v2841, %v4141
      %v4143 = vand.u32 %v1046, 4294901760
      %4144 = vmatmul.f32.gmra.mxu0 %v4143
      %v4145 = vpop.f32.mrf.mxu0
      %v4146 = vadd.f32 %v2849, %v4145
      %v4147 = vand.u32 %v1049, 4294901760
      %4148 = vmatmul.f32.gmra.mxu0 %v4147
      %v4149 = vpop.f32.mrf.mxu0
      %v4150 = vadd.f32 %v2857, %v4149
      %v4151 = vand.u32 %v1052, 4294901760
      %4152 = vmatmul.f32.gmra.mxu0 %v4151
      %v4153 = vpop.f32.mrf.mxu0
      %v4154 = vadd.f32 %v2865, %v4153
      %v4155 = vand.u32 %v1055, 4294901760
      %4156 = vmatmul.f32.gmra.mxu0 %v4155
      %v4157 = vpop.f32.mrf.mxu0
      %v4158 = vadd.f32 %v2873, %v4157
      %v4159 = vand.u32 %v1058, 4294901760
      %4160 = vmatmul.f32.gmra.mxu0 %v4159
      %v4161 = vpop.f32.mrf.mxu0
      %v4162 = vadd.f32 %v2881, %v4161
      %v4163 = vand.u32 %v1061, 4294901760
      %4164 = vmatmul.f32.gmra.mxu0 %v4163
      %v4165 = vpop.f32.mrf.mxu0
      %v4166 = vadd.f32 %v2889, %v4165
      %v4167 = vand.u32 %v1064, 4294901760
      %4168 = vmatmul.f32.gmra.mxu0 %v4167
      %v4169 = vpop.f32.mrf.mxu0
      %v4170 = vadd.f32 %v2897, %v4169
      %v4171 = vand.u32 %v1067, 4294901760
      %4172 = vmatmul.f32.gmra.mxu0 %v4171
      %v4173 = vpop.f32.mrf.mxu0
      %v4174 = vadd.f32 %v2905, %v4173
      %v4175 = vand.u32 %v1070, 4294901760
      %4176 = vmatmul.f32.gmra.mxu0 %v4175
      %v4177 = vpop.f32.mrf.mxu0
      %v4178 = vadd.f32 %v2913, %v4177
      %v4179 = vand.u32 %v1073, 4294901760
      %4180 = vmatmul.f32.gmra.mxu0 %v4179
      %v4181 = vpop.f32.mrf.mxu0
      %v4182 = vadd.f32 %v2921, %v4181
      %v4183 = vand.u32 %v1076, 4294901760
      %4184 = vmatmul.f32.gmra.mxu0 %v4183
      %v4185 = vpop.f32.mrf.mxu0
      %v4186 = vadd.f32 %v2929, %v4185
      %v4187 = vand.u32 %v1079, 4294901760
      %4188 = vmatmul.f32.gmra.mxu0 %v4187
      %v4189 = vpop.f32.mrf.mxu0
      %v4190 = vadd.f32 %v2937, %v4189
      %v4191 = vand.u32 %v1082, 4294901760
      %4192 = vmatmul.f32.gmra.mxu0 %v4191
      %v4193 = vpop.f32.mrf.mxu0
      %v4194 = vadd.f32 %v2945, %v4193
      %v4195 = vand.u32 %v1085, 4294901760
      %4196 = vmatmul.f32.gmra.mxu0 %v4195
      %v4197 = vpop.f32.mrf.mxu0
      %v4198 = vadd.f32 %v2953, %v4197
      %v4199 = vand.u32 %v1088, 4294901760
      %4200 = vmatmul.f32.gmra.mxu0 %v4199
      %v4201 = vpop.f32.mrf.mxu0
      %v4202 = vadd.f32 %v2961, %v4201
      %v4203 = vand.u32 %v1091, 4294901760
      %4204 = vmatmul.f32.gmra.mxu0 %v4203
      %v4205 = vpop.f32.mrf.mxu0
      %v4206 = vadd.f32 %v2969, %v4205
      %v4207 = vand.u32 %v1094, 4294901760
      %4208 = vmatmul.f32.gmra.mxu0 %v4207
      %v4209 = vpop.f32.mrf.mxu0
      %v4210 = vadd.f32 %v2977, %v4209
      %v4211 = vand.u32 %v1097, 4294901760
      %4212 = vmatmul.f32.gmra.mxu0 %v4211
      %v4213 = vpop.f32.mrf.mxu0
      %v4214 = vadd.f32 %v2985, %v4213
      %v4215 = vand.u32 %v1100, 4294901760
      %4216 = vmatmul.f32.gmra.mxu0 %v4215
      %v4217 = vpop.f32.mrf.mxu0
      %v4218 = vadd.f32 %v2993, %v4217
      %v4219 = vand.u32 %v1103, 4294901760
      %4220 = vmatmul.f32.gmra.mxu0 %v4219
      %v4221 = vpop.f32.mrf.mxu0
      %v4222 = vadd.f32 %v3001, %v4221
      %v4223 = vand.u32 %v1106, 4294901760
      %4224 = vmatmul.f32.gmra.mxu0 %v4223
      %v4225 = vpop.f32.mrf.mxu0
      %v4226 = vadd.f32 %v3009, %v4225
      %v4227 = vand.u32 %v1109, 4294901760
      %4228 = vmatmul.f32.gmra.mxu0 %v4227
      %v4229 = vpop.f32.mrf.mxu0
      %v4230 = vadd.f32 %v3017, %v4229
      %v4231 = vand.u32 %v1112, 4294901760
      %4232 = vmatmul.f32.gmra.mxu0 %v4231
      %v4233 = vpop.f32.mrf.mxu0
      %v4234 = vadd.f32 %v3025, %v4233
      %v4235 = vand.u32 %v1115, 4294901760
      %4236 = vmatmul.f32.gmra.mxu0 %v4235
      %v4237 = vpop.f32.mrf.mxu0
      %v4238 = vadd.f32 %v3033, %v4237
      %v4239 = vand.u32 %v1118, 4294901760
      %4240 = vmatmul.f32.gmra.mxu0 %v4239
      %v4241 = vpop.f32.mrf.mxu0
      %v4242 = vadd.f32 %v3041, %v4241
      %v4243 = vand.u32 %v1121, 4294901760
      %4244 = vmatmul.f32.gmra.mxu0 %v4243
      %v4245 = vpop.f32.mrf.mxu0
      %v4246 = vadd.f32 %v3049, %v4245
      %v4247 = vand.u32 %v1124, 4294901760
      %4248 = vmatmul.f32.gmra.mxu0 %v4247
      %v4249 = vpop.f32.mrf.mxu0
      %v4250 = vadd.f32 %v3057, %v4249
      %v4251 = vand.u32 %v1127, 4294901760
      %4252 = vmatmul.f32.gmra.mxu0 %v4251
      %v4253 = vpop.f32.mrf.mxu0
      %v4254 = vadd.f32 %v3065, %v4253
      %v4255 = vand.u32 %v1130, 4294901760
      %4256 = vmatmul.f32.gmra.mxu0 %v4255
      %v4257 = vpop.f32.mrf.mxu0
      %v4258 = vadd.f32 %v3073, %v4257
      %v4259 = vand.u32 %v1133, 4294901760
      %4260 = vmatmul.f32.gmra.mxu0 %v4259
      %v4261 = vpop.f32.mrf.mxu0
      %v4262 = vadd.f32 %v3081, %v4261
      %v4263 = vand.u32 %v1136, 4294901760
      %4264 = vmatmul.f32.gmra.mxu0 %v4263
      %v4265 = vpop.f32.mrf.mxu0
      %v4266 = vadd.f32 %v3089, %v4265
      %v4267 = vand.u32 %v1139, 4294901760
      %4268 = vmatmul.f32.gmra.mxu0 %v4267
      %v4269 = vpop.f32.mrf.mxu0
      %v4270 = vadd.f32 %v3097, %v4269
      %v4271 = vand.u32 %v1142, 4294901760
      %4272 = vmatmul.f32.gmra.mxu0 %v4271
      %v4273 = vpop.f32.mrf.mxu0
      %v4274 = vadd.f32 %v3105, %v4273
      %v4275 = vand.u32 %v1145, 4294901760
      %4276 = vmatmul.f32.gmra.mxu0 %v4275
      %v4277 = vpop.f32.mrf.mxu0
      %v4278 = vadd.f32 %v3113, %v4277
      %v4279 = vand.u32 %v1148, 4294901760
      %4280 = vmatmul.f32.gmra.mxu0 %v4279
      %v4281 = vpop.f32.mrf.mxu0
      %v4282 = vadd.f32 %v3121, %v4281
      %v4283 = vand.u32 %v1151, 4294901760
      %4284 = vmatmul.f32.gmra.mxu0 %v4283
      %v4285 = vpop.f32.mrf.mxu0
      %v4286 = vadd.f32 %v3129, %v4285
      %v4287 = vand.u32 %v1154, 4294901760
      %4288 = vmatmul.f32.gmra.mxu0 %v4287
      %v4289 = vpop.f32.mrf.mxu0
      %v4290 = vadd.f32 %v3137, %v4289
      %v4291 = vand.u32 %v1157, 4294901760
      %4292 = vmatmul.f32.gmra.mxu0 %v4291
      %v4293 = vpop.f32.mrf.mxu0
      %v4294 = vadd.f32 %v3145, %v4293
      %v4295 = vand.u32 %v1160, 4294901760
      %4296 = vmatmul.f32.gmra.mxu0 %v4295
      %v4297 = vpop.f32.mrf.mxu0
      %v4298 = vadd.f32 %v3153, %v4297
      %v4299 = vand.u32 %v1163, 4294901760
      %4300 = vmatmul.f32.gmra.mxu0 %v4299
      %v4301 = vpop.f32.mrf.mxu0
      %v4302 = vadd.f32 %v3161, %v4301
      %v4303 = vand.u32 %v1166, 4294901760
      %4304 = vmatmul.f32.gmra.mxu0 %v4303
      %v4305 = vpop.f32.mrf.mxu0
      %v4306 = vadd.f32 %v3169, %v4305
      %v4307 = vand.u32 %v1169, 4294901760
      %4308 = vmatmul.f32.gmra.mxu0 %v4307
      %v4309 = vpop.f32.mrf.mxu0
      %v4310 = vadd.f32 %v3177, %v4309
      %v4311 = vand.u32 %v1172, 4294901760
      %4312 = vmatmul.f32.gmra.mxu0 %v4311
      %v4313 = vpop.f32.mrf.mxu0
      %v4314 = vadd.f32 %v3185, %v4313
      %v4315 = vand.u32 %v1175, 4294901760
      %4316 = vmatmul.f32.gmra.mxu0 %v4315
      %v4317 = vpop.f32.mrf.mxu0
      %v4318 = vadd.f32 %v3193, %v4317
      %v4319 = vand.u32 %v1178, 4294901760
      %4320 = vmatmul.f32.gmra.mxu0 %v4319
      %v4321 = vpop.f32.mrf.mxu0
      %v4322 = vadd.f32 %v3201, %v4321
      %v4323 = vand.u32 %v1181, 4294901760
      %4324 = vmatmul.f32.gmra.mxu0 %v4323
      %v4325 = vpop.f32.mrf.mxu0
      %v4326 = vadd.f32 %v3209, %v4325
      %v4327 = vand.u32 %v1184, 4294901760
      %4328 = vmatmul.f32.gmra.mxu0 %v4327
      %v4329 = vpop.f32.mrf.mxu0
      %v4330 = vadd.f32 %v3217, %v4329
      %v4331 = vand.u32 %v1187, 4294901760
      %4332 = vmatmul.f32.gmra.mxu0 %v4331
      %v4333 = vpop.f32.mrf.mxu0
      %v4334 = vadd.f32 %v3225, %v4333
      %v4335 = vand.u32 %v1190, 4294901760
      %4336 = vmatmul.f32.gmra.mxu0 %v4335
      %v4337 = vpop.f32.mrf.mxu0
      %v4338 = vadd.f32 %v3233, %v4337
      %v4339 = vand.u32 %v1193, 4294901760
      %4340 = vmatmul.f32.gmra.mxu0 %v4339
      %v4341 = vpop.f32.mrf.mxu0
      %v4342 = vadd.f32 %v3241, %v4341
      %v4343 = vand.u32 %v1196, 4294901760
      %4344 = vmatmul.f32.gmra.mxu0 %v4343
      %v4345 = vpop.f32.mrf.mxu0
      %v4346 = vadd.f32 %v3249, %v4345
      %v4347 = vand.u32 %v1199, 4294901760
      %4348 = vmatmul.f32.gmra.mxu0 %v4347
      %v4349 = vpop.f32.mrf.mxu0
      %v4350 = vadd.f32 %v3257, %v4349
      %v4351 = vand.u32 %v1202, 4294901760
      %4352 = vmatmul.f32.gmra.mxu0 %v4351
      %v4353 = vpop.f32.mrf.mxu0
      %v4354 = vadd.f32 %v3265, %v4353
      %v4355 = vand.u32 %v1205, 4294901760
      %4356 = vmatmul.f32.gmra.mxu0 %v4355
      %v4357 = vpop.f32.mrf.mxu0
      %v4358 = vadd.f32 %v3273, %v4357
      %v4359 = vand.u32 %v1208, 4294901760
      %4360 = vmatmul.f32.gmra.mxu0 %v4359
      %v4361 = vpop.f32.mrf.mxu0
      %v4362 = vadd.f32 %v3281, %v4361
      %4363 = vdwg.mxu0
      %4364 = vmatpush.msra.mxu0 0.0
      %4365 = vmatpush.msra.mxu0 0.0
      %4366 = vmatpush.msra.mxu0 0.0
      %4367 = vmatpush.msra.mxu0 0.0
      %4368 = vmatpush.msra.mxu0 0.0
      %4369 = vmatpush.msra.mxu0 0.0
      %4370 = vmatpush.msra.mxu0 0.0
      %4371 = vmatpush.msra.mxu0 0.0
      %v4372 = vand.u32 %v438, 4294901760
      %v4373 = vsub.f32 %v438, %v4372
      %4374 = vmatpush.msra.mxu0 %v4373
      %v4375 = vand.u32 %v437, 4294901760
      %v4376 = vsub.f32 %v437, %v4375
      %4377 = vmatpush.msra.mxu0 %v4376
      %v4378 = vand.u32 %v436, 4294901760
      %v4379 = vsub.f32 %v436, %v4378
      %4380 = vmatpush.msra.mxu0 %v4379
      %v4381 = vand.u32 %v435, 4294901760
      %v4382 = vsub.f32 %v435, %v4381
      %4383 = vmatpush.msra.mxu0 %v4382
      %v4384 = vand.u32 %v434, 4294901760
      %v4385 = vsub.f32 %v434, %v4384
      %4386 = vmatpush.msra.mxu0 %v4385
      %v4387 = vand.u32 %v433, 4294901760
      %v4388 = vsub.f32 %v433, %v4387
      %4389 = vmatpush.msra.mxu0 %v4388
      %v4390 = vand.u32 %v432, 4294901760
      %v4391 = vsub.f32 %v432, %v4390
      %4392 = vmatpush.msra.mxu0 %v4391
      %v4393 = vand.u32 %v431, 4294901760
      %v4394 = vsub.f32 %v431, %v4393
      %4395 = vmatpush.msra.mxu0 %v4394
      %v4396 = vand.u32 %v443, 4294901760
      %v4397 = vsub.f32 %v443, %v4396
      %4398 = vmatmul.f32.gmra.mxu0 %v4397
      %v4399 = vpop.f32.mrf.mxu0
      %v4400 = vadd.f32 %v3342, %v4399
      %v4401 = vand.u32 %v446, 4294901760
      %v4402 = vsub.f32 %v446, %v4401
      %4403 = vmatmul.f32.gmra.mxu0 %v4402
      %v4404 = vpop.f32.mrf.mxu0
      %v4405 = vadd.f32 %v3346, %v4404
      %v4406 = vand.u32 %v449, 4294901760
      %v4407 = vsub.f32 %v449, %v4406
      %4408 = vmatmul.f32.gmra.mxu0 %v4407
      %v4409 = vpop.f32.mrf.mxu0
      %v4410 = vadd.f32 %v3350, %v4409
      %v4411 = vand.u32 %v452, 4294901760
      %v4412 = vsub.f32 %v452, %v4411
      %4413 = vmatmul.f32.gmra.mxu0 %v4412
      %v4414 = vpop.f32.mrf.mxu0
      %v4415 = vadd.f32 %v3354, %v4414
      %v4416 = vand.u32 %v455, 4294901760
      %v4417 = vsub.f32 %v455, %v4416
      %4418 = vmatmul.f32.gmra.mxu0 %v4417
      %v4419 = vpop.f32.mrf.mxu0
      %v4420 = vadd.f32 %v3358, %v4419
      %v4421 = vand.u32 %v458, 4294901760
      %v4422 = vsub.f32 %v458, %v4421
      %4423 = vmatmul.f32.gmra.mxu0 %v4422
      %v4424 = vpop.f32.mrf.mxu0
      %v4425 = vadd.f32 %v3362, %v4424
      %v4426 = vand.u32 %v461, 4294901760
      %v4427 = vsub.f32 %v461, %v4426
      %4428 = vmatmul.f32.gmra.mxu0 %v4427
      %v4429 = vpop.f32.mrf.mxu0
      %v4430 = vadd.f32 %v3366, %v4429
      %v4431 = vand.u32 %v464, 4294901760
      %v4432 = vsub.f32 %v464, %v4431
      %4433 = vmatmul.f32.gmra.mxu0 %v4432
      %v4434 = vpop.f32.mrf.mxu0
      %v4435 = vadd.f32 %v3370, %v4434
      %v4436 = vand.u32 %v467, 4294901760
      %v4437 = vsub.f32 %v467, %v4436
      %4438 = vmatmul.f32.gmra.mxu0 %v4437
      %v4439 = vpop.f32.mrf.mxu0
      %v4440 = vadd.f32 %v3374, %v4439
      %v4441 = vand.u32 %v470, 4294901760
      %v4442 = vsub.f32 %v470, %v4441
      %4443 = vmatmul.f32.gmra.mxu0 %v4442
      %v4444 = vpop.f32.mrf.mxu0
      %v4445 = vadd.f32 %v3378, %v4444
      %v4446 = vand.u32 %v473, 4294901760
      %v4447 = vsub.f32 %v473, %v4446
      %4448 = vmatmul.f32.gmra.mxu0 %v4447
      %v4449 = vpop.f32.mrf.mxu0
      %v4450 = vadd.f32 %v3382, %v4449
      %v4451 = vand.u32 %v476, 4294901760
      %v4452 = vsub.f32 %v476, %v4451
      %4453 = vmatmul.f32.gmra.mxu0 %v4452
      %v4454 = vpop.f32.mrf.mxu0
      %v4455 = vadd.f32 %v3386, %v4454
      %v4456 = vand.u32 %v479, 4294901760
      %v4457 = vsub.f32 %v479, %v4456
      %4458 = vmatmul.f32.gmra.mxu0 %v4457
      %v4459 = vpop.f32.mrf.mxu0
      %v4460 = vadd.f32 %v3390, %v4459
      %v4461 = vand.u32 %v482, 4294901760
      %v4462 = vsub.f32 %v482, %v4461
      %4463 = vmatmul.f32.gmra.mxu0 %v4462
      %v4464 = vpop.f32.mrf.mxu0
      %v4465 = vadd.f32 %v3394, %v4464
      %v4466 = vand.u32 %v485, 4294901760
      %v4467 = vsub.f32 %v485, %v4466
      %4468 = vmatmul.f32.gmra.mxu0 %v4467
      %v4469 = vpop.f32.mrf.mxu0
      %v4470 = vadd.f32 %v3398, %v4469
      %v4471 = vand.u32 %v488, 4294901760
      %v4472 = vsub.f32 %v488, %v4471
      %4473 = vmatmul.f32.gmra.mxu0 %v4472
      %v4474 = vpop.f32.mrf.mxu0
      %v4475 = vadd.f32 %v3402, %v4474
      %v4476 = vand.u32 %v491, 4294901760
      %v4477 = vsub.f32 %v491, %v4476
      %4478 = vmatmul.f32.gmra.mxu0 %v4477
      %v4479 = vpop.f32.mrf.mxu0
      %v4480 = vadd.f32 %v3406, %v4479
      %v4481 = vand.u32 %v494, 4294901760
      %v4482 = vsub.f32 %v494, %v4481
      %4483 = vmatmul.f32.gmra.mxu0 %v4482
      %v4484 = vpop.f32.mrf.mxu0
      %v4485 = vadd.f32 %v3410, %v4484
      %v4486 = vand.u32 %v497, 4294901760
      %v4487 = vsub.f32 %v497, %v4486
      %4488 = vmatmul.f32.gmra.mxu0 %v4487
      %v4489 = vpop.f32.mrf.mxu0
      %v4490 = vadd.f32 %v3414, %v4489
      %v4491 = vand.u32 %v500, 4294901760
      %v4492 = vsub.f32 %v500, %v4491
      %4493 = vmatmul.f32.gmra.mxu0 %v4492
      %v4494 = vpop.f32.mrf.mxu0
      %v4495 = vadd.f32 %v3418, %v4494
      %v4496 = vand.u32 %v503, 4294901760
      %v4497 = vsub.f32 %v503, %v4496
      %4498 = vmatmul.f32.gmra.mxu0 %v4497
      %v4499 = vpop.f32.mrf.mxu0
      %v4500 = vadd.f32 %v3422, %v4499
      %v4501 = vand.u32 %v506, 4294901760
      %v4502 = vsub.f32 %v506, %v4501
      %4503 = vmatmul.f32.gmra.mxu0 %v4502
      %v4504 = vpop.f32.mrf.mxu0
      %v4505 = vadd.f32 %v3426, %v4504
      %v4506 = vand.u32 %v509, 4294901760
      %v4507 = vsub.f32 %v509, %v4506
      %4508 = vmatmul.f32.gmra.mxu0 %v4507
      %v4509 = vpop.f32.mrf.mxu0
      %v4510 = vadd.f32 %v3430, %v4509
      %v4511 = vand.u32 %v512, 4294901760
      %v4512 = vsub.f32 %v512, %v4511
      %4513 = vmatmul.f32.gmra.mxu0 %v4512
      %v4514 = vpop.f32.mrf.mxu0
      %v4515 = vadd.f32 %v3434, %v4514
      %v4516 = vand.u32 %v515, 4294901760
      %v4517 = vsub.f32 %v515, %v4516
      %4518 = vmatmul.f32.gmra.mxu0 %v4517
      %v4519 = vpop.f32.mrf.mxu0
      %v4520 = vadd.f32 %v3438, %v4519
      %v4521 = vand.u32 %v518, 4294901760
      %v4522 = vsub.f32 %v518, %v4521
      %4523 = vmatmul.f32.gmra.mxu0 %v4522
      %v4524 = vpop.f32.mrf.mxu0
      %v4525 = vadd.f32 %v3442, %v4524
      %v4526 = vand.u32 %v521, 4294901760
      %v4527 = vsub.f32 %v521, %v4526
      %4528 = vmatmul.f32.gmra.mxu0 %v4527
      %v4529 = vpop.f32.mrf.mxu0
      %v4530 = vadd.f32 %v3446, %v4529
      %v4531 = vand.u32 %v524, 4294901760
      %v4532 = vsub.f32 %v524, %v4531
      %4533 = vmatmul.f32.gmra.mxu0 %v4532
      %v4534 = vpop.f32.mrf.mxu0
      %v4535 = vadd.f32 %v3450, %v4534
      %v4536 = vand.u32 %v527, 4294901760
      %v4537 = vsub.f32 %v527, %v4536
      %4538 = vmatmul.f32.gmra.mxu0 %v4537
      %v4539 = vpop.f32.mrf.mxu0
      %v4540 = vadd.f32 %v3454, %v4539
      %v4541 = vand.u32 %v530, 4294901760
      %v4542 = vsub.f32 %v530, %v4541
      %4543 = vmatmul.f32.gmra.mxu0 %v4542
      %v4544 = vpop.f32.mrf.mxu0
      %v4545 = vadd.f32 %v3458, %v4544
      %v4546 = vand.u32 %v533, 4294901760
      %v4547 = vsub.f32 %v533, %v4546
      %4548 = vmatmul.f32.gmra.mxu0 %v4547
      %v4549 = vpop.f32.mrf.mxu0
      %v4550 = vadd.f32 %v3462, %v4549
      %v4551 = vand.u32 %v536, 4294901760
      %v4552 = vsub.f32 %v536, %v4551
      %4553 = vmatmul.f32.gmra.mxu0 %v4552
      %v4554 = vpop.f32.mrf.mxu0
      %v4555 = vadd.f32 %v3466, %v4554
      %v4556 = vand.u32 %v539, 4294901760
      %v4557 = vsub.f32 %v539, %v4556
      %4558 = vmatmul.f32.gmra.mxu0 %v4557
      %v4559 = vpop.f32.mrf.mxu0
      %v4560 = vadd.f32 %v3470, %v4559
      %v4561 = vand.u32 %v542, 4294901760
      %v4562 = vsub.f32 %v542, %v4561
      %4563 = vmatmul.f32.gmra.mxu0 %v4562
      %v4564 = vpop.f32.mrf.mxu0
      %v4565 = vadd.f32 %v3474, %v4564
      %v4566 = vand.u32 %v545, 4294901760
      %v4567 = vsub.f32 %v545, %v4566
      %4568 = vmatmul.f32.gmra.mxu0 %v4567
      %v4569 = vpop.f32.mrf.mxu0
      %v4570 = vadd.f32 %v3478, %v4569
      %v4571 = vand.u32 %v548, 4294901760
      %v4572 = vsub.f32 %v548, %v4571
      %4573 = vmatmul.f32.gmra.mxu0 %v4572
      %v4574 = vpop.f32.mrf.mxu0
      %v4575 = vadd.f32 %v3482, %v4574
      %v4576 = vand.u32 %v551, 4294901760
      %v4577 = vsub.f32 %v551, %v4576
      %4578 = vmatmul.f32.gmra.mxu0 %v4577
      %v4579 = vpop.f32.mrf.mxu0
      %v4580 = vadd.f32 %v3486, %v4579
      %v4581 = vand.u32 %v554, 4294901760
      %v4582 = vsub.f32 %v554, %v4581
      %4583 = vmatmul.f32.gmra.mxu0 %v4582
      %v4584 = vpop.f32.mrf.mxu0
      %v4585 = vadd.f32 %v3490, %v4584
      %v4586 = vand.u32 %v557, 4294901760
      %v4587 = vsub.f32 %v557, %v4586
      %4588 = vmatmul.f32.gmra.mxu0 %v4587
      %v4589 = vpop.f32.mrf.mxu0
      %v4590 = vadd.f32 %v3494, %v4589
      %v4591 = vand.u32 %v560, 4294901760
      %v4592 = vsub.f32 %v560, %v4591
      %4593 = vmatmul.f32.gmra.mxu0 %v4592
      %v4594 = vpop.f32.mrf.mxu0
      %v4595 = vadd.f32 %v3498, %v4594
      %v4596 = vand.u32 %v563, 4294901760
      %v4597 = vsub.f32 %v563, %v4596
      %4598 = vmatmul.f32.gmra.mxu0 %v4597
      %v4599 = vpop.f32.mrf.mxu0
      %v4600 = vadd.f32 %v3502, %v4599
      %v4601 = vand.u32 %v566, 4294901760
      %v4602 = vsub.f32 %v566, %v4601
      %4603 = vmatmul.f32.gmra.mxu0 %v4602
      %v4604 = vpop.f32.mrf.mxu0
      %v4605 = vadd.f32 %v3506, %v4604
      %v4606 = vand.u32 %v569, 4294901760
      %v4607 = vsub.f32 %v569, %v4606
      %4608 = vmatmul.f32.gmra.mxu0 %v4607
      %v4609 = vpop.f32.mrf.mxu0
      %v4610 = vadd.f32 %v3510, %v4609
      %v4611 = vand.u32 %v572, 4294901760
      %v4612 = vsub.f32 %v572, %v4611
      %4613 = vmatmul.f32.gmra.mxu0 %v4612
      %v4614 = vpop.f32.mrf.mxu0
      %v4615 = vadd.f32 %v3514, %v4614
      %v4616 = vand.u32 %v575, 4294901760
      %v4617 = vsub.f32 %v575, %v4616
      %4618 = vmatmul.f32.gmra.mxu0 %v4617
      %v4619 = vpop.f32.mrf.mxu0
      %v4620 = vadd.f32 %v3518, %v4619
      %v4621 = vand.u32 %v578, 4294901760
      %v4622 = vsub.f32 %v578, %v4621
      %4623 = vmatmul.f32.gmra.mxu0 %v4622
      %v4624 = vpop.f32.mrf.mxu0
      %v4625 = vadd.f32 %v3522, %v4624
      %v4626 = vand.u32 %v581, 4294901760
      %v4627 = vsub.f32 %v581, %v4626
      %4628 = vmatmul.f32.gmra.mxu0 %v4627
      %v4629 = vpop.f32.mrf.mxu0
      %v4630 = vadd.f32 %v3526, %v4629
      %v4631 = vand.u32 %v584, 4294901760
      %v4632 = vsub.f32 %v584, %v4631
      %4633 = vmatmul.f32.gmra.mxu0 %v4632
      %v4634 = vpop.f32.mrf.mxu0
      %v4635 = vadd.f32 %v3530, %v4634
      %v4636 = vand.u32 %v587, 4294901760
      %v4637 = vsub.f32 %v587, %v4636
      %4638 = vmatmul.f32.gmra.mxu0 %v4637
      %v4639 = vpop.f32.mrf.mxu0
      %v4640 = vadd.f32 %v3534, %v4639
      %v4641 = vand.u32 %v590, 4294901760
      %v4642 = vsub.f32 %v590, %v4641
      %4643 = vmatmul.f32.gmra.mxu0 %v4642
      %v4644 = vpop.f32.mrf.mxu0
      %v4645 = vadd.f32 %v3538, %v4644
      %v4646 = vand.u32 %v593, 4294901760
      %v4647 = vsub.f32 %v593, %v4646
      %4648 = vmatmul.f32.gmra.mxu0 %v4647
      %v4649 = vpop.f32.mrf.mxu0
      %v4650 = vadd.f32 %v3542, %v4649
      %v4651 = vand.u32 %v596, 4294901760
      %v4652 = vsub.f32 %v596, %v4651
      %4653 = vmatmul.f32.gmra.mxu0 %v4652
      %v4654 = vpop.f32.mrf.mxu0
      %v4655 = vadd.f32 %v3546, %v4654
      %v4656 = vand.u32 %v599, 4294901760
      %v4657 = vsub.f32 %v599, %v4656
      %4658 = vmatmul.f32.gmra.mxu0 %v4657
      %v4659 = vpop.f32.mrf.mxu0
      %v4660 = vadd.f32 %v3550, %v4659
      %v4661 = vand.u32 %v602, 4294901760
      %v4662 = vsub.f32 %v602, %v4661
      %4663 = vmatmul.f32.gmra.mxu0 %v4662
      %v4664 = vpop.f32.mrf.mxu0
      %v4665 = vadd.f32 %v3554, %v4664
      %v4666 = vand.u32 %v605, 4294901760
      %v4667 = vsub.f32 %v605, %v4666
      %4668 = vmatmul.f32.gmra.mxu0 %v4667
      %v4669 = vpop.f32.mrf.mxu0
      %v4670 = vadd.f32 %v3558, %v4669
      %v4671 = vand.u32 %v608, 4294901760
      %v4672 = vsub.f32 %v608, %v4671
      %4673 = vmatmul.f32.gmra.mxu0 %v4672
      %v4674 = vpop.f32.mrf.mxu0
      %v4675 = vadd.f32 %v3562, %v4674
      %v4676 = vand.u32 %v611, 4294901760
      %v4677 = vsub.f32 %v611, %v4676
      %4678 = vmatmul.f32.gmra.mxu0 %v4677
      %v4679 = vpop.f32.mrf.mxu0
      %v4680 = vadd.f32 %v3566, %v4679
      %v4681 = vand.u32 %v614, 4294901760
      %v4682 = vsub.f32 %v614, %v4681
      %4683 = vmatmul.f32.gmra.mxu0 %v4682
      %v4684 = vpop.f32.mrf.mxu0
      %v4685 = vadd.f32 %v3570, %v4684
      %v4686 = vand.u32 %v617, 4294901760
      %v4687 = vsub.f32 %v617, %v4686
      %4688 = vmatmul.f32.gmra.mxu0 %v4687
      %v4689 = vpop.f32.mrf.mxu0
      %v4690 = vadd.f32 %v3574, %v4689
      %v4691 = vand.u32 %v620, 4294901760
      %v4692 = vsub.f32 %v620, %v4691
      %4693 = vmatmul.f32.gmra.mxu0 %v4692
      %v4694 = vpop.f32.mrf.mxu0
      %v4695 = vadd.f32 %v3578, %v4694
      %v4696 = vand.u32 %v623, 4294901760
      %v4697 = vsub.f32 %v623, %v4696
      %4698 = vmatmul.f32.gmra.mxu0 %v4697
      %v4699 = vpop.f32.mrf.mxu0
      %v4700 = vadd.f32 %v3582, %v4699
      %v4701 = vand.u32 %v626, 4294901760
      %v4702 = vsub.f32 %v626, %v4701
      %4703 = vmatmul.f32.gmra.mxu0 %v4702
      %v4704 = vpop.f32.mrf.mxu0
      %v4705 = vadd.f32 %v3586, %v4704
      %v4706 = vand.u32 %v629, 4294901760
      %v4707 = vsub.f32 %v629, %v4706
      %4708 = vmatmul.f32.gmra.mxu0 %v4707
      %v4709 = vpop.f32.mrf.mxu0
      %v4710 = vadd.f32 %v3590, %v4709
      %v4711 = vand.u32 %v632, 4294901760
      %v4712 = vsub.f32 %v632, %v4711
      %4713 = vmatmul.f32.gmra.mxu0 %v4712
      %v4714 = vpop.f32.mrf.mxu0
      %v4715 = vadd.f32 %v3594, %v4714
      %v4716 = vand.u32 %v635, 4294901760
      %v4717 = vsub.f32 %v635, %v4716
      %4718 = vmatmul.f32.gmra.mxu0 %v4717
      %v4719 = vpop.f32.mrf.mxu0
      %v4720 = vadd.f32 %v3598, %v4719
      %v4721 = vand.u32 %v638, 4294901760
      %v4722 = vsub.f32 %v638, %v4721
      %4723 = vmatmul.f32.gmra.mxu0 %v4722
      %v4724 = vpop.f32.mrf.mxu0
      %v4725 = vadd.f32 %v3602, %v4724
      %v4726 = vand.u32 %v641, 4294901760
      %v4727 = vsub.f32 %v641, %v4726
      %4728 = vmatmul.f32.gmra.mxu0 %v4727
      %v4729 = vpop.f32.mrf.mxu0
      %v4730 = vadd.f32 %v3606, %v4729
      %v4731 = vand.u32 %v644, 4294901760
      %v4732 = vsub.f32 %v644, %v4731
      %4733 = vmatmul.f32.gmra.mxu0 %v4732
      %v4734 = vpop.f32.mrf.mxu0
      %v4735 = vadd.f32 %v3610, %v4734
      %v4736 = vand.u32 %v647, 4294901760
      %v4737 = vsub.f32 %v647, %v4736
      %4738 = vmatmul.f32.gmra.mxu0 %v4737
      %v4739 = vpop.f32.mrf.mxu0
      %v4740 = vadd.f32 %v3614, %v4739
      %v4741 = vand.u32 %v650, 4294901760
      %v4742 = vsub.f32 %v650, %v4741
      %4743 = vmatmul.f32.gmra.mxu0 %v4742
      %v4744 = vpop.f32.mrf.mxu0
      %v4745 = vadd.f32 %v3618, %v4744
      %v4746 = vand.u32 %v653, 4294901760
      %v4747 = vsub.f32 %v653, %v4746
      %4748 = vmatmul.f32.gmra.mxu0 %v4747
      %v4749 = vpop.f32.mrf.mxu0
      %v4750 = vadd.f32 %v3622, %v4749
      %v4751 = vand.u32 %v656, 4294901760
      %v4752 = vsub.f32 %v656, %v4751
      %4753 = vmatmul.f32.gmra.mxu0 %v4752
      %v4754 = vpop.f32.mrf.mxu0
      %v4755 = vadd.f32 %v3626, %v4754
      %v4756 = vand.u32 %v659, 4294901760
      %v4757 = vsub.f32 %v659, %v4756
      %4758 = vmatmul.f32.gmra.mxu0 %v4757
      %v4759 = vpop.f32.mrf.mxu0
      %v4760 = vadd.f32 %v3630, %v4759
      %v4761 = vand.u32 %v662, 4294901760
      %v4762 = vsub.f32 %v662, %v4761
      %4763 = vmatmul.f32.gmra.mxu0 %v4762
      %v4764 = vpop.f32.mrf.mxu0
      %v4765 = vadd.f32 %v3634, %v4764
      %v4766 = vand.u32 %v665, 4294901760
      %v4767 = vsub.f32 %v665, %v4766
      %4768 = vmatmul.f32.gmra.mxu0 %v4767
      %v4769 = vpop.f32.mrf.mxu0
      %v4770 = vadd.f32 %v3638, %v4769
      %v4771 = vand.u32 %v668, 4294901760
      %v4772 = vsub.f32 %v668, %v4771
      %4773 = vmatmul.f32.gmra.mxu0 %v4772
      %v4774 = vpop.f32.mrf.mxu0
      %v4775 = vadd.f32 %v3642, %v4774
      %v4776 = vand.u32 %v671, 4294901760
      %v4777 = vsub.f32 %v671, %v4776
      %4778 = vmatmul.f32.gmra.mxu0 %v4777
      %v4779 = vpop.f32.mrf.mxu0
      %v4780 = vadd.f32 %v3646, %v4779
      %v4781 = vand.u32 %v674, 4294901760
      %v4782 = vsub.f32 %v674, %v4781
      %4783 = vmatmul.f32.gmra.mxu0 %v4782
      %v4784 = vpop.f32.mrf.mxu0
      %v4785 = vadd.f32 %v3650, %v4784
      %v4786 = vand.u32 %v677, 4294901760
      %v4787 = vsub.f32 %v677, %v4786
      %4788 = vmatmul.f32.gmra.mxu0 %v4787
      %v4789 = vpop.f32.mrf.mxu0
      %v4790 = vadd.f32 %v3654, %v4789
      %v4791 = vand.u32 %v680, 4294901760
      %v4792 = vsub.f32 %v680, %v4791
      %4793 = vmatmul.f32.gmra.mxu0 %v4792
      %v4794 = vpop.f32.mrf.mxu0
      %v4795 = vadd.f32 %v3658, %v4794
      %v4796 = vand.u32 %v683, 4294901760
      %v4797 = vsub.f32 %v683, %v4796
      %4798 = vmatmul.f32.gmra.mxu0 %v4797
      %v4799 = vpop.f32.mrf.mxu0
      %v4800 = vadd.f32 %v3662, %v4799
      %v4801 = vand.u32 %v686, 4294901760
      %v4802 = vsub.f32 %v686, %v4801
      %4803 = vmatmul.f32.gmra.mxu0 %v4802
      %v4804 = vpop.f32.mrf.mxu0
      %v4805 = vadd.f32 %v3666, %v4804
      %v4806 = vand.u32 %v689, 4294901760
      %v4807 = vsub.f32 %v689, %v4806
      %4808 = vmatmul.f32.gmra.mxu0 %v4807
      %v4809 = vpop.f32.mrf.mxu0
      %v4810 = vadd.f32 %v3670, %v4809
      %v4811 = vand.u32 %v692, 4294901760
      %v4812 = vsub.f32 %v692, %v4811
      %4813 = vmatmul.f32.gmra.mxu0 %v4812
      %v4814 = vpop.f32.mrf.mxu0
      %v4815 = vadd.f32 %v3674, %v4814
      %v4816 = vand.u32 %v695, 4294901760
      %v4817 = vsub.f32 %v695, %v4816
      %4818 = vmatmul.f32.gmra.mxu0 %v4817
      %v4819 = vpop.f32.mrf.mxu0
      %v4820 = vadd.f32 %v3678, %v4819
      %v4821 = vand.u32 %v698, 4294901760
      %v4822 = vsub.f32 %v698, %v4821
      %4823 = vmatmul.f32.gmra.mxu0 %v4822
      %v4824 = vpop.f32.mrf.mxu0
      %v4825 = vadd.f32 %v3682, %v4824
      %v4826 = vand.u32 %v701, 4294901760
      %v4827 = vsub.f32 %v701, %v4826
      %4828 = vmatmul.f32.gmra.mxu0 %v4827
      %v4829 = vpop.f32.mrf.mxu0
      %v4830 = vadd.f32 %v3686, %v4829
      %v4831 = vand.u32 %v704, 4294901760
      %v4832 = vsub.f32 %v704, %v4831
      %4833 = vmatmul.f32.gmra.mxu0 %v4832
      %v4834 = vpop.f32.mrf.mxu0
      %v4835 = vadd.f32 %v3690, %v4834
      %v4836 = vand.u32 %v707, 4294901760
      %v4837 = vsub.f32 %v707, %v4836
      %4838 = vmatmul.f32.gmra.mxu0 %v4837
      %v4839 = vpop.f32.mrf.mxu0
      %v4840 = vadd.f32 %v3694, %v4839
      %v4841 = vand.u32 %v710, 4294901760
      %v4842 = vsub.f32 %v710, %v4841
      %4843 = vmatmul.f32.gmra.mxu0 %v4842
      %v4844 = vpop.f32.mrf.mxu0
      %v4845 = vadd.f32 %v3698, %v4844
      %v4846 = vand.u32 %v713, 4294901760
      %v4847 = vsub.f32 %v713, %v4846
      %4848 = vmatmul.f32.gmra.mxu0 %v4847
      %v4849 = vpop.f32.mrf.mxu0
      %v4850 = vadd.f32 %v3702, %v4849
      %v4851 = vand.u32 %v716, 4294901760
      %v4852 = vsub.f32 %v716, %v4851
      %4853 = vmatmul.f32.gmra.mxu0 %v4852
      %v4854 = vpop.f32.mrf.mxu0
      %v4855 = vadd.f32 %v3706, %v4854
      %v4856 = vand.u32 %v719, 4294901760
      %v4857 = vsub.f32 %v719, %v4856
      %4858 = vmatmul.f32.gmra.mxu0 %v4857
      %v4859 = vpop.f32.mrf.mxu0
      %v4860 = vadd.f32 %v3710, %v4859
      %v4861 = vand.u32 %v722, 4294901760
      %v4862 = vsub.f32 %v722, %v4861
      %4863 = vmatmul.f32.gmra.mxu0 %v4862
      %v4864 = vpop.f32.mrf.mxu0
      %v4865 = vadd.f32 %v3714, %v4864
      %v4866 = vand.u32 %v725, 4294901760
      %v4867 = vsub.f32 %v725, %v4866
      %4868 = vmatmul.f32.gmra.mxu0 %v4867
      %v4869 = vpop.f32.mrf.mxu0
      %v4870 = vadd.f32 %v3718, %v4869
      %v4871 = vand.u32 %v728, 4294901760
      %v4872 = vsub.f32 %v728, %v4871
      %4873 = vmatmul.f32.gmra.mxu0 %v4872
      %v4874 = vpop.f32.mrf.mxu0
      %v4875 = vadd.f32 %v3722, %v4874
      %v4876 = vand.u32 %v731, 4294901760
      %v4877 = vsub.f32 %v731, %v4876
      %4878 = vmatmul.f32.gmra.mxu0 %v4877
      %v4879 = vpop.f32.mrf.mxu0
      %v4880 = vadd.f32 %v3726, %v4879
      %v4881 = vand.u32 %v734, 4294901760
      %v4882 = vsub.f32 %v734, %v4881
      %4883 = vmatmul.f32.gmra.mxu0 %v4882
      %v4884 = vpop.f32.mrf.mxu0
      %v4885 = vadd.f32 %v3730, %v4884
      %v4886 = vand.u32 %v737, 4294901760
      %v4887 = vsub.f32 %v737, %v4886
      %4888 = vmatmul.f32.gmra.mxu0 %v4887
      %v4889 = vpop.f32.mrf.mxu0
      %v4890 = vadd.f32 %v3734, %v4889
      %v4891 = vand.u32 %v740, 4294901760
      %v4892 = vsub.f32 %v740, %v4891
      %4893 = vmatmul.f32.gmra.mxu0 %v4892
      %v4894 = vpop.f32.mrf.mxu0
      %v4895 = vadd.f32 %v3738, %v4894
      %v4896 = vand.u32 %v743, 4294901760
      %v4897 = vsub.f32 %v743, %v4896
      %4898 = vmatmul.f32.gmra.mxu0 %v4897
      %v4899 = vpop.f32.mrf.mxu0
      %v4900 = vadd.f32 %v3742, %v4899
      %v4901 = vand.u32 %v746, 4294901760
      %v4902 = vsub.f32 %v746, %v4901
      %4903 = vmatmul.f32.gmra.mxu0 %v4902
      %v4904 = vpop.f32.mrf.mxu0
      %v4905 = vadd.f32 %v3746, %v4904
      %v4906 = vand.u32 %v749, 4294901760
      %v4907 = vsub.f32 %v749, %v4906
      %4908 = vmatmul.f32.gmra.mxu0 %v4907
      %v4909 = vpop.f32.mrf.mxu0
      %v4910 = vadd.f32 %v3750, %v4909
      %v4911 = vand.u32 %v752, 4294901760
      %v4912 = vsub.f32 %v752, %v4911
      %4913 = vmatmul.f32.gmra.mxu0 %v4912
      %v4914 = vpop.f32.mrf.mxu0
      %v4915 = vadd.f32 %v3754, %v4914
      %v4916 = vand.u32 %v755, 4294901760
      %v4917 = vsub.f32 %v755, %v4916
      %4918 = vmatmul.f32.gmra.mxu0 %v4917
      %v4919 = vpop.f32.mrf.mxu0
      %v4920 = vadd.f32 %v3758, %v4919
      %v4921 = vand.u32 %v758, 4294901760
      %v4922 = vsub.f32 %v758, %v4921
      %4923 = vmatmul.f32.gmra.mxu0 %v4922
      %v4924 = vpop.f32.mrf.mxu0
      %v4925 = vadd.f32 %v3762, %v4924
      %v4926 = vand.u32 %v761, 4294901760
      %v4927 = vsub.f32 %v761, %v4926
      %4928 = vmatmul.f32.gmra.mxu0 %v4927
      %v4929 = vpop.f32.mrf.mxu0
      %v4930 = vadd.f32 %v3766, %v4929
      %v4931 = vand.u32 %v764, 4294901760
      %v4932 = vsub.f32 %v764, %v4931
      %4933 = vmatmul.f32.gmra.mxu0 %v4932
      %v4934 = vpop.f32.mrf.mxu0
      %v4935 = vadd.f32 %v3770, %v4934
      %v4936 = vand.u32 %v767, 4294901760
      %v4937 = vsub.f32 %v767, %v4936
      %4938 = vmatmul.f32.gmra.mxu0 %v4937
      %v4939 = vpop.f32.mrf.mxu0
      %v4940 = vadd.f32 %v3774, %v4939
      %v4941 = vand.u32 %v770, 4294901760
      %v4942 = vsub.f32 %v770, %v4941
      %4943 = vmatmul.f32.gmra.mxu0 %v4942
      %v4944 = vpop.f32.mrf.mxu0
      %v4945 = vadd.f32 %v3778, %v4944
      %v4946 = vand.u32 %v773, 4294901760
      %v4947 = vsub.f32 %v773, %v4946
      %4948 = vmatmul.f32.gmra.mxu0 %v4947
      %v4949 = vpop.f32.mrf.mxu0
      %v4950 = vadd.f32 %v3782, %v4949
      %v4951 = vand.u32 %v776, 4294901760
      %v4952 = vsub.f32 %v776, %v4951
      %4953 = vmatmul.f32.gmra.mxu0 %v4952
      %v4954 = vpop.f32.mrf.mxu0
      %v4955 = vadd.f32 %v3786, %v4954
      %v4956 = vand.u32 %v779, 4294901760
      %v4957 = vsub.f32 %v779, %v4956
      %4958 = vmatmul.f32.gmra.mxu0 %v4957
      %v4959 = vpop.f32.mrf.mxu0
      %v4960 = vadd.f32 %v3790, %v4959
      %v4961 = vand.u32 %v782, 4294901760
      %v4962 = vsub.f32 %v782, %v4961
      %4963 = vmatmul.f32.gmra.mxu0 %v4962
      %v4964 = vpop.f32.mrf.mxu0
      %v4965 = vadd.f32 %v3794, %v4964
      %v4966 = vand.u32 %v785, 4294901760
      %v4967 = vsub.f32 %v785, %v4966
      %4968 = vmatmul.f32.gmra.mxu0 %v4967
      %v4969 = vpop.f32.mrf.mxu0
      %v4970 = vadd.f32 %v3798, %v4969
      %v4971 = vand.u32 %v788, 4294901760
      %v4972 = vsub.f32 %v788, %v4971
      %4973 = vmatmul.f32.gmra.mxu0 %v4972
      %v4974 = vpop.f32.mrf.mxu0
      %v4975 = vadd.f32 %v3802, %v4974
      %v4976 = vand.u32 %v791, 4294901760
      %v4977 = vsub.f32 %v791, %v4976
      %4978 = vmatmul.f32.gmra.mxu0 %v4977
      %v4979 = vpop.f32.mrf.mxu0
      %v4980 = vadd.f32 %v3806, %v4979
      %v4981 = vand.u32 %v794, 4294901760
      %v4982 = vsub.f32 %v794, %v4981
      %4983 = vmatmul.f32.gmra.mxu0 %v4982
      %v4984 = vpop.f32.mrf.mxu0
      %v4985 = vadd.f32 %v3810, %v4984
      %v4986 = vand.u32 %v797, 4294901760
      %v4987 = vsub.f32 %v797, %v4986
      %4988 = vmatmul.f32.gmra.mxu0 %v4987
      %v4989 = vpop.f32.mrf.mxu0
      %v4990 = vadd.f32 %v3814, %v4989
      %v4991 = vand.u32 %v800, 4294901760
      %v4992 = vsub.f32 %v800, %v4991
      %4993 = vmatmul.f32.gmra.mxu0 %v4992
      %v4994 = vpop.f32.mrf.mxu0
      %v4995 = vadd.f32 %v3818, %v4994
      %v4996 = vand.u32 %v803, 4294901760
      %v4997 = vsub.f32 %v803, %v4996
      %4998 = vmatmul.f32.gmra.mxu0 %v4997
      %v4999 = vpop.f32.mrf.mxu0
      %v5000 = vadd.f32 %v3822, %v4999
      %v5001 = vand.u32 %v806, 4294901760
      %v5002 = vsub.f32 %v806, %v5001
      %5003 = vmatmul.f32.gmra.mxu0 %v5002
      %v5004 = vpop.f32.mrf.mxu0
      %v5005 = vadd.f32 %v3826, %v5004
      %v5006 = vand.u32 %v809, 4294901760
      %v5007 = vsub.f32 %v809, %v5006
      %5008 = vmatmul.f32.gmra.mxu0 %v5007
      %v5009 = vpop.f32.mrf.mxu0
      %v5010 = vadd.f32 %v3830, %v5009
      %v5011 = vand.u32 %v812, 4294901760
      %v5012 = vsub.f32 %v812, %v5011
      %5013 = vmatmul.f32.gmra.mxu0 %v5012
      %v5014 = vpop.f32.mrf.mxu0
      %v5015 = vadd.f32 %v3834, %v5014
      %v5016 = vand.u32 %v815, 4294901760
      %v5017 = vsub.f32 %v815, %v5016
      %5018 = vmatmul.f32.gmra.mxu0 %v5017
      %v5019 = vpop.f32.mrf.mxu0
      %v5020 = vadd.f32 %v3838, %v5019
      %v5021 = vand.u32 %v818, 4294901760
      %v5022 = vsub.f32 %v818, %v5021
      %5023 = vmatmul.f32.gmra.mxu0 %v5022
      %v5024 = vpop.f32.mrf.mxu0
      %v5025 = vadd.f32 %v3842, %v5024
      %v5026 = vand.u32 %v821, 4294901760
      %v5027 = vsub.f32 %v821, %v5026
      %5028 = vmatmul.f32.gmra.mxu0 %v5027
      %v5029 = vpop.f32.mrf.mxu0
      %v5030 = vadd.f32 %v3846, %v5029
      %v5031 = vand.u32 %v824, 4294901760
      %v5032 = vsub.f32 %v824, %v5031
      %5033 = vmatmul.f32.gmra.mxu0 %v5032
      %v5034 = vpop.f32.mrf.mxu0
      %v5035 = vadd.f32 %v3850, %v5034
      %v5036 = vand.u32 %v827, 4294901760
      %v5037 = vsub.f32 %v827, %v5036
      %5038 = vmatmul.f32.gmra.mxu0 %v5037
      %v5039 = vpop.f32.mrf.mxu0
      %v5040 = vadd.f32 %v3854, %v5039
      %v5041 = vand.u32 %v830, 4294901760
      %v5042 = vsub.f32 %v830, %v5041
      %5043 = vmatmul.f32.gmra.mxu0 %v5042
      %v5044 = vpop.f32.mrf.mxu0
      %v5045 = vadd.f32 %v3858, %v5044
      %v5046 = vand.u32 %v833, 4294901760
      %v5047 = vsub.f32 %v833, %v5046
      %5048 = vmatmul.f32.gmra.mxu0 %v5047
      %v5049 = vpop.f32.mrf.mxu0
      %v5050 = vadd.f32 %v3862, %v5049
      %v5051 = vand.u32 %v836, 4294901760
      %v5052 = vsub.f32 %v836, %v5051
      %5053 = vmatmul.f32.gmra.mxu0 %v5052
      %v5054 = vpop.f32.mrf.mxu0
      %v5055 = vadd.f32 %v3866, %v5054
      %v5056 = vand.u32 %v839, 4294901760
      %v5057 = vsub.f32 %v839, %v5056
      %5058 = vmatmul.f32.gmra.mxu0 %v5057
      %v5059 = vpop.f32.mrf.mxu0
      %v5060 = vadd.f32 %v3870, %v5059
      %v5061 = vand.u32 %v842, 4294901760
      %v5062 = vsub.f32 %v842, %v5061
      %5063 = vmatmul.f32.gmra.mxu0 %v5062
      %v5064 = vpop.f32.mrf.mxu0
      %v5065 = vadd.f32 %v3874, %v5064
      %v5066 = vand.u32 %v845, 4294901760
      %v5067 = vsub.f32 %v845, %v5066
      %5068 = vmatmul.f32.gmra.mxu0 %v5067
      %v5069 = vpop.f32.mrf.mxu0
      %v5070 = vadd.f32 %v3878, %v5069
      %v5071 = vand.u32 %v848, 4294901760
      %v5072 = vsub.f32 %v848, %v5071
      %5073 = vmatmul.f32.gmra.mxu0 %v5072
      %v5074 = vpop.f32.mrf.mxu0
      %v5075 = vadd.f32 %v3882, %v5074
      %v5076 = vand.u32 %v851, 4294901760
      %v5077 = vsub.f32 %v851, %v5076
      %5078 = vmatmul.f32.gmra.mxu0 %v5077
      %v5079 = vpop.f32.mrf.mxu0
      %v5080 = vadd.f32 %v3886, %v5079
      %v5081 = vand.u32 %v854, 4294901760
      %v5082 = vsub.f32 %v854, %v5081
      %5083 = vmatmul.f32.gmra.mxu0 %v5082
      %v5084 = vpop.f32.mrf.mxu0
      %v5085 = vadd.f32 %v3890, %v5084
      %v5086 = vand.u32 %v857, 4294901760
      %v5087 = vsub.f32 %v857, %v5086
      %5088 = vmatmul.f32.gmra.mxu0 %v5087
      %v5089 = vpop.f32.mrf.mxu0
      %v5090 = vadd.f32 %v3894, %v5089
      %v5091 = vand.u32 %v860, 4294901760
      %v5092 = vsub.f32 %v860, %v5091
      %5093 = vmatmul.f32.gmra.mxu0 %v5092
      %v5094 = vpop.f32.mrf.mxu0
      %v5095 = vadd.f32 %v3898, %v5094
      %v5096 = vand.u32 %v863, 4294901760
      %v5097 = vsub.f32 %v863, %v5096
      %5098 = vmatmul.f32.gmra.mxu0 %v5097
      %v5099 = vpop.f32.mrf.mxu0
      %v5100 = vadd.f32 %v3902, %v5099
      %v5101 = vand.u32 %v866, 4294901760
      %v5102 = vsub.f32 %v866, %v5101
      %5103 = vmatmul.f32.gmra.mxu0 %v5102
      %v5104 = vpop.f32.mrf.mxu0
      %v5105 = vadd.f32 %v3906, %v5104
      %v5106 = vand.u32 %v869, 4294901760
      %v5107 = vsub.f32 %v869, %v5106
      %5108 = vmatmul.f32.gmra.mxu0 %v5107
      %v5109 = vpop.f32.mrf.mxu0
      %v5110 = vadd.f32 %v3910, %v5109
      %v5111 = vand.u32 %v872, 4294901760
      %v5112 = vsub.f32 %v872, %v5111
      %5113 = vmatmul.f32.gmra.mxu0 %v5112
      %v5114 = vpop.f32.mrf.mxu0
      %v5115 = vadd.f32 %v3914, %v5114
      %v5116 = vand.u32 %v875, 4294901760
      %v5117 = vsub.f32 %v875, %v5116
      %5118 = vmatmul.f32.gmra.mxu0 %v5117
      %v5119 = vpop.f32.mrf.mxu0
      %v5120 = vadd.f32 %v3918, %v5119
      %v5121 = vand.u32 %v878, 4294901760
      %v5122 = vsub.f32 %v878, %v5121
      %5123 = vmatmul.f32.gmra.mxu0 %v5122
      %v5124 = vpop.f32.mrf.mxu0
      %v5125 = vadd.f32 %v3922, %v5124
      %v5126 = vand.u32 %v881, 4294901760
      %v5127 = vsub.f32 %v881, %v5126
      %5128 = vmatmul.f32.gmra.mxu0 %v5127
      %v5129 = vpop.f32.mrf.mxu0
      %v5130 = vadd.f32 %v3926, %v5129
      %v5131 = vand.u32 %v884, 4294901760
      %v5132 = vsub.f32 %v884, %v5131
      %5133 = vmatmul.f32.gmra.mxu0 %v5132
      %v5134 = vpop.f32.mrf.mxu0
      %v5135 = vadd.f32 %v3930, %v5134
      %v5136 = vand.u32 %v887, 4294901760
      %v5137 = vsub.f32 %v887, %v5136
      %5138 = vmatmul.f32.gmra.mxu0 %v5137
      %v5139 = vpop.f32.mrf.mxu0
      %v5140 = vadd.f32 %v3934, %v5139
      %v5141 = vand.u32 %v890, 4294901760
      %v5142 = vsub.f32 %v890, %v5141
      %5143 = vmatmul.f32.gmra.mxu0 %v5142
      %v5144 = vpop.f32.mrf.mxu0
      %v5145 = vadd.f32 %v3938, %v5144
      %v5146 = vand.u32 %v893, 4294901760
      %v5147 = vsub.f32 %v893, %v5146
      %5148 = vmatmul.f32.gmra.mxu0 %v5147
      %v5149 = vpop.f32.mrf.mxu0
      %v5150 = vadd.f32 %v3942, %v5149
      %v5151 = vand.u32 %v896, 4294901760
      %v5152 = vsub.f32 %v896, %v5151
      %5153 = vmatmul.f32.gmra.mxu0 %v5152
      %v5154 = vpop.f32.mrf.mxu0
      %v5155 = vadd.f32 %v3946, %v5154
      %v5156 = vand.u32 %v899, 4294901760
      %v5157 = vsub.f32 %v899, %v5156
      %5158 = vmatmul.f32.gmra.mxu0 %v5157
      %v5159 = vpop.f32.mrf.mxu0
      %v5160 = vadd.f32 %v3950, %v5159
      %v5161 = vand.u32 %v902, 4294901760
      %v5162 = vsub.f32 %v902, %v5161
      %5163 = vmatmul.f32.gmra.mxu0 %v5162
      %v5164 = vpop.f32.mrf.mxu0
      %v5165 = vadd.f32 %v3954, %v5164
      %v5166 = vand.u32 %v905, 4294901760
      %v5167 = vsub.f32 %v905, %v5166
      %5168 = vmatmul.f32.gmra.mxu0 %v5167
      %v5169 = vpop.f32.mrf.mxu0
      %v5170 = vadd.f32 %v3958, %v5169
      %v5171 = vand.u32 %v908, 4294901760
      %v5172 = vsub.f32 %v908, %v5171
      %5173 = vmatmul.f32.gmra.mxu0 %v5172
      %v5174 = vpop.f32.mrf.mxu0
      %v5175 = vadd.f32 %v3962, %v5174
      %v5176 = vand.u32 %v911, 4294901760
      %v5177 = vsub.f32 %v911, %v5176
      %5178 = vmatmul.f32.gmra.mxu0 %v5177
      %v5179 = vpop.f32.mrf.mxu0
      %v5180 = vadd.f32 %v3966, %v5179
      %v5181 = vand.u32 %v914, 4294901760
      %v5182 = vsub.f32 %v914, %v5181
      %5183 = vmatmul.f32.gmra.mxu0 %v5182
      %v5184 = vpop.f32.mrf.mxu0
      %v5185 = vadd.f32 %v3970, %v5184
      %v5186 = vand.u32 %v917, 4294901760
      %v5187 = vsub.f32 %v917, %v5186
      %5188 = vmatmul.f32.gmra.mxu0 %v5187
      %v5189 = vpop.f32.mrf.mxu0
      %v5190 = vadd.f32 %v3974, %v5189
      %v5191 = vand.u32 %v920, 4294901760
      %v5192 = vsub.f32 %v920, %v5191
      %5193 = vmatmul.f32.gmra.mxu0 %v5192
      %v5194 = vpop.f32.mrf.mxu0
      %v5195 = vadd.f32 %v3978, %v5194
      %v5196 = vand.u32 %v923, 4294901760
      %v5197 = vsub.f32 %v923, %v5196
      %5198 = vmatmul.f32.gmra.mxu0 %v5197
      %v5199 = vpop.f32.mrf.mxu0
      %v5200 = vadd.f32 %v3982, %v5199
      %v5201 = vand.u32 %v926, 4294901760
      %v5202 = vsub.f32 %v926, %v5201
      %5203 = vmatmul.f32.gmra.mxu0 %v5202
      %v5204 = vpop.f32.mrf.mxu0
      %v5205 = vadd.f32 %v3986, %v5204
      %v5206 = vand.u32 %v929, 4294901760
      %v5207 = vsub.f32 %v929, %v5206
      %5208 = vmatmul.f32.gmra.mxu0 %v5207
      %v5209 = vpop.f32.mrf.mxu0
      %v5210 = vadd.f32 %v3990, %v5209
      %v5211 = vand.u32 %v932, 4294901760
      %v5212 = vsub.f32 %v932, %v5211
      %5213 = vmatmul.f32.gmra.mxu0 %v5212
      %v5214 = vpop.f32.mrf.mxu0
      %v5215 = vadd.f32 %v3994, %v5214
      %v5216 = vand.u32 %v935, 4294901760
      %v5217 = vsub.f32 %v935, %v5216
      %5218 = vmatmul.f32.gmra.mxu0 %v5217
      %v5219 = vpop.f32.mrf.mxu0
      %v5220 = vadd.f32 %v3998, %v5219
      %v5221 = vand.u32 %v938, 4294901760
      %v5222 = vsub.f32 %v938, %v5221
      %5223 = vmatmul.f32.gmra.mxu0 %v5222
      %v5224 = vpop.f32.mrf.mxu0
      %v5225 = vadd.f32 %v4002, %v5224
      %v5226 = vand.u32 %v941, 4294901760
      %v5227 = vsub.f32 %v941, %v5226
      %5228 = vmatmul.f32.gmra.mxu0 %v5227
      %v5229 = vpop.f32.mrf.mxu0
      %v5230 = vadd.f32 %v4006, %v5229
      %v5231 = vand.u32 %v944, 4294901760
      %v5232 = vsub.f32 %v944, %v5231
      %5233 = vmatmul.f32.gmra.mxu0 %v5232
      %v5234 = vpop.f32.mrf.mxu0
      %v5235 = vadd.f32 %v4010, %v5234
      %v5236 = vand.u32 %v947, 4294901760
      %v5237 = vsub.f32 %v947, %v5236
      %5238 = vmatmul.f32.gmra.mxu0 %v5237
      %v5239 = vpop.f32.mrf.mxu0
      %v5240 = vadd.f32 %v4014, %v5239
      %v5241 = vand.u32 %v950, 4294901760
      %v5242 = vsub.f32 %v950, %v5241
      %5243 = vmatmul.f32.gmra.mxu0 %v5242
      %v5244 = vpop.f32.mrf.mxu0
      %v5245 = vadd.f32 %v4018, %v5244
      %v5246 = vand.u32 %v953, 4294901760
      %v5247 = vsub.f32 %v953, %v5246
      %5248 = vmatmul.f32.gmra.mxu0 %v5247
      %v5249 = vpop.f32.mrf.mxu0
      %v5250 = vadd.f32 %v4022, %v5249
      %v5251 = vand.u32 %v956, 4294901760
      %v5252 = vsub.f32 %v956, %v5251
      %5253 = vmatmul.f32.gmra.mxu0 %v5252
      %v5254 = vpop.f32.mrf.mxu0
      %v5255 = vadd.f32 %v4026, %v5254
      %v5256 = vand.u32 %v959, 4294901760
      %v5257 = vsub.f32 %v959, %v5256
      %5258 = vmatmul.f32.gmra.mxu0 %v5257
      %v5259 = vpop.f32.mrf.mxu0
      %v5260 = vadd.f32 %v4030, %v5259
      %v5261 = vand.u32 %v962, 4294901760
      %v5262 = vsub.f32 %v962, %v5261
      %5263 = vmatmul.f32.gmra.mxu0 %v5262
      %v5264 = vpop.f32.mrf.mxu0
      %v5265 = vadd.f32 %v4034, %v5264
      %v5266 = vand.u32 %v965, 4294901760
      %v5267 = vsub.f32 %v965, %v5266
      %5268 = vmatmul.f32.gmra.mxu0 %v5267
      %v5269 = vpop.f32.mrf.mxu0
      %v5270 = vadd.f32 %v4038, %v5269
      %v5271 = vand.u32 %v968, 4294901760
      %v5272 = vsub.f32 %v968, %v5271
      %5273 = vmatmul.f32.gmra.mxu0 %v5272
      %v5274 = vpop.f32.mrf.mxu0
      %v5275 = vadd.f32 %v4042, %v5274
      %v5276 = vand.u32 %v971, 4294901760
      %v5277 = vsub.f32 %v971, %v5276
      %5278 = vmatmul.f32.gmra.mxu0 %v5277
      %v5279 = vpop.f32.mrf.mxu0
      %v5280 = vadd.f32 %v4046, %v5279
      %v5281 = vand.u32 %v974, 4294901760
      %v5282 = vsub.f32 %v974, %v5281
      %5283 = vmatmul.f32.gmra.mxu0 %v5282
      %v5284 = vpop.f32.mrf.mxu0
      %v5285 = vadd.f32 %v4050, %v5284
      %v5286 = vand.u32 %v977, 4294901760
      %v5287 = vsub.f32 %v977, %v5286
      %5288 = vmatmul.f32.gmra.mxu0 %v5287
      %v5289 = vpop.f32.mrf.mxu0
      %v5290 = vadd.f32 %v4054, %v5289
      %v5291 = vand.u32 %v980, 4294901760
      %v5292 = vsub.f32 %v980, %v5291
      %5293 = vmatmul.f32.gmra.mxu0 %v5292
      %v5294 = vpop.f32.mrf.mxu0
      %v5295 = vadd.f32 %v4058, %v5294
      %v5296 = vand.u32 %v983, 4294901760
      %v5297 = vsub.f32 %v983, %v5296
      %5298 = vmatmul.f32.gmra.mxu0 %v5297
      %v5299 = vpop.f32.mrf.mxu0
      %v5300 = vadd.f32 %v4062, %v5299
      %v5301 = vand.u32 %v986, 4294901760
      %v5302 = vsub.f32 %v986, %v5301
      %5303 = vmatmul.f32.gmra.mxu0 %v5302
      %v5304 = vpop.f32.mrf.mxu0
      %v5305 = vadd.f32 %v4066, %v5304
      %v5306 = vand.u32 %v989, 4294901760
      %v5307 = vsub.f32 %v989, %v5306
      %5308 = vmatmul.f32.gmra.mxu0 %v5307
      %v5309 = vpop.f32.mrf.mxu0
      %v5310 = vadd.f32 %v4070, %v5309
      %v5311 = vand.u32 %v992, 4294901760
      %v5312 = vsub.f32 %v992, %v5311
      %5313 = vmatmul.f32.gmra.mxu0 %v5312
      %v5314 = vpop.f32.mrf.mxu0
      %v5315 = vadd.f32 %v4074, %v5314
      %v5316 = vand.u32 %v995, 4294901760
      %v5317 = vsub.f32 %v995, %v5316
      %5318 = vmatmul.f32.gmra.mxu0 %v5317
      %v5319 = vpop.f32.mrf.mxu0
      %v5320 = vadd.f32 %v4078, %v5319
      %v5321 = vand.u32 %v998, 4294901760
      %v5322 = vsub.f32 %v998, %v5321
      %5323 = vmatmul.f32.gmra.mxu0 %v5322
      %v5324 = vpop.f32.mrf.mxu0
      %v5325 = vadd.f32 %v4082, %v5324
      %v5326 = vand.u32 %v1001, 4294901760
      %v5327 = vsub.f32 %v1001, %v5326
      %5328 = vmatmul.f32.gmra.mxu0 %v5327
      %v5329 = vpop.f32.mrf.mxu0
      %v5330 = vadd.f32 %v4086, %v5329
      %v5331 = vand.u32 %v1004, 4294901760
      %v5332 = vsub.f32 %v1004, %v5331
      %5333 = vmatmul.f32.gmra.mxu0 %v5332
      %v5334 = vpop.f32.mrf.mxu0
      %v5335 = vadd.f32 %v4090, %v5334
      %v5336 = vand.u32 %v1007, 4294901760
      %v5337 = vsub.f32 %v1007, %v5336
      %5338 = vmatmul.f32.gmra.mxu0 %v5337
      %v5339 = vpop.f32.mrf.mxu0
      %v5340 = vadd.f32 %v4094, %v5339
      %v5341 = vand.u32 %v1010, 4294901760
      %v5342 = vsub.f32 %v1010, %v5341
      %5343 = vmatmul.f32.gmra.mxu0 %v5342
      %v5344 = vpop.f32.mrf.mxu0
      %v5345 = vadd.f32 %v4098, %v5344
      %v5346 = vand.u32 %v1013, 4294901760
      %v5347 = vsub.f32 %v1013, %v5346
      %5348 = vmatmul.f32.gmra.mxu0 %v5347
      %v5349 = vpop.f32.mrf.mxu0
      %v5350 = vadd.f32 %v4102, %v5349
      %v5351 = vand.u32 %v1016, 4294901760
      %v5352 = vsub.f32 %v1016, %v5351
      %5353 = vmatmul.f32.gmra.mxu0 %v5352
      %v5354 = vpop.f32.mrf.mxu0
      %v5355 = vadd.f32 %v4106, %v5354
      %v5356 = vand.u32 %v1019, 4294901760
      %v5357 = vsub.f32 %v1019, %v5356
      %5358 = vmatmul.f32.gmra.mxu0 %v5357
      %v5359 = vpop.f32.mrf.mxu0
      %v5360 = vadd.f32 %v4110, %v5359
      %v5361 = vand.u32 %v1022, 4294901760
      %v5362 = vsub.f32 %v1022, %v5361
      %5363 = vmatmul.f32.gmra.mxu0 %v5362
      %v5364 = vpop.f32.mrf.mxu0
      %v5365 = vadd.f32 %v4114, %v5364
      %v5366 = vand.u32 %v1025, 4294901760
      %v5367 = vsub.f32 %v1025, %v5366
      %5368 = vmatmul.f32.gmra.mxu0 %v5367
      %v5369 = vpop.f32.mrf.mxu0
      %v5370 = vadd.f32 %v4118, %v5369
      %v5371 = vand.u32 %v1028, 4294901760
      %v5372 = vsub.f32 %v1028, %v5371
      %5373 = vmatmul.f32.gmra.mxu0 %v5372
      %v5374 = vpop.f32.mrf.mxu0
      %v5375 = vadd.f32 %v4122, %v5374
      %v5376 = vand.u32 %v1031, 4294901760
      %v5377 = vsub.f32 %v1031, %v5376
      %5378 = vmatmul.f32.gmra.mxu0 %v5377
      %v5379 = vpop.f32.mrf.mxu0
      %v5380 = vadd.f32 %v4126, %v5379
      %v5381 = vand.u32 %v1034, 4294901760
      %v5382 = vsub.f32 %v1034, %v5381
      %5383 = vmatmul.f32.gmra.mxu0 %v5382
      %v5384 = vpop.f32.mrf.mxu0
      %v5385 = vadd.f32 %v4130, %v5384
      %v5386 = vand.u32 %v1037, 4294901760
      %v5387 = vsub.f32 %v1037, %v5386
      %5388 = vmatmul.f32.gmra.mxu0 %v5387
      %v5389 = vpop.f32.mrf.mxu0
      %v5390 = vadd.f32 %v4134, %v5389
      %v5391 = vand.u32 %v1040, 4294901760
      %v5392 = vsub.f32 %v1040, %v5391
      %5393 = vmatmul.f32.gmra.mxu0 %v5392
      %v5394 = vpop.f32.mrf.mxu0
      %v5395 = vadd.f32 %v4138, %v5394
      %v5396 = vand.u32 %v1043, 4294901760
      %v5397 = vsub.f32 %v1043, %v5396
      %5398 = vmatmul.f32.gmra.mxu0 %v5397
      %v5399 = vpop.f32.mrf.mxu0
      %v5400 = vadd.f32 %v4142, %v5399
      %v5401 = vand.u32 %v1046, 4294901760
      %v5402 = vsub.f32 %v1046, %v5401
      %5403 = vmatmul.f32.gmra.mxu0 %v5402
      %v5404 = vpop.f32.mrf.mxu0
      %v5405 = vadd.f32 %v4146, %v5404
      %v5406 = vand.u32 %v1049, 4294901760
      %v5407 = vsub.f32 %v1049, %v5406
      %5408 = vmatmul.f32.gmra.mxu0 %v5407
      %v5409 = vpop.f32.mrf.mxu0
      %v5410 = vadd.f32 %v4150, %v5409
      %v5411 = vand.u32 %v1052, 4294901760
      %v5412 = vsub.f32 %v1052, %v5411
      %5413 = vmatmul.f32.gmra.mxu0 %v5412
      %v5414 = vpop.f32.mrf.mxu0
      %v5415 = vadd.f32 %v4154, %v5414
      %v5416 = vand.u32 %v1055, 4294901760
      %v5417 = vsub.f32 %v1055, %v5416
      %5418 = vmatmul.f32.gmra.mxu0 %v5417
      %v5419 = vpop.f32.mrf.mxu0
      %v5420 = vadd.f32 %v4158, %v5419
      %v5421 = vand.u32 %v1058, 4294901760
      %v5422 = vsub.f32 %v1058, %v5421
      %5423 = vmatmul.f32.gmra.mxu0 %v5422
      %v5424 = vpop.f32.mrf.mxu0
      %v5425 = vadd.f32 %v4162, %v5424
      %v5426 = vand.u32 %v1061, 4294901760
      %v5427 = vsub.f32 %v1061, %v5426
      %5428 = vmatmul.f32.gmra.mxu0 %v5427
      %v5429 = vpop.f32.mrf.mxu0
      %v5430 = vadd.f32 %v4166, %v5429
      %v5431 = vand.u32 %v1064, 4294901760
      %v5432 = vsub.f32 %v1064, %v5431
      %5433 = vmatmul.f32.gmra.mxu0 %v5432
      %v5434 = vpop.f32.mrf.mxu0
      %v5435 = vadd.f32 %v4170, %v5434
      %v5436 = vand.u32 %v1067, 4294901760
      %v5437 = vsub.f32 %v1067, %v5436
      %5438 = vmatmul.f32.gmra.mxu0 %v5437
      %v5439 = vpop.f32.mrf.mxu0
      %v5440 = vadd.f32 %v4174, %v5439
      %v5441 = vand.u32 %v1070, 4294901760
      %v5442 = vsub.f32 %v1070, %v5441
      %5443 = vmatmul.f32.gmra.mxu0 %v5442
      %v5444 = vpop.f32.mrf.mxu0
      %v5445 = vadd.f32 %v4178, %v5444
      %v5446 = vand.u32 %v1073, 4294901760
      %v5447 = vsub.f32 %v1073, %v5446
      %5448 = vmatmul.f32.gmra.mxu0 %v5447
      %v5449 = vpop.f32.mrf.mxu0
      %v5450 = vadd.f32 %v4182, %v5449
      %v5451 = vand.u32 %v1076, 4294901760
      %v5452 = vsub.f32 %v1076, %v5451
      %5453 = vmatmul.f32.gmra.mxu0 %v5452
      %v5454 = vpop.f32.mrf.mxu0
      %v5455 = vadd.f32 %v4186, %v5454
      %v5456 = vand.u32 %v1079, 4294901760
      %v5457 = vsub.f32 %v1079, %v5456
      %5458 = vmatmul.f32.gmra.mxu0 %v5457
      %v5459 = vpop.f32.mrf.mxu0
      %v5460 = vadd.f32 %v4190, %v5459
      %v5461 = vand.u32 %v1082, 4294901760
      %v5462 = vsub.f32 %v1082, %v5461
      %5463 = vmatmul.f32.gmra.mxu0 %v5462
      %v5464 = vpop.f32.mrf.mxu0
      %v5465 = vadd.f32 %v4194, %v5464
      %v5466 = vand.u32 %v1085, 4294901760
      %v5467 = vsub.f32 %v1085, %v5466
      %5468 = vmatmul.f32.gmra.mxu0 %v5467
      %v5469 = vpop.f32.mrf.mxu0
      %v5470 = vadd.f32 %v4198, %v5469
      %v5471 = vand.u32 %v1088, 4294901760
      %v5472 = vsub.f32 %v1088, %v5471
      %5473 = vmatmul.f32.gmra.mxu0 %v5472
      %v5474 = vpop.f32.mrf.mxu0
      %v5475 = vadd.f32 %v4202, %v5474
      %v5476 = vand.u32 %v1091, 4294901760
      %v5477 = vsub.f32 %v1091, %v5476
      %5478 = vmatmul.f32.gmra.mxu0 %v5477
      %v5479 = vpop.f32.mrf.mxu0
      %v5480 = vadd.f32 %v4206, %v5479
      %v5481 = vand.u32 %v1094, 4294901760
      %v5482 = vsub.f32 %v1094, %v5481
      %5483 = vmatmul.f32.gmra.mxu0 %v5482
      %v5484 = vpop.f32.mrf.mxu0
      %v5485 = vadd.f32 %v4210, %v5484
      %v5486 = vand.u32 %v1097, 4294901760
      %v5487 = vsub.f32 %v1097, %v5486
      %5488 = vmatmul.f32.gmra.mxu0 %v5487
      %v5489 = vpop.f32.mrf.mxu0
      %v5490 = vadd.f32 %v4214, %v5489
      %v5491 = vand.u32 %v1100, 4294901760
      %v5492 = vsub.f32 %v1100, %v5491
      %5493 = vmatmul.f32.gmra.mxu0 %v5492
      %v5494 = vpop.f32.mrf.mxu0
      %v5495 = vadd.f32 %v4218, %v5494
      %v5496 = vand.u32 %v1103, 4294901760
      %v5497 = vsub.f32 %v1103, %v5496
      %5498 = vmatmul.f32.gmra.mxu0 %v5497
      %v5499 = vpop.f32.mrf.mxu0
      %v5500 = vadd.f32 %v4222, %v5499
      %v5501 = vand.u32 %v1106, 4294901760
      %v5502 = vsub.f32 %v1106, %v5501
      %5503 = vmatmul.f32.gmra.mxu0 %v5502
      %v5504 = vpop.f32.mrf.mxu0
      %v5505 = vadd.f32 %v4226, %v5504
      %v5506 = vand.u32 %v1109, 4294901760
      %v5507 = vsub.f32 %v1109, %v5506
      %5508 = vmatmul.f32.gmra.mxu0 %v5507
      %v5509 = vpop.f32.mrf.mxu0
      %v5510 = vadd.f32 %v4230, %v5509
      %v5511 = vand.u32 %v1112, 4294901760
      %v5512 = vsub.f32 %v1112, %v5511
      %5513 = vmatmul.f32.gmra.mxu0 %v5512
      %v5514 = vpop.f32.mrf.mxu0
      %v5515 = vadd.f32 %v4234, %v5514
      %v5516 = vand.u32 %v1115, 4294901760
      %v5517 = vsub.f32 %v1115, %v5516
      %5518 = vmatmul.f32.gmra.mxu0 %v5517
      %v5519 = vpop.f32.mrf.mxu0
      %v5520 = vadd.f32 %v4238, %v5519
      %v5521 = vand.u32 %v1118, 4294901760
      %v5522 = vsub.f32 %v1118, %v5521
      %5523 = vmatmul.f32.gmra.mxu0 %v5522
      %v5524 = vpop.f32.mrf.mxu0
      %v5525 = vadd.f32 %v4242, %v5524
      %v5526 = vand.u32 %v1121, 4294901760
      %v5527 = vsub.f32 %v1121, %v5526
      %5528 = vmatmul.f32.gmra.mxu0 %v5527
      %v5529 = vpop.f32.mrf.mxu0
      %v5530 = vadd.f32 %v4246, %v5529
      %v5531 = vand.u32 %v1124, 4294901760
      %v5532 = vsub.f32 %v1124, %v5531
      %5533 = vmatmul.f32.gmra.mxu0 %v5532
      %v5534 = vpop.f32.mrf.mxu0
      %v5535 = vadd.f32 %v4250, %v5534
      %v5536 = vand.u32 %v1127, 4294901760
      %v5537 = vsub.f32 %v1127, %v5536
      %5538 = vmatmul.f32.gmra.mxu0 %v5537
      %v5539 = vpop.f32.mrf.mxu0
      %v5540 = vadd.f32 %v4254, %v5539
      %v5541 = vand.u32 %v1130, 4294901760
      %v5542 = vsub.f32 %v1130, %v5541
      %5543 = vmatmul.f32.gmra.mxu0 %v5542
      %v5544 = vpop.f32.mrf.mxu0
      %v5545 = vadd.f32 %v4258, %v5544
      %v5546 = vand.u32 %v1133, 4294901760
      %v5547 = vsub.f32 %v1133, %v5546
      %5548 = vmatmul.f32.gmra.mxu0 %v5547
      %v5549 = vpop.f32.mrf.mxu0
      %v5550 = vadd.f32 %v4262, %v5549
      %v5551 = vand.u32 %v1136, 4294901760
      %v5552 = vsub.f32 %v1136, %v5551
      %5553 = vmatmul.f32.gmra.mxu0 %v5552
      %v5554 = vpop.f32.mrf.mxu0
      %v5555 = vadd.f32 %v4266, %v5554
      %v5556 = vand.u32 %v1139, 4294901760
      %v5557 = vsub.f32 %v1139, %v5556
      %5558 = vmatmul.f32.gmra.mxu0 %v5557
      %v5559 = vpop.f32.mrf.mxu0
      %v5560 = vadd.f32 %v4270, %v5559
      %v5561 = vand.u32 %v1142, 4294901760
      %v5562 = vsub.f32 %v1142, %v5561
      %5563 = vmatmul.f32.gmra.mxu0 %v5562
      %v5564 = vpop.f32.mrf.mxu0
      %v5565 = vadd.f32 %v4274, %v5564
      %v5566 = vand.u32 %v1145, 4294901760
      %v5567 = vsub.f32 %v1145, %v5566
      %5568 = vmatmul.f32.gmra.mxu0 %v5567
      %v5569 = vpop.f32.mrf.mxu0
      %v5570 = vadd.f32 %v4278, %v5569
      %v5571 = vand.u32 %v1148, 4294901760
      %v5572 = vsub.f32 %v1148, %v5571
      %5573 = vmatmul.f32.gmra.mxu0 %v5572
      %v5574 = vpop.f32.mrf.mxu0
      %v5575 = vadd.f32 %v4282, %v5574
      %v5576 = vand.u32 %v1151, 4294901760
      %v5577 = vsub.f32 %v1151, %v5576
      %5578 = vmatmul.f32.gmra.mxu0 %v5577
      %v5579 = vpop.f32.mrf.mxu0
      %v5580 = vadd.f32 %v4286, %v5579
      %v5581 = vand.u32 %v1154, 4294901760
      %v5582 = vsub.f32 %v1154, %v5581
      %5583 = vmatmul.f32.gmra.mxu0 %v5582
      %v5584 = vpop.f32.mrf.mxu0
      %v5585 = vadd.f32 %v4290, %v5584
      %v5586 = vand.u32 %v1157, 4294901760
      %v5587 = vsub.f32 %v1157, %v5586
      %5588 = vmatmul.f32.gmra.mxu0 %v5587
      %v5589 = vpop.f32.mrf.mxu0
      %v5590 = vadd.f32 %v4294, %v5589
      %v5591 = vand.u32 %v1160, 4294901760
      %v5592 = vsub.f32 %v1160, %v5591
      %5593 = vmatmul.f32.gmra.mxu0 %v5592
      %v5594 = vpop.f32.mrf.mxu0
      %v5595 = vadd.f32 %v4298, %v5594
      %v5596 = vand.u32 %v1163, 4294901760
      %v5597 = vsub.f32 %v1163, %v5596
      %5598 = vmatmul.f32.gmra.mxu0 %v5597
      %v5599 = vpop.f32.mrf.mxu0
      %v5600 = vadd.f32 %v4302, %v5599
      %v5601 = vand.u32 %v1166, 4294901760
      %v5602 = vsub.f32 %v1166, %v5601
      %5603 = vmatmul.f32.gmra.mxu0 %v5602
      %v5604 = vpop.f32.mrf.mxu0
      %v5605 = vadd.f32 %v4306, %v5604
      %v5606 = vand.u32 %v1169, 4294901760
      %v5607 = vsub.f32 %v1169, %v5606
      %5608 = vmatmul.f32.gmra.mxu0 %v5607
      %v5609 = vpop.f32.mrf.mxu0
      %v5610 = vadd.f32 %v4310, %v5609
      %v5611 = vand.u32 %v1172, 4294901760
      %v5612 = vsub.f32 %v1172, %v5611
      %5613 = vmatmul.f32.gmra.mxu0 %v5612
      %v5614 = vpop.f32.mrf.mxu0
      %v5615 = vadd.f32 %v4314, %v5614
      %v5616 = vand.u32 %v1175, 4294901760
      %v5617 = vsub.f32 %v1175, %v5616
      %5618 = vmatmul.f32.gmra.mxu0 %v5617
      %v5619 = vpop.f32.mrf.mxu0
      %v5620 = vadd.f32 %v4318, %v5619
      %v5621 = vand.u32 %v1178, 4294901760
      %v5622 = vsub.f32 %v1178, %v5621
      %5623 = vmatmul.f32.gmra.mxu0 %v5622
      %v5624 = vpop.f32.mrf.mxu0
      %v5625 = vadd.f32 %v4322, %v5624
      %v5626 = vand.u32 %v1181, 4294901760
      %v5627 = vsub.f32 %v1181, %v5626
      %5628 = vmatmul.f32.gmra.mxu0 %v5627
      %v5629 = vpop.f32.mrf.mxu0
      %v5630 = vadd.f32 %v4326, %v5629
      %v5631 = vand.u32 %v1184, 4294901760
      %v5632 = vsub.f32 %v1184, %v5631
      %5633 = vmatmul.f32.gmra.mxu0 %v5632
      %v5634 = vpop.f32.mrf.mxu0
      %v5635 = vadd.f32 %v4330, %v5634
      %v5636 = vand.u32 %v1187, 4294901760
      %v5637 = vsub.f32 %v1187, %v5636
      %5638 = vmatmul.f32.gmra.mxu0 %v5637
      %v5639 = vpop.f32.mrf.mxu0
      %v5640 = vadd.f32 %v4334, %v5639
      %v5641 = vand.u32 %v1190, 4294901760
      %v5642 = vsub.f32 %v1190, %v5641
      %5643 = vmatmul.f32.gmra.mxu0 %v5642
      %v5644 = vpop.f32.mrf.mxu0
      %v5645 = vadd.f32 %v4338, %v5644
      %v5646 = vand.u32 %v1193, 4294901760
      %v5647 = vsub.f32 %v1193, %v5646
      %5648 = vmatmul.f32.gmra.mxu0 %v5647
      %v5649 = vpop.f32.mrf.mxu0
      %v5650 = vadd.f32 %v4342, %v5649
      %v5651 = vand.u32 %v1196, 4294901760
      %v5652 = vsub.f32 %v1196, %v5651
      %5653 = vmatmul.f32.gmra.mxu0 %v5652
      %v5654 = vpop.f32.mrf.mxu0
      %v5655 = vadd.f32 %v4346, %v5654
      %v5656 = vand.u32 %v1199, 4294901760
      %v5657 = vsub.f32 %v1199, %v5656
      %5658 = vmatmul.f32.gmra.mxu0 %v5657
      %v5659 = vpop.f32.mrf.mxu0
      %v5660 = vadd.f32 %v4350, %v5659
      %v5661 = vand.u32 %v1202, 4294901760
      %v5662 = vsub.f32 %v1202, %v5661
      %5663 = vmatmul.f32.gmra.mxu0 %v5662
      %v5664 = vpop.f32.mrf.mxu0
      %v5665 = vadd.f32 %v4354, %v5664
      %v5666 = vand.u32 %v1205, 4294901760
      %v5667 = vsub.f32 %v1205, %v5666
      %5668 = vmatmul.f32.gmra.mxu0 %v5667
      %v5669 = vpop.f32.mrf.mxu0
      %v5670 = vadd.f32 %v4358, %v5669
      %v5671 = vand.u32 %v1208, 4294901760
      %v5672 = vsub.f32 %v1208, %v5671
      %5673 = vmatmul.f32.gmra.mxu0 %v5672
      %v5674 = vpop.f32.mrf.mxu0
      %v5675 = vadd.f32 %v4362, %v5674
      %5676 = vdwg.mxu0
      %5677 = vmatpush.msra.mxu0 0.0
      %5678 = vmatpush.msra.mxu0 0.0
      %5679 = vmatpush.msra.mxu0 0.0
      %5680 = vmatpush.msra.mxu0 0.0
      %5681 = vmatpush.msra.mxu0 0.0
      %5682 = vmatpush.msra.mxu0 0.0
      %5683 = vmatpush.msra.mxu0 0.0
      %5684 = vmatpush.msra.mxu0 0.0
      %v5685 = vand.u32 %v438, 4294901760
      %5686 = vmatpush.msra.mxu0 %v5685
      %v5687 = vand.u32 %v437, 4294901760
      %5688 = vmatpush.msra.mxu0 %v5687
      %v5689 = vand.u32 %v436, 4294901760
      %5690 = vmatpush.msra.mxu0 %v5689
      %v5691 = vand.u32 %v435, 4294901760
      %5692 = vmatpush.msra.mxu0 %v5691
      %v5693 = vand.u32 %v434, 4294901760
      %5694 = vmatpush.msra.mxu0 %v5693
      %v5695 = vand.u32 %v433, 4294901760
      %5696 = vmatpush.msra.mxu0 %v5695
      %v5697 = vand.u32 %v432, 4294901760
      %5698 = vmatpush.msra.mxu0 %v5697
      %v5699 = vand.u32 %v431, 4294901760
      %5700 = vmatpush.msra.mxu0 %v5699
      %v5701 = vand.u32 %v443, 4294901760
      %v5702 = vsub.f32 %v443, %v5701
      %v5703 = vand.u32 %v5702, 4294901760
      %5704 = vmatmul.f32.gmra.mxu0 %v5703
      %v5705 = vpop.f32.mrf.mxu0
      %v5706 = vadd.f32 %v4400, %v5705
      %v5707 = vand.u32 %v446, 4294901760
      %v5708 = vsub.f32 %v446, %v5707
      %v5709 = vand.u32 %v5708, 4294901760
      %5710 = vmatmul.f32.gmra.mxu0 %v5709
      %v5711 = vpop.f32.mrf.mxu0
      %v5712 = vadd.f32 %v4405, %v5711
      %v5713 = vand.u32 %v449, 4294901760
      %v5714 = vsub.f32 %v449, %v5713
      %v5715 = vand.u32 %v5714, 4294901760
      %5716 = vmatmul.f32.gmra.mxu0 %v5715
      %v5717 = vpop.f32.mrf.mxu0
      %v5718 = vadd.f32 %v4410, %v5717
      %v5719 = vand.u32 %v452, 4294901760
      %v5720 = vsub.f32 %v452, %v5719
      %v5721 = vand.u32 %v5720, 4294901760
      %5722 = vmatmul.f32.gmra.mxu0 %v5721
      %v5723 = vpop.f32.mrf.mxu0
      %v5724 = vadd.f32 %v4415, %v5723
      %v5725 = vand.u32 %v455, 4294901760
      %v5726 = vsub.f32 %v455, %v5725
      %v5727 = vand.u32 %v5726, 4294901760
      %5728 = vmatmul.f32.gmra.mxu0 %v5727
      %v5729 = vpop.f32.mrf.mxu0
      %v5730 = vadd.f32 %v4420, %v5729
      %v5731 = vand.u32 %v458, 4294901760
      %v5732 = vsub.f32 %v458, %v5731
      %v5733 = vand.u32 %v5732, 4294901760
      %5734 = vmatmul.f32.gmra.mxu0 %v5733
      %v5735 = vpop.f32.mrf.mxu0
      %v5736 = vadd.f32 %v4425, %v5735
      %v5737 = vand.u32 %v461, 4294901760
      %v5738 = vsub.f32 %v461, %v5737
      %v5739 = vand.u32 %v5738, 4294901760
      %5740 = vmatmul.f32.gmra.mxu0 %v5739
      %v5741 = vpop.f32.mrf.mxu0
      %v5742 = vadd.f32 %v4430, %v5741
      %v5743 = vand.u32 %v464, 4294901760
      %v5744 = vsub.f32 %v464, %v5743
      %v5745 = vand.u32 %v5744, 4294901760
      %5746 = vmatmul.f32.gmra.mxu0 %v5745
      %v5747 = vpop.f32.mrf.mxu0
      %v5748 = vadd.f32 %v4435, %v5747
      %v5749 = vand.u32 %v467, 4294901760
      %v5750 = vsub.f32 %v467, %v5749
      %v5751 = vand.u32 %v5750, 4294901760
      %5752 = vmatmul.f32.gmra.mxu0 %v5751
      %v5753 = vpop.f32.mrf.mxu0
      %v5754 = vadd.f32 %v4440, %v5753
      %v5755 = vand.u32 %v470, 4294901760
      %v5756 = vsub.f32 %v470, %v5755
      %v5757 = vand.u32 %v5756, 4294901760
      %5758 = vmatmul.f32.gmra.mxu0 %v5757
      %v5759 = vpop.f32.mrf.mxu0
      %v5760 = vadd.f32 %v4445, %v5759
      %v5761 = vand.u32 %v473, 4294901760
      %v5762 = vsub.f32 %v473, %v5761
      %v5763 = vand.u32 %v5762, 4294901760
      %5764 = vmatmul.f32.gmra.mxu0 %v5763
      %v5765 = vpop.f32.mrf.mxu0
      %v5766 = vadd.f32 %v4450, %v5765
      %v5767 = vand.u32 %v476, 4294901760
      %v5768 = vsub.f32 %v476, %v5767
      %v5769 = vand.u32 %v5768, 4294901760
      %5770 = vmatmul.f32.gmra.mxu0 %v5769
      %v5771 = vpop.f32.mrf.mxu0
      %v5772 = vadd.f32 %v4455, %v5771
      %v5773 = vand.u32 %v479, 4294901760
      %v5774 = vsub.f32 %v479, %v5773
      %v5775 = vand.u32 %v5774, 4294901760
      %5776 = vmatmul.f32.gmra.mxu0 %v5775
      %v5777 = vpop.f32.mrf.mxu0
      %v5778 = vadd.f32 %v4460, %v5777
      %v5779 = vand.u32 %v482, 4294901760
      %v5780 = vsub.f32 %v482, %v5779
      %v5781 = vand.u32 %v5780, 4294901760
      %5782 = vmatmul.f32.gmra.mxu0 %v5781
      %v5783 = vpop.f32.mrf.mxu0
      %v5784 = vadd.f32 %v4465, %v5783
      %v5785 = vand.u32 %v485, 4294901760
      %v5786 = vsub.f32 %v485, %v5785
      %v5787 = vand.u32 %v5786, 4294901760
      %5788 = vmatmul.f32.gmra.mxu0 %v5787
      %v5789 = vpop.f32.mrf.mxu0
      %v5790 = vadd.f32 %v4470, %v5789
      %v5791 = vand.u32 %v488, 4294901760
      %v5792 = vsub.f32 %v488, %v5791
      %v5793 = vand.u32 %v5792, 4294901760
      %5794 = vmatmul.f32.gmra.mxu0 %v5793
      %v5795 = vpop.f32.mrf.mxu0
      %v5796 = vadd.f32 %v4475, %v5795
      %v5797 = vand.u32 %v491, 4294901760
      %v5798 = vsub.f32 %v491, %v5797
      %v5799 = vand.u32 %v5798, 4294901760
      %5800 = vmatmul.f32.gmra.mxu0 %v5799
      %v5801 = vpop.f32.mrf.mxu0
      %v5802 = vadd.f32 %v4480, %v5801
      %v5803 = vand.u32 %v494, 4294901760
      %v5804 = vsub.f32 %v494, %v5803
      %v5805 = vand.u32 %v5804, 4294901760
      %5806 = vmatmul.f32.gmra.mxu0 %v5805
      %v5807 = vpop.f32.mrf.mxu0
      %v5808 = vadd.f32 %v4485, %v5807
      %v5809 = vand.u32 %v497, 4294901760
      %v5810 = vsub.f32 %v497, %v5809
      %v5811 = vand.u32 %v5810, 4294901760
      %5812 = vmatmul.f32.gmra.mxu0 %v5811
      %v5813 = vpop.f32.mrf.mxu0
      %v5814 = vadd.f32 %v4490, %v5813
      %v5815 = vand.u32 %v500, 4294901760
      %v5816 = vsub.f32 %v500, %v5815
      %v5817 = vand.u32 %v5816, 4294901760
      %5818 = vmatmul.f32.gmra.mxu0 %v5817
      %v5819 = vpop.f32.mrf.mxu0
      %v5820 = vadd.f32 %v4495, %v5819
      %v5821 = vand.u32 %v503, 4294901760
      %v5822 = vsub.f32 %v503, %v5821
      %v5823 = vand.u32 %v5822, 4294901760
      %5824 = vmatmul.f32.gmra.mxu0 %v5823
      %v5825 = vpop.f32.mrf.mxu0
      %v5826 = vadd.f32 %v4500, %v5825
      %v5827 = vand.u32 %v506, 4294901760
      %v5828 = vsub.f32 %v506, %v5827
      %v5829 = vand.u32 %v5828, 4294901760
      %5830 = vmatmul.f32.gmra.mxu0 %v5829
      %v5831 = vpop.f32.mrf.mxu0
      %v5832 = vadd.f32 %v4505, %v5831
      %v5833 = vand.u32 %v509, 4294901760
      %v5834 = vsub.f32 %v509, %v5833
      %v5835 = vand.u32 %v5834, 4294901760
      %5836 = vmatmul.f32.gmra.mxu0 %v5835
      %v5837 = vpop.f32.mrf.mxu0
      %v5838 = vadd.f32 %v4510, %v5837
      %v5839 = vand.u32 %v512, 4294901760
      %v5840 = vsub.f32 %v512, %v5839
      %v5841 = vand.u32 %v5840, 4294901760
      %5842 = vmatmul.f32.gmra.mxu0 %v5841
      %v5843 = vpop.f32.mrf.mxu0
      %v5844 = vadd.f32 %v4515, %v5843
      %v5845 = vand.u32 %v515, 4294901760
      %v5846 = vsub.f32 %v515, %v5845
      %v5847 = vand.u32 %v5846, 4294901760
      %5848 = vmatmul.f32.gmra.mxu0 %v5847
      %v5849 = vpop.f32.mrf.mxu0
      %v5850 = vadd.f32 %v4520, %v5849
      %v5851 = vand.u32 %v518, 4294901760
      %v5852 = vsub.f32 %v518, %v5851
      %v5853 = vand.u32 %v5852, 4294901760
      %5854 = vmatmul.f32.gmra.mxu0 %v5853
      %v5855 = vpop.f32.mrf.mxu0
      %v5856 = vadd.f32 %v4525, %v5855
      %v5857 = vand.u32 %v521, 4294901760
      %v5858 = vsub.f32 %v521, %v5857
      %v5859 = vand.u32 %v5858, 4294901760
      %5860 = vmatmul.f32.gmra.mxu0 %v5859
      %v5861 = vpop.f32.mrf.mxu0
      %v5862 = vadd.f32 %v4530, %v5861
      %v5863 = vand.u32 %v524, 4294901760
      %v5864 = vsub.f32 %v524, %v5863
      %v5865 = vand.u32 %v5864, 4294901760
      %5866 = vmatmul.f32.gmra.mxu0 %v5865
      %v5867 = vpop.f32.mrf.mxu0
      %v5868 = vadd.f32 %v4535, %v5867
      %v5869 = vand.u32 %v527, 4294901760
      %v5870 = vsub.f32 %v527, %v5869
      %v5871 = vand.u32 %v5870, 4294901760
      %5872 = vmatmul.f32.gmra.mxu0 %v5871
      %v5873 = vpop.f32.mrf.mxu0
      %v5874 = vadd.f32 %v4540, %v5873
      %v5875 = vand.u32 %v530, 4294901760
      %v5876 = vsub.f32 %v530, %v5875
      %v5877 = vand.u32 %v5876, 4294901760
      %5878 = vmatmul.f32.gmra.mxu0 %v5877
      %v5879 = vpop.f32.mrf.mxu0
      %v5880 = vadd.f32 %v4545, %v5879
      %v5881 = vand.u32 %v533, 4294901760
      %v5882 = vsub.f32 %v533, %v5881
      %v5883 = vand.u32 %v5882, 4294901760
      %5884 = vmatmul.f32.gmra.mxu0 %v5883
      %v5885 = vpop.f32.mrf.mxu0
      %v5886 = vadd.f32 %v4550, %v5885
      %v5887 = vand.u32 %v536, 4294901760
      %v5888 = vsub.f32 %v536, %v5887
      %v5889 = vand.u32 %v5888, 4294901760
      %5890 = vmatmul.f32.gmra.mxu0 %v5889
      %v5891 = vpop.f32.mrf.mxu0
      %v5892 = vadd.f32 %v4555, %v5891
      %v5893 = vand.u32 %v539, 4294901760
      %v5894 = vsub.f32 %v539, %v5893
      %v5895 = vand.u32 %v5894, 4294901760
      %5896 = vmatmul.f32.gmra.mxu0 %v5895
      %v5897 = vpop.f32.mrf.mxu0
      %v5898 = vadd.f32 %v4560, %v5897
      %v5899 = vand.u32 %v542, 4294901760
      %v5900 = vsub.f32 %v542, %v5899
      %v5901 = vand.u32 %v5900, 4294901760
      %5902 = vmatmul.f32.gmra.mxu0 %v5901
      %v5903 = vpop.f32.mrf.mxu0
      %v5904 = vadd.f32 %v4565, %v5903
      %v5905 = vand.u32 %v545, 4294901760
      %v5906 = vsub.f32 %v545, %v5905
      %v5907 = vand.u32 %v5906, 4294901760
      %5908 = vmatmul.f32.gmra.mxu0 %v5907
      %v5909 = vpop.f32.mrf.mxu0
      %v5910 = vadd.f32 %v4570, %v5909
      %v5911 = vand.u32 %v548, 4294901760
      %v5912 = vsub.f32 %v548, %v5911
      %v5913 = vand.u32 %v5912, 4294901760
      %5914 = vmatmul.f32.gmra.mxu0 %v5913
      %v5915 = vpop.f32.mrf.mxu0
      %v5916 = vadd.f32 %v4575, %v5915
      %v5917 = vand.u32 %v551, 4294901760
      %v5918 = vsub.f32 %v551, %v5917
      %v5919 = vand.u32 %v5918, 4294901760
      %5920 = vmatmul.f32.gmra.mxu0 %v5919
      %v5921 = vpop.f32.mrf.mxu0
      %v5922 = vadd.f32 %v4580, %v5921
      %v5923 = vand.u32 %v554, 4294901760
      %v5924 = vsub.f32 %v554, %v5923
      %v5925 = vand.u32 %v5924, 4294901760
      %5926 = vmatmul.f32.gmra.mxu0 %v5925
      %v5927 = vpop.f32.mrf.mxu0
      %v5928 = vadd.f32 %v4585, %v5927
      %v5929 = vand.u32 %v557, 4294901760
      %v5930 = vsub.f32 %v557, %v5929
      %v5931 = vand.u32 %v5930, 4294901760
      %5932 = vmatmul.f32.gmra.mxu0 %v5931
      %v5933 = vpop.f32.mrf.mxu0
      %v5934 = vadd.f32 %v4590, %v5933
      %v5935 = vand.u32 %v560, 4294901760
      %v5936 = vsub.f32 %v560, %v5935
      %v5937 = vand.u32 %v5936, 4294901760
      %5938 = vmatmul.f32.gmra.mxu0 %v5937
      %v5939 = vpop.f32.mrf.mxu0
      %v5940 = vadd.f32 %v4595, %v5939
      %v5941 = vand.u32 %v563, 4294901760
      %v5942 = vsub.f32 %v563, %v5941
      %v5943 = vand.u32 %v5942, 4294901760
      %5944 = vmatmul.f32.gmra.mxu0 %v5943
      %v5945 = vpop.f32.mrf.mxu0
      %v5946 = vadd.f32 %v4600, %v5945
      %v5947 = vand.u32 %v566, 4294901760
      %v5948 = vsub.f32 %v566, %v5947
      %v5949 = vand.u32 %v5948, 4294901760
      %5950 = vmatmul.f32.gmra.mxu0 %v5949
      %v5951 = vpop.f32.mrf.mxu0
      %v5952 = vadd.f32 %v4605, %v5951
      %v5953 = vand.u32 %v569, 4294901760
      %v5954 = vsub.f32 %v569, %v5953
      %v5955 = vand.u32 %v5954, 4294901760
      %5956 = vmatmul.f32.gmra.mxu0 %v5955
      %v5957 = vpop.f32.mrf.mxu0
      %v5958 = vadd.f32 %v4610, %v5957
      %v5959 = vand.u32 %v572, 4294901760
      %v5960 = vsub.f32 %v572, %v5959
      %v5961 = vand.u32 %v5960, 4294901760
      %5962 = vmatmul.f32.gmra.mxu0 %v5961
      %v5963 = vpop.f32.mrf.mxu0
      %v5964 = vadd.f32 %v4615, %v5963
      %v5965 = vand.u32 %v575, 4294901760
      %v5966 = vsub.f32 %v575, %v5965
      %v5967 = vand.u32 %v5966, 4294901760
      %5968 = vmatmul.f32.gmra.mxu0 %v5967
      %v5969 = vpop.f32.mrf.mxu0
      %v5970 = vadd.f32 %v4620, %v5969
      %v5971 = vand.u32 %v578, 4294901760
      %v5972 = vsub.f32 %v578, %v5971
      %v5973 = vand.u32 %v5972, 4294901760
      %5974 = vmatmul.f32.gmra.mxu0 %v5973
      %v5975 = vpop.f32.mrf.mxu0
      %v5976 = vadd.f32 %v4625, %v5975
      %v5977 = vand.u32 %v581, 4294901760
      %v5978 = vsub.f32 %v581, %v5977
      %v5979 = vand.u32 %v5978, 4294901760
      %5980 = vmatmul.f32.gmra.mxu0 %v5979
      %v5981 = vpop.f32.mrf.mxu0
      %v5982 = vadd.f32 %v4630, %v5981
      %v5983 = vand.u32 %v584, 4294901760
      %v5984 = vsub.f32 %v584, %v5983
      %v5985 = vand.u32 %v5984, 4294901760
      %5986 = vmatmul.f32.gmra.mxu0 %v5985
      %v5987 = vpop.f32.mrf.mxu0
      %v5988 = vadd.f32 %v4635, %v5987
      %v5989 = vand.u32 %v587, 4294901760
      %v5990 = vsub.f32 %v587, %v5989
      %v5991 = vand.u32 %v5990, 4294901760
      %5992 = vmatmul.f32.gmra.mxu0 %v5991
      %v5993 = vpop.f32.mrf.mxu0
      %v5994 = vadd.f32 %v4640, %v5993
      %v5995 = vand.u32 %v590, 4294901760
      %v5996 = vsub.f32 %v590, %v5995
      %v5997 = vand.u32 %v5996, 4294901760
      %5998 = vmatmul.f32.gmra.mxu0 %v5997
      %v5999 = vpop.f32.mrf.mxu0
      %v6000 = vadd.f32 %v4645, %v5999
      %v6001 = vand.u32 %v593, 4294901760
      %v6002 = vsub.f32 %v593, %v6001
      %v6003 = vand.u32 %v6002, 4294901760
      %6004 = vmatmul.f32.gmra.mxu0 %v6003
      %v6005 = vpop.f32.mrf.mxu0
      %v6006 = vadd.f32 %v4650, %v6005
      %v6007 = vand.u32 %v596, 4294901760
      %v6008 = vsub.f32 %v596, %v6007
      %v6009 = vand.u32 %v6008, 4294901760
      %6010 = vmatmul.f32.gmra.mxu0 %v6009
      %v6011 = vpop.f32.mrf.mxu0
      %v6012 = vadd.f32 %v4655, %v6011
      %v6013 = vand.u32 %v599, 4294901760
      %v6014 = vsub.f32 %v599, %v6013
      %v6015 = vand.u32 %v6014, 4294901760
      %6016 = vmatmul.f32.gmra.mxu0 %v6015
      %v6017 = vpop.f32.mrf.mxu0
      %v6018 = vadd.f32 %v4660, %v6017
      %v6019 = vand.u32 %v602, 4294901760
      %v6020 = vsub.f32 %v602, %v6019
      %v6021 = vand.u32 %v6020, 4294901760
      %6022 = vmatmul.f32.gmra.mxu0 %v6021
      %v6023 = vpop.f32.mrf.mxu0
      %v6024 = vadd.f32 %v4665, %v6023
      %v6025 = vand.u32 %v605, 4294901760
      %v6026 = vsub.f32 %v605, %v6025
      %v6027 = vand.u32 %v6026, 4294901760
      %6028 = vmatmul.f32.gmra.mxu0 %v6027
      %v6029 = vpop.f32.mrf.mxu0
      %v6030 = vadd.f32 %v4670, %v6029
      %v6031 = vand.u32 %v608, 4294901760
      %v6032 = vsub.f32 %v608, %v6031
      %v6033 = vand.u32 %v6032, 4294901760
      %6034 = vmatmul.f32.gmra.mxu0 %v6033
      %v6035 = vpop.f32.mrf.mxu0
      %v6036 = vadd.f32 %v4675, %v6035
      %v6037 = vand.u32 %v611, 4294901760
      %v6038 = vsub.f32 %v611, %v6037
      %v6039 = vand.u32 %v6038, 4294901760
      %6040 = vmatmul.f32.gmra.mxu0 %v6039
      %v6041 = vpop.f32.mrf.mxu0
      %v6042 = vadd.f32 %v4680, %v6041
      %v6043 = vand.u32 %v614, 4294901760
      %v6044 = vsub.f32 %v614, %v6043
      %v6045 = vand.u32 %v6044, 4294901760
      %6046 = vmatmul.f32.gmra.mxu0 %v6045
      %v6047 = vpop.f32.mrf.mxu0
      %v6048 = vadd.f32 %v4685, %v6047
      %v6049 = vand.u32 %v617, 4294901760
      %v6050 = vsub.f32 %v617, %v6049
      %v6051 = vand.u32 %v6050, 4294901760
      %6052 = vmatmul.f32.gmra.mxu0 %v6051
      %v6053 = vpop.f32.mrf.mxu0
      %v6054 = vadd.f32 %v4690, %v6053
      %v6055 = vand.u32 %v620, 4294901760
      %v6056 = vsub.f32 %v620, %v6055
      %v6057 = vand.u32 %v6056, 4294901760
      %6058 = vmatmul.f32.gmra.mxu0 %v6057
      %v6059 = vpop.f32.mrf.mxu0
      %v6060 = vadd.f32 %v4695, %v6059
      %v6061 = vand.u32 %v623, 4294901760
      %v6062 = vsub.f32 %v623, %v6061
      %v6063 = vand.u32 %v6062, 4294901760
      %6064 = vmatmul.f32.gmra.mxu0 %v6063
      %v6065 = vpop.f32.mrf.mxu0
      %v6066 = vadd.f32 %v4700, %v6065
      %v6067 = vand.u32 %v626, 4294901760
      %v6068 = vsub.f32 %v626, %v6067
      %v6069 = vand.u32 %v6068, 4294901760
      %6070 = vmatmul.f32.gmra.mxu0 %v6069
      %v6071 = vpop.f32.mrf.mxu0
      %v6072 = vadd.f32 %v4705, %v6071
      %v6073 = vand.u32 %v629, 4294901760
      %v6074 = vsub.f32 %v629, %v6073
      %v6075 = vand.u32 %v6074, 4294901760
      %6076 = vmatmul.f32.gmra.mxu0 %v6075
      %v6077 = vpop.f32.mrf.mxu0
      %v6078 = vadd.f32 %v4710, %v6077
      %v6079 = vand.u32 %v632, 4294901760
      %v6080 = vsub.f32 %v632, %v6079
      %v6081 = vand.u32 %v6080, 4294901760
      %6082 = vmatmul.f32.gmra.mxu0 %v6081
      %v6083 = vpop.f32.mrf.mxu0
      %v6084 = vadd.f32 %v4715, %v6083
      %v6085 = vand.u32 %v635, 4294901760
      %v6086 = vsub.f32 %v635, %v6085
      %v6087 = vand.u32 %v6086, 4294901760
      %6088 = vmatmul.f32.gmra.mxu0 %v6087
      %v6089 = vpop.f32.mrf.mxu0
      %v6090 = vadd.f32 %v4720, %v6089
      %v6091 = vand.u32 %v638, 4294901760
      %v6092 = vsub.f32 %v638, %v6091
      %v6093 = vand.u32 %v6092, 4294901760
      %6094 = vmatmul.f32.gmra.mxu0 %v6093
      %v6095 = vpop.f32.mrf.mxu0
      %v6096 = vadd.f32 %v4725, %v6095
      %v6097 = vand.u32 %v641, 4294901760
      %v6098 = vsub.f32 %v641, %v6097
      %v6099 = vand.u32 %v6098, 4294901760
      %6100 = vmatmul.f32.gmra.mxu0 %v6099
      %v6101 = vpop.f32.mrf.mxu0
      %v6102 = vadd.f32 %v4730, %v6101
      %v6103 = vand.u32 %v644, 4294901760
      %v6104 = vsub.f32 %v644, %v6103
      %v6105 = vand.u32 %v6104, 4294901760
      %6106 = vmatmul.f32.gmra.mxu0 %v6105
      %v6107 = vpop.f32.mrf.mxu0
      %v6108 = vadd.f32 %v4735, %v6107
      %v6109 = vand.u32 %v647, 4294901760
      %v6110 = vsub.f32 %v647, %v6109
      %v6111 = vand.u32 %v6110, 4294901760
      %6112 = vmatmul.f32.gmra.mxu0 %v6111
      %v6113 = vpop.f32.mrf.mxu0
      %v6114 = vadd.f32 %v4740, %v6113
      %v6115 = vand.u32 %v650, 4294901760
      %v6116 = vsub.f32 %v650, %v6115
      %v6117 = vand.u32 %v6116, 4294901760
      %6118 = vmatmul.f32.gmra.mxu0 %v6117
      %v6119 = vpop.f32.mrf.mxu0
      %v6120 = vadd.f32 %v4745, %v6119
      %v6121 = vand.u32 %v653, 4294901760
      %v6122 = vsub.f32 %v653, %v6121
      %v6123 = vand.u32 %v6122, 4294901760
      %6124 = vmatmul.f32.gmra.mxu0 %v6123
      %v6125 = vpop.f32.mrf.mxu0
      %v6126 = vadd.f32 %v4750, %v6125
      %v6127 = vand.u32 %v656, 4294901760
      %v6128 = vsub.f32 %v656, %v6127
      %v6129 = vand.u32 %v6128, 4294901760
      %6130 = vmatmul.f32.gmra.mxu0 %v6129
      %v6131 = vpop.f32.mrf.mxu0
      %v6132 = vadd.f32 %v4755, %v6131
      %v6133 = vand.u32 %v659, 4294901760
      %v6134 = vsub.f32 %v659, %v6133
      %v6135 = vand.u32 %v6134, 4294901760
      %6136 = vmatmul.f32.gmra.mxu0 %v6135
      %v6137 = vpop.f32.mrf.mxu0
      %v6138 = vadd.f32 %v4760, %v6137
      %v6139 = vand.u32 %v662, 4294901760
      %v6140 = vsub.f32 %v662, %v6139
      %v6141 = vand.u32 %v6140, 4294901760
      %6142 = vmatmul.f32.gmra.mxu0 %v6141
      %v6143 = vpop.f32.mrf.mxu0
      %v6144 = vadd.f32 %v4765, %v6143
      %v6145 = vand.u32 %v665, 4294901760
      %v6146 = vsub.f32 %v665, %v6145
      %v6147 = vand.u32 %v6146, 4294901760
      %6148 = vmatmul.f32.gmra.mxu0 %v6147
      %v6149 = vpop.f32.mrf.mxu0
      %v6150 = vadd.f32 %v4770, %v6149
      %v6151 = vand.u32 %v668, 4294901760
      %v6152 = vsub.f32 %v668, %v6151
      %v6153 = vand.u32 %v6152, 4294901760
      %6154 = vmatmul.f32.gmra.mxu0 %v6153
      %v6155 = vpop.f32.mrf.mxu0
      %v6156 = vadd.f32 %v4775, %v6155
      %v6157 = vand.u32 %v671, 4294901760
      %v6158 = vsub.f32 %v671, %v6157
      %v6159 = vand.u32 %v6158, 4294901760
      %6160 = vmatmul.f32.gmra.mxu0 %v6159
      %v6161 = vpop.f32.mrf.mxu0
      %v6162 = vadd.f32 %v4780, %v6161
      %v6163 = vand.u32 %v674, 4294901760
      %v6164 = vsub.f32 %v674, %v6163
      %v6165 = vand.u32 %v6164, 4294901760
      %6166 = vmatmul.f32.gmra.mxu0 %v6165
      %v6167 = vpop.f32.mrf.mxu0
      %v6168 = vadd.f32 %v4785, %v6167
      %v6169 = vand.u32 %v677, 4294901760
      %v6170 = vsub.f32 %v677, %v6169
      %v6171 = vand.u32 %v6170, 4294901760
      %6172 = vmatmul.f32.gmra.mxu0 %v6171
      %v6173 = vpop.f32.mrf.mxu0
      %v6174 = vadd.f32 %v4790, %v6173
      %v6175 = vand.u32 %v680, 4294901760
      %v6176 = vsub.f32 %v680, %v6175
      %v6177 = vand.u32 %v6176, 4294901760
      %6178 = vmatmul.f32.gmra.mxu0 %v6177
      %v6179 = vpop.f32.mrf.mxu0
      %v6180 = vadd.f32 %v4795, %v6179
      %v6181 = vand.u32 %v683, 4294901760
      %v6182 = vsub.f32 %v683, %v6181
      %v6183 = vand.u32 %v6182, 4294901760
      %6184 = vmatmul.f32.gmra.mxu0 %v6183
      %v6185 = vpop.f32.mrf.mxu0
      %v6186 = vadd.f32 %v4800, %v6185
      %v6187 = vand.u32 %v686, 4294901760
      %v6188 = vsub.f32 %v686, %v6187
      %v6189 = vand.u32 %v6188, 4294901760
      %6190 = vmatmul.f32.gmra.mxu0 %v6189
      %v6191 = vpop.f32.mrf.mxu0
      %v6192 = vadd.f32 %v4805, %v6191
      %v6193 = vand.u32 %v689, 4294901760
      %v6194 = vsub.f32 %v689, %v6193
      %v6195 = vand.u32 %v6194, 4294901760
      %6196 = vmatmul.f32.gmra.mxu0 %v6195
      %v6197 = vpop.f32.mrf.mxu0
      %v6198 = vadd.f32 %v4810, %v6197
      %v6199 = vand.u32 %v692, 4294901760
      %v6200 = vsub.f32 %v692, %v6199
      %v6201 = vand.u32 %v6200, 4294901760
      %6202 = vmatmul.f32.gmra.mxu0 %v6201
      %v6203 = vpop.f32.mrf.mxu0
      %v6204 = vadd.f32 %v4815, %v6203
      %v6205 = vand.u32 %v695, 4294901760
      %v6206 = vsub.f32 %v695, %v6205
      %v6207 = vand.u32 %v6206, 4294901760
      %6208 = vmatmul.f32.gmra.mxu0 %v6207
      %v6209 = vpop.f32.mrf.mxu0
      %v6210 = vadd.f32 %v4820, %v6209
      %v6211 = vand.u32 %v698, 4294901760
      %v6212 = vsub.f32 %v698, %v6211
      %v6213 = vand.u32 %v6212, 4294901760
      %6214 = vmatmul.f32.gmra.mxu0 %v6213
      %v6215 = vpop.f32.mrf.mxu0
      %v6216 = vadd.f32 %v4825, %v6215
      %v6217 = vand.u32 %v701, 4294901760
      %v6218 = vsub.f32 %v701, %v6217
      %v6219 = vand.u32 %v6218, 4294901760
      %6220 = vmatmul.f32.gmra.mxu0 %v6219
      %v6221 = vpop.f32.mrf.mxu0
      %v6222 = vadd.f32 %v4830, %v6221
      %v6223 = vand.u32 %v704, 4294901760
      %v6224 = vsub.f32 %v704, %v6223
      %v6225 = vand.u32 %v6224, 4294901760
      %6226 = vmatmul.f32.gmra.mxu0 %v6225
      %v6227 = vpop.f32.mrf.mxu0
      %v6228 = vadd.f32 %v4835, %v6227
      %v6229 = vand.u32 %v707, 4294901760
      %v6230 = vsub.f32 %v707, %v6229
      %v6231 = vand.u32 %v6230, 4294901760
      %6232 = vmatmul.f32.gmra.mxu0 %v6231
      %v6233 = vpop.f32.mrf.mxu0
      %v6234 = vadd.f32 %v4840, %v6233
      %v6235 = vand.u32 %v710, 4294901760
      %v6236 = vsub.f32 %v710, %v6235
      %v6237 = vand.u32 %v6236, 4294901760
      %6238 = vmatmul.f32.gmra.mxu0 %v6237
      %v6239 = vpop.f32.mrf.mxu0
      %v6240 = vadd.f32 %v4845, %v6239
      %v6241 = vand.u32 %v713, 4294901760
      %v6242 = vsub.f32 %v713, %v6241
      %v6243 = vand.u32 %v6242, 4294901760
      %6244 = vmatmul.f32.gmra.mxu0 %v6243
      %v6245 = vpop.f32.mrf.mxu0
      %v6246 = vadd.f32 %v4850, %v6245
      %v6247 = vand.u32 %v716, 4294901760
      %v6248 = vsub.f32 %v716, %v6247
      %v6249 = vand.u32 %v6248, 4294901760
      %6250 = vmatmul.f32.gmra.mxu0 %v6249
      %v6251 = vpop.f32.mrf.mxu0
      %v6252 = vadd.f32 %v4855, %v6251
      %v6253 = vand.u32 %v719, 4294901760
      %v6254 = vsub.f32 %v719, %v6253
      %v6255 = vand.u32 %v6254, 4294901760
      %6256 = vmatmul.f32.gmra.mxu0 %v6255
      %v6257 = vpop.f32.mrf.mxu0
      %v6258 = vadd.f32 %v4860, %v6257
      %v6259 = vand.u32 %v722, 4294901760
      %v6260 = vsub.f32 %v722, %v6259
      %v6261 = vand.u32 %v6260, 4294901760
      %6262 = vmatmul.f32.gmra.mxu0 %v6261
      %v6263 = vpop.f32.mrf.mxu0
      %v6264 = vadd.f32 %v4865, %v6263
      %v6265 = vand.u32 %v725, 4294901760
      %v6266 = vsub.f32 %v725, %v6265
      %v6267 = vand.u32 %v6266, 4294901760
      %6268 = vmatmul.f32.gmra.mxu0 %v6267
      %v6269 = vpop.f32.mrf.mxu0
      %v6270 = vadd.f32 %v4870, %v6269
      %v6271 = vand.u32 %v728, 4294901760
      %v6272 = vsub.f32 %v728, %v6271
      %v6273 = vand.u32 %v6272, 4294901760
      %6274 = vmatmul.f32.gmra.mxu0 %v6273
      %v6275 = vpop.f32.mrf.mxu0
      %v6276 = vadd.f32 %v4875, %v6275
      %v6277 = vand.u32 %v731, 4294901760
      %v6278 = vsub.f32 %v731, %v6277
      %v6279 = vand.u32 %v6278, 4294901760
      %6280 = vmatmul.f32.gmra.mxu0 %v6279
      %v6281 = vpop.f32.mrf.mxu0
      %v6282 = vadd.f32 %v4880, %v6281
      %v6283 = vand.u32 %v734, 4294901760
      %v6284 = vsub.f32 %v734, %v6283
      %v6285 = vand.u32 %v6284, 4294901760
      %6286 = vmatmul.f32.gmra.mxu0 %v6285
      %v6287 = vpop.f32.mrf.mxu0
      %v6288 = vadd.f32 %v4885, %v6287
      %v6289 = vand.u32 %v737, 4294901760
      %v6290 = vsub.f32 %v737, %v6289
      %v6291 = vand.u32 %v6290, 4294901760
      %6292 = vmatmul.f32.gmra.mxu0 %v6291
      %v6293 = vpop.f32.mrf.mxu0
      %v6294 = vadd.f32 %v4890, %v6293
      %v6295 = vand.u32 %v740, 4294901760
      %v6296 = vsub.f32 %v740, %v6295
      %v6297 = vand.u32 %v6296, 4294901760
      %6298 = vmatmul.f32.gmra.mxu0 %v6297
      %v6299 = vpop.f32.mrf.mxu0
      %v6300 = vadd.f32 %v4895, %v6299
      %v6301 = vand.u32 %v743, 4294901760
      %v6302 = vsub.f32 %v743, %v6301
      %v6303 = vand.u32 %v6302, 4294901760
      %6304 = vmatmul.f32.gmra.mxu0 %v6303
      %v6305 = vpop.f32.mrf.mxu0
      %v6306 = vadd.f32 %v4900, %v6305
      %v6307 = vand.u32 %v746, 4294901760
      %v6308 = vsub.f32 %v746, %v6307
      %v6309 = vand.u32 %v6308, 4294901760
      %6310 = vmatmul.f32.gmra.mxu0 %v6309
      %v6311 = vpop.f32.mrf.mxu0
      %v6312 = vadd.f32 %v4905, %v6311
      %v6313 = vand.u32 %v749, 4294901760
      %v6314 = vsub.f32 %v749, %v6313
      %v6315 = vand.u32 %v6314, 4294901760
      %6316 = vmatmul.f32.gmra.mxu0 %v6315
      %v6317 = vpop.f32.mrf.mxu0
      %v6318 = vadd.f32 %v4910, %v6317
      %v6319 = vand.u32 %v752, 4294901760
      %v6320 = vsub.f32 %v752, %v6319
      %v6321 = vand.u32 %v6320, 4294901760
      %6322 = vmatmul.f32.gmra.mxu0 %v6321
      %v6323 = vpop.f32.mrf.mxu0
      %v6324 = vadd.f32 %v4915, %v6323
      %v6325 = vand.u32 %v755, 4294901760
      %v6326 = vsub.f32 %v755, %v6325
      %v6327 = vand.u32 %v6326, 4294901760
      %6328 = vmatmul.f32.gmra.mxu0 %v6327
      %v6329 = vpop.f32.mrf.mxu0
      %v6330 = vadd.f32 %v4920, %v6329
      %v6331 = vand.u32 %v758, 4294901760
      %v6332 = vsub.f32 %v758, %v6331
      %v6333 = vand.u32 %v6332, 4294901760
      %6334 = vmatmul.f32.gmra.mxu0 %v6333
      %v6335 = vpop.f32.mrf.mxu0
      %v6336 = vadd.f32 %v4925, %v6335
      %v6337 = vand.u32 %v761, 4294901760
      %v6338 = vsub.f32 %v761, %v6337
      %v6339 = vand.u32 %v6338, 4294901760
      %6340 = vmatmul.f32.gmra.mxu0 %v6339
      %v6341 = vpop.f32.mrf.mxu0
      %v6342 = vadd.f32 %v4930, %v6341
      %v6343 = vand.u32 %v764, 4294901760
      %v6344 = vsub.f32 %v764, %v6343
      %v6345 = vand.u32 %v6344, 4294901760
      %6346 = vmatmul.f32.gmra.mxu0 %v6345
      %v6347 = vpop.f32.mrf.mxu0
      %v6348 = vadd.f32 %v4935, %v6347
      %v6349 = vand.u32 %v767, 4294901760
      %v6350 = vsub.f32 %v767, %v6349
      %v6351 = vand.u32 %v6350, 4294901760
      %6352 = vmatmul.f32.gmra.mxu0 %v6351
      %v6353 = vpop.f32.mrf.mxu0
      %v6354 = vadd.f32 %v4940, %v6353
      %v6355 = vand.u32 %v770, 4294901760
      %v6356 = vsub.f32 %v770, %v6355
      %v6357 = vand.u32 %v6356, 4294901760
      %6358 = vmatmul.f32.gmra.mxu0 %v6357
      %v6359 = vpop.f32.mrf.mxu0
      %v6360 = vadd.f32 %v4945, %v6359
      %v6361 = vand.u32 %v773, 4294901760
      %v6362 = vsub.f32 %v773, %v6361
      %v6363 = vand.u32 %v6362, 4294901760
      %6364 = vmatmul.f32.gmra.mxu0 %v6363
      %v6365 = vpop.f32.mrf.mxu0
      %v6366 = vadd.f32 %v4950, %v6365
      %v6367 = vand.u32 %v776, 4294901760
      %v6368 = vsub.f32 %v776, %v6367
      %v6369 = vand.u32 %v6368, 4294901760
      %6370 = vmatmul.f32.gmra.mxu0 %v6369
      %v6371 = vpop.f32.mrf.mxu0
      %v6372 = vadd.f32 %v4955, %v6371
      %v6373 = vand.u32 %v779, 4294901760
      %v6374 = vsub.f32 %v779, %v6373
      %v6375 = vand.u32 %v6374, 4294901760
      %6376 = vmatmul.f32.gmra.mxu0 %v6375
      %v6377 = vpop.f32.mrf.mxu0
      %v6378 = vadd.f32 %v4960, %v6377
      %v6379 = vand.u32 %v782, 4294901760
      %v6380 = vsub.f32 %v782, %v6379
      %v6381 = vand.u32 %v6380, 4294901760
      %6382 = vmatmul.f32.gmra.mxu0 %v6381
      %v6383 = vpop.f32.mrf.mxu0
      %v6384 = vadd.f32 %v4965, %v6383
      %v6385 = vand.u32 %v785, 4294901760
      %v6386 = vsub.f32 %v785, %v6385
      %v6387 = vand.u32 %v6386, 4294901760
      %6388 = vmatmul.f32.gmra.mxu0 %v6387
      %v6389 = vpop.f32.mrf.mxu0
      %v6390 = vadd.f32 %v4970, %v6389
      %v6391 = vand.u32 %v788, 4294901760
      %v6392 = vsub.f32 %v788, %v6391
      %v6393 = vand.u32 %v6392, 4294901760
      %6394 = vmatmul.f32.gmra.mxu0 %v6393
      %v6395 = vpop.f32.mrf.mxu0
      %v6396 = vadd.f32 %v4975, %v6395
      %v6397 = vand.u32 %v791, 4294901760
      %v6398 = vsub.f32 %v791, %v6397
      %v6399 = vand.u32 %v6398, 4294901760
      %6400 = vmatmul.f32.gmra.mxu0 %v6399
      %v6401 = vpop.f32.mrf.mxu0
      %v6402 = vadd.f32 %v4980, %v6401
      %v6403 = vand.u32 %v794, 4294901760
      %v6404 = vsub.f32 %v794, %v6403
      %v6405 = vand.u32 %v6404, 4294901760
      %6406 = vmatmul.f32.gmra.mxu0 %v6405
      %v6407 = vpop.f32.mrf.mxu0
      %v6408 = vadd.f32 %v4985, %v6407
      %v6409 = vand.u32 %v797, 4294901760
      %v6410 = vsub.f32 %v797, %v6409
      %v6411 = vand.u32 %v6410, 4294901760
      %6412 = vmatmul.f32.gmra.mxu0 %v6411
      %v6413 = vpop.f32.mrf.mxu0
      %v6414 = vadd.f32 %v4990, %v6413
      %v6415 = vand.u32 %v800, 4294901760
      %v6416 = vsub.f32 %v800, %v6415
      %v6417 = vand.u32 %v6416, 4294901760
      %6418 = vmatmul.f32.gmra.mxu0 %v6417
      %v6419 = vpop.f32.mrf.mxu0
      %v6420 = vadd.f32 %v4995, %v6419
      %v6421 = vand.u32 %v803, 4294901760
      %v6422 = vsub.f32 %v803, %v6421
      %v6423 = vand.u32 %v6422, 4294901760
      %6424 = vmatmul.f32.gmra.mxu0 %v6423
      %v6425 = vpop.f32.mrf.mxu0
      %v6426 = vadd.f32 %v5000, %v6425
      %v6427 = vand.u32 %v806, 4294901760
      %v6428 = vsub.f32 %v806, %v6427
      %v6429 = vand.u32 %v6428, 4294901760
      %6430 = vmatmul.f32.gmra.mxu0 %v6429
      %v6431 = vpop.f32.mrf.mxu0
      %v6432 = vadd.f32 %v5005, %v6431
      %v6433 = vand.u32 %v809, 4294901760
      %v6434 = vsub.f32 %v809, %v6433
      %v6435 = vand.u32 %v6434, 4294901760
      %6436 = vmatmul.f32.gmra.mxu0 %v6435
      %v6437 = vpop.f32.mrf.mxu0
      %v6438 = vadd.f32 %v5010, %v6437
      %v6439 = vand.u32 %v812, 4294901760
      %v6440 = vsub.f32 %v812, %v6439
      %v6441 = vand.u32 %v6440, 4294901760
      %6442 = vmatmul.f32.gmra.mxu0 %v6441
      %v6443 = vpop.f32.mrf.mxu0
      %v6444 = vadd.f32 %v5015, %v6443
      %v6445 = vand.u32 %v815, 4294901760
      %v6446 = vsub.f32 %v815, %v6445
      %v6447 = vand.u32 %v6446, 4294901760
      %6448 = vmatmul.f32.gmra.mxu0 %v6447
      %v6449 = vpop.f32.mrf.mxu0
      %v6450 = vadd.f32 %v5020, %v6449
      %v6451 = vand.u32 %v818, 4294901760
      %v6452 = vsub.f32 %v818, %v6451
      %v6453 = vand.u32 %v6452, 4294901760
      %6454 = vmatmul.f32.gmra.mxu0 %v6453
      %v6455 = vpop.f32.mrf.mxu0
      %v6456 = vadd.f32 %v5025, %v6455
      %v6457 = vand.u32 %v821, 4294901760
      %v6458 = vsub.f32 %v821, %v6457
      %v6459 = vand.u32 %v6458, 4294901760
      %6460 = vmatmul.f32.gmra.mxu0 %v6459
      %v6461 = vpop.f32.mrf.mxu0
      %v6462 = vadd.f32 %v5030, %v6461
      %v6463 = vand.u32 %v824, 4294901760
      %v6464 = vsub.f32 %v824, %v6463
      %v6465 = vand.u32 %v6464, 4294901760
      %6466 = vmatmul.f32.gmra.mxu0 %v6465
      %v6467 = vpop.f32.mrf.mxu0
      %v6468 = vadd.f32 %v5035, %v6467
      %v6469 = vand.u32 %v827, 4294901760
      %v6470 = vsub.f32 %v827, %v6469
      %v6471 = vand.u32 %v6470, 4294901760
      %6472 = vmatmul.f32.gmra.mxu0 %v6471
      %v6473 = vpop.f32.mrf.mxu0
      %v6474 = vadd.f32 %v5040, %v6473
      %v6475 = vand.u32 %v830, 4294901760
      %v6476 = vsub.f32 %v830, %v6475
      %v6477 = vand.u32 %v6476, 4294901760
      %6478 = vmatmul.f32.gmra.mxu0 %v6477
      %v6479 = vpop.f32.mrf.mxu0
      %v6480 = vadd.f32 %v5045, %v6479
      %v6481 = vand.u32 %v833, 4294901760
      %v6482 = vsub.f32 %v833, %v6481
      %v6483 = vand.u32 %v6482, 4294901760
      %6484 = vmatmul.f32.gmra.mxu0 %v6483
      %v6485 = vpop.f32.mrf.mxu0
      %v6486 = vadd.f32 %v5050, %v6485
      %v6487 = vand.u32 %v836, 4294901760
      %v6488 = vsub.f32 %v836, %v6487
      %v6489 = vand.u32 %v6488, 4294901760
      %6490 = vmatmul.f32.gmra.mxu0 %v6489
      %v6491 = vpop.f32.mrf.mxu0
      %v6492 = vadd.f32 %v5055, %v6491
      %v6493 = vand.u32 %v839, 4294901760
      %v6494 = vsub.f32 %v839, %v6493
      %v6495 = vand.u32 %v6494, 4294901760
      %6496 = vmatmul.f32.gmra.mxu0 %v6495
      %v6497 = vpop.f32.mrf.mxu0
      %v6498 = vadd.f32 %v5060, %v6497
      %v6499 = vand.u32 %v842, 4294901760
      %v6500 = vsub.f32 %v842, %v6499
      %v6501 = vand.u32 %v6500, 4294901760
      %6502 = vmatmul.f32.gmra.mxu0 %v6501
      %v6503 = vpop.f32.mrf.mxu0
      %v6504 = vadd.f32 %v5065, %v6503
      %v6505 = vand.u32 %v845, 4294901760
      %v6506 = vsub.f32 %v845, %v6505
      %v6507 = vand.u32 %v6506, 4294901760
      %6508 = vmatmul.f32.gmra.mxu0 %v6507
      %v6509 = vpop.f32.mrf.mxu0
      %v6510 = vadd.f32 %v5070, %v6509
      %v6511 = vand.u32 %v848, 4294901760
      %v6512 = vsub.f32 %v848, %v6511
      %v6513 = vand.u32 %v6512, 4294901760
      %6514 = vmatmul.f32.gmra.mxu0 %v6513
      %v6515 = vpop.f32.mrf.mxu0
      %v6516 = vadd.f32 %v5075, %v6515
      %v6517 = vand.u32 %v851, 4294901760
      %v6518 = vsub.f32 %v851, %v6517
      %v6519 = vand.u32 %v6518, 4294901760
      %6520 = vmatmul.f32.gmra.mxu0 %v6519
      %v6521 = vpop.f32.mrf.mxu0
      %v6522 = vadd.f32 %v5080, %v6521
      %v6523 = vand.u32 %v854, 4294901760
      %v6524 = vsub.f32 %v854, %v6523
      %v6525 = vand.u32 %v6524, 4294901760
      %6526 = vmatmul.f32.gmra.mxu0 %v6525
      %v6527 = vpop.f32.mrf.mxu0
      %v6528 = vadd.f32 %v5085, %v6527
      %v6529 = vand.u32 %v857, 4294901760
      %v6530 = vsub.f32 %v857, %v6529
      %v6531 = vand.u32 %v6530, 4294901760
      %6532 = vmatmul.f32.gmra.mxu0 %v6531
      %v6533 = vpop.f32.mrf.mxu0
      %v6534 = vadd.f32 %v5090, %v6533
      %v6535 = vand.u32 %v860, 4294901760
      %v6536 = vsub.f32 %v860, %v6535
      %v6537 = vand.u32 %v6536, 4294901760
      %6538 = vmatmul.f32.gmra.mxu0 %v6537
      %v6539 = vpop.f32.mrf.mxu0
      %v6540 = vadd.f32 %v5095, %v6539
      %v6541 = vand.u32 %v863, 4294901760
      %v6542 = vsub.f32 %v863, %v6541
      %v6543 = vand.u32 %v6542, 4294901760
      %6544 = vmatmul.f32.gmra.mxu0 %v6543
      %v6545 = vpop.f32.mrf.mxu0
      %v6546 = vadd.f32 %v5100, %v6545
      %v6547 = vand.u32 %v866, 4294901760
      %v6548 = vsub.f32 %v866, %v6547
      %v6549 = vand.u32 %v6548, 4294901760
      %6550 = vmatmul.f32.gmra.mxu0 %v6549
      %v6551 = vpop.f32.mrf.mxu0
      %v6552 = vadd.f32 %v5105, %v6551
      %v6553 = vand.u32 %v869, 4294901760
      %v6554 = vsub.f32 %v869, %v6553
      %v6555 = vand.u32 %v6554, 4294901760
      %6556 = vmatmul.f32.gmra.mxu0 %v6555
      %v6557 = vpop.f32.mrf.mxu0
      %v6558 = vadd.f32 %v5110, %v6557
      %v6559 = vand.u32 %v872, 4294901760
      %v6560 = vsub.f32 %v872, %v6559
      %v6561 = vand.u32 %v6560, 4294901760
      %6562 = vmatmul.f32.gmra.mxu0 %v6561
      %v6563 = vpop.f32.mrf.mxu0
      %v6564 = vadd.f32 %v5115, %v6563
      %v6565 = vand.u32 %v875, 4294901760
      %v6566 = vsub.f32 %v875, %v6565
      %v6567 = vand.u32 %v6566, 4294901760
      %6568 = vmatmul.f32.gmra.mxu0 %v6567
      %v6569 = vpop.f32.mrf.mxu0
      %v6570 = vadd.f32 %v5120, %v6569
      %v6571 = vand.u32 %v878, 4294901760
      %v6572 = vsub.f32 %v878, %v6571
      %v6573 = vand.u32 %v6572, 4294901760
      %6574 = vmatmul.f32.gmra.mxu0 %v6573
      %v6575 = vpop.f32.mrf.mxu0
      %v6576 = vadd.f32 %v5125, %v6575
      %v6577 = vand.u32 %v881, 4294901760
      %v6578 = vsub.f32 %v881, %v6577
      %v6579 = vand.u32 %v6578, 4294901760
      %6580 = vmatmul.f32.gmra.mxu0 %v6579
      %v6581 = vpop.f32.mrf.mxu0
      %v6582 = vadd.f32 %v5130, %v6581
      %v6583 = vand.u32 %v884, 4294901760
      %v6584 = vsub.f32 %v884, %v6583
      %v6585 = vand.u32 %v6584, 4294901760
      %6586 = vmatmul.f32.gmra.mxu0 %v6585
      %v6587 = vpop.f32.mrf.mxu0
      %v6588 = vadd.f32 %v5135, %v6587
      %v6589 = vand.u32 %v887, 4294901760
      %v6590 = vsub.f32 %v887, %v6589
      %v6591 = vand.u32 %v6590, 4294901760
      %6592 = vmatmul.f32.gmra.mxu0 %v6591
      %v6593 = vpop.f32.mrf.mxu0
      %v6594 = vadd.f32 %v5140, %v6593
      %v6595 = vand.u32 %v890, 4294901760
      %v6596 = vsub.f32 %v890, %v6595
      %v6597 = vand.u32 %v6596, 4294901760
      %6598 = vmatmul.f32.gmra.mxu0 %v6597
      %v6599 = vpop.f32.mrf.mxu0
      %v6600 = vadd.f32 %v5145, %v6599
      %v6601 = vand.u32 %v893, 4294901760
      %v6602 = vsub.f32 %v893, %v6601
      %v6603 = vand.u32 %v6602, 4294901760
      %6604 = vmatmul.f32.gmra.mxu0 %v6603
      %v6605 = vpop.f32.mrf.mxu0
      %v6606 = vadd.f32 %v5150, %v6605
      %v6607 = vand.u32 %v896, 4294901760
      %v6608 = vsub.f32 %v896, %v6607
      %v6609 = vand.u32 %v6608, 4294901760
      %6610 = vmatmul.f32.gmra.mxu0 %v6609
      %v6611 = vpop.f32.mrf.mxu0
      %v6612 = vadd.f32 %v5155, %v6611
      %v6613 = vand.u32 %v899, 4294901760
      %v6614 = vsub.f32 %v899, %v6613
      %v6615 = vand.u32 %v6614, 4294901760
      %6616 = vmatmul.f32.gmra.mxu0 %v6615
      %v6617 = vpop.f32.mrf.mxu0
      %v6618 = vadd.f32 %v5160, %v6617
      %v6619 = vand.u32 %v902, 4294901760
      %v6620 = vsub.f32 %v902, %v6619
      %v6621 = vand.u32 %v6620, 4294901760
      %6622 = vmatmul.f32.gmra.mxu0 %v6621
      %v6623 = vpop.f32.mrf.mxu0
      %v6624 = vadd.f32 %v5165, %v6623
      %v6625 = vand.u32 %v905, 4294901760
      %v6626 = vsub.f32 %v905, %v6625
      %v6627 = vand.u32 %v6626, 4294901760
      %6628 = vmatmul.f32.gmra.mxu0 %v6627
      %v6629 = vpop.f32.mrf.mxu0
      %v6630 = vadd.f32 %v5170, %v6629
      %v6631 = vand.u32 %v908, 4294901760
      %v6632 = vsub.f32 %v908, %v6631
      %v6633 = vand.u32 %v6632, 4294901760
      %6634 = vmatmul.f32.gmra.mxu0 %v6633
      %v6635 = vpop.f32.mrf.mxu0
      %v6636 = vadd.f32 %v5175, %v6635
      %v6637 = vand.u32 %v911, 4294901760
      %v6638 = vsub.f32 %v911, %v6637
      %v6639 = vand.u32 %v6638, 4294901760
      %6640 = vmatmul.f32.gmra.mxu0 %v6639
      %v6641 = vpop.f32.mrf.mxu0
      %v6642 = vadd.f32 %v5180, %v6641
      %v6643 = vand.u32 %v914, 4294901760
      %v6644 = vsub.f32 %v914, %v6643
      %v6645 = vand.u32 %v6644, 4294901760
      %6646 = vmatmul.f32.gmra.mxu0 %v6645
      %v6647 = vpop.f32.mrf.mxu0
      %v6648 = vadd.f32 %v5185, %v6647
      %v6649 = vand.u32 %v917, 4294901760
      %v6650 = vsub.f32 %v917, %v6649
      %v6651 = vand.u32 %v6650, 4294901760
      %6652 = vmatmul.f32.gmra.mxu0 %v6651
      %v6653 = vpop.f32.mrf.mxu0
      %v6654 = vadd.f32 %v5190, %v6653
      %v6655 = vand.u32 %v920, 4294901760
      %v6656 = vsub.f32 %v920, %v6655
      %v6657 = vand.u32 %v6656, 4294901760
      %6658 = vmatmul.f32.gmra.mxu0 %v6657
      %v6659 = vpop.f32.mrf.mxu0
      %v6660 = vadd.f32 %v5195, %v6659
      %v6661 = vand.u32 %v923, 4294901760
      %v6662 = vsub.f32 %v923, %v6661
      %v6663 = vand.u32 %v6662, 4294901760
      %6664 = vmatmul.f32.gmra.mxu0 %v6663
      %v6665 = vpop.f32.mrf.mxu0
      %v6666 = vadd.f32 %v5200, %v6665
      %v6667 = vand.u32 %v926, 4294901760
      %v6668 = vsub.f32 %v926, %v6667
      %v6669 = vand.u32 %v6668, 4294901760
      %6670 = vmatmul.f32.gmra.mxu0 %v6669
      %v6671 = vpop.f32.mrf.mxu0
      %v6672 = vadd.f32 %v5205, %v6671
      %v6673 = vand.u32 %v929, 4294901760
      %v6674 = vsub.f32 %v929, %v6673
      %v6675 = vand.u32 %v6674, 4294901760
      %6676 = vmatmul.f32.gmra.mxu0 %v6675
      %v6677 = vpop.f32.mrf.mxu0
      %v6678 = vadd.f32 %v5210, %v6677
      %v6679 = vand.u32 %v932, 4294901760
      %v6680 = vsub.f32 %v932, %v6679
      %v6681 = vand.u32 %v6680, 4294901760
      %6682 = vmatmul.f32.gmra.mxu0 %v6681
      %v6683 = vpop.f32.mrf.mxu0
      %v6684 = vadd.f32 %v5215, %v6683
      %v6685 = vand.u32 %v935, 4294901760
      %v6686 = vsub.f32 %v935, %v6685
      %v6687 = vand.u32 %v6686, 4294901760
      %6688 = vmatmul.f32.gmra.mxu0 %v6687
      %v6689 = vpop.f32.mrf.mxu0
      %v6690 = vadd.f32 %v5220, %v6689
      %v6691 = vand.u32 %v938, 4294901760
      %v6692 = vsub.f32 %v938, %v6691
      %v6693 = vand.u32 %v6692, 4294901760
      %6694 = vmatmul.f32.gmra.mxu0 %v6693
      %v6695 = vpop.f32.mrf.mxu0
      %v6696 = vadd.f32 %v5225, %v6695
      %v6697 = vand.u32 %v941, 4294901760
      %v6698 = vsub.f32 %v941, %v6697
      %v6699 = vand.u32 %v6698, 4294901760
      %6700 = vmatmul.f32.gmra.mxu0 %v6699
      %v6701 = vpop.f32.mrf.mxu0
      %v6702 = vadd.f32 %v5230, %v6701
      %v6703 = vand.u32 %v944, 4294901760
      %v6704 = vsub.f32 %v944, %v6703
      %v6705 = vand.u32 %v6704, 4294901760
      %6706 = vmatmul.f32.gmra.mxu0 %v6705
      %v6707 = vpop.f32.mrf.mxu0
      %v6708 = vadd.f32 %v5235, %v6707
      %v6709 = vand.u32 %v947, 4294901760
      %v6710 = vsub.f32 %v947, %v6709
      %v6711 = vand.u32 %v6710, 4294901760
      %6712 = vmatmul.f32.gmra.mxu0 %v6711
      %v6713 = vpop.f32.mrf.mxu0
      %v6714 = vadd.f32 %v5240, %v6713
      %v6715 = vand.u32 %v950, 4294901760
      %v6716 = vsub.f32 %v950, %v6715
      %v6717 = vand.u32 %v6716, 4294901760
      %6718 = vmatmul.f32.gmra.mxu0 %v6717
      %v6719 = vpop.f32.mrf.mxu0
      %v6720 = vadd.f32 %v5245, %v6719
      %v6721 = vand.u32 %v953, 4294901760
      %v6722 = vsub.f32 %v953, %v6721
      %v6723 = vand.u32 %v6722, 4294901760
      %6724 = vmatmul.f32.gmra.mxu0 %v6723
      %v6725 = vpop.f32.mrf.mxu0
      %v6726 = vadd.f32 %v5250, %v6725
      %v6727 = vand.u32 %v956, 4294901760
      %v6728 = vsub.f32 %v956, %v6727
      %v6729 = vand.u32 %v6728, 4294901760
      %6730 = vmatmul.f32.gmra.mxu0 %v6729
      %v6731 = vpop.f32.mrf.mxu0
      %v6732 = vadd.f32 %v5255, %v6731
      %v6733 = vand.u32 %v959, 4294901760
      %v6734 = vsub.f32 %v959, %v6733
      %v6735 = vand.u32 %v6734, 4294901760
      %6736 = vmatmul.f32.gmra.mxu0 %v6735
      %v6737 = vpop.f32.mrf.mxu0
      %v6738 = vadd.f32 %v5260, %v6737
      %v6739 = vand.u32 %v962, 4294901760
      %v6740 = vsub.f32 %v962, %v6739
      %v6741 = vand.u32 %v6740, 4294901760
      %6742 = vmatmul.f32.gmra.mxu0 %v6741
      %v6743 = vpop.f32.mrf.mxu0
      %v6744 = vadd.f32 %v5265, %v6743
      %v6745 = vand.u32 %v965, 4294901760
      %v6746 = vsub.f32 %v965, %v6745
      %v6747 = vand.u32 %v6746, 4294901760
      %6748 = vmatmul.f32.gmra.mxu0 %v6747
      %v6749 = vpop.f32.mrf.mxu0
      %v6750 = vadd.f32 %v5270, %v6749
      %v6751 = vand.u32 %v968, 4294901760
      %v6752 = vsub.f32 %v968, %v6751
      %v6753 = vand.u32 %v6752, 4294901760
      %6754 = vmatmul.f32.gmra.mxu0 %v6753
      %v6755 = vpop.f32.mrf.mxu0
      %v6756 = vadd.f32 %v5275, %v6755
      %v6757 = vand.u32 %v971, 4294901760
      %v6758 = vsub.f32 %v971, %v6757
      %v6759 = vand.u32 %v6758, 4294901760
      %6760 = vmatmul.f32.gmra.mxu0 %v6759
      %v6761 = vpop.f32.mrf.mxu0
      %v6762 = vadd.f32 %v5280, %v6761
      %v6763 = vand.u32 %v974, 4294901760
      %v6764 = vsub.f32 %v974, %v6763
      %v6765 = vand.u32 %v6764, 4294901760
      %6766 = vmatmul.f32.gmra.mxu0 %v6765
      %v6767 = vpop.f32.mrf.mxu0
      %v6768 = vadd.f32 %v5285, %v6767
      %v6769 = vand.u32 %v977, 4294901760
      %v6770 = vsub.f32 %v977, %v6769
      %v6771 = vand.u32 %v6770, 4294901760
      %6772 = vmatmul.f32.gmra.mxu0 %v6771
      %v6773 = vpop.f32.mrf.mxu0
      %v6774 = vadd.f32 %v5290, %v6773
      %v6775 = vand.u32 %v980, 4294901760
      %v6776 = vsub.f32 %v980, %v6775
      %v6777 = vand.u32 %v6776, 4294901760
      %6778 = vmatmul.f32.gmra.mxu0 %v6777
      %v6779 = vpop.f32.mrf.mxu0
      %v6780 = vadd.f32 %v5295, %v6779
      %v6781 = vand.u32 %v983, 4294901760
      %v6782 = vsub.f32 %v983, %v6781
      %v6783 = vand.u32 %v6782, 4294901760
      %6784 = vmatmul.f32.gmra.mxu0 %v6783
      %v6785 = vpop.f32.mrf.mxu0
      %v6786 = vadd.f32 %v5300, %v6785
      %v6787 = vand.u32 %v986, 4294901760
      %v6788 = vsub.f32 %v986, %v6787
      %v6789 = vand.u32 %v6788, 4294901760
      %6790 = vmatmul.f32.gmra.mxu0 %v6789
      %v6791 = vpop.f32.mrf.mxu0
      %v6792 = vadd.f32 %v5305, %v6791
      %v6793 = vand.u32 %v989, 4294901760
      %v6794 = vsub.f32 %v989, %v6793
      %v6795 = vand.u32 %v6794, 4294901760
      %6796 = vmatmul.f32.gmra.mxu0 %v6795
      %v6797 = vpop.f32.mrf.mxu0
      %v6798 = vadd.f32 %v5310, %v6797
      %v6799 = vand.u32 %v992, 4294901760
      %v6800 = vsub.f32 %v992, %v6799
      %v6801 = vand.u32 %v6800, 4294901760
      %6802 = vmatmul.f32.gmra.mxu0 %v6801
      %v6803 = vpop.f32.mrf.mxu0
      %v6804 = vadd.f32 %v5315, %v6803
      %v6805 = vand.u32 %v995, 4294901760
      %v6806 = vsub.f32 %v995, %v6805
      %v6807 = vand.u32 %v6806, 4294901760
      %6808 = vmatmul.f32.gmra.mxu0 %v6807
      %v6809 = vpop.f32.mrf.mxu0
      %v6810 = vadd.f32 %v5320, %v6809
      %v6811 = vand.u32 %v998, 4294901760
      %v6812 = vsub.f32 %v998, %v6811
      %v6813 = vand.u32 %v6812, 4294901760
      %6814 = vmatmul.f32.gmra.mxu0 %v6813
      %v6815 = vpop.f32.mrf.mxu0
      %v6816 = vadd.f32 %v5325, %v6815
      %v6817 = vand.u32 %v1001, 4294901760
      %v6818 = vsub.f32 %v1001, %v6817
      %v6819 = vand.u32 %v6818, 4294901760
      %6820 = vmatmul.f32.gmra.mxu0 %v6819
      %v6821 = vpop.f32.mrf.mxu0
      %v6822 = vadd.f32 %v5330, %v6821
      %v6823 = vand.u32 %v1004, 4294901760
      %v6824 = vsub.f32 %v1004, %v6823
      %v6825 = vand.u32 %v6824, 4294901760
      %6826 = vmatmul.f32.gmra.mxu0 %v6825
      %v6827 = vpop.f32.mrf.mxu0
      %v6828 = vadd.f32 %v5335, %v6827
      %v6829 = vand.u32 %v1007, 4294901760
      %v6830 = vsub.f32 %v1007, %v6829
      %v6831 = vand.u32 %v6830, 4294901760
      %6832 = vmatmul.f32.gmra.mxu0 %v6831
      %v6833 = vpop.f32.mrf.mxu0
      %v6834 = vadd.f32 %v5340, %v6833
      %v6835 = vand.u32 %v1010, 4294901760
      %v6836 = vsub.f32 %v1010, %v6835
      %v6837 = vand.u32 %v6836, 4294901760
      %6838 = vmatmul.f32.gmra.mxu0 %v6837
      %v6839 = vpop.f32.mrf.mxu0
      %v6840 = vadd.f32 %v5345, %v6839
      %v6841 = vand.u32 %v1013, 4294901760
      %v6842 = vsub.f32 %v1013, %v6841
      %v6843 = vand.u32 %v6842, 4294901760
      %6844 = vmatmul.f32.gmra.mxu0 %v6843
      %v6845 = vpop.f32.mrf.mxu0
      %v6846 = vadd.f32 %v5350, %v6845
      %v6847 = vand.u32 %v1016, 4294901760
      %v6848 = vsub.f32 %v1016, %v6847
      %v6849 = vand.u32 %v6848, 4294901760
      %6850 = vmatmul.f32.gmra.mxu0 %v6849
      %v6851 = vpop.f32.mrf.mxu0
      %v6852 = vadd.f32 %v5355, %v6851
      %v6853 = vand.u32 %v1019, 4294901760
      %v6854 = vsub.f32 %v1019, %v6853
      %v6855 = vand.u32 %v6854, 4294901760
      %6856 = vmatmul.f32.gmra.mxu0 %v6855
      %v6857 = vpop.f32.mrf.mxu0
      %v6858 = vadd.f32 %v5360, %v6857
      %v6859 = vand.u32 %v1022, 4294901760
      %v6860 = vsub.f32 %v1022, %v6859
      %v6861 = vand.u32 %v6860, 4294901760
      %6862 = vmatmul.f32.gmra.mxu0 %v6861
      %v6863 = vpop.f32.mrf.mxu0
      %v6864 = vadd.f32 %v5365, %v6863
      %v6865 = vand.u32 %v1025, 4294901760
      %v6866 = vsub.f32 %v1025, %v6865
      %v6867 = vand.u32 %v6866, 4294901760
      %6868 = vmatmul.f32.gmra.mxu0 %v6867
      %v6869 = vpop.f32.mrf.mxu0
      %v6870 = vadd.f32 %v5370, %v6869
      %v6871 = vand.u32 %v1028, 4294901760
      %v6872 = vsub.f32 %v1028, %v6871
      %v6873 = vand.u32 %v6872, 4294901760
      %6874 = vmatmul.f32.gmra.mxu0 %v6873
      %v6875 = vpop.f32.mrf.mxu0
      %v6876 = vadd.f32 %v5375, %v6875
      %v6877 = vand.u32 %v1031, 4294901760
      %v6878 = vsub.f32 %v1031, %v6877
      %v6879 = vand.u32 %v6878, 4294901760
      %6880 = vmatmul.f32.gmra.mxu0 %v6879
      %v6881 = vpop.f32.mrf.mxu0
      %v6882 = vadd.f32 %v5380, %v6881
      %v6883 = vand.u32 %v1034, 4294901760
      %v6884 = vsub.f32 %v1034, %v6883
      %v6885 = vand.u32 %v6884, 4294901760
      %6886 = vmatmul.f32.gmra.mxu0 %v6885
      %v6887 = vpop.f32.mrf.mxu0
      %v6888 = vadd.f32 %v5385, %v6887
      %v6889 = vand.u32 %v1037, 4294901760
      %v6890 = vsub.f32 %v1037, %v6889
      %v6891 = vand.u32 %v6890, 4294901760
      %6892 = vmatmul.f32.gmra.mxu0 %v6891
      %v6893 = vpop.f32.mrf.mxu0
      %v6894 = vadd.f32 %v5390, %v6893
      %v6895 = vand.u32 %v1040, 4294901760
      %v6896 = vsub.f32 %v1040, %v6895
      %v6897 = vand.u32 %v6896, 4294901760
      %6898 = vmatmul.f32.gmra.mxu0 %v6897
      %v6899 = vpop.f32.mrf.mxu0
      %v6900 = vadd.f32 %v5395, %v6899
      %v6901 = vand.u32 %v1043, 4294901760
      %v6902 = vsub.f32 %v1043, %v6901
      %v6903 = vand.u32 %v6902, 4294901760
      %6904 = vmatmul.f32.gmra.mxu0 %v6903
      %v6905 = vpop.f32.mrf.mxu0
      %v6906 = vadd.f32 %v5400, %v6905
      %v6907 = vand.u32 %v1046, 4294901760
      %v6908 = vsub.f32 %v1046, %v6907
      %v6909 = vand.u32 %v6908, 4294901760
      %6910 = vmatmul.f32.gmra.mxu0 %v6909
      %v6911 = vpop.f32.mrf.mxu0
      %v6912 = vadd.f32 %v5405, %v6911
      %v6913 = vand.u32 %v1049, 4294901760
      %v6914 = vsub.f32 %v1049, %v6913
      %v6915 = vand.u32 %v6914, 4294901760
      %6916 = vmatmul.f32.gmra.mxu0 %v6915
      %v6917 = vpop.f32.mrf.mxu0
      %v6918 = vadd.f32 %v5410, %v6917
      %v6919 = vand.u32 %v1052, 4294901760
      %v6920 = vsub.f32 %v1052, %v6919
      %v6921 = vand.u32 %v6920, 4294901760
      %6922 = vmatmul.f32.gmra.mxu0 %v6921
      %v6923 = vpop.f32.mrf.mxu0
      %v6924 = vadd.f32 %v5415, %v6923
      %v6925 = vand.u32 %v1055, 4294901760
      %v6926 = vsub.f32 %v1055, %v6925
      %v6927 = vand.u32 %v6926, 4294901760
      %6928 = vmatmul.f32.gmra.mxu0 %v6927
      %v6929 = vpop.f32.mrf.mxu0
      %v6930 = vadd.f32 %v5420, %v6929
      %v6931 = vand.u32 %v1058, 4294901760
      %v6932 = vsub.f32 %v1058, %v6931
      %v6933 = vand.u32 %v6932, 4294901760
      %6934 = vmatmul.f32.gmra.mxu0 %v6933
      %v6935 = vpop.f32.mrf.mxu0
      %v6936 = vadd.f32 %v5425, %v6935
      %v6937 = vand.u32 %v1061, 4294901760
      %v6938 = vsub.f32 %v1061, %v6937
      %v6939 = vand.u32 %v6938, 4294901760
      %6940 = vmatmul.f32.gmra.mxu0 %v6939
      %v6941 = vpop.f32.mrf.mxu0
      %v6942 = vadd.f32 %v5430, %v6941
      %v6943 = vand.u32 %v1064, 4294901760
      %v6944 = vsub.f32 %v1064, %v6943
      %v6945 = vand.u32 %v6944, 4294901760
      %6946 = vmatmul.f32.gmra.mxu0 %v6945
      %v6947 = vpop.f32.mrf.mxu0
      %v6948 = vadd.f32 %v5435, %v6947
      %v6949 = vand.u32 %v1067, 4294901760
      %v6950 = vsub.f32 %v1067, %v6949
      %v6951 = vand.u32 %v6950, 4294901760
      %6952 = vmatmul.f32.gmra.mxu0 %v6951
      %v6953 = vpop.f32.mrf.mxu0
      %v6954 = vadd.f32 %v5440, %v6953
      %v6955 = vand.u32 %v1070, 4294901760
      %v6956 = vsub.f32 %v1070, %v6955
      %v6957 = vand.u32 %v6956, 4294901760
      %6958 = vmatmul.f32.gmra.mxu0 %v6957
      %v6959 = vpop.f32.mrf.mxu0
      %v6960 = vadd.f32 %v5445, %v6959
      %v6961 = vand.u32 %v1073, 4294901760
      %v6962 = vsub.f32 %v1073, %v6961
      %v6963 = vand.u32 %v6962, 4294901760
      %6964 = vmatmul.f32.gmra.mxu0 %v6963
      %v6965 = vpop.f32.mrf.mxu0
      %v6966 = vadd.f32 %v5450, %v6965
      %v6967 = vand.u32 %v1076, 4294901760
      %v6968 = vsub.f32 %v1076, %v6967
      %v6969 = vand.u32 %v6968, 4294901760
      %6970 = vmatmul.f32.gmra.mxu0 %v6969
      %v6971 = vpop.f32.mrf.mxu0
      %v6972 = vadd.f32 %v5455, %v6971
      %v6973 = vand.u32 %v1079, 4294901760
      %v6974 = vsub.f32 %v1079, %v6973
      %v6975 = vand.u32 %v6974, 4294901760
      %6976 = vmatmul.f32.gmra.mxu0 %v6975
      %v6977 = vpop.f32.mrf.mxu0
      %v6978 = vadd.f32 %v5460, %v6977
      %v6979 = vand.u32 %v1082, 4294901760
      %v6980 = vsub.f32 %v1082, %v6979
      %v6981 = vand.u32 %v6980, 4294901760
      %6982 = vmatmul.f32.gmra.mxu0 %v6981
      %v6983 = vpop.f32.mrf.mxu0
      %v6984 = vadd.f32 %v5465, %v6983
      %v6985 = vand.u32 %v1085, 4294901760
      %v6986 = vsub.f32 %v1085, %v6985
      %v6987 = vand.u32 %v6986, 4294901760
      %6988 = vmatmul.f32.gmra.mxu0 %v6987
      %v6989 = vpop.f32.mrf.mxu0
      %v6990 = vadd.f32 %v5470, %v6989
      %v6991 = vand.u32 %v1088, 4294901760
      %v6992 = vsub.f32 %v1088, %v6991
      %v6993 = vand.u32 %v6992, 4294901760
      %6994 = vmatmul.f32.gmra.mxu0 %v6993
      %v6995 = vpop.f32.mrf.mxu0
      %v6996 = vadd.f32 %v5475, %v6995
      %v6997 = vand.u32 %v1091, 4294901760
      %v6998 = vsub.f32 %v1091, %v6997
      %v6999 = vand.u32 %v6998, 4294901760
      %7000 = vmatmul.f32.gmra.mxu0 %v6999
      %v7001 = vpop.f32.mrf.mxu0
      %v7002 = vadd.f32 %v5480, %v7001
      %v7003 = vand.u32 %v1094, 4294901760
      %v7004 = vsub.f32 %v1094, %v7003
      %v7005 = vand.u32 %v7004, 4294901760
      %7006 = vmatmul.f32.gmra.mxu0 %v7005
      %v7007 = vpop.f32.mrf.mxu0
      %v7008 = vadd.f32 %v5485, %v7007
      %v7009 = vand.u32 %v1097, 4294901760
      %v7010 = vsub.f32 %v1097, %v7009
      %v7011 = vand.u32 %v7010, 4294901760
      %7012 = vmatmul.f32.gmra.mxu0 %v7011
      %v7013 = vpop.f32.mrf.mxu0
      %v7014 = vadd.f32 %v5490, %v7013
      %v7015 = vand.u32 %v1100, 4294901760
      %v7016 = vsub.f32 %v1100, %v7015
      %v7017 = vand.u32 %v7016, 4294901760
      %7018 = vmatmul.f32.gmra.mxu0 %v7017
      %v7019 = vpop.f32.mrf.mxu0
      %v7020 = vadd.f32 %v5495, %v7019
      %v7021 = vand.u32 %v1103, 4294901760
      %v7022 = vsub.f32 %v1103, %v7021
      %v7023 = vand.u32 %v7022, 4294901760
      %7024 = vmatmul.f32.gmra.mxu0 %v7023
      %v7025 = vpop.f32.mrf.mxu0
      %v7026 = vadd.f32 %v5500, %v7025
      %v7027 = vand.u32 %v1106, 4294901760
      %v7028 = vsub.f32 %v1106, %v7027
      %v7029 = vand.u32 %v7028, 4294901760
      %7030 = vmatmul.f32.gmra.mxu0 %v7029
      %v7031 = vpop.f32.mrf.mxu0
      %v7032 = vadd.f32 %v5505, %v7031
      %v7033 = vand.u32 %v1109, 4294901760
      %v7034 = vsub.f32 %v1109, %v7033
      %v7035 = vand.u32 %v7034, 4294901760
      %7036 = vmatmul.f32.gmra.mxu0 %v7035
      %v7037 = vpop.f32.mrf.mxu0
      %v7038 = vadd.f32 %v5510, %v7037
      %v7039 = vand.u32 %v1112, 4294901760
      %v7040 = vsub.f32 %v1112, %v7039
      %v7041 = vand.u32 %v7040, 4294901760
      %7042 = vmatmul.f32.gmra.mxu0 %v7041
      %v7043 = vpop.f32.mrf.mxu0
      %v7044 = vadd.f32 %v5515, %v7043
      %v7045 = vand.u32 %v1115, 4294901760
      %v7046 = vsub.f32 %v1115, %v7045
      %v7047 = vand.u32 %v7046, 4294901760
      %7048 = vmatmul.f32.gmra.mxu0 %v7047
      %v7049 = vpop.f32.mrf.mxu0
      %v7050 = vadd.f32 %v5520, %v7049
      %v7051 = vand.u32 %v1118, 4294901760
      %v7052 = vsub.f32 %v1118, %v7051
      %v7053 = vand.u32 %v7052, 4294901760
      %7054 = vmatmul.f32.gmra.mxu0 %v7053
      %v7055 = vpop.f32.mrf.mxu0
      %v7056 = vadd.f32 %v5525, %v7055
      %v7057 = vand.u32 %v1121, 4294901760
      %v7058 = vsub.f32 %v1121, %v7057
      %v7059 = vand.u32 %v7058, 4294901760
      %7060 = vmatmul.f32.gmra.mxu0 %v7059
      %v7061 = vpop.f32.mrf.mxu0
      %v7062 = vadd.f32 %v5530, %v7061
      %v7063 = vand.u32 %v1124, 4294901760
      %v7064 = vsub.f32 %v1124, %v7063
      %v7065 = vand.u32 %v7064, 4294901760
      %7066 = vmatmul.f32.gmra.mxu0 %v7065
      %v7067 = vpop.f32.mrf.mxu0
      %v7068 = vadd.f32 %v5535, %v7067
      %v7069 = vand.u32 %v1127, 4294901760
      %v7070 = vsub.f32 %v1127, %v7069
      %v7071 = vand.u32 %v7070, 4294901760
      %7072 = vmatmul.f32.gmra.mxu0 %v7071
      %v7073 = vpop.f32.mrf.mxu0
      %v7074 = vadd.f32 %v5540, %v7073
      %v7075 = vand.u32 %v1130, 4294901760
      %v7076 = vsub.f32 %v1130, %v7075
      %v7077 = vand.u32 %v7076, 4294901760
      %7078 = vmatmul.f32.gmra.mxu0 %v7077
      %v7079 = vpop.f32.mrf.mxu0
      %v7080 = vadd.f32 %v5545, %v7079
      %v7081 = vand.u32 %v1133, 4294901760
      %v7082 = vsub.f32 %v1133, %v7081
      %v7083 = vand.u32 %v7082, 4294901760
      %7084 = vmatmul.f32.gmra.mxu0 %v7083
      %v7085 = vpop.f32.mrf.mxu0
      %v7086 = vadd.f32 %v5550, %v7085
      %v7087 = vand.u32 %v1136, 4294901760
      %v7088 = vsub.f32 %v1136, %v7087
      %v7089 = vand.u32 %v7088, 4294901760
      %7090 = vmatmul.f32.gmra.mxu0 %v7089
      %v7091 = vpop.f32.mrf.mxu0
      %v7092 = vadd.f32 %v5555, %v7091
      %v7093 = vand.u32 %v1139, 4294901760
      %v7094 = vsub.f32 %v1139, %v7093
      %v7095 = vand.u32 %v7094, 4294901760
      %7096 = vmatmul.f32.gmra.mxu0 %v7095
      %v7097 = vpop.f32.mrf.mxu0
      %v7098 = vadd.f32 %v5560, %v7097
      %v7099 = vand.u32 %v1142, 4294901760
      %v7100 = vsub.f32 %v1142, %v7099
      %v7101 = vand.u32 %v7100, 4294901760
      %7102 = vmatmul.f32.gmra.mxu0 %v7101
      %v7103 = vpop.f32.mrf.mxu0
      %v7104 = vadd.f32 %v5565, %v7103
      %v7105 = vand.u32 %v1145, 4294901760
      %v7106 = vsub.f32 %v1145, %v7105
      %v7107 = vand.u32 %v7106, 4294901760
      %7108 = vmatmul.f32.gmra.mxu0 %v7107
      %v7109 = vpop.f32.mrf.mxu0
      %v7110 = vadd.f32 %v5570, %v7109
      %v7111 = vand.u32 %v1148, 4294901760
      %v7112 = vsub.f32 %v1148, %v7111
      %v7113 = vand.u32 %v7112, 4294901760
      %7114 = vmatmul.f32.gmra.mxu0 %v7113
      %v7115 = vpop.f32.mrf.mxu0
      %v7116 = vadd.f32 %v5575, %v7115
      %v7117 = vand.u32 %v1151, 4294901760
      %v7118 = vsub.f32 %v1151, %v7117
      %v7119 = vand.u32 %v7118, 4294901760
      %7120 = vmatmul.f32.gmra.mxu0 %v7119
      %v7121 = vpop.f32.mrf.mxu0
      %v7122 = vadd.f32 %v5580, %v7121
      %v7123 = vand.u32 %v1154, 4294901760
      %v7124 = vsub.f32 %v1154, %v7123
      %v7125 = vand.u32 %v7124, 4294901760
      %7126 = vmatmul.f32.gmra.mxu0 %v7125
      %v7127 = vpop.f32.mrf.mxu0
      %v7128 = vadd.f32 %v5585, %v7127
      %v7129 = vand.u32 %v1157, 4294901760
      %v7130 = vsub.f32 %v1157, %v7129
      %v7131 = vand.u32 %v7130, 4294901760
      %7132 = vmatmul.f32.gmra.mxu0 %v7131
      %v7133 = vpop.f32.mrf.mxu0
      %v7134 = vadd.f32 %v5590, %v7133
      %v7135 = vand.u32 %v1160, 4294901760
      %v7136 = vsub.f32 %v1160, %v7135
      %v7137 = vand.u32 %v7136, 4294901760
      %7138 = vmatmul.f32.gmra.mxu0 %v7137
      %v7139 = vpop.f32.mrf.mxu0
      %v7140 = vadd.f32 %v5595, %v7139
      %v7141 = vand.u32 %v1163, 4294901760
      %v7142 = vsub.f32 %v1163, %v7141
      %v7143 = vand.u32 %v7142, 4294901760
      %7144 = vmatmul.f32.gmra.mxu0 %v7143
      %v7145 = vpop.f32.mrf.mxu0
      %v7146 = vadd.f32 %v5600, %v7145
      %v7147 = vand.u32 %v1166, 4294901760
      %v7148 = vsub.f32 %v1166, %v7147
      %v7149 = vand.u32 %v7148, 4294901760
      %7150 = vmatmul.f32.gmra.mxu0 %v7149
      %v7151 = vpop.f32.mrf.mxu0
      %v7152 = vadd.f32 %v5605, %v7151
      %v7153 = vand.u32 %v1169, 4294901760
      %v7154 = vsub.f32 %v1169, %v7153
      %v7155 = vand.u32 %v7154, 4294901760
      %7156 = vmatmul.f32.gmra.mxu0 %v7155
      %v7157 = vpop.f32.mrf.mxu0
      %v7158 = vadd.f32 %v5610, %v7157
      %v7159 = vand.u32 %v1172, 4294901760
      %v7160 = vsub.f32 %v1172, %v7159
      %v7161 = vand.u32 %v7160, 4294901760
      %7162 = vmatmul.f32.gmra.mxu0 %v7161
      %v7163 = vpop.f32.mrf.mxu0
      %v7164 = vadd.f32 %v5615, %v7163
      %v7165 = vand.u32 %v1175, 4294901760
      %v7166 = vsub.f32 %v1175, %v7165
      %v7167 = vand.u32 %v7166, 4294901760
      %7168 = vmatmul.f32.gmra.mxu0 %v7167
      %v7169 = vpop.f32.mrf.mxu0
      %v7170 = vadd.f32 %v5620, %v7169
      %v7171 = vand.u32 %v1178, 4294901760
      %v7172 = vsub.f32 %v1178, %v7171
      %v7173 = vand.u32 %v7172, 4294901760
      %7174 = vmatmul.f32.gmra.mxu0 %v7173
      %v7175 = vpop.f32.mrf.mxu0
      %v7176 = vadd.f32 %v5625, %v7175
      %v7177 = vand.u32 %v1181, 4294901760
      %v7178 = vsub.f32 %v1181, %v7177
      %v7179 = vand.u32 %v7178, 4294901760
      %7180 = vmatmul.f32.gmra.mxu0 %v7179
      %v7181 = vpop.f32.mrf.mxu0
      %v7182 = vadd.f32 %v5630, %v7181
      %v7183 = vand.u32 %v1184, 4294901760
      %v7184 = vsub.f32 %v1184, %v7183
      %v7185 = vand.u32 %v7184, 4294901760
      %7186 = vmatmul.f32.gmra.mxu0 %v7185
      %v7187 = vpop.f32.mrf.mxu0
      %v7188 = vadd.f32 %v5635, %v7187
      %v7189 = vand.u32 %v1187, 4294901760
      %v7190 = vsub.f32 %v1187, %v7189
      %v7191 = vand.u32 %v7190, 4294901760
      %7192 = vmatmul.f32.gmra.mxu0 %v7191
      %v7193 = vpop.f32.mrf.mxu0
      %v7194 = vadd.f32 %v5640, %v7193
      %v7195 = vand.u32 %v1190, 4294901760
      %v7196 = vsub.f32 %v1190, %v7195
      %v7197 = vand.u32 %v7196, 4294901760
      %7198 = vmatmul.f32.gmra.mxu0 %v7197
      %v7199 = vpop.f32.mrf.mxu0
      %v7200 = vadd.f32 %v5645, %v7199
      %v7201 = vand.u32 %v1193, 4294901760
      %v7202 = vsub.f32 %v1193, %v7201
      %v7203 = vand.u32 %v7202, 4294901760
      %7204 = vmatmul.f32.gmra.mxu0 %v7203
      %v7205 = vpop.f32.mrf.mxu0
      %v7206 = vadd.f32 %v5650, %v7205
      %v7207 = vand.u32 %v1196, 4294901760
      %v7208 = vsub.f32 %v1196, %v7207
      %v7209 = vand.u32 %v7208, 4294901760
      %7210 = vmatmul.f32.gmra.mxu0 %v7209
      %v7211 = vpop.f32.mrf.mxu0
      %v7212 = vadd.f32 %v5655, %v7211
      %v7213 = vand.u32 %v1199, 4294901760
      %v7214 = vsub.f32 %v1199, %v7213
      %v7215 = vand.u32 %v7214, 4294901760
      %7216 = vmatmul.f32.gmra.mxu0 %v7215
      %v7217 = vpop.f32.mrf.mxu0
      %v7218 = vadd.f32 %v5660, %v7217
      %v7219 = vand.u32 %v1202, 4294901760
      %v7220 = vsub.f32 %v1202, %v7219
      %v7221 = vand.u32 %v7220, 4294901760
      %7222 = vmatmul.f32.gmra.mxu0 %v7221
      %v7223 = vpop.f32.mrf.mxu0
      %v7224 = vadd.f32 %v5665, %v7223
      %v7225 = vand.u32 %v1205, 4294901760
      %v7226 = vsub.f32 %v1205, %v7225
      %v7227 = vand.u32 %v7226, 4294901760
      %7228 = vmatmul.f32.gmra.mxu0 %v7227
      %v7229 = vpop.f32.mrf.mxu0
      %v7230 = vadd.f32 %v5670, %v7229
      %v7231 = vand.u32 %v1208, 4294901760
      %v7232 = vsub.f32 %v1208, %v7231
      %v7233 = vand.u32 %v7232, 4294901760
      %7234 = vmatmul.f32.gmra.mxu0 %v7233
      %v7235 = vpop.f32.mrf.mxu0
      %v7236 = vadd.f32 %v5675, %v7235
      %7237 = vdwg.mxu0
      %7238 = vmatpush.msra.mxu0 0.0
      %7239 = vmatpush.msra.mxu0 0.0
      %7240 = vmatpush.msra.mxu0 0.0
      %7241 = vmatpush.msra.mxu0 0.0
      %7242 = vmatpush.msra.mxu0 0.0
      %7243 = vmatpush.msra.mxu0 0.0
      %7244 = vmatpush.msra.mxu0 0.0
      %7245 = vmatpush.msra.mxu0 0.0
      %v7246 = vand.u32 %v438, 4294901760
      %v7247 = vsub.f32 %v438, %v7246
      %v7248 = vand.u32 %v7247, 4294901760
      %7249 = vmatpush.msra.mxu0 %v7248
      %v7250 = vand.u32 %v437, 4294901760
      %v7251 = vsub.f32 %v437, %v7250
      %v7252 = vand.u32 %v7251, 4294901760
      %7253 = vmatpush.msra.mxu0 %v7252
      %v7254 = vand.u32 %v436, 4294901760
      %v7255 = vsub.f32 %v436, %v7254
      %v7256 = vand.u32 %v7255, 4294901760
      %7257 = vmatpush.msra.mxu0 %v7256
      %v7258 = vand.u32 %v435, 4294901760
      %v7259 = vsub.f32 %v435, %v7258
      %v7260 = vand.u32 %v7259, 4294901760
      %7261 = vmatpush.msra.mxu0 %v7260
      %v7262 = vand.u32 %v434, 4294901760
      %v7263 = vsub.f32 %v434, %v7262
      %v7264 = vand.u32 %v7263, 4294901760
      %7265 = vmatpush.msra.mxu0 %v7264
      %v7266 = vand.u32 %v433, 4294901760
      %v7267 = vsub.f32 %v433, %v7266
      %v7268 = vand.u32 %v7267, 4294901760
      %7269 = vmatpush.msra.mxu0 %v7268
      %v7270 = vand.u32 %v432, 4294901760
      %v7271 = vsub.f32 %v432, %v7270
      %v7272 = vand.u32 %v7271, 4294901760
      %7273 = vmatpush.msra.mxu0 %v7272
      %v7274 = vand.u32 %v431, 4294901760
      %v7275 = vsub.f32 %v431, %v7274
      %v7276 = vand.u32 %v7275, 4294901760
      %7277 = vmatpush.msra.mxu0 %v7276
      %v7278 = vand.u32 %v443, 4294901760
      %7279 = vmatmul.f32.gmra.mxu0 %v7278
      %v7280 = vpop.f32.mrf.mxu0
      %v7281 = vadd.f32 %v5706, %v7280
      %v7282 = vand.u32 %v446, 4294901760
      %7283 = vmatmul.f32.gmra.mxu0 %v7282
      %v7284 = vpop.f32.mrf.mxu0
      %v7285 = vadd.f32 %v5712, %v7284
      %v7286 = vand.u32 %v449, 4294901760
      %7287 = vmatmul.f32.gmra.mxu0 %v7286
      %v7288 = vpop.f32.mrf.mxu0
      %v7289 = vadd.f32 %v5718, %v7288
      %v7290 = vand.u32 %v452, 4294901760
      %7291 = vmatmul.f32.gmra.mxu0 %v7290
      %v7292 = vpop.f32.mrf.mxu0
      %v7293 = vadd.f32 %v5724, %v7292
      %v7294 = vand.u32 %v455, 4294901760
      %7295 = vmatmul.f32.gmra.mxu0 %v7294
      %v7296 = vpop.f32.mrf.mxu0
      %v7297 = vadd.f32 %v5730, %v7296
      %v7298 = vand.u32 %v458, 4294901760
      %7299 = vmatmul.f32.gmra.mxu0 %v7298
      %v7300 = vpop.f32.mrf.mxu0
      %v7301 = vadd.f32 %v5736, %v7300
      %v7302 = vand.u32 %v461, 4294901760
      %7303 = vmatmul.f32.gmra.mxu0 %v7302
      %v7304 = vpop.f32.mrf.mxu0
      %v7305 = vadd.f32 %v5742, %v7304
      %v7306 = vand.u32 %v464, 4294901760
      %7307 = vmatmul.f32.gmra.mxu0 %v7306
      %v7308 = vpop.f32.mrf.mxu0
      %v7309 = vadd.f32 %v5748, %v7308
      %v7310 = vand.u32 %v467, 4294901760
      %7311 = vmatmul.f32.gmra.mxu0 %v7310
      %v7312 = vpop.f32.mrf.mxu0
      %v7313 = vadd.f32 %v5754, %v7312
      %v7314 = vand.u32 %v470, 4294901760
      %7315 = vmatmul.f32.gmra.mxu0 %v7314
      %v7316 = vpop.f32.mrf.mxu0
      %v7317 = vadd.f32 %v5760, %v7316
      %v7318 = vand.u32 %v473, 4294901760
      %7319 = vmatmul.f32.gmra.mxu0 %v7318
      %v7320 = vpop.f32.mrf.mxu0
      %v7321 = vadd.f32 %v5766, %v7320
      %v7322 = vand.u32 %v476, 4294901760
      %7323 = vmatmul.f32.gmra.mxu0 %v7322
      %v7324 = vpop.f32.mrf.mxu0
      %v7325 = vadd.f32 %v5772, %v7324
      %v7326 = vand.u32 %v479, 4294901760
      %7327 = vmatmul.f32.gmra.mxu0 %v7326
      %v7328 = vpop.f32.mrf.mxu0
      %v7329 = vadd.f32 %v5778, %v7328
      %v7330 = vand.u32 %v482, 4294901760
      %7331 = vmatmul.f32.gmra.mxu0 %v7330
      %v7332 = vpop.f32.mrf.mxu0
      %v7333 = vadd.f32 %v5784, %v7332
      %v7334 = vand.u32 %v485, 4294901760
      %7335 = vmatmul.f32.gmra.mxu0 %v7334
      %v7336 = vpop.f32.mrf.mxu0
      %v7337 = vadd.f32 %v5790, %v7336
      %v7338 = vand.u32 %v488, 4294901760
      %7339 = vmatmul.f32.gmra.mxu0 %v7338
      %v7340 = vpop.f32.mrf.mxu0
      %v7341 = vadd.f32 %v5796, %v7340
      %v7342 = vand.u32 %v491, 4294901760
      %7343 = vmatmul.f32.gmra.mxu0 %v7342
      %v7344 = vpop.f32.mrf.mxu0
      %v7345 = vadd.f32 %v5802, %v7344
      %v7346 = vand.u32 %v494, 4294901760
      %7347 = vmatmul.f32.gmra.mxu0 %v7346
      %v7348 = vpop.f32.mrf.mxu0
      %v7349 = vadd.f32 %v5808, %v7348
      %v7350 = vand.u32 %v497, 4294901760
      %7351 = vmatmul.f32.gmra.mxu0 %v7350
      %v7352 = vpop.f32.mrf.mxu0
      %v7353 = vadd.f32 %v5814, %v7352
      %v7354 = vand.u32 %v500, 4294901760
      %7355 = vmatmul.f32.gmra.mxu0 %v7354
      %v7356 = vpop.f32.mrf.mxu0
      %v7357 = vadd.f32 %v5820, %v7356
      %v7358 = vand.u32 %v503, 4294901760
      %7359 = vmatmul.f32.gmra.mxu0 %v7358
      %v7360 = vpop.f32.mrf.mxu0
      %v7361 = vadd.f32 %v5826, %v7360
      %v7362 = vand.u32 %v506, 4294901760
      %7363 = vmatmul.f32.gmra.mxu0 %v7362
      %v7364 = vpop.f32.mrf.mxu0
      %v7365 = vadd.f32 %v5832, %v7364
      %v7366 = vand.u32 %v509, 4294901760
      %7367 = vmatmul.f32.gmra.mxu0 %v7366
      %v7368 = vpop.f32.mrf.mxu0
      %v7369 = vadd.f32 %v5838, %v7368
      %v7370 = vand.u32 %v512, 4294901760
      %7371 = vmatmul.f32.gmra.mxu0 %v7370
      %v7372 = vpop.f32.mrf.mxu0
      %v7373 = vadd.f32 %v5844, %v7372
      %v7374 = vand.u32 %v515, 4294901760
      %7375 = vmatmul.f32.gmra.mxu0 %v7374
      %v7376 = vpop.f32.mrf.mxu0
      %v7377 = vadd.f32 %v5850, %v7376
      %v7378 = vand.u32 %v518, 4294901760
      %7379 = vmatmul.f32.gmra.mxu0 %v7378
      %v7380 = vpop.f32.mrf.mxu0
      %v7381 = vadd.f32 %v5856, %v7380
      %v7382 = vand.u32 %v521, 4294901760
      %7383 = vmatmul.f32.gmra.mxu0 %v7382
      %v7384 = vpop.f32.mrf.mxu0
      %v7385 = vadd.f32 %v5862, %v7384
      %v7386 = vand.u32 %v524, 4294901760
      %7387 = vmatmul.f32.gmra.mxu0 %v7386
      %v7388 = vpop.f32.mrf.mxu0
      %v7389 = vadd.f32 %v5868, %v7388
      %v7390 = vand.u32 %v527, 4294901760
      %7391 = vmatmul.f32.gmra.mxu0 %v7390
      %v7392 = vpop.f32.mrf.mxu0
      %v7393 = vadd.f32 %v5874, %v7392
      %v7394 = vand.u32 %v530, 4294901760
      %7395 = vmatmul.f32.gmra.mxu0 %v7394
      %v7396 = vpop.f32.mrf.mxu0
      %v7397 = vadd.f32 %v5880, %v7396
      %v7398 = vand.u32 %v533, 4294901760
      %7399 = vmatmul.f32.gmra.mxu0 %v7398
      %v7400 = vpop.f32.mrf.mxu0
      %v7401 = vadd.f32 %v5886, %v7400
      %v7402 = vand.u32 %v536, 4294901760
      %7403 = vmatmul.f32.gmra.mxu0 %v7402
      %v7404 = vpop.f32.mrf.mxu0
      %v7405 = vadd.f32 %v5892, %v7404
      %v7406 = vand.u32 %v539, 4294901760
      %7407 = vmatmul.f32.gmra.mxu0 %v7406
      %v7408 = vpop.f32.mrf.mxu0
      %v7409 = vadd.f32 %v5898, %v7408
      %v7410 = vand.u32 %v542, 4294901760
      %7411 = vmatmul.f32.gmra.mxu0 %v7410
      %v7412 = vpop.f32.mrf.mxu0
      %v7413 = vadd.f32 %v5904, %v7412
      %v7414 = vand.u32 %v545, 4294901760
      %7415 = vmatmul.f32.gmra.mxu0 %v7414
      %v7416 = vpop.f32.mrf.mxu0
      %v7417 = vadd.f32 %v5910, %v7416
      %v7418 = vand.u32 %v548, 4294901760
      %7419 = vmatmul.f32.gmra.mxu0 %v7418
      %v7420 = vpop.f32.mrf.mxu0
      %v7421 = vadd.f32 %v5916, %v7420
      %v7422 = vand.u32 %v551, 4294901760
      %7423 = vmatmul.f32.gmra.mxu0 %v7422
      %v7424 = vpop.f32.mrf.mxu0
      %v7425 = vadd.f32 %v5922, %v7424
      %v7426 = vand.u32 %v554, 4294901760
      %7427 = vmatmul.f32.gmra.mxu0 %v7426
      %v7428 = vpop.f32.mrf.mxu0
      %v7429 = vadd.f32 %v5928, %v7428
      %v7430 = vand.u32 %v557, 4294901760
      %7431 = vmatmul.f32.gmra.mxu0 %v7430
      %v7432 = vpop.f32.mrf.mxu0
      %v7433 = vadd.f32 %v5934, %v7432
      %v7434 = vand.u32 %v560, 4294901760
      %7435 = vmatmul.f32.gmra.mxu0 %v7434
      %v7436 = vpop.f32.mrf.mxu0
      %v7437 = vadd.f32 %v5940, %v7436
      %v7438 = vand.u32 %v563, 4294901760
      %7439 = vmatmul.f32.gmra.mxu0 %v7438
      %v7440 = vpop.f32.mrf.mxu0
      %v7441 = vadd.f32 %v5946, %v7440
      %v7442 = vand.u32 %v566, 4294901760
      %7443 = vmatmul.f32.gmra.mxu0 %v7442
      %v7444 = vpop.f32.mrf.mxu0
      %v7445 = vadd.f32 %v5952, %v7444
      %v7446 = vand.u32 %v569, 4294901760
      %7447 = vmatmul.f32.gmra.mxu0 %v7446
      %v7448 = vpop.f32.mrf.mxu0
      %v7449 = vadd.f32 %v5958, %v7448
      %v7450 = vand.u32 %v572, 4294901760
      %7451 = vmatmul.f32.gmra.mxu0 %v7450
      %v7452 = vpop.f32.mrf.mxu0
      %v7453 = vadd.f32 %v5964, %v7452
      %v7454 = vand.u32 %v575, 4294901760
      %7455 = vmatmul.f32.gmra.mxu0 %v7454
      %v7456 = vpop.f32.mrf.mxu0
      %v7457 = vadd.f32 %v5970, %v7456
      %v7458 = vand.u32 %v578, 4294901760
      %7459 = vmatmul.f32.gmra.mxu0 %v7458
      %v7460 = vpop.f32.mrf.mxu0
      %v7461 = vadd.f32 %v5976, %v7460
      %v7462 = vand.u32 %v581, 4294901760
      %7463 = vmatmul.f32.gmra.mxu0 %v7462
      %v7464 = vpop.f32.mrf.mxu0
      %v7465 = vadd.f32 %v5982, %v7464
      %v7466 = vand.u32 %v584, 4294901760
      %7467 = vmatmul.f32.gmra.mxu0 %v7466
      %v7468 = vpop.f32.mrf.mxu0
      %v7469 = vadd.f32 %v5988, %v7468
      %v7470 = vand.u32 %v587, 4294901760
      %7471 = vmatmul.f32.gmra.mxu0 %v7470
      %v7472 = vpop.f32.mrf.mxu0
      %v7473 = vadd.f32 %v5994, %v7472
      %v7474 = vand.u32 %v590, 4294901760
      %7475 = vmatmul.f32.gmra.mxu0 %v7474
      %v7476 = vpop.f32.mrf.mxu0
      %v7477 = vadd.f32 %v6000, %v7476
      %v7478 = vand.u32 %v593, 4294901760
      %7479 = vmatmul.f32.gmra.mxu0 %v7478
      %v7480 = vpop.f32.mrf.mxu0
      %v7481 = vadd.f32 %v6006, %v7480
      %v7482 = vand.u32 %v596, 4294901760
      %7483 = vmatmul.f32.gmra.mxu0 %v7482
      %v7484 = vpop.f32.mrf.mxu0
      %v7485 = vadd.f32 %v6012, %v7484
      %v7486 = vand.u32 %v599, 4294901760
      %7487 = vmatmul.f32.gmra.mxu0 %v7486
      %v7488 = vpop.f32.mrf.mxu0
      %v7489 = vadd.f32 %v6018, %v7488
      %v7490 = vand.u32 %v602, 4294901760
      %7491 = vmatmul.f32.gmra.mxu0 %v7490
      %v7492 = vpop.f32.mrf.mxu0
      %v7493 = vadd.f32 %v6024, %v7492
      %v7494 = vand.u32 %v605, 4294901760
      %7495 = vmatmul.f32.gmra.mxu0 %v7494
      %v7496 = vpop.f32.mrf.mxu0
      %v7497 = vadd.f32 %v6030, %v7496
      %v7498 = vand.u32 %v608, 4294901760
      %7499 = vmatmul.f32.gmra.mxu0 %v7498
      %v7500 = vpop.f32.mrf.mxu0
      %v7501 = vadd.f32 %v6036, %v7500
      %v7502 = vand.u32 %v611, 4294901760
      %7503 = vmatmul.f32.gmra.mxu0 %v7502
      %v7504 = vpop.f32.mrf.mxu0
      %v7505 = vadd.f32 %v6042, %v7504
      %v7506 = vand.u32 %v614, 4294901760
      %7507 = vmatmul.f32.gmra.mxu0 %v7506
      %v7508 = vpop.f32.mrf.mxu0
      %v7509 = vadd.f32 %v6048, %v7508
      %v7510 = vand.u32 %v617, 4294901760
      %7511 = vmatmul.f32.gmra.mxu0 %v7510
      %v7512 = vpop.f32.mrf.mxu0
      %v7513 = vadd.f32 %v6054, %v7512
      %v7514 = vand.u32 %v620, 4294901760
      %7515 = vmatmul.f32.gmra.mxu0 %v7514
      %v7516 = vpop.f32.mrf.mxu0
      %v7517 = vadd.f32 %v6060, %v7516
      %v7518 = vand.u32 %v623, 4294901760
      %7519 = vmatmul.f32.gmra.mxu0 %v7518
      %v7520 = vpop.f32.mrf.mxu0
      %v7521 = vadd.f32 %v6066, %v7520
      %v7522 = vand.u32 %v626, 4294901760
      %7523 = vmatmul.f32.gmra.mxu0 %v7522
      %v7524 = vpop.f32.mrf.mxu0
      %v7525 = vadd.f32 %v6072, %v7524
      %v7526 = vand.u32 %v629, 4294901760
      %7527 = vmatmul.f32.gmra.mxu0 %v7526
      %v7528 = vpop.f32.mrf.mxu0
      %v7529 = vadd.f32 %v6078, %v7528
      %v7530 = vand.u32 %v632, 4294901760
      %7531 = vmatmul.f32.gmra.mxu0 %v7530
      %v7532 = vpop.f32.mrf.mxu0
      %v7533 = vadd.f32 %v6084, %v7532
      %v7534 = vand.u32 %v635, 4294901760
      %7535 = vmatmul.f32.gmra.mxu0 %v7534
      %v7536 = vpop.f32.mrf.mxu0
      %v7537 = vadd.f32 %v6090, %v7536
      %v7538 = vand.u32 %v638, 4294901760
      %7539 = vmatmul.f32.gmra.mxu0 %v7538
      %v7540 = vpop.f32.mrf.mxu0
      %v7541 = vadd.f32 %v6096, %v7540
      %v7542 = vand.u32 %v641, 4294901760
      %7543 = vmatmul.f32.gmra.mxu0 %v7542
      %v7544 = vpop.f32.mrf.mxu0
      %v7545 = vadd.f32 %v6102, %v7544
      %v7546 = vand.u32 %v644, 4294901760
      %7547 = vmatmul.f32.gmra.mxu0 %v7546
      %v7548 = vpop.f32.mrf.mxu0
      %v7549 = vadd.f32 %v6108, %v7548
      %v7550 = vand.u32 %v647, 4294901760
      %7551 = vmatmul.f32.gmra.mxu0 %v7550
      %v7552 = vpop.f32.mrf.mxu0
      %v7553 = vadd.f32 %v6114, %v7552
      %v7554 = vand.u32 %v650, 4294901760
      %7555 = vmatmul.f32.gmra.mxu0 %v7554
      %v7556 = vpop.f32.mrf.mxu0
      %v7557 = vadd.f32 %v6120, %v7556
      %v7558 = vand.u32 %v653, 4294901760
      %7559 = vmatmul.f32.gmra.mxu0 %v7558
      %v7560 = vpop.f32.mrf.mxu0
      %v7561 = vadd.f32 %v6126, %v7560
      %v7562 = vand.u32 %v656, 4294901760
      %7563 = vmatmul.f32.gmra.mxu0 %v7562
      %v7564 = vpop.f32.mrf.mxu0
      %v7565 = vadd.f32 %v6132, %v7564
      %v7566 = vand.u32 %v659, 4294901760
      %7567 = vmatmul.f32.gmra.mxu0 %v7566
      %v7568 = vpop.f32.mrf.mxu0
      %v7569 = vadd.f32 %v6138, %v7568
      %v7570 = vand.u32 %v662, 4294901760
      %7571 = vmatmul.f32.gmra.mxu0 %v7570
      %v7572 = vpop.f32.mrf.mxu0
      %v7573 = vadd.f32 %v6144, %v7572
      %v7574 = vand.u32 %v665, 4294901760
      %7575 = vmatmul.f32.gmra.mxu0 %v7574
      %v7576 = vpop.f32.mrf.mxu0
      %v7577 = vadd.f32 %v6150, %v7576
      %v7578 = vand.u32 %v668, 4294901760
      %7579 = vmatmul.f32.gmra.mxu0 %v7578
      %v7580 = vpop.f32.mrf.mxu0
      %v7581 = vadd.f32 %v6156, %v7580
      %v7582 = vand.u32 %v671, 4294901760
      %7583 = vmatmul.f32.gmra.mxu0 %v7582
      %v7584 = vpop.f32.mrf.mxu0
      %v7585 = vadd.f32 %v6162, %v7584
      %v7586 = vand.u32 %v674, 4294901760
      %7587 = vmatmul.f32.gmra.mxu0 %v7586
      %v7588 = vpop.f32.mrf.mxu0
      %v7589 = vadd.f32 %v6168, %v7588
      %v7590 = vand.u32 %v677, 4294901760
      %7591 = vmatmul.f32.gmra.mxu0 %v7590
      %v7592 = vpop.f32.mrf.mxu0
      %v7593 = vadd.f32 %v6174, %v7592
      %v7594 = vand.u32 %v680, 4294901760
      %7595 = vmatmul.f32.gmra.mxu0 %v7594
      %v7596 = vpop.f32.mrf.mxu0
      %v7597 = vadd.f32 %v6180, %v7596
      %v7598 = vand.u32 %v683, 4294901760
      %7599 = vmatmul.f32.gmra.mxu0 %v7598
      %v7600 = vpop.f32.mrf.mxu0
      %v7601 = vadd.f32 %v6186, %v7600
      %v7602 = vand.u32 %v686, 4294901760
      %7603 = vmatmul.f32.gmra.mxu0 %v7602
      %v7604 = vpop.f32.mrf.mxu0
      %v7605 = vadd.f32 %v6192, %v7604
      %v7606 = vand.u32 %v689, 4294901760
      %7607 = vmatmul.f32.gmra.mxu0 %v7606
      %v7608 = vpop.f32.mrf.mxu0
      %v7609 = vadd.f32 %v6198, %v7608
      %v7610 = vand.u32 %v692, 4294901760
      %7611 = vmatmul.f32.gmra.mxu0 %v7610
      %v7612 = vpop.f32.mrf.mxu0
      %v7613 = vadd.f32 %v6204, %v7612
      %v7614 = vand.u32 %v695, 4294901760
      %7615 = vmatmul.f32.gmra.mxu0 %v7614
      %v7616 = vpop.f32.mrf.mxu0
      %v7617 = vadd.f32 %v6210, %v7616
      %v7618 = vand.u32 %v698, 4294901760
      %7619 = vmatmul.f32.gmra.mxu0 %v7618
      %v7620 = vpop.f32.mrf.mxu0
      %v7621 = vadd.f32 %v6216, %v7620
      %v7622 = vand.u32 %v701, 4294901760
      %7623 = vmatmul.f32.gmra.mxu0 %v7622
      %v7624 = vpop.f32.mrf.mxu0
      %v7625 = vadd.f32 %v6222, %v7624
      %v7626 = vand.u32 %v704, 4294901760
      %7627 = vmatmul.f32.gmra.mxu0 %v7626
      %v7628 = vpop.f32.mrf.mxu0
      %v7629 = vadd.f32 %v6228, %v7628
      %v7630 = vand.u32 %v707, 4294901760
      %7631 = vmatmul.f32.gmra.mxu0 %v7630
      %v7632 = vpop.f32.mrf.mxu0
      %v7633 = vadd.f32 %v6234, %v7632
      %v7634 = vand.u32 %v710, 4294901760
      %7635 = vmatmul.f32.gmra.mxu0 %v7634
      %v7636 = vpop.f32.mrf.mxu0
      %v7637 = vadd.f32 %v6240, %v7636
      %v7638 = vand.u32 %v713, 4294901760
      %7639 = vmatmul.f32.gmra.mxu0 %v7638
      %v7640 = vpop.f32.mrf.mxu0
      %v7641 = vadd.f32 %v6246, %v7640
      %v7642 = vand.u32 %v716, 4294901760
      %7643 = vmatmul.f32.gmra.mxu0 %v7642
      %v7644 = vpop.f32.mrf.mxu0
      %v7645 = vadd.f32 %v6252, %v7644
      %v7646 = vand.u32 %v719, 4294901760
      %7647 = vmatmul.f32.gmra.mxu0 %v7646
      %v7648 = vpop.f32.mrf.mxu0
      %v7649 = vadd.f32 %v6258, %v7648
      %v7650 = vand.u32 %v722, 4294901760
      %7651 = vmatmul.f32.gmra.mxu0 %v7650
      %v7652 = vpop.f32.mrf.mxu0
      %v7653 = vadd.f32 %v6264, %v7652
      %v7654 = vand.u32 %v725, 4294901760
      %7655 = vmatmul.f32.gmra.mxu0 %v7654
      %v7656 = vpop.f32.mrf.mxu0
      %v7657 = vadd.f32 %v6270, %v7656
      %v7658 = vand.u32 %v728, 4294901760
      %7659 = vmatmul.f32.gmra.mxu0 %v7658
      %v7660 = vpop.f32.mrf.mxu0
      %v7661 = vadd.f32 %v6276, %v7660
      %v7662 = vand.u32 %v731, 4294901760
      %7663 = vmatmul.f32.gmra.mxu0 %v7662
      %v7664 = vpop.f32.mrf.mxu0
      %v7665 = vadd.f32 %v6282, %v7664
      %v7666 = vand.u32 %v734, 4294901760
      %7667 = vmatmul.f32.gmra.mxu0 %v7666
      %v7668 = vpop.f32.mrf.mxu0
      %v7669 = vadd.f32 %v6288, %v7668
      %v7670 = vand.u32 %v737, 4294901760
      %7671 = vmatmul.f32.gmra.mxu0 %v7670
      %v7672 = vpop.f32.mrf.mxu0
      %v7673 = vadd.f32 %v6294, %v7672
      %v7674 = vand.u32 %v740, 4294901760
      %7675 = vmatmul.f32.gmra.mxu0 %v7674
      %v7676 = vpop.f32.mrf.mxu0
      %v7677 = vadd.f32 %v6300, %v7676
      %v7678 = vand.u32 %v743, 4294901760
      %7679 = vmatmul.f32.gmra.mxu0 %v7678
      %v7680 = vpop.f32.mrf.mxu0
      %v7681 = vadd.f32 %v6306, %v7680
      %v7682 = vand.u32 %v746, 4294901760
      %7683 = vmatmul.f32.gmra.mxu0 %v7682
      %v7684 = vpop.f32.mrf.mxu0
      %v7685 = vadd.f32 %v6312, %v7684
      %v7686 = vand.u32 %v749, 4294901760
      %7687 = vmatmul.f32.gmra.mxu0 %v7686
      %v7688 = vpop.f32.mrf.mxu0
      %v7689 = vadd.f32 %v6318, %v7688
      %v7690 = vand.u32 %v752, 4294901760
      %7691 = vmatmul.f32.gmra.mxu0 %v7690
      %v7692 = vpop.f32.mrf.mxu0
      %v7693 = vadd.f32 %v6324, %v7692
      %v7694 = vand.u32 %v755, 4294901760
      %7695 = vmatmul.f32.gmra.mxu0 %v7694
      %v7696 = vpop.f32.mrf.mxu0
      %v7697 = vadd.f32 %v6330, %v7696
      %v7698 = vand.u32 %v758, 4294901760
      %7699 = vmatmul.f32.gmra.mxu0 %v7698
      %v7700 = vpop.f32.mrf.mxu0
      %v7701 = vadd.f32 %v6336, %v7700
      %v7702 = vand.u32 %v761, 4294901760
      %7703 = vmatmul.f32.gmra.mxu0 %v7702
      %v7704 = vpop.f32.mrf.mxu0
      %v7705 = vadd.f32 %v6342, %v7704
      %v7706 = vand.u32 %v764, 4294901760
      %7707 = vmatmul.f32.gmra.mxu0 %v7706
      %v7708 = vpop.f32.mrf.mxu0
      %v7709 = vadd.f32 %v6348, %v7708
      %v7710 = vand.u32 %v767, 4294901760
      %7711 = vmatmul.f32.gmra.mxu0 %v7710
      %v7712 = vpop.f32.mrf.mxu0
      %v7713 = vadd.f32 %v6354, %v7712
      %v7714 = vand.u32 %v770, 4294901760
      %7715 = vmatmul.f32.gmra.mxu0 %v7714
      %v7716 = vpop.f32.mrf.mxu0
      %v7717 = vadd.f32 %v6360, %v7716
      %v7718 = vand.u32 %v773, 4294901760
      %7719 = vmatmul.f32.gmra.mxu0 %v7718
      %v7720 = vpop.f32.mrf.mxu0
      %v7721 = vadd.f32 %v6366, %v7720
      %v7722 = vand.u32 %v776, 4294901760
      %7723 = vmatmul.f32.gmra.mxu0 %v7722
      %v7724 = vpop.f32.mrf.mxu0
      %v7725 = vadd.f32 %v6372, %v7724
      %v7726 = vand.u32 %v779, 4294901760
      %7727 = vmatmul.f32.gmra.mxu0 %v7726
      %v7728 = vpop.f32.mrf.mxu0
      %v7729 = vadd.f32 %v6378, %v7728
      %v7730 = vand.u32 %v782, 4294901760
      %7731 = vmatmul.f32.gmra.mxu0 %v7730
      %v7732 = vpop.f32.mrf.mxu0
      %v7733 = vadd.f32 %v6384, %v7732
      %v7734 = vand.u32 %v785, 4294901760
      %7735 = vmatmul.f32.gmra.mxu0 %v7734
      %v7736 = vpop.f32.mrf.mxu0
      %v7737 = vadd.f32 %v6390, %v7736
      %v7738 = vand.u32 %v788, 4294901760
      %7739 = vmatmul.f32.gmra.mxu0 %v7738
      %v7740 = vpop.f32.mrf.mxu0
      %v7741 = vadd.f32 %v6396, %v7740
      %v7742 = vand.u32 %v791, 4294901760
      %7743 = vmatmul.f32.gmra.mxu0 %v7742
      %v7744 = vpop.f32.mrf.mxu0
      %v7745 = vadd.f32 %v6402, %v7744
      %v7746 = vand.u32 %v794, 4294901760
      %7747 = vmatmul.f32.gmra.mxu0 %v7746
      %v7748 = vpop.f32.mrf.mxu0
      %v7749 = vadd.f32 %v6408, %v7748
      %v7750 = vand.u32 %v797, 4294901760
      %7751 = vmatmul.f32.gmra.mxu0 %v7750
      %v7752 = vpop.f32.mrf.mxu0
      %v7753 = vadd.f32 %v6414, %v7752
      %v7754 = vand.u32 %v800, 4294901760
      %7755 = vmatmul.f32.gmra.mxu0 %v7754
      %v7756 = vpop.f32.mrf.mxu0
      %v7757 = vadd.f32 %v6420, %v7756
      %v7758 = vand.u32 %v803, 4294901760
      %7759 = vmatmul.f32.gmra.mxu0 %v7758
      %v7760 = vpop.f32.mrf.mxu0
      %v7761 = vadd.f32 %v6426, %v7760
      %v7762 = vand.u32 %v806, 4294901760
      %7763 = vmatmul.f32.gmra.mxu0 %v7762
      %v7764 = vpop.f32.mrf.mxu0
      %v7765 = vadd.f32 %v6432, %v7764
      %v7766 = vand.u32 %v809, 4294901760
      %7767 = vmatmul.f32.gmra.mxu0 %v7766
      %v7768 = vpop.f32.mrf.mxu0
      %v7769 = vadd.f32 %v6438, %v7768
      %v7770 = vand.u32 %v812, 4294901760
      %7771 = vmatmul.f32.gmra.mxu0 %v7770
      %v7772 = vpop.f32.mrf.mxu0
      %v7773 = vadd.f32 %v6444, %v7772
      %v7774 = vand.u32 %v815, 4294901760
      %7775 = vmatmul.f32.gmra.mxu0 %v7774
      %v7776 = vpop.f32.mrf.mxu0
      %v7777 = vadd.f32 %v6450, %v7776
      %v7778 = vand.u32 %v818, 4294901760
      %7779 = vmatmul.f32.gmra.mxu0 %v7778
      %v7780 = vpop.f32.mrf.mxu0
      %v7781 = vadd.f32 %v6456, %v7780
      %v7782 = vand.u32 %v821, 4294901760
      %7783 = vmatmul.f32.gmra.mxu0 %v7782
      %v7784 = vpop.f32.mrf.mxu0
      %v7785 = vadd.f32 %v6462, %v7784
      %v7786 = vand.u32 %v824, 4294901760
      %7787 = vmatmul.f32.gmra.mxu0 %v7786
      %v7788 = vpop.f32.mrf.mxu0
      %v7789 = vadd.f32 %v6468, %v7788
      %v7790 = vand.u32 %v827, 4294901760
      %7791 = vmatmul.f32.gmra.mxu0 %v7790
      %v7792 = vpop.f32.mrf.mxu0
      %v7793 = vadd.f32 %v6474, %v7792
      %v7794 = vand.u32 %v830, 4294901760
      %7795 = vmatmul.f32.gmra.mxu0 %v7794
      %v7796 = vpop.f32.mrf.mxu0
      %v7797 = vadd.f32 %v6480, %v7796
      %v7798 = vand.u32 %v833, 4294901760
      %7799 = vmatmul.f32.gmra.mxu0 %v7798
      %v7800 = vpop.f32.mrf.mxu0
      %v7801 = vadd.f32 %v6486, %v7800
      %v7802 = vand.u32 %v836, 4294901760
      %7803 = vmatmul.f32.gmra.mxu0 %v7802
      %v7804 = vpop.f32.mrf.mxu0
      %v7805 = vadd.f32 %v6492, %v7804
      %v7806 = vand.u32 %v839, 4294901760
      %7807 = vmatmul.f32.gmra.mxu0 %v7806
      %v7808 = vpop.f32.mrf.mxu0
      %v7809 = vadd.f32 %v6498, %v7808
      %v7810 = vand.u32 %v842, 4294901760
      %7811 = vmatmul.f32.gmra.mxu0 %v7810
      %v7812 = vpop.f32.mrf.mxu0
      %v7813 = vadd.f32 %v6504, %v7812
      %v7814 = vand.u32 %v845, 4294901760
      %7815 = vmatmul.f32.gmra.mxu0 %v7814
      %v7816 = vpop.f32.mrf.mxu0
      %v7817 = vadd.f32 %v6510, %v7816
      %v7818 = vand.u32 %v848, 4294901760
      %7819 = vmatmul.f32.gmra.mxu0 %v7818
      %v7820 = vpop.f32.mrf.mxu0
      %v7821 = vadd.f32 %v6516, %v7820
      %v7822 = vand.u32 %v851, 4294901760
      %7823 = vmatmul.f32.gmra.mxu0 %v7822
      %v7824 = vpop.f32.mrf.mxu0
      %v7825 = vadd.f32 %v6522, %v7824
      %v7826 = vand.u32 %v854, 4294901760
      %7827 = vmatmul.f32.gmra.mxu0 %v7826
      %v7828 = vpop.f32.mrf.mxu0
      %v7829 = vadd.f32 %v6528, %v7828
      %v7830 = vand.u32 %v857, 4294901760
      %7831 = vmatmul.f32.gmra.mxu0 %v7830
      %v7832 = vpop.f32.mrf.mxu0
      %v7833 = vadd.f32 %v6534, %v7832
      %v7834 = vand.u32 %v860, 4294901760
      %7835 = vmatmul.f32.gmra.mxu0 %v7834
      %v7836 = vpop.f32.mrf.mxu0
      %v7837 = vadd.f32 %v6540, %v7836
      %v7838 = vand.u32 %v863, 4294901760
      %7839 = vmatmul.f32.gmra.mxu0 %v7838
      %v7840 = vpop.f32.mrf.mxu0
      %v7841 = vadd.f32 %v6546, %v7840
      %v7842 = vand.u32 %v866, 4294901760
      %7843 = vmatmul.f32.gmra.mxu0 %v7842
      %v7844 = vpop.f32.mrf.mxu0
      %v7845 = vadd.f32 %v6552, %v7844
      %v7846 = vand.u32 %v869, 4294901760
      %7847 = vmatmul.f32.gmra.mxu0 %v7846
      %v7848 = vpop.f32.mrf.mxu0
      %v7849 = vadd.f32 %v6558, %v7848
      %v7850 = vand.u32 %v872, 4294901760
      %7851 = vmatmul.f32.gmra.mxu0 %v7850
      %v7852 = vpop.f32.mrf.mxu0
      %v7853 = vadd.f32 %v6564, %v7852
      %v7854 = vand.u32 %v875, 4294901760
      %7855 = vmatmul.f32.gmra.mxu0 %v7854
      %v7856 = vpop.f32.mrf.mxu0
      %v7857 = vadd.f32 %v6570, %v7856
      %v7858 = vand.u32 %v878, 4294901760
      %7859 = vmatmul.f32.gmra.mxu0 %v7858
      %v7860 = vpop.f32.mrf.mxu0
      %v7861 = vadd.f32 %v6576, %v7860
      %v7862 = vand.u32 %v881, 4294901760
      %7863 = vmatmul.f32.gmra.mxu0 %v7862
      %v7864 = vpop.f32.mrf.mxu0
      %v7865 = vadd.f32 %v6582, %v7864
      %v7866 = vand.u32 %v884, 4294901760
      %7867 = vmatmul.f32.gmra.mxu0 %v7866
      %v7868 = vpop.f32.mrf.mxu0
      %v7869 = vadd.f32 %v6588, %v7868
      %v7870 = vand.u32 %v887, 4294901760
      %7871 = vmatmul.f32.gmra.mxu0 %v7870
      %v7872 = vpop.f32.mrf.mxu0
      %v7873 = vadd.f32 %v6594, %v7872
      %v7874 = vand.u32 %v890, 4294901760
      %7875 = vmatmul.f32.gmra.mxu0 %v7874
      %v7876 = vpop.f32.mrf.mxu0
      %v7877 = vadd.f32 %v6600, %v7876
      %v7878 = vand.u32 %v893, 4294901760
      %7879 = vmatmul.f32.gmra.mxu0 %v7878
      %v7880 = vpop.f32.mrf.mxu0
      %v7881 = vadd.f32 %v6606, %v7880
      %v7882 = vand.u32 %v896, 4294901760
      %7883 = vmatmul.f32.gmra.mxu0 %v7882
      %v7884 = vpop.f32.mrf.mxu0
      %v7885 = vadd.f32 %v6612, %v7884
      %v7886 = vand.u32 %v899, 4294901760
      %7887 = vmatmul.f32.gmra.mxu0 %v7886
      %v7888 = vpop.f32.mrf.mxu0
      %v7889 = vadd.f32 %v6618, %v7888
      %v7890 = vand.u32 %v902, 4294901760
      %7891 = vmatmul.f32.gmra.mxu0 %v7890
      %v7892 = vpop.f32.mrf.mxu0
      %v7893 = vadd.f32 %v6624, %v7892
      %v7894 = vand.u32 %v905, 4294901760
      %7895 = vmatmul.f32.gmra.mxu0 %v7894
      %v7896 = vpop.f32.mrf.mxu0
      %v7897 = vadd.f32 %v6630, %v7896
      %v7898 = vand.u32 %v908, 4294901760
      %7899 = vmatmul.f32.gmra.mxu0 %v7898
      %v7900 = vpop.f32.mrf.mxu0
      %v7901 = vadd.f32 %v6636, %v7900
      %v7902 = vand.u32 %v911, 4294901760
      %7903 = vmatmul.f32.gmra.mxu0 %v7902
      %v7904 = vpop.f32.mrf.mxu0
      %v7905 = vadd.f32 %v6642, %v7904
      %v7906 = vand.u32 %v914, 4294901760
      %7907 = vmatmul.f32.gmra.mxu0 %v7906
      %v7908 = vpop.f32.mrf.mxu0
      %v7909 = vadd.f32 %v6648, %v7908
      %v7910 = vand.u32 %v917, 4294901760
      %7911 = vmatmul.f32.gmra.mxu0 %v7910
      %v7912 = vpop.f32.mrf.mxu0
      %v7913 = vadd.f32 %v6654, %v7912
      %v7914 = vand.u32 %v920, 4294901760
      %7915 = vmatmul.f32.gmra.mxu0 %v7914
      %v7916 = vpop.f32.mrf.mxu0
      %v7917 = vadd.f32 %v6660, %v7916
      %v7918 = vand.u32 %v923, 4294901760
      %7919 = vmatmul.f32.gmra.mxu0 %v7918
      %v7920 = vpop.f32.mrf.mxu0
      %v7921 = vadd.f32 %v6666, %v7920
      %v7922 = vand.u32 %v926, 4294901760
      %7923 = vmatmul.f32.gmra.mxu0 %v7922
      %v7924 = vpop.f32.mrf.mxu0
      %v7925 = vadd.f32 %v6672, %v7924
      %v7926 = vand.u32 %v929, 4294901760
      %7927 = vmatmul.f32.gmra.mxu0 %v7926
      %v7928 = vpop.f32.mrf.mxu0
      %v7929 = vadd.f32 %v6678, %v7928
      %v7930 = vand.u32 %v932, 4294901760
      %7931 = vmatmul.f32.gmra.mxu0 %v7930
      %v7932 = vpop.f32.mrf.mxu0
      %v7933 = vadd.f32 %v6684, %v7932
      %v7934 = vand.u32 %v935, 4294901760
      %7935 = vmatmul.f32.gmra.mxu0 %v7934
      %v7936 = vpop.f32.mrf.mxu0
      %v7937 = vadd.f32 %v6690, %v7936
      %v7938 = vand.u32 %v938, 4294901760
      %7939 = vmatmul.f32.gmra.mxu0 %v7938
      %v7940 = vpop.f32.mrf.mxu0
      %v7941 = vadd.f32 %v6696, %v7940
      %v7942 = vand.u32 %v941, 4294901760
      %7943 = vmatmul.f32.gmra.mxu0 %v7942
      %v7944 = vpop.f32.mrf.mxu0
      %v7945 = vadd.f32 %v6702, %v7944
      %v7946 = vand.u32 %v944, 4294901760
      %7947 = vmatmul.f32.gmra.mxu0 %v7946
      %v7948 = vpop.f32.mrf.mxu0
      %v7949 = vadd.f32 %v6708, %v7948
      %v7950 = vand.u32 %v947, 4294901760
      %7951 = vmatmul.f32.gmra.mxu0 %v7950
      %v7952 = vpop.f32.mrf.mxu0
      %v7953 = vadd.f32 %v6714, %v7952
      %v7954 = vand.u32 %v950, 4294901760
      %7955 = vmatmul.f32.gmra.mxu0 %v7954
      %v7956 = vpop.f32.mrf.mxu0
      %v7957 = vadd.f32 %v6720, %v7956
      %v7958 = vand.u32 %v953, 4294901760
      %7959 = vmatmul.f32.gmra.mxu0 %v7958
      %v7960 = vpop.f32.mrf.mxu0
      %v7961 = vadd.f32 %v6726, %v7960
      %v7962 = vand.u32 %v956, 4294901760
      %7963 = vmatmul.f32.gmra.mxu0 %v7962
      %v7964 = vpop.f32.mrf.mxu0
      %v7965 = vadd.f32 %v6732, %v7964
      %v7966 = vand.u32 %v959, 4294901760
      %7967 = vmatmul.f32.gmra.mxu0 %v7966
      %v7968 = vpop.f32.mrf.mxu0
      %v7969 = vadd.f32 %v6738, %v7968
      %v7970 = vand.u32 %v962, 4294901760
      %7971 = vmatmul.f32.gmra.mxu0 %v7970
      %v7972 = vpop.f32.mrf.mxu0
      %v7973 = vadd.f32 %v6744, %v7972
      %v7974 = vand.u32 %v965, 4294901760
      %7975 = vmatmul.f32.gmra.mxu0 %v7974
      %v7976 = vpop.f32.mrf.mxu0
      %v7977 = vadd.f32 %v6750, %v7976
      %v7978 = vand.u32 %v968, 4294901760
      %7979 = vmatmul.f32.gmra.mxu0 %v7978
      %v7980 = vpop.f32.mrf.mxu0
      %v7981 = vadd.f32 %v6756, %v7980
      %v7982 = vand.u32 %v971, 4294901760
      %7983 = vmatmul.f32.gmra.mxu0 %v7982
      %v7984 = vpop.f32.mrf.mxu0
      %v7985 = vadd.f32 %v6762, %v7984
      %v7986 = vand.u32 %v974, 4294901760
      %7987 = vmatmul.f32.gmra.mxu0 %v7986
      %v7988 = vpop.f32.mrf.mxu0
      %v7989 = vadd.f32 %v6768, %v7988
      %v7990 = vand.u32 %v977, 4294901760
      %7991 = vmatmul.f32.gmra.mxu0 %v7990
      %v7992 = vpop.f32.mrf.mxu0
      %v7993 = vadd.f32 %v6774, %v7992
      %v7994 = vand.u32 %v980, 4294901760
      %7995 = vmatmul.f32.gmra.mxu0 %v7994
      %v7996 = vpop.f32.mrf.mxu0
      %v7997 = vadd.f32 %v6780, %v7996
      %v7998 = vand.u32 %v983, 4294901760
      %7999 = vmatmul.f32.gmra.mxu0 %v7998
      %v8000 = vpop.f32.mrf.mxu0
      %v8001 = vadd.f32 %v6786, %v8000
      %v8002 = vand.u32 %v986, 4294901760
      %8003 = vmatmul.f32.gmra.mxu0 %v8002
      %v8004 = vpop.f32.mrf.mxu0
      %v8005 = vadd.f32 %v6792, %v8004
      %v8006 = vand.u32 %v989, 4294901760
      %8007 = vmatmul.f32.gmra.mxu0 %v8006
      %v8008 = vpop.f32.mrf.mxu0
      %v8009 = vadd.f32 %v6798, %v8008
      %v8010 = vand.u32 %v992, 4294901760
      %8011 = vmatmul.f32.gmra.mxu0 %v8010
      %v8012 = vpop.f32.mrf.mxu0
      %v8013 = vadd.f32 %v6804, %v8012
      %v8014 = vand.u32 %v995, 4294901760
      %8015 = vmatmul.f32.gmra.mxu0 %v8014
      %v8016 = vpop.f32.mrf.mxu0
      %v8017 = vadd.f32 %v6810, %v8016
      %v8018 = vand.u32 %v998, 4294901760
      %8019 = vmatmul.f32.gmra.mxu0 %v8018
      %v8020 = vpop.f32.mrf.mxu0
      %v8021 = vadd.f32 %v6816, %v8020
      %v8022 = vand.u32 %v1001, 4294901760
      %8023 = vmatmul.f32.gmra.mxu0 %v8022
      %v8024 = vpop.f32.mrf.mxu0
      %v8025 = vadd.f32 %v6822, %v8024
      %v8026 = vand.u32 %v1004, 4294901760
      %8027 = vmatmul.f32.gmra.mxu0 %v8026
      %v8028 = vpop.f32.mrf.mxu0
      %v8029 = vadd.f32 %v6828, %v8028
      %v8030 = vand.u32 %v1007, 4294901760
      %8031 = vmatmul.f32.gmra.mxu0 %v8030
      %v8032 = vpop.f32.mrf.mxu0
      %v8033 = vadd.f32 %v6834, %v8032
      %v8034 = vand.u32 %v1010, 4294901760
      %8035 = vmatmul.f32.gmra.mxu0 %v8034
      %v8036 = vpop.f32.mrf.mxu0
      %v8037 = vadd.f32 %v6840, %v8036
      %v8038 = vand.u32 %v1013, 4294901760
      %8039 = vmatmul.f32.gmra.mxu0 %v8038
      %v8040 = vpop.f32.mrf.mxu0
      %v8041 = vadd.f32 %v6846, %v8040
      %v8042 = vand.u32 %v1016, 4294901760
      %8043 = vmatmul.f32.gmra.mxu0 %v8042
      %v8044 = vpop.f32.mrf.mxu0
      %v8045 = vadd.f32 %v6852, %v8044
      %v8046 = vand.u32 %v1019, 4294901760
      %8047 = vmatmul.f32.gmra.mxu0 %v8046
      %v8048 = vpop.f32.mrf.mxu0
      %v8049 = vadd.f32 %v6858, %v8048
      %v8050 = vand.u32 %v1022, 4294901760
      %8051 = vmatmul.f32.gmra.mxu0 %v8050
      %v8052 = vpop.f32.mrf.mxu0
      %v8053 = vadd.f32 %v6864, %v8052
      %v8054 = vand.u32 %v1025, 4294901760
      %8055 = vmatmul.f32.gmra.mxu0 %v8054
      %v8056 = vpop.f32.mrf.mxu0
      %v8057 = vadd.f32 %v6870, %v8056
      %v8058 = vand.u32 %v1028, 4294901760
      %8059 = vmatmul.f32.gmra.mxu0 %v8058
      %v8060 = vpop.f32.mrf.mxu0
      %v8061 = vadd.f32 %v6876, %v8060
      %v8062 = vand.u32 %v1031, 4294901760
      %8063 = vmatmul.f32.gmra.mxu0 %v8062
      %v8064 = vpop.f32.mrf.mxu0
      %v8065 = vadd.f32 %v6882, %v8064
      %v8066 = vand.u32 %v1034, 4294901760
      %8067 = vmatmul.f32.gmra.mxu0 %v8066
      %v8068 = vpop.f32.mrf.mxu0
      %v8069 = vadd.f32 %v6888, %v8068
      %v8070 = vand.u32 %v1037, 4294901760
      %8071 = vmatmul.f32.gmra.mxu0 %v8070
      %v8072 = vpop.f32.mrf.mxu0
      %v8073 = vadd.f32 %v6894, %v8072
      %v8074 = vand.u32 %v1040, 4294901760
      %8075 = vmatmul.f32.gmra.mxu0 %v8074
      %v8076 = vpop.f32.mrf.mxu0
      %v8077 = vadd.f32 %v6900, %v8076
      %v8078 = vand.u32 %v1043, 4294901760
      %8079 = vmatmul.f32.gmra.mxu0 %v8078
      %v8080 = vpop.f32.mrf.mxu0
      %v8081 = vadd.f32 %v6906, %v8080
      %v8082 = vand.u32 %v1046, 4294901760
      %8083 = vmatmul.f32.gmra.mxu0 %v8082
      %v8084 = vpop.f32.mrf.mxu0
      %v8085 = vadd.f32 %v6912, %v8084
      %v8086 = vand.u32 %v1049, 4294901760
      %8087 = vmatmul.f32.gmra.mxu0 %v8086
      %v8088 = vpop.f32.mrf.mxu0
      %v8089 = vadd.f32 %v6918, %v8088
      %v8090 = vand.u32 %v1052, 4294901760
      %8091 = vmatmul.f32.gmra.mxu0 %v8090
      %v8092 = vpop.f32.mrf.mxu0
      %v8093 = vadd.f32 %v6924, %v8092
      %v8094 = vand.u32 %v1055, 4294901760
      %8095 = vmatmul.f32.gmra.mxu0 %v8094
      %v8096 = vpop.f32.mrf.mxu0
      %v8097 = vadd.f32 %v6930, %v8096
      %v8098 = vand.u32 %v1058, 4294901760
      %8099 = vmatmul.f32.gmra.mxu0 %v8098
      %v8100 = vpop.f32.mrf.mxu0
      %v8101 = vadd.f32 %v6936, %v8100
      %v8102 = vand.u32 %v1061, 4294901760
      %8103 = vmatmul.f32.gmra.mxu0 %v8102
      %v8104 = vpop.f32.mrf.mxu0
      %v8105 = vadd.f32 %v6942, %v8104
      %v8106 = vand.u32 %v1064, 4294901760
      %8107 = vmatmul.f32.gmra.mxu0 %v8106
      %v8108 = vpop.f32.mrf.mxu0
      %v8109 = vadd.f32 %v6948, %v8108
      %v8110 = vand.u32 %v1067, 4294901760
      %8111 = vmatmul.f32.gmra.mxu0 %v8110
      %v8112 = vpop.f32.mrf.mxu0
      %v8113 = vadd.f32 %v6954, %v8112
      %v8114 = vand.u32 %v1070, 4294901760
      %8115 = vmatmul.f32.gmra.mxu0 %v8114
      %v8116 = vpop.f32.mrf.mxu0
      %v8117 = vadd.f32 %v6960, %v8116
      %v8118 = vand.u32 %v1073, 4294901760
      %8119 = vmatmul.f32.gmra.mxu0 %v8118
      %v8120 = vpop.f32.mrf.mxu0
      %v8121 = vadd.f32 %v6966, %v8120
      %v8122 = vand.u32 %v1076, 4294901760
      %8123 = vmatmul.f32.gmra.mxu0 %v8122
      %v8124 = vpop.f32.mrf.mxu0
      %v8125 = vadd.f32 %v6972, %v8124
      %v8126 = vand.u32 %v1079, 4294901760
      %8127 = vmatmul.f32.gmra.mxu0 %v8126
      %v8128 = vpop.f32.mrf.mxu0
      %v8129 = vadd.f32 %v6978, %v8128
      %v8130 = vand.u32 %v1082, 4294901760
      %8131 = vmatmul.f32.gmra.mxu0 %v8130
      %v8132 = vpop.f32.mrf.mxu0
      %v8133 = vadd.f32 %v6984, %v8132
      %v8134 = vand.u32 %v1085, 4294901760
      %8135 = vmatmul.f32.gmra.mxu0 %v8134
      %v8136 = vpop.f32.mrf.mxu0
      %v8137 = vadd.f32 %v6990, %v8136
      %v8138 = vand.u32 %v1088, 4294901760
      %8139 = vmatmul.f32.gmra.mxu0 %v8138
      %v8140 = vpop.f32.mrf.mxu0
      %v8141 = vadd.f32 %v6996, %v8140
      %v8142 = vand.u32 %v1091, 4294901760
      %8143 = vmatmul.f32.gmra.mxu0 %v8142
      %v8144 = vpop.f32.mrf.mxu0
      %v8145 = vadd.f32 %v7002, %v8144
      %v8146 = vand.u32 %v1094, 4294901760
      %8147 = vmatmul.f32.gmra.mxu0 %v8146
      %v8148 = vpop.f32.mrf.mxu0
      %v8149 = vadd.f32 %v7008, %v8148
      %v8150 = vand.u32 %v1097, 4294901760
      %8151 = vmatmul.f32.gmra.mxu0 %v8150
      %v8152 = vpop.f32.mrf.mxu0
      %v8153 = vadd.f32 %v7014, %v8152
      %v8154 = vand.u32 %v1100, 4294901760
      %8155 = vmatmul.f32.gmra.mxu0 %v8154
      %v8156 = vpop.f32.mrf.mxu0
      %v8157 = vadd.f32 %v7020, %v8156
      %v8158 = vand.u32 %v1103, 4294901760
      %8159 = vmatmul.f32.gmra.mxu0 %v8158
      %v8160 = vpop.f32.mrf.mxu0
      %v8161 = vadd.f32 %v7026, %v8160
      %v8162 = vand.u32 %v1106, 4294901760
      %8163 = vmatmul.f32.gmra.mxu0 %v8162
      %v8164 = vpop.f32.mrf.mxu0
      %v8165 = vadd.f32 %v7032, %v8164
      %v8166 = vand.u32 %v1109, 4294901760
      %8167 = vmatmul.f32.gmra.mxu0 %v8166
      %v8168 = vpop.f32.mrf.mxu0
      %v8169 = vadd.f32 %v7038, %v8168
      %v8170 = vand.u32 %v1112, 4294901760
      %8171 = vmatmul.f32.gmra.mxu0 %v8170
      %v8172 = vpop.f32.mrf.mxu0
      %v8173 = vadd.f32 %v7044, %v8172
      %v8174 = vand.u32 %v1115, 4294901760
      %8175 = vmatmul.f32.gmra.mxu0 %v8174
      %v8176 = vpop.f32.mrf.mxu0
      %v8177 = vadd.f32 %v7050, %v8176
      %v8178 = vand.u32 %v1118, 4294901760
      %8179 = vmatmul.f32.gmra.mxu0 %v8178
      %v8180 = vpop.f32.mrf.mxu0
      %v8181 = vadd.f32 %v7056, %v8180
      %v8182 = vand.u32 %v1121, 4294901760
      %8183 = vmatmul.f32.gmra.mxu0 %v8182
      %v8184 = vpop.f32.mrf.mxu0
      %v8185 = vadd.f32 %v7062, %v8184
      %v8186 = vand.u32 %v1124, 4294901760
      %8187 = vmatmul.f32.gmra.mxu0 %v8186
      %v8188 = vpop.f32.mrf.mxu0
      %v8189 = vadd.f32 %v7068, %v8188
      %v8190 = vand.u32 %v1127, 4294901760
      %8191 = vmatmul.f32.gmra.mxu0 %v8190
      %v8192 = vpop.f32.mrf.mxu0
      %v8193 = vadd.f32 %v7074, %v8192
      %v8194 = vand.u32 %v1130, 4294901760
      %8195 = vmatmul.f32.gmra.mxu0 %v8194
      %v8196 = vpop.f32.mrf.mxu0
      %v8197 = vadd.f32 %v7080, %v8196
      %v8198 = vand.u32 %v1133, 4294901760
      %8199 = vmatmul.f32.gmra.mxu0 %v8198
      %v8200 = vpop.f32.mrf.mxu0
      %v8201 = vadd.f32 %v7086, %v8200
      %v8202 = vand.u32 %v1136, 4294901760
      %8203 = vmatmul.f32.gmra.mxu0 %v8202
      %v8204 = vpop.f32.mrf.mxu0
      %v8205 = vadd.f32 %v7092, %v8204
      %v8206 = vand.u32 %v1139, 4294901760
      %8207 = vmatmul.f32.gmra.mxu0 %v8206
      %v8208 = vpop.f32.mrf.mxu0
      %v8209 = vadd.f32 %v7098, %v8208
      %v8210 = vand.u32 %v1142, 4294901760
      %8211 = vmatmul.f32.gmra.mxu0 %v8210
      %v8212 = vpop.f32.mrf.mxu0
      %v8213 = vadd.f32 %v7104, %v8212
      %v8214 = vand.u32 %v1145, 4294901760
      %8215 = vmatmul.f32.gmra.mxu0 %v8214
      %v8216 = vpop.f32.mrf.mxu0
      %v8217 = vadd.f32 %v7110, %v8216
      %v8218 = vand.u32 %v1148, 4294901760
      %8219 = vmatmul.f32.gmra.mxu0 %v8218
      %v8220 = vpop.f32.mrf.mxu0
      %v8221 = vadd.f32 %v7116, %v8220
      %v8222 = vand.u32 %v1151, 4294901760
      %8223 = vmatmul.f32.gmra.mxu0 %v8222
      %v8224 = vpop.f32.mrf.mxu0
      %v8225 = vadd.f32 %v7122, %v8224
      %v8226 = vand.u32 %v1154, 4294901760
      %8227 = vmatmul.f32.gmra.mxu0 %v8226
      %v8228 = vpop.f32.mrf.mxu0
      %v8229 = vadd.f32 %v7128, %v8228
      %v8230 = vand.u32 %v1157, 4294901760
      %8231 = vmatmul.f32.gmra.mxu0 %v8230
      %v8232 = vpop.f32.mrf.mxu0
      %v8233 = vadd.f32 %v7134, %v8232
      %v8234 = vand.u32 %v1160, 4294901760
      %8235 = vmatmul.f32.gmra.mxu0 %v8234
      %v8236 = vpop.f32.mrf.mxu0
      %v8237 = vadd.f32 %v7140, %v8236
      %v8238 = vand.u32 %v1163, 4294901760
      %8239 = vmatmul.f32.gmra.mxu0 %v8238
      %v8240 = vpop.f32.mrf.mxu0
      %v8241 = vadd.f32 %v7146, %v8240
      %v8242 = vand.u32 %v1166, 4294901760
      %8243 = vmatmul.f32.gmra.mxu0 %v8242
      %v8244 = vpop.f32.mrf.mxu0
      %v8245 = vadd.f32 %v7152, %v8244
      %v8246 = vand.u32 %v1169, 4294901760
      %8247 = vmatmul.f32.gmra.mxu0 %v8246
      %v8248 = vpop.f32.mrf.mxu0
      %v8249 = vadd.f32 %v7158, %v8248
      %v8250 = vand.u32 %v1172, 4294901760
      %8251 = vmatmul.f32.gmra.mxu0 %v8250
      %v8252 = vpop.f32.mrf.mxu0
      %v8253 = vadd.f32 %v7164, %v8252
      %v8254 = vand.u32 %v1175, 4294901760
      %8255 = vmatmul.f32.gmra.mxu0 %v8254
      %v8256 = vpop.f32.mrf.mxu0
      %v8257 = vadd.f32 %v7170, %v8256
      %v8258 = vand.u32 %v1178, 4294901760
      %8259 = vmatmul.f32.gmra.mxu0 %v8258
      %v8260 = vpop.f32.mrf.mxu0
      %v8261 = vadd.f32 %v7176, %v8260
      %v8262 = vand.u32 %v1181, 4294901760
      %8263 = vmatmul.f32.gmra.mxu0 %v8262
      %v8264 = vpop.f32.mrf.mxu0
      %v8265 = vadd.f32 %v7182, %v8264
      %v8266 = vand.u32 %v1184, 4294901760
      %8267 = vmatmul.f32.gmra.mxu0 %v8266
      %v8268 = vpop.f32.mrf.mxu0
      %v8269 = vadd.f32 %v7188, %v8268
      %v8270 = vand.u32 %v1187, 4294901760
      %8271 = vmatmul.f32.gmra.mxu0 %v8270
      %v8272 = vpop.f32.mrf.mxu0
      %v8273 = vadd.f32 %v7194, %v8272
      %v8274 = vand.u32 %v1190, 4294901760
      %8275 = vmatmul.f32.gmra.mxu0 %v8274
      %v8276 = vpop.f32.mrf.mxu0
      %v8277 = vadd.f32 %v7200, %v8276
      %v8278 = vand.u32 %v1193, 4294901760
      %8279 = vmatmul.f32.gmra.mxu0 %v8278
      %v8280 = vpop.f32.mrf.mxu0
      %v8281 = vadd.f32 %v7206, %v8280
      %v8282 = vand.u32 %v1196, 4294901760
      %8283 = vmatmul.f32.gmra.mxu0 %v8282
      %v8284 = vpop.f32.mrf.mxu0
      %v8285 = vadd.f32 %v7212, %v8284
      %v8286 = vand.u32 %v1199, 4294901760
      %8287 = vmatmul.f32.gmra.mxu0 %v8286
      %v8288 = vpop.f32.mrf.mxu0
      %v8289 = vadd.f32 %v7218, %v8288
      %v8290 = vand.u32 %v1202, 4294901760
      %8291 = vmatmul.f32.gmra.mxu0 %v8290
      %v8292 = vpop.f32.mrf.mxu0
      %v8293 = vadd.f32 %v7224, %v8292
      %v8294 = vand.u32 %v1205, 4294901760
      %8295 = vmatmul.f32.gmra.mxu0 %v8294
      %v8296 = vpop.f32.mrf.mxu0
      %v8297 = vadd.f32 %v7230, %v8296
      %v8298 = vand.u32 %v1208, 4294901760
      %8299 = vmatmul.f32.gmra.mxu0 %v8298
      %v8300 = vpop.f32.mrf.mxu0
      %v8301 = vadd.f32 %v7236, %v8300
      %8302 = vdwg.mxu0
      %8303 = vmatpush.msra.mxu0 0.0
      %8304 = vmatpush.msra.mxu0 0.0
      %8305 = vmatpush.msra.mxu0 0.0
      %8306 = vmatpush.msra.mxu0 0.0
      %8307 = vmatpush.msra.mxu0 0.0
      %8308 = vmatpush.msra.mxu0 0.0
      %8309 = vmatpush.msra.mxu0 0.0
      %8310 = vmatpush.msra.mxu0 0.0
      %v8311 = vand.u32 %v438, 4294901760
      %8312 = vmatpush.msra.mxu0 %v8311
      %v8313 = vand.u32 %v437, 4294901760
      %8314 = vmatpush.msra.mxu0 %v8313
      %v8315 = vand.u32 %v436, 4294901760
      %8316 = vmatpush.msra.mxu0 %v8315
      %v8317 = vand.u32 %v435, 4294901760
      %8318 = vmatpush.msra.mxu0 %v8317
      %v8319 = vand.u32 %v434, 4294901760
      %8320 = vmatpush.msra.mxu0 %v8319
      %v8321 = vand.u32 %v433, 4294901760
      %8322 = vmatpush.msra.mxu0 %v8321
      %v8323 = vand.u32 %v432, 4294901760
      %8324 = vmatpush.msra.mxu0 %v8323
      %v8325 = vand.u32 %v431, 4294901760
      %8326 = vmatpush.msra.mxu0 %v8325
      %v8327 = vand.u32 %v443, 4294901760
      %8328 = vmatmul.f32.gmra.mxu0 %v8327
      %v8329 = vpop.f32.mrf.mxu0
      %v8330 = vadd.f32 %v7281, %v8329
      %v8331 = vand.u32 %v446, 4294901760
      %8332 = vmatmul.f32.gmra.mxu0 %v8331
      %v8333 = vpop.f32.mrf.mxu0
      %v8334 = vadd.f32 %v7285, %v8333
      %v8335 = vand.u32 %v449, 4294901760
      %8336 = vmatmul.f32.gmra.mxu0 %v8335
      %v8337 = vpop.f32.mrf.mxu0
      %v8338 = vadd.f32 %v7289, %v8337
      %v8339 = vand.u32 %v452, 4294901760
      %8340 = vmatmul.f32.gmra.mxu0 %v8339
      %v8341 = vpop.f32.mrf.mxu0
      %v8342 = vadd.f32 %v7293, %v8341
      %v8343 = vand.u32 %v455, 4294901760
      %8344 = vmatmul.f32.gmra.mxu0 %v8343
      %v8345 = vpop.f32.mrf.mxu0
      %v8346 = vadd.f32 %v7297, %v8345
      %v8347 = vand.u32 %v458, 4294901760
      %8348 = vmatmul.f32.gmra.mxu0 %v8347
      %v8349 = vpop.f32.mrf.mxu0
      %v8350 = vadd.f32 %v7301, %v8349
      %v8351 = vand.u32 %v461, 4294901760
      %8352 = vmatmul.f32.gmra.mxu0 %v8351
      %v8353 = vpop.f32.mrf.mxu0
      %v8354 = vadd.f32 %v7305, %v8353
      %v8355 = vand.u32 %v464, 4294901760
      %8356 = vmatmul.f32.gmra.mxu0 %v8355
      %v8357 = vpop.f32.mrf.mxu0
      %v8358 = vadd.f32 %v7309, %v8357
      %v8359 = vand.u32 %v467, 4294901760
      %8360 = vmatmul.f32.gmra.mxu0 %v8359
      %v8361 = vpop.f32.mrf.mxu0
      %v8362 = vadd.f32 %v7313, %v8361
      %v8363 = vand.u32 %v470, 4294901760
      %8364 = vmatmul.f32.gmra.mxu0 %v8363
      %v8365 = vpop.f32.mrf.mxu0
      %v8366 = vadd.f32 %v7317, %v8365
      %v8367 = vand.u32 %v473, 4294901760
      %8368 = vmatmul.f32.gmra.mxu0 %v8367
      %v8369 = vpop.f32.mrf.mxu0
      %v8370 = vadd.f32 %v7321, %v8369
      %v8371 = vand.u32 %v476, 4294901760
      %8372 = vmatmul.f32.gmra.mxu0 %v8371
      %v8373 = vpop.f32.mrf.mxu0
      %v8374 = vadd.f32 %v7325, %v8373
      %v8375 = vand.u32 %v479, 4294901760
      %8376 = vmatmul.f32.gmra.mxu0 %v8375
      %v8377 = vpop.f32.mrf.mxu0
      %v8378 = vadd.f32 %v7329, %v8377
      %v8379 = vand.u32 %v482, 4294901760
      %8380 = vmatmul.f32.gmra.mxu0 %v8379
      %v8381 = vpop.f32.mrf.mxu0
      %v8382 = vadd.f32 %v7333, %v8381
      %v8383 = vand.u32 %v485, 4294901760
      %8384 = vmatmul.f32.gmra.mxu0 %v8383
      %v8385 = vpop.f32.mrf.mxu0
      %v8386 = vadd.f32 %v7337, %v8385
      %v8387 = vand.u32 %v488, 4294901760
      %8388 = vmatmul.f32.gmra.mxu0 %v8387
      %v8389 = vpop.f32.mrf.mxu0
      %v8390 = vadd.f32 %v7341, %v8389
      %v8391 = vand.u32 %v491, 4294901760
      %8392 = vmatmul.f32.gmra.mxu0 %v8391
      %v8393 = vpop.f32.mrf.mxu0
      %v8394 = vadd.f32 %v7345, %v8393
      %v8395 = vand.u32 %v494, 4294901760
      %8396 = vmatmul.f32.gmra.mxu0 %v8395
      %v8397 = vpop.f32.mrf.mxu0
      %v8398 = vadd.f32 %v7349, %v8397
      %v8399 = vand.u32 %v497, 4294901760
      %8400 = vmatmul.f32.gmra.mxu0 %v8399
      %v8401 = vpop.f32.mrf.mxu0
      %v8402 = vadd.f32 %v7353, %v8401
      %v8403 = vand.u32 %v500, 4294901760
      %8404 = vmatmul.f32.gmra.mxu0 %v8403
      %v8405 = vpop.f32.mrf.mxu0
      %v8406 = vadd.f32 %v7357, %v8405
      %v8407 = vand.u32 %v503, 4294901760
      %8408 = vmatmul.f32.gmra.mxu0 %v8407
      %v8409 = vpop.f32.mrf.mxu0
      %v8410 = vadd.f32 %v7361, %v8409
      %v8411 = vand.u32 %v506, 4294901760
      %8412 = vmatmul.f32.gmra.mxu0 %v8411
      %v8413 = vpop.f32.mrf.mxu0
      %v8414 = vadd.f32 %v7365, %v8413
      %v8415 = vand.u32 %v509, 4294901760
      %8416 = vmatmul.f32.gmra.mxu0 %v8415
      %v8417 = vpop.f32.mrf.mxu0
      %v8418 = vadd.f32 %v7369, %v8417
      %v8419 = vand.u32 %v512, 4294901760
      %8420 = vmatmul.f32.gmra.mxu0 %v8419
      %v8421 = vpop.f32.mrf.mxu0
      %v8422 = vadd.f32 %v7373, %v8421
      %v8423 = vand.u32 %v515, 4294901760
      %8424 = vmatmul.f32.gmra.mxu0 %v8423
      %v8425 = vpop.f32.mrf.mxu0
      %v8426 = vadd.f32 %v7377, %v8425
      %v8427 = vand.u32 %v518, 4294901760
      %8428 = vmatmul.f32.gmra.mxu0 %v8427
      %v8429 = vpop.f32.mrf.mxu0
      %v8430 = vadd.f32 %v7381, %v8429
      %v8431 = vand.u32 %v521, 4294901760
      %8432 = vmatmul.f32.gmra.mxu0 %v8431
      %v8433 = vpop.f32.mrf.mxu0
      %v8434 = vadd.f32 %v7385, %v8433
      %v8435 = vand.u32 %v524, 4294901760
      %8436 = vmatmul.f32.gmra.mxu0 %v8435
      %v8437 = vpop.f32.mrf.mxu0
      %v8438 = vadd.f32 %v7389, %v8437
      %v8439 = vand.u32 %v527, 4294901760
      %8440 = vmatmul.f32.gmra.mxu0 %v8439
      %v8441 = vpop.f32.mrf.mxu0
      %v8442 = vadd.f32 %v7393, %v8441
      %v8443 = vand.u32 %v530, 4294901760
      %8444 = vmatmul.f32.gmra.mxu0 %v8443
      %v8445 = vpop.f32.mrf.mxu0
      %v8446 = vadd.f32 %v7397, %v8445
      %v8447 = vand.u32 %v533, 4294901760
      %8448 = vmatmul.f32.gmra.mxu0 %v8447
      %v8449 = vpop.f32.mrf.mxu0
      %v8450 = vadd.f32 %v7401, %v8449
      %v8451 = vand.u32 %v536, 4294901760
      %8452 = vmatmul.f32.gmra.mxu0 %v8451
      %v8453 = vpop.f32.mrf.mxu0
      %v8454 = vadd.f32 %v7405, %v8453
      %v8455 = vand.u32 %v539, 4294901760
      %8456 = vmatmul.f32.gmra.mxu0 %v8455
      %v8457 = vpop.f32.mrf.mxu0
      %v8458 = vadd.f32 %v7409, %v8457
      %v8459 = vand.u32 %v542, 4294901760
      %8460 = vmatmul.f32.gmra.mxu0 %v8459
      %v8461 = vpop.f32.mrf.mxu0
      %v8462 = vadd.f32 %v7413, %v8461
      %v8463 = vand.u32 %v545, 4294901760
      %8464 = vmatmul.f32.gmra.mxu0 %v8463
      %v8465 = vpop.f32.mrf.mxu0
      %v8466 = vadd.f32 %v7417, %v8465
      %v8467 = vand.u32 %v548, 4294901760
      %8468 = vmatmul.f32.gmra.mxu0 %v8467
      %v8469 = vpop.f32.mrf.mxu0
      %v8470 = vadd.f32 %v7421, %v8469
      %v8471 = vand.u32 %v551, 4294901760
      %8472 = vmatmul.f32.gmra.mxu0 %v8471
      %v8473 = vpop.f32.mrf.mxu0
      %v8474 = vadd.f32 %v7425, %v8473
      %v8475 = vand.u32 %v554, 4294901760
      %8476 = vmatmul.f32.gmra.mxu0 %v8475
      %v8477 = vpop.f32.mrf.mxu0
      %v8478 = vadd.f32 %v7429, %v8477
      %v8479 = vand.u32 %v557, 4294901760
      %8480 = vmatmul.f32.gmra.mxu0 %v8479
      %v8481 = vpop.f32.mrf.mxu0
      %v8482 = vadd.f32 %v7433, %v8481
      %v8483 = vand.u32 %v560, 4294901760
      %8484 = vmatmul.f32.gmra.mxu0 %v8483
      %v8485 = vpop.f32.mrf.mxu0
      %v8486 = vadd.f32 %v7437, %v8485
      %v8487 = vand.u32 %v563, 4294901760
      %8488 = vmatmul.f32.gmra.mxu0 %v8487
      %v8489 = vpop.f32.mrf.mxu0
      %v8490 = vadd.f32 %v7441, %v8489
      %v8491 = vand.u32 %v566, 4294901760
      %8492 = vmatmul.f32.gmra.mxu0 %v8491
      %v8493 = vpop.f32.mrf.mxu0
      %v8494 = vadd.f32 %v7445, %v8493
      %v8495 = vand.u32 %v569, 4294901760
      %8496 = vmatmul.f32.gmra.mxu0 %v8495
      %v8497 = vpop.f32.mrf.mxu0
      %v8498 = vadd.f32 %v7449, %v8497
      %v8499 = vand.u32 %v572, 4294901760
      %8500 = vmatmul.f32.gmra.mxu0 %v8499
      %v8501 = vpop.f32.mrf.mxu0
      %v8502 = vadd.f32 %v7453, %v8501
      %v8503 = vand.u32 %v575, 4294901760
      %8504 = vmatmul.f32.gmra.mxu0 %v8503
      %v8505 = vpop.f32.mrf.mxu0
      %v8506 = vadd.f32 %v7457, %v8505
      %v8507 = vand.u32 %v578, 4294901760
      %8508 = vmatmul.f32.gmra.mxu0 %v8507
      %v8509 = vpop.f32.mrf.mxu0
      %v8510 = vadd.f32 %v7461, %v8509
      %v8511 = vand.u32 %v581, 4294901760
      %8512 = vmatmul.f32.gmra.mxu0 %v8511
      %v8513 = vpop.f32.mrf.mxu0
      %v8514 = vadd.f32 %v7465, %v8513
      %v8515 = vand.u32 %v584, 4294901760
      %8516 = vmatmul.f32.gmra.mxu0 %v8515
      %v8517 = vpop.f32.mrf.mxu0
      %v8518 = vadd.f32 %v7469, %v8517
      %v8519 = vand.u32 %v587, 4294901760
      %8520 = vmatmul.f32.gmra.mxu0 %v8519
      %v8521 = vpop.f32.mrf.mxu0
      %v8522 = vadd.f32 %v7473, %v8521
      %v8523 = vand.u32 %v590, 4294901760
      %8524 = vmatmul.f32.gmra.mxu0 %v8523
      %v8525 = vpop.f32.mrf.mxu0
      %v8526 = vadd.f32 %v7477, %v8525
      %v8527 = vand.u32 %v593, 4294901760
      %8528 = vmatmul.f32.gmra.mxu0 %v8527
      %v8529 = vpop.f32.mrf.mxu0
      %v8530 = vadd.f32 %v7481, %v8529
      %v8531 = vand.u32 %v596, 4294901760
      %8532 = vmatmul.f32.gmra.mxu0 %v8531
      %v8533 = vpop.f32.mrf.mxu0
      %v8534 = vadd.f32 %v7485, %v8533
      %v8535 = vand.u32 %v599, 4294901760
      %8536 = vmatmul.f32.gmra.mxu0 %v8535
      %v8537 = vpop.f32.mrf.mxu0
      %v8538 = vadd.f32 %v7489, %v8537
      %v8539 = vand.u32 %v602, 4294901760
      %8540 = vmatmul.f32.gmra.mxu0 %v8539
      %v8541 = vpop.f32.mrf.mxu0
      %v8542 = vadd.f32 %v7493, %v8541
      %v8543 = vand.u32 %v605, 4294901760
      %8544 = vmatmul.f32.gmra.mxu0 %v8543
      %v8545 = vpop.f32.mrf.mxu0
      %v8546 = vadd.f32 %v7497, %v8545
      %v8547 = vand.u32 %v608, 4294901760
      %8548 = vmatmul.f32.gmra.mxu0 %v8547
      %v8549 = vpop.f32.mrf.mxu0
      %v8550 = vadd.f32 %v7501, %v8549
      %v8551 = vand.u32 %v611, 4294901760
      %8552 = vmatmul.f32.gmra.mxu0 %v8551
      %v8553 = vpop.f32.mrf.mxu0
      %v8554 = vadd.f32 %v7505, %v8553
      %v8555 = vand.u32 %v614, 4294901760
      %8556 = vmatmul.f32.gmra.mxu0 %v8555
      %v8557 = vpop.f32.mrf.mxu0
      %v8558 = vadd.f32 %v7509, %v8557
      %v8559 = vand.u32 %v617, 4294901760
      %8560 = vmatmul.f32.gmra.mxu0 %v8559
      %v8561 = vpop.f32.mrf.mxu0
      %v8562 = vadd.f32 %v7513, %v8561
      %v8563 = vand.u32 %v620, 4294901760
      %8564 = vmatmul.f32.gmra.mxu0 %v8563
      %v8565 = vpop.f32.mrf.mxu0
      %v8566 = vadd.f32 %v7517, %v8565
      %v8567 = vand.u32 %v623, 4294901760
      %8568 = vmatmul.f32.gmra.mxu0 %v8567
      %v8569 = vpop.f32.mrf.mxu0
      %v8570 = vadd.f32 %v7521, %v8569
      %v8571 = vand.u32 %v626, 4294901760
      %8572 = vmatmul.f32.gmra.mxu0 %v8571
      %v8573 = vpop.f32.mrf.mxu0
      %v8574 = vadd.f32 %v7525, %v8573
      %v8575 = vand.u32 %v629, 4294901760
      %8576 = vmatmul.f32.gmra.mxu0 %v8575
      %v8577 = vpop.f32.mrf.mxu0
      %v8578 = vadd.f32 %v7529, %v8577
      %v8579 = vand.u32 %v632, 4294901760
      %8580 = vmatmul.f32.gmra.mxu0 %v8579
      %v8581 = vpop.f32.mrf.mxu0
      %v8582 = vadd.f32 %v7533, %v8581
      %v8583 = vand.u32 %v635, 4294901760
      %8584 = vmatmul.f32.gmra.mxu0 %v8583
      %v8585 = vpop.f32.mrf.mxu0
      %v8586 = vadd.f32 %v7537, %v8585
      %v8587 = vand.u32 %v638, 4294901760
      %8588 = vmatmul.f32.gmra.mxu0 %v8587
      %v8589 = vpop.f32.mrf.mxu0
      %v8590 = vadd.f32 %v7541, %v8589
      %v8591 = vand.u32 %v641, 4294901760
      %8592 = vmatmul.f32.gmra.mxu0 %v8591
      %v8593 = vpop.f32.mrf.mxu0
      %v8594 = vadd.f32 %v7545, %v8593
      %v8595 = vand.u32 %v644, 4294901760
      %8596 = vmatmul.f32.gmra.mxu0 %v8595
      %v8597 = vpop.f32.mrf.mxu0
      %v8598 = vadd.f32 %v7549, %v8597
      %v8599 = vand.u32 %v647, 4294901760
      %8600 = vmatmul.f32.gmra.mxu0 %v8599
      %v8601 = vpop.f32.mrf.mxu0
      %v8602 = vadd.f32 %v7553, %v8601
      %v8603 = vand.u32 %v650, 4294901760
      %8604 = vmatmul.f32.gmra.mxu0 %v8603
      %v8605 = vpop.f32.mrf.mxu0
      %v8606 = vadd.f32 %v7557, %v8605
      %v8607 = vand.u32 %v653, 4294901760
      %8608 = vmatmul.f32.gmra.mxu0 %v8607
      %v8609 = vpop.f32.mrf.mxu0
      %v8610 = vadd.f32 %v7561, %v8609
      %v8611 = vand.u32 %v656, 4294901760
      %8612 = vmatmul.f32.gmra.mxu0 %v8611
      %v8613 = vpop.f32.mrf.mxu0
      %v8614 = vadd.f32 %v7565, %v8613
      %v8615 = vand.u32 %v659, 4294901760
      %8616 = vmatmul.f32.gmra.mxu0 %v8615
      %v8617 = vpop.f32.mrf.mxu0
      %v8618 = vadd.f32 %v7569, %v8617
      %v8619 = vand.u32 %v662, 4294901760
      %8620 = vmatmul.f32.gmra.mxu0 %v8619
      %v8621 = vpop.f32.mrf.mxu0
      %v8622 = vadd.f32 %v7573, %v8621
      %v8623 = vand.u32 %v665, 4294901760
      %8624 = vmatmul.f32.gmra.mxu0 %v8623
      %v8625 = vpop.f32.mrf.mxu0
      %v8626 = vadd.f32 %v7577, %v8625
      %v8627 = vand.u32 %v668, 4294901760
      %8628 = vmatmul.f32.gmra.mxu0 %v8627
      %v8629 = vpop.f32.mrf.mxu0
      %v8630 = vadd.f32 %v7581, %v8629
      %v8631 = vand.u32 %v671, 4294901760
      %8632 = vmatmul.f32.gmra.mxu0 %v8631
      %v8633 = vpop.f32.mrf.mxu0
      %v8634 = vadd.f32 %v7585, %v8633
      %v8635 = vand.u32 %v674, 4294901760
      %8636 = vmatmul.f32.gmra.mxu0 %v8635
      %v8637 = vpop.f32.mrf.mxu0
      %v8638 = vadd.f32 %v7589, %v8637
      %v8639 = vand.u32 %v677, 4294901760
      %8640 = vmatmul.f32.gmra.mxu0 %v8639
      %v8641 = vpop.f32.mrf.mxu0
      %v8642 = vadd.f32 %v7593, %v8641
      %v8643 = vand.u32 %v680, 4294901760
      %8644 = vmatmul.f32.gmra.mxu0 %v8643
      %v8645 = vpop.f32.mrf.mxu0
      %v8646 = vadd.f32 %v7597, %v8645
      %v8647 = vand.u32 %v683, 4294901760
      %8648 = vmatmul.f32.gmra.mxu0 %v8647
      %v8649 = vpop.f32.mrf.mxu0
      %v8650 = vadd.f32 %v7601, %v8649
      %v8651 = vand.u32 %v686, 4294901760
      %8652 = vmatmul.f32.gmra.mxu0 %v8651
      %v8653 = vpop.f32.mrf.mxu0
      %v8654 = vadd.f32 %v7605, %v8653
      %v8655 = vand.u32 %v689, 4294901760
      %8656 = vmatmul.f32.gmra.mxu0 %v8655
      %v8657 = vpop.f32.mrf.mxu0
      %v8658 = vadd.f32 %v7609, %v8657
      %v8659 = vand.u32 %v692, 4294901760
      %8660 = vmatmul.f32.gmra.mxu0 %v8659
      %v8661 = vpop.f32.mrf.mxu0
      %v8662 = vadd.f32 %v7613, %v8661
      %v8663 = vand.u32 %v695, 4294901760
      %8664 = vmatmul.f32.gmra.mxu0 %v8663
      %v8665 = vpop.f32.mrf.mxu0
      %v8666 = vadd.f32 %v7617, %v8665
      %v8667 = vand.u32 %v698, 4294901760
      %8668 = vmatmul.f32.gmra.mxu0 %v8667
      %v8669 = vpop.f32.mrf.mxu0
      %v8670 = vadd.f32 %v7621, %v8669
      %v8671 = vand.u32 %v701, 4294901760
      %8672 = vmatmul.f32.gmra.mxu0 %v8671
      %v8673 = vpop.f32.mrf.mxu0
      %v8674 = vadd.f32 %v7625, %v8673
      %v8675 = vand.u32 %v704, 4294901760
      %8676 = vmatmul.f32.gmra.mxu0 %v8675
      %v8677 = vpop.f32.mrf.mxu0
      %v8678 = vadd.f32 %v7629, %v8677
      %v8679 = vand.u32 %v707, 4294901760
      %8680 = vmatmul.f32.gmra.mxu0 %v8679
      %v8681 = vpop.f32.mrf.mxu0
      %v8682 = vadd.f32 %v7633, %v8681
      %v8683 = vand.u32 %v710, 4294901760
      %8684 = vmatmul.f32.gmra.mxu0 %v8683
      %v8685 = vpop.f32.mrf.mxu0
      %v8686 = vadd.f32 %v7637, %v8685
      %v8687 = vand.u32 %v713, 4294901760
      %8688 = vmatmul.f32.gmra.mxu0 %v8687
      %v8689 = vpop.f32.mrf.mxu0
      %v8690 = vadd.f32 %v7641, %v8689
      %v8691 = vand.u32 %v716, 4294901760
      %8692 = vmatmul.f32.gmra.mxu0 %v8691
      %v8693 = vpop.f32.mrf.mxu0
      %v8694 = vadd.f32 %v7645, %v8693
      %v8695 = vand.u32 %v719, 4294901760
      %8696 = vmatmul.f32.gmra.mxu0 %v8695
      %v8697 = vpop.f32.mrf.mxu0
      %v8698 = vadd.f32 %v7649, %v8697
      %v8699 = vand.u32 %v722, 4294901760
      %8700 = vmatmul.f32.gmra.mxu0 %v8699
      %v8701 = vpop.f32.mrf.mxu0
      %v8702 = vadd.f32 %v7653, %v8701
      %v8703 = vand.u32 %v725, 4294901760
      %8704 = vmatmul.f32.gmra.mxu0 %v8703
      %v8705 = vpop.f32.mrf.mxu0
      %v8706 = vadd.f32 %v7657, %v8705
      %v8707 = vand.u32 %v728, 4294901760
      %8708 = vmatmul.f32.gmra.mxu0 %v8707
      %v8709 = vpop.f32.mrf.mxu0
      %v8710 = vadd.f32 %v7661, %v8709
      %v8711 = vand.u32 %v731, 4294901760
      %8712 = vmatmul.f32.gmra.mxu0 %v8711
      %v8713 = vpop.f32.mrf.mxu0
      %v8714 = vadd.f32 %v7665, %v8713
      %v8715 = vand.u32 %v734, 4294901760
      %8716 = vmatmul.f32.gmra.mxu0 %v8715
      %v8717 = vpop.f32.mrf.mxu0
      %v8718 = vadd.f32 %v7669, %v8717
      %v8719 = vand.u32 %v737, 4294901760
      %8720 = vmatmul.f32.gmra.mxu0 %v8719
      %v8721 = vpop.f32.mrf.mxu0
      %v8722 = vadd.f32 %v7673, %v8721
      %v8723 = vand.u32 %v740, 4294901760
      %8724 = vmatmul.f32.gmra.mxu0 %v8723
      %v8725 = vpop.f32.mrf.mxu0
      %v8726 = vadd.f32 %v7677, %v8725
      %v8727 = vand.u32 %v743, 4294901760
      %8728 = vmatmul.f32.gmra.mxu0 %v8727
      %v8729 = vpop.f32.mrf.mxu0
      %v8730 = vadd.f32 %v7681, %v8729
      %v8731 = vand.u32 %v746, 4294901760
      %8732 = vmatmul.f32.gmra.mxu0 %v8731
      %v8733 = vpop.f32.mrf.mxu0
      %v8734 = vadd.f32 %v7685, %v8733
      %v8735 = vand.u32 %v749, 4294901760
      %8736 = vmatmul.f32.gmra.mxu0 %v8735
      %v8737 = vpop.f32.mrf.mxu0
      %v8738 = vadd.f32 %v7689, %v8737
      %v8739 = vand.u32 %v752, 4294901760
      %8740 = vmatmul.f32.gmra.mxu0 %v8739
      %v8741 = vpop.f32.mrf.mxu0
      %v8742 = vadd.f32 %v7693, %v8741
      %v8743 = vand.u32 %v755, 4294901760
      %8744 = vmatmul.f32.gmra.mxu0 %v8743
      %v8745 = vpop.f32.mrf.mxu0
      %v8746 = vadd.f32 %v7697, %v8745
      %v8747 = vand.u32 %v758, 4294901760
      %8748 = vmatmul.f32.gmra.mxu0 %v8747
      %v8749 = vpop.f32.mrf.mxu0
      %v8750 = vadd.f32 %v7701, %v8749
      %v8751 = vand.u32 %v761, 4294901760
      %8752 = vmatmul.f32.gmra.mxu0 %v8751
      %v8753 = vpop.f32.mrf.mxu0
      %v8754 = vadd.f32 %v7705, %v8753
      %v8755 = vand.u32 %v764, 4294901760
      %8756 = vmatmul.f32.gmra.mxu0 %v8755
      %v8757 = vpop.f32.mrf.mxu0
      %v8758 = vadd.f32 %v7709, %v8757
      %v8759 = vand.u32 %v767, 4294901760
      %8760 = vmatmul.f32.gmra.mxu0 %v8759
      %v8761 = vpop.f32.mrf.mxu0
      %v8762 = vadd.f32 %v7713, %v8761
      %v8763 = vand.u32 %v770, 4294901760
      %8764 = vmatmul.f32.gmra.mxu0 %v8763
      %v8765 = vpop.f32.mrf.mxu0
      %v8766 = vadd.f32 %v7717, %v8765
      %v8767 = vand.u32 %v773, 4294901760
      %8768 = vmatmul.f32.gmra.mxu0 %v8767
      %v8769 = vpop.f32.mrf.mxu0
      %v8770 = vadd.f32 %v7721, %v8769
      %v8771 = vand.u32 %v776, 4294901760
      %8772 = vmatmul.f32.gmra.mxu0 %v8771
      %v8773 = vpop.f32.mrf.mxu0
      %v8774 = vadd.f32 %v7725, %v8773
      %v8775 = vand.u32 %v779, 4294901760
      %8776 = vmatmul.f32.gmra.mxu0 %v8775
      %v8777 = vpop.f32.mrf.mxu0
      %v8778 = vadd.f32 %v7729, %v8777
      %v8779 = vand.u32 %v782, 4294901760
      %8780 = vmatmul.f32.gmra.mxu0 %v8779
      %v8781 = vpop.f32.mrf.mxu0
      %v8782 = vadd.f32 %v7733, %v8781
      %v8783 = vand.u32 %v785, 4294901760
      %8784 = vmatmul.f32.gmra.mxu0 %v8783
      %v8785 = vpop.f32.mrf.mxu0
      %v8786 = vadd.f32 %v7737, %v8785
      %v8787 = vand.u32 %v788, 4294901760
      %8788 = vmatmul.f32.gmra.mxu0 %v8787
      %v8789 = vpop.f32.mrf.mxu0
      %v8790 = vadd.f32 %v7741, %v8789
      %v8791 = vand.u32 %v791, 4294901760
      %8792 = vmatmul.f32.gmra.mxu0 %v8791
      %v8793 = vpop.f32.mrf.mxu0
      %v8794 = vadd.f32 %v7745, %v8793
      %v8795 = vand.u32 %v794, 4294901760
      %8796 = vmatmul.f32.gmra.mxu0 %v8795
      %v8797 = vpop.f32.mrf.mxu0
      %v8798 = vadd.f32 %v7749, %v8797
      %v8799 = vand.u32 %v797, 4294901760
      %8800 = vmatmul.f32.gmra.mxu0 %v8799
      %v8801 = vpop.f32.mrf.mxu0
      %v8802 = vadd.f32 %v7753, %v8801
      %v8803 = vand.u32 %v800, 4294901760
      %8804 = vmatmul.f32.gmra.mxu0 %v8803
      %v8805 = vpop.f32.mrf.mxu0
      %v8806 = vadd.f32 %v7757, %v8805
      %v8807 = vand.u32 %v803, 4294901760
      %8808 = vmatmul.f32.gmra.mxu0 %v8807
      %v8809 = vpop.f32.mrf.mxu0
      %v8810 = vadd.f32 %v7761, %v8809
      %v8811 = vand.u32 %v806, 4294901760
      %8812 = vmatmul.f32.gmra.mxu0 %v8811
      %v8813 = vpop.f32.mrf.mxu0
      %v8814 = vadd.f32 %v7765, %v8813
      %v8815 = vand.u32 %v809, 4294901760
      %8816 = vmatmul.f32.gmra.mxu0 %v8815
      %v8817 = vpop.f32.mrf.mxu0
      %v8818 = vadd.f32 %v7769, %v8817
      %v8819 = vand.u32 %v812, 4294901760
      %8820 = vmatmul.f32.gmra.mxu0 %v8819
      %v8821 = vpop.f32.mrf.mxu0
      %v8822 = vadd.f32 %v7773, %v8821
      %v8823 = vand.u32 %v815, 4294901760
      %8824 = vmatmul.f32.gmra.mxu0 %v8823
      %v8825 = vpop.f32.mrf.mxu0
      %v8826 = vadd.f32 %v7777, %v8825
      %v8827 = vand.u32 %v818, 4294901760
      %8828 = vmatmul.f32.gmra.mxu0 %v8827
      %v8829 = vpop.f32.mrf.mxu0
      %v8830 = vadd.f32 %v7781, %v8829
      %v8831 = vand.u32 %v821, 4294901760
      %8832 = vmatmul.f32.gmra.mxu0 %v8831
      %v8833 = vpop.f32.mrf.mxu0
      %v8834 = vadd.f32 %v7785, %v8833
      %v8835 = vand.u32 %v824, 4294901760
      %8836 = vmatmul.f32.gmra.mxu0 %v8835
      %v8837 = vpop.f32.mrf.mxu0
      %v8838 = vadd.f32 %v7789, %v8837
      %v8839 = vand.u32 %v827, 4294901760
      %8840 = vmatmul.f32.gmra.mxu0 %v8839
      %v8841 = vpop.f32.mrf.mxu0
      %v8842 = vadd.f32 %v7793, %v8841
      %v8843 = vand.u32 %v830, 4294901760
      %8844 = vmatmul.f32.gmra.mxu0 %v8843
      %v8845 = vpop.f32.mrf.mxu0
      %v8846 = vadd.f32 %v7797, %v8845
      %v8847 = vand.u32 %v833, 4294901760
      %8848 = vmatmul.f32.gmra.mxu0 %v8847
      %v8849 = vpop.f32.mrf.mxu0
      %v8850 = vadd.f32 %v7801, %v8849
      %v8851 = vand.u32 %v836, 4294901760
      %8852 = vmatmul.f32.gmra.mxu0 %v8851
      %v8853 = vpop.f32.mrf.mxu0
      %v8854 = vadd.f32 %v7805, %v8853
      %v8855 = vand.u32 %v839, 4294901760
      %8856 = vmatmul.f32.gmra.mxu0 %v8855
      %v8857 = vpop.f32.mrf.mxu0
      %v8858 = vadd.f32 %v7809, %v8857
      %v8859 = vand.u32 %v842, 4294901760
      %8860 = vmatmul.f32.gmra.mxu0 %v8859
      %v8861 = vpop.f32.mrf.mxu0
      %v8862 = vadd.f32 %v7813, %v8861
      %v8863 = vand.u32 %v845, 4294901760
      %8864 = vmatmul.f32.gmra.mxu0 %v8863
      %v8865 = vpop.f32.mrf.mxu0
      %v8866 = vadd.f32 %v7817, %v8865
      %v8867 = vand.u32 %v848, 4294901760
      %8868 = vmatmul.f32.gmra.mxu0 %v8867
      %v8869 = vpop.f32.mrf.mxu0
      %v8870 = vadd.f32 %v7821, %v8869
      %v8871 = vand.u32 %v851, 4294901760
      %8872 = vmatmul.f32.gmra.mxu0 %v8871
      %v8873 = vpop.f32.mrf.mxu0
      %v8874 = vadd.f32 %v7825, %v8873
      %v8875 = vand.u32 %v854, 4294901760
      %8876 = vmatmul.f32.gmra.mxu0 %v8875
      %v8877 = vpop.f32.mrf.mxu0
      %v8878 = vadd.f32 %v7829, %v8877
      %v8879 = vand.u32 %v857, 4294901760
      %8880 = vmatmul.f32.gmra.mxu0 %v8879
      %v8881 = vpop.f32.mrf.mxu0
      %v8882 = vadd.f32 %v7833, %v8881
      %v8883 = vand.u32 %v860, 4294901760
      %8884 = vmatmul.f32.gmra.mxu0 %v8883
      %v8885 = vpop.f32.mrf.mxu0
      %v8886 = vadd.f32 %v7837, %v8885
      %v8887 = vand.u32 %v863, 4294901760
      %8888 = vmatmul.f32.gmra.mxu0 %v8887
      %v8889 = vpop.f32.mrf.mxu0
      %v8890 = vadd.f32 %v7841, %v8889
      %v8891 = vand.u32 %v866, 4294901760
      %8892 = vmatmul.f32.gmra.mxu0 %v8891
      %v8893 = vpop.f32.mrf.mxu0
      %v8894 = vadd.f32 %v7845, %v8893
      %v8895 = vand.u32 %v869, 4294901760
      %8896 = vmatmul.f32.gmra.mxu0 %v8895
      %v8897 = vpop.f32.mrf.mxu0
      %v8898 = vadd.f32 %v7849, %v8897
      %v8899 = vand.u32 %v872, 4294901760
      %8900 = vmatmul.f32.gmra.mxu0 %v8899
      %v8901 = vpop.f32.mrf.mxu0
      %v8902 = vadd.f32 %v7853, %v8901
      %v8903 = vand.u32 %v875, 4294901760
      %8904 = vmatmul.f32.gmra.mxu0 %v8903
      %v8905 = vpop.f32.mrf.mxu0
      %v8906 = vadd.f32 %v7857, %v8905
      %v8907 = vand.u32 %v878, 4294901760
      %8908 = vmatmul.f32.gmra.mxu0 %v8907
      %v8909 = vpop.f32.mrf.mxu0
      %v8910 = vadd.f32 %v7861, %v8909
      %v8911 = vand.u32 %v881, 4294901760
      %8912 = vmatmul.f32.gmra.mxu0 %v8911
      %v8913 = vpop.f32.mrf.mxu0
      %v8914 = vadd.f32 %v7865, %v8913
      %v8915 = vand.u32 %v884, 4294901760
      %8916 = vmatmul.f32.gmra.mxu0 %v8915
      %v8917 = vpop.f32.mrf.mxu0
      %v8918 = vadd.f32 %v7869, %v8917
      %v8919 = vand.u32 %v887, 4294901760
      %8920 = vmatmul.f32.gmra.mxu0 %v8919
      %v8921 = vpop.f32.mrf.mxu0
      %v8922 = vadd.f32 %v7873, %v8921
      %v8923 = vand.u32 %v890, 4294901760
      %8924 = vmatmul.f32.gmra.mxu0 %v8923
      %v8925 = vpop.f32.mrf.mxu0
      %v8926 = vadd.f32 %v7877, %v8925
      %v8927 = vand.u32 %v893, 4294901760
      %8928 = vmatmul.f32.gmra.mxu0 %v8927
      %v8929 = vpop.f32.mrf.mxu0
      %v8930 = vadd.f32 %v7881, %v8929
      %v8931 = vand.u32 %v896, 4294901760
      %8932 = vmatmul.f32.gmra.mxu0 %v8931
      %v8933 = vpop.f32.mrf.mxu0
      %v8934 = vadd.f32 %v7885, %v8933
      %v8935 = vand.u32 %v899, 4294901760
      %8936 = vmatmul.f32.gmra.mxu0 %v8935
      %v8937 = vpop.f32.mrf.mxu0
      %v8938 = vadd.f32 %v7889, %v8937
      %v8939 = vand.u32 %v902, 4294901760
      %8940 = vmatmul.f32.gmra.mxu0 %v8939
      %v8941 = vpop.f32.mrf.mxu0
      %v8942 = vadd.f32 %v7893, %v8941
      %v8943 = vand.u32 %v905, 4294901760
      %8944 = vmatmul.f32.gmra.mxu0 %v8943
      %v8945 = vpop.f32.mrf.mxu0
      %v8946 = vadd.f32 %v7897, %v8945
      %v8947 = vand.u32 %v908, 4294901760
      %8948 = vmatmul.f32.gmra.mxu0 %v8947
      %v8949 = vpop.f32.mrf.mxu0
      %v8950 = vadd.f32 %v7901, %v8949
      %v8951 = vand.u32 %v911, 4294901760
      %8952 = vmatmul.f32.gmra.mxu0 %v8951
      %v8953 = vpop.f32.mrf.mxu0
      %v8954 = vadd.f32 %v7905, %v8953
      %v8955 = vand.u32 %v914, 4294901760
      %8956 = vmatmul.f32.gmra.mxu0 %v8955
      %v8957 = vpop.f32.mrf.mxu0
      %v8958 = vadd.f32 %v7909, %v8957
      %v8959 = vand.u32 %v917, 4294901760
      %8960 = vmatmul.f32.gmra.mxu0 %v8959
      %v8961 = vpop.f32.mrf.mxu0
      %v8962 = vadd.f32 %v7913, %v8961
      %v8963 = vand.u32 %v920, 4294901760
      %8964 = vmatmul.f32.gmra.mxu0 %v8963
      %v8965 = vpop.f32.mrf.mxu0
      %v8966 = vadd.f32 %v7917, %v8965
      %v8967 = vand.u32 %v923, 4294901760
      %8968 = vmatmul.f32.gmra.mxu0 %v8967
      %v8969 = vpop.f32.mrf.mxu0
      %v8970 = vadd.f32 %v7921, %v8969
      %v8971 = vand.u32 %v926, 4294901760
      %8972 = vmatmul.f32.gmra.mxu0 %v8971
      %v8973 = vpop.f32.mrf.mxu0
      %v8974 = vadd.f32 %v7925, %v8973
      %v8975 = vand.u32 %v929, 4294901760
      %8976 = vmatmul.f32.gmra.mxu0 %v8975
      %v8977 = vpop.f32.mrf.mxu0
      %v8978 = vadd.f32 %v7929, %v8977
      %v8979 = vand.u32 %v932, 4294901760
      %8980 = vmatmul.f32.gmra.mxu0 %v8979
      %v8981 = vpop.f32.mrf.mxu0
      %v8982 = vadd.f32 %v7933, %v8981
      %v8983 = vand.u32 %v935, 4294901760
      %8984 = vmatmul.f32.gmra.mxu0 %v8983
      %v8985 = vpop.f32.mrf.mxu0
      %v8986 = vadd.f32 %v7937, %v8985
      %v8987 = vand.u32 %v938, 4294901760
      %8988 = vmatmul.f32.gmra.mxu0 %v8987
      %v8989 = vpop.f32.mrf.mxu0
      %v8990 = vadd.f32 %v7941, %v8989
      %v8991 = vand.u32 %v941, 4294901760
      %8992 = vmatmul.f32.gmra.mxu0 %v8991
      %v8993 = vpop.f32.mrf.mxu0
      %v8994 = vadd.f32 %v7945, %v8993
      %v8995 = vand.u32 %v944, 4294901760
      %8996 = vmatmul.f32.gmra.mxu0 %v8995
      %v8997 = vpop.f32.mrf.mxu0
      %v8998 = vadd.f32 %v7949, %v8997
      %v8999 = vand.u32 %v947, 4294901760
      %9000 = vmatmul.f32.gmra.mxu0 %v8999
      %v9001 = vpop.f32.mrf.mxu0
      %v9002 = vadd.f32 %v7953, %v9001
      %v9003 = vand.u32 %v950, 4294901760
      %9004 = vmatmul.f32.gmra.mxu0 %v9003
      %v9005 = vpop.f32.mrf.mxu0
      %v9006 = vadd.f32 %v7957, %v9005
      %v9007 = vand.u32 %v953, 4294901760
      %9008 = vmatmul.f32.gmra.mxu0 %v9007
      %v9009 = vpop.f32.mrf.mxu0
      %v9010 = vadd.f32 %v7961, %v9009
      %v9011 = vand.u32 %v956, 4294901760
      %9012 = vmatmul.f32.gmra.mxu0 %v9011
      %v9013 = vpop.f32.mrf.mxu0
      %v9014 = vadd.f32 %v7965, %v9013
      %v9015 = vand.u32 %v959, 4294901760
      %9016 = vmatmul.f32.gmra.mxu0 %v9015
      %v9017 = vpop.f32.mrf.mxu0
      %v9018 = vadd.f32 %v7969, %v9017
      %v9019 = vand.u32 %v962, 4294901760
      %9020 = vmatmul.f32.gmra.mxu0 %v9019
      %v9021 = vpop.f32.mrf.mxu0
      %v9022 = vadd.f32 %v7973, %v9021
      %v9023 = vand.u32 %v965, 4294901760
      %9024 = vmatmul.f32.gmra.mxu0 %v9023
      %v9025 = vpop.f32.mrf.mxu0
      %v9026 = vadd.f32 %v7977, %v9025
      %v9027 = vand.u32 %v968, 4294901760
      %9028 = vmatmul.f32.gmra.mxu0 %v9027
      %v9029 = vpop.f32.mrf.mxu0
      %v9030 = vadd.f32 %v7981, %v9029
      %v9031 = vand.u32 %v971, 4294901760
      %9032 = vmatmul.f32.gmra.mxu0 %v9031
      %v9033 = vpop.f32.mrf.mxu0
      %v9034 = vadd.f32 %v7985, %v9033
      %v9035 = vand.u32 %v974, 4294901760
      %9036 = vmatmul.f32.gmra.mxu0 %v9035
      %v9037 = vpop.f32.mrf.mxu0
      %v9038 = vadd.f32 %v7989, %v9037
      %v9039 = vand.u32 %v977, 4294901760
      %9040 = vmatmul.f32.gmra.mxu0 %v9039
      %v9041 = vpop.f32.mrf.mxu0
      %v9042 = vadd.f32 %v7993, %v9041
      %v9043 = vand.u32 %v980, 4294901760
      %9044 = vmatmul.f32.gmra.mxu0 %v9043
      %v9045 = vpop.f32.mrf.mxu0
      %v9046 = vadd.f32 %v7997, %v9045
      %v9047 = vand.u32 %v983, 4294901760
      %9048 = vmatmul.f32.gmra.mxu0 %v9047
      %v9049 = vpop.f32.mrf.mxu0
      %v9050 = vadd.f32 %v8001, %v9049
      %v9051 = vand.u32 %v986, 4294901760
      %9052 = vmatmul.f32.gmra.mxu0 %v9051
      %v9053 = vpop.f32.mrf.mxu0
      %v9054 = vadd.f32 %v8005, %v9053
      %v9055 = vand.u32 %v989, 4294901760
      %9056 = vmatmul.f32.gmra.mxu0 %v9055
      %v9057 = vpop.f32.mrf.mxu0
      %v9058 = vadd.f32 %v8009, %v9057
      %v9059 = vand.u32 %v992, 4294901760
      %9060 = vmatmul.f32.gmra.mxu0 %v9059
      %v9061 = vpop.f32.mrf.mxu0
      %v9062 = vadd.f32 %v8013, %v9061
      %v9063 = vand.u32 %v995, 4294901760
      %9064 = vmatmul.f32.gmra.mxu0 %v9063
      %v9065 = vpop.f32.mrf.mxu0
      %v9066 = vadd.f32 %v8017, %v9065
      %v9067 = vand.u32 %v998, 4294901760
      %9068 = vmatmul.f32.gmra.mxu0 %v9067
      %v9069 = vpop.f32.mrf.mxu0
      %v9070 = vadd.f32 %v8021, %v9069
      %v9071 = vand.u32 %v1001, 4294901760
      %9072 = vmatmul.f32.gmra.mxu0 %v9071
      %v9073 = vpop.f32.mrf.mxu0
      %v9074 = vadd.f32 %v8025, %v9073
      %v9075 = vand.u32 %v1004, 4294901760
      %9076 = vmatmul.f32.gmra.mxu0 %v9075
      %v9077 = vpop.f32.mrf.mxu0
      %v9078 = vadd.f32 %v8029, %v9077
      %v9079 = vand.u32 %v1007, 4294901760
      %9080 = vmatmul.f32.gmra.mxu0 %v9079
      %v9081 = vpop.f32.mrf.mxu0
      %v9082 = vadd.f32 %v8033, %v9081
      %v9083 = vand.u32 %v1010, 4294901760
      %9084 = vmatmul.f32.gmra.mxu0 %v9083
      %v9085 = vpop.f32.mrf.mxu0
      %v9086 = vadd.f32 %v8037, %v9085
      %v9087 = vand.u32 %v1013, 4294901760
      %9088 = vmatmul.f32.gmra.mxu0 %v9087
      %v9089 = vpop.f32.mrf.mxu0
      %v9090 = vadd.f32 %v8041, %v9089
      %v9091 = vand.u32 %v1016, 4294901760
      %9092 = vmatmul.f32.gmra.mxu0 %v9091
      %v9093 = vpop.f32.mrf.mxu0
      %v9094 = vadd.f32 %v8045, %v9093
      %v9095 = vand.u32 %v1019, 4294901760
      %9096 = vmatmul.f32.gmra.mxu0 %v9095
      %v9097 = vpop.f32.mrf.mxu0
      %v9098 = vadd.f32 %v8049, %v9097
      %v9099 = vand.u32 %v1022, 4294901760
      %9100 = vmatmul.f32.gmra.mxu0 %v9099
      %v9101 = vpop.f32.mrf.mxu0
      %v9102 = vadd.f32 %v8053, %v9101
      %v9103 = vand.u32 %v1025, 4294901760
      %9104 = vmatmul.f32.gmra.mxu0 %v9103
      %v9105 = vpop.f32.mrf.mxu0
      %v9106 = vadd.f32 %v8057, %v9105
      %v9107 = vand.u32 %v1028, 4294901760
      %9108 = vmatmul.f32.gmra.mxu0 %v9107
      %v9109 = vpop.f32.mrf.mxu0
      %v9110 = vadd.f32 %v8061, %v9109
      %v9111 = vand.u32 %v1031, 4294901760
      %9112 = vmatmul.f32.gmra.mxu0 %v9111
      %v9113 = vpop.f32.mrf.mxu0
      %v9114 = vadd.f32 %v8065, %v9113
      %v9115 = vand.u32 %v1034, 4294901760
      %9116 = vmatmul.f32.gmra.mxu0 %v9115
      %v9117 = vpop.f32.mrf.mxu0
      %v9118 = vadd.f32 %v8069, %v9117
      %v9119 = vand.u32 %v1037, 4294901760
      %9120 = vmatmul.f32.gmra.mxu0 %v9119
      %v9121 = vpop.f32.mrf.mxu0
      %v9122 = vadd.f32 %v8073, %v9121
      %v9123 = vand.u32 %v1040, 4294901760
      %9124 = vmatmul.f32.gmra.mxu0 %v9123
      %v9125 = vpop.f32.mrf.mxu0
      %v9126 = vadd.f32 %v8077, %v9125
      %v9127 = vand.u32 %v1043, 4294901760
      %9128 = vmatmul.f32.gmra.mxu0 %v9127
      %v9129 = vpop.f32.mrf.mxu0
      %v9130 = vadd.f32 %v8081, %v9129
      %v9131 = vand.u32 %v1046, 4294901760
      %9132 = vmatmul.f32.gmra.mxu0 %v9131
      %v9133 = vpop.f32.mrf.mxu0
      %v9134 = vadd.f32 %v8085, %v9133
      %v9135 = vand.u32 %v1049, 4294901760
      %9136 = vmatmul.f32.gmra.mxu0 %v9135
      %v9137 = vpop.f32.mrf.mxu0
      %v9138 = vadd.f32 %v8089, %v9137
      %v9139 = vand.u32 %v1052, 4294901760
      %9140 = vmatmul.f32.gmra.mxu0 %v9139
      %v9141 = vpop.f32.mrf.mxu0
      %v9142 = vadd.f32 %v8093, %v9141
      %v9143 = vand.u32 %v1055, 4294901760
      %9144 = vmatmul.f32.gmra.mxu0 %v9143
      %v9145 = vpop.f32.mrf.mxu0
      %v9146 = vadd.f32 %v8097, %v9145
      %v9147 = vand.u32 %v1058, 4294901760
      %9148 = vmatmul.f32.gmra.mxu0 %v9147
      %v9149 = vpop.f32.mrf.mxu0
      %v9150 = vadd.f32 %v8101, %v9149
      %v9151 = vand.u32 %v1061, 4294901760
      %9152 = vmatmul.f32.gmra.mxu0 %v9151
      %v9153 = vpop.f32.mrf.mxu0
      %v9154 = vadd.f32 %v8105, %v9153
      %v9155 = vand.u32 %v1064, 4294901760
      %9156 = vmatmul.f32.gmra.mxu0 %v9155
      %v9157 = vpop.f32.mrf.mxu0
      %v9158 = vadd.f32 %v8109, %v9157
      %v9159 = vand.u32 %v1067, 4294901760
      %9160 = vmatmul.f32.gmra.mxu0 %v9159
      %v9161 = vpop.f32.mrf.mxu0
      %v9162 = vadd.f32 %v8113, %v9161
      %v9163 = vand.u32 %v1070, 4294901760
      %9164 = vmatmul.f32.gmra.mxu0 %v9163
      %v9165 = vpop.f32.mrf.mxu0
      %v9166 = vadd.f32 %v8117, %v9165
      %v9167 = vand.u32 %v1073, 4294901760
      %9168 = vmatmul.f32.gmra.mxu0 %v9167
      %v9169 = vpop.f32.mrf.mxu0
      %v9170 = vadd.f32 %v8121, %v9169
      %v9171 = vand.u32 %v1076, 4294901760
      %9172 = vmatmul.f32.gmra.mxu0 %v9171
      %v9173 = vpop.f32.mrf.mxu0
      %v9174 = vadd.f32 %v8125, %v9173
      %v9175 = vand.u32 %v1079, 4294901760
      %9176 = vmatmul.f32.gmra.mxu0 %v9175
      %v9177 = vpop.f32.mrf.mxu0
      %v9178 = vadd.f32 %v8129, %v9177
      %v9179 = vand.u32 %v1082, 4294901760
      %9180 = vmatmul.f32.gmra.mxu0 %v9179
      %v9181 = vpop.f32.mrf.mxu0
      %v9182 = vadd.f32 %v8133, %v9181
      %v9183 = vand.u32 %v1085, 4294901760
      %9184 = vmatmul.f32.gmra.mxu0 %v9183
      %v9185 = vpop.f32.mrf.mxu0
      %v9186 = vadd.f32 %v8137, %v9185
      %v9187 = vand.u32 %v1088, 4294901760
      %9188 = vmatmul.f32.gmra.mxu0 %v9187
      %v9189 = vpop.f32.mrf.mxu0
      %v9190 = vadd.f32 %v8141, %v9189
      %v9191 = vand.u32 %v1091, 4294901760
      %9192 = vmatmul.f32.gmra.mxu0 %v9191
      %v9193 = vpop.f32.mrf.mxu0
      %v9194 = vadd.f32 %v8145, %v9193
      %v9195 = vand.u32 %v1094, 4294901760
      %9196 = vmatmul.f32.gmra.mxu0 %v9195
      %v9197 = vpop.f32.mrf.mxu0
      %v9198 = vadd.f32 %v8149, %v9197
      %v9199 = vand.u32 %v1097, 4294901760
      %9200 = vmatmul.f32.gmra.mxu0 %v9199
      %v9201 = vpop.f32.mrf.mxu0
      %v9202 = vadd.f32 %v8153, %v9201
      %v9203 = vand.u32 %v1100, 4294901760
      %9204 = vmatmul.f32.gmra.mxu0 %v9203
      %v9205 = vpop.f32.mrf.mxu0
      %v9206 = vadd.f32 %v8157, %v9205
      %v9207 = vand.u32 %v1103, 4294901760
      %9208 = vmatmul.f32.gmra.mxu0 %v9207
      %v9209 = vpop.f32.mrf.mxu0
      %v9210 = vadd.f32 %v8161, %v9209
      %v9211 = vand.u32 %v1106, 4294901760
      %9212 = vmatmul.f32.gmra.mxu0 %v9211
      %v9213 = vpop.f32.mrf.mxu0
      %v9214 = vadd.f32 %v8165, %v9213
      %v9215 = vand.u32 %v1109, 4294901760
      %9216 = vmatmul.f32.gmra.mxu0 %v9215
      %v9217 = vpop.f32.mrf.mxu0
      %v9218 = vadd.f32 %v8169, %v9217
      %v9219 = vand.u32 %v1112, 4294901760
      %9220 = vmatmul.f32.gmra.mxu0 %v9219
      %v9221 = vpop.f32.mrf.mxu0
      %v9222 = vadd.f32 %v8173, %v9221
      %v9223 = vand.u32 %v1115, 4294901760
      %9224 = vmatmul.f32.gmra.mxu0 %v9223
      %v9225 = vpop.f32.mrf.mxu0
      %v9226 = vadd.f32 %v8177, %v9225
      %v9227 = vand.u32 %v1118, 4294901760
      %9228 = vmatmul.f32.gmra.mxu0 %v9227
      %v9229 = vpop.f32.mrf.mxu0
      %v9230 = vadd.f32 %v8181, %v9229
      %v9231 = vand.u32 %v1121, 4294901760
      %9232 = vmatmul.f32.gmra.mxu0 %v9231
      %v9233 = vpop.f32.mrf.mxu0
      %v9234 = vadd.f32 %v8185, %v9233
      %v9235 = vand.u32 %v1124, 4294901760
      %9236 = vmatmul.f32.gmra.mxu0 %v9235
      %v9237 = vpop.f32.mrf.mxu0
      %v9238 = vadd.f32 %v8189, %v9237
      %v9239 = vand.u32 %v1127, 4294901760
      %9240 = vmatmul.f32.gmra.mxu0 %v9239
      %v9241 = vpop.f32.mrf.mxu0
      %v9242 = vadd.f32 %v8193, %v9241
      %v9243 = vand.u32 %v1130, 4294901760
      %9244 = vmatmul.f32.gmra.mxu0 %v9243
      %v9245 = vpop.f32.mrf.mxu0
      %v9246 = vadd.f32 %v8197, %v9245
      %v9247 = vand.u32 %v1133, 4294901760
      %9248 = vmatmul.f32.gmra.mxu0 %v9247
      %v9249 = vpop.f32.mrf.mxu0
      %v9250 = vadd.f32 %v8201, %v9249
      %v9251 = vand.u32 %v1136, 4294901760
      %9252 = vmatmul.f32.gmra.mxu0 %v9251
      %v9253 = vpop.f32.mrf.mxu0
      %v9254 = vadd.f32 %v8205, %v9253
      %v9255 = vand.u32 %v1139, 4294901760
      %9256 = vmatmul.f32.gmra.mxu0 %v9255
      %v9257 = vpop.f32.mrf.mxu0
      %v9258 = vadd.f32 %v8209, %v9257
      %v9259 = vand.u32 %v1142, 4294901760
      %9260 = vmatmul.f32.gmra.mxu0 %v9259
      %v9261 = vpop.f32.mrf.mxu0
      %v9262 = vadd.f32 %v8213, %v9261
      %v9263 = vand.u32 %v1145, 4294901760
      %9264 = vmatmul.f32.gmra.mxu0 %v9263
      %v9265 = vpop.f32.mrf.mxu0
      %v9266 = vadd.f32 %v8217, %v9265
      %v9267 = vand.u32 %v1148, 4294901760
      %9268 = vmatmul.f32.gmra.mxu0 %v9267
      %v9269 = vpop.f32.mrf.mxu0
      %v9270 = vadd.f32 %v8221, %v9269
      %v9271 = vand.u32 %v1151, 4294901760
      %9272 = vmatmul.f32.gmra.mxu0 %v9271
      %v9273 = vpop.f32.mrf.mxu0
      %v9274 = vadd.f32 %v8225, %v9273
      %v9275 = vand.u32 %v1154, 4294901760
      %9276 = vmatmul.f32.gmra.mxu0 %v9275
      %v9277 = vpop.f32.mrf.mxu0
      %v9278 = vadd.f32 %v8229, %v9277
      %v9279 = vand.u32 %v1157, 4294901760
      %9280 = vmatmul.f32.gmra.mxu0 %v9279
      %v9281 = vpop.f32.mrf.mxu0
      %v9282 = vadd.f32 %v8233, %v9281
      %v9283 = vand.u32 %v1160, 4294901760
      %9284 = vmatmul.f32.gmra.mxu0 %v9283
      %v9285 = vpop.f32.mrf.mxu0
      %v9286 = vadd.f32 %v8237, %v9285
      %v9287 = vand.u32 %v1163, 4294901760
      %9288 = vmatmul.f32.gmra.mxu0 %v9287
      %v9289 = vpop.f32.mrf.mxu0
      %v9290 = vadd.f32 %v8241, %v9289
      %v9291 = vand.u32 %v1166, 4294901760
      %9292 = vmatmul.f32.gmra.mxu0 %v9291
      %v9293 = vpop.f32.mrf.mxu0
      %v9294 = vadd.f32 %v8245, %v9293
      %v9295 = vand.u32 %v1169, 4294901760
      %9296 = vmatmul.f32.gmra.mxu0 %v9295
      %v9297 = vpop.f32.mrf.mxu0
      %v9298 = vadd.f32 %v8249, %v9297
      %v9299 = vand.u32 %v1172, 4294901760
      %9300 = vmatmul.f32.gmra.mxu0 %v9299
      %v9301 = vpop.f32.mrf.mxu0
      %v9302 = vadd.f32 %v8253, %v9301
      %v9303 = vand.u32 %v1175, 4294901760
      %9304 = vmatmul.f32.gmra.mxu0 %v9303
      %v9305 = vpop.f32.mrf.mxu0
      %v9306 = vadd.f32 %v8257, %v9305
      %v9307 = vand.u32 %v1178, 4294901760
      %9308 = vmatmul.f32.gmra.mxu0 %v9307
      %v9309 = vpop.f32.mrf.mxu0
      %v9310 = vadd.f32 %v8261, %v9309
      %v9311 = vand.u32 %v1181, 4294901760
      %9312 = vmatmul.f32.gmra.mxu0 %v9311
      %v9313 = vpop.f32.mrf.mxu0
      %v9314 = vadd.f32 %v8265, %v9313
      %v9315 = vand.u32 %v1184, 4294901760
      %9316 = vmatmul.f32.gmra.mxu0 %v9315
      %v9317 = vpop.f32.mrf.mxu0
      %v9318 = vadd.f32 %v8269, %v9317
      %v9319 = vand.u32 %v1187, 4294901760
      %9320 = vmatmul.f32.gmra.mxu0 %v9319
      %v9321 = vpop.f32.mrf.mxu0
      %v9322 = vadd.f32 %v8273, %v9321
      %v9323 = vand.u32 %v1190, 4294901760
      %9324 = vmatmul.f32.gmra.mxu0 %v9323
      %v9325 = vpop.f32.mrf.mxu0
      %v9326 = vadd.f32 %v8277, %v9325
      %v9327 = vand.u32 %v1193, 4294901760
      %9328 = vmatmul.f32.gmra.mxu0 %v9327
      %v9329 = vpop.f32.mrf.mxu0
      %v9330 = vadd.f32 %v8281, %v9329
      %v9331 = vand.u32 %v1196, 4294901760
      %9332 = vmatmul.f32.gmra.mxu0 %v9331
      %v9333 = vpop.f32.mrf.mxu0
      %v9334 = vadd.f32 %v8285, %v9333
      %v9335 = vand.u32 %v1199, 4294901760
      %9336 = vmatmul.f32.gmra.mxu0 %v9335
      %v9337 = vpop.f32.mrf.mxu0
      %v9338 = vadd.f32 %v8289, %v9337
      %v9339 = vand.u32 %v1202, 4294901760
      %9340 = vmatmul.f32.gmra.mxu0 %v9339
      %v9341 = vpop.f32.mrf.mxu0
      %v9342 = vadd.f32 %v8293, %v9341
      %v9343 = vand.u32 %v1205, 4294901760
      %9344 = vmatmul.f32.gmra.mxu0 %v9343
      %v9345 = vpop.f32.mrf.mxu0
      %v9346 = vadd.f32 %v8297, %v9345
      %v9347 = vand.u32 %v1208, 4294901760
      %9348 = vmatmul.f32.gmra.mxu0 %v9347
      %v9349 = vpop.f32.mrf.mxu0
      %v9350 = vadd.f32 %v8301, %v9349
      %9351 = vdwg.mxu0
      %v9352 = vadd.f32 %v8330, 3.0
      %v9353 = vadd.f32 %v8334, 3.0
      %v9354 = vadd.f32 %v8338, 3.0
      %v9355 = vadd.f32 %v8342, 3.0
      %v9356 = vadd.f32 %v8346, 3.0
      %v9357 = vadd.f32 %v8350, 3.0
      %v9358 = vadd.f32 %v8354, 3.0
      %v9359 = vadd.f32 %v8358, 3.0
      %v9360 = vadd.f32 %v8362, 3.0
      %v9361 = vadd.f32 %v8366, 3.0
      %v9362 = vadd.f32 %v8370, 3.0
      %v9363 = vadd.f32 %v8374, 3.0
      %v9364 = vadd.f32 %v8378, 3.0
      %v9365 = vadd.f32 %v8382, 3.0
      %v9366 = vadd.f32 %v8386, 3.0
      %v9367 = vadd.f32 %v8390, 3.0
      %v9368 = vadd.f32 %v8394, 3.0
      %v9369 = vadd.f32 %v8398, 3.0
      %v9370 = vadd.f32 %v8402, 3.0
      %v9371 = vadd.f32 %v8406, 3.0
      %v9372 = vadd.f32 %v8410, 3.0
      %v9373 = vadd.f32 %v8414, 3.0
      %v9374 = vadd.f32 %v8418, 3.0
      %v9375 = vadd.f32 %v8422, 3.0
      %v9376 = vadd.f32 %v8426, 3.0
      %v9377 = vadd.f32 %v8430, 3.0
      %v9378 = vadd.f32 %v8434, 3.0
      %v9379 = vadd.f32 %v8438, 3.0
      %v9380 = vadd.f32 %v8442, 3.0
      %v9381 = vadd.f32 %v8446, 3.0
      %v9382 = vadd.f32 %v8450, 3.0
      %v9383 = vadd.f32 %v8454, 3.0
      %v9384 = vadd.f32 %v8458, 3.0
      %v9385 = vadd.f32 %v8462, 3.0
      %v9386 = vadd.f32 %v8466, 3.0
      %v9387 = vadd.f32 %v8470, 3.0
      %v9388 = vadd.f32 %v8474, 3.0
      %v9389 = vadd.f32 %v8478, 3.0
      %v9390 = vadd.f32 %v8482, 3.0
      %v9391 = vadd.f32 %v8486, 3.0
      %v9392 = vadd.f32 %v8490, 3.0
      %v9393 = vadd.f32 %v8494, 3.0
      %v9394 = vadd.f32 %v8498, 3.0
      %v9395 = vadd.f32 %v8502, 3.0
      %v9396 = vadd.f32 %v8506, 3.0
      %v9397 = vadd.f32 %v8510, 3.0
      %v9398 = vadd.f32 %v8514, 3.0
      %v9399 = vadd.f32 %v8518, 3.0
      %v9400 = vadd.f32 %v8522, 3.0
      %v9401 = vadd.f32 %v8526, 3.0
      %v9402 = vadd.f32 %v8530, 3.0
      %v9403 = vadd.f32 %v8534, 3.0
      %v9404 = vadd.f32 %v8538, 3.0
      %v9405 = vadd.f32 %v8542, 3.0
      %v9406 = vadd.f32 %v8546, 3.0
      %v9407 = vadd.f32 %v8550, 3.0
      %v9408 = vadd.f32 %v8554, 3.0
      %v9409 = vadd.f32 %v8558, 3.0
      %v9410 = vadd.f32 %v8562, 3.0
      %v9411 = vadd.f32 %v8566, 3.0
      %v9412 = vadd.f32 %v8570, 3.0
      %v9413 = vadd.f32 %v8574, 3.0
      %v9414 = vadd.f32 %v8578, 3.0
      %v9415 = vadd.f32 %v8582, 3.0
      %v9416 = vadd.f32 %v8586, 3.0
      %v9417 = vadd.f32 %v8590, 3.0
      %v9418 = vadd.f32 %v8594, 3.0
      %v9419 = vadd.f32 %v8598, 3.0
      %v9420 = vadd.f32 %v8602, 3.0
      %v9421 = vadd.f32 %v8606, 3.0
      %v9422 = vadd.f32 %v8610, 3.0
      %v9423 = vadd.f32 %v8614, 3.0
      %v9424 = vadd.f32 %v8618, 3.0
      %v9425 = vadd.f32 %v8622, 3.0
      %v9426 = vadd.f32 %v8626, 3.0
      %v9427 = vadd.f32 %v8630, 3.0
      %v9428 = vadd.f32 %v8634, 3.0
      %v9429 = vadd.f32 %v8638, 3.0
      %v9430 = vadd.f32 %v8642, 3.0
      %v9431 = vadd.f32 %v8646, 3.0
      %v9432 = vadd.f32 %v8650, 3.0
      %v9433 = vadd.f32 %v8654, 3.0
      %v9434 = vadd.f32 %v8658, 3.0
      %v9435 = vadd.f32 %v8662, 3.0
      %v9436 = vadd.f32 %v8666, 3.0
      %v9437 = vadd.f32 %v8670, 3.0
      %v9438 = vadd.f32 %v8674, 3.0
      %v9439 = vadd.f32 %v8678, 3.0
      %v9440 = vadd.f32 %v8682, 3.0
      %v9441 = vadd.f32 %v8686, 3.0
      %v9442 = vadd.f32 %v8690, 3.0
      %v9443 = vadd.f32 %v8694, 3.0
      %v9444 = vadd.f32 %v8698, 3.0
      %v9445 = vadd.f32 %v8702, 3.0
      %v9446 = vadd.f32 %v8706, 3.0
      %v9447 = vadd.f32 %v8710, 3.0
      %v9448 = vadd.f32 %v8714, 3.0
      %v9449 = vadd.f32 %v8718, 3.0
      %v9450 = vadd.f32 %v8722, 3.0
      %v9451 = vadd.f32 %v8726, 3.0
      %v9452 = vadd.f32 %v8730, 3.0
      %v9453 = vadd.f32 %v8734, 3.0
      %v9454 = vadd.f32 %v8738, 3.0
      %v9455 = vadd.f32 %v8742, 3.0
      %v9456 = vadd.f32 %v8746, 3.0
      %v9457 = vadd.f32 %v8750, 3.0
      %v9458 = vadd.f32 %v8754, 3.0
      %v9459 = vadd.f32 %v8758, 3.0
      %v9460 = vadd.f32 %v8762, 3.0
      %v9461 = vadd.f32 %v8766, 3.0
      %v9462 = vadd.f32 %v8770, 3.0
      %v9463 = vadd.f32 %v8774, 3.0
      %v9464 = vadd.f32 %v8778, 3.0
      %v9465 = vadd.f32 %v8782, 3.0
      %v9466 = vadd.f32 %v8786, 3.0
      %v9467 = vadd.f32 %v8790, 3.0
      %v9468 = vadd.f32 %v8794, 3.0
      %v9469 = vadd.f32 %v8798, 3.0
      %v9470 = vadd.f32 %v8802, 3.0
      %v9471 = vadd.f32 %v8806, 3.0
      %v9472 = vadd.f32 %v8810, 3.0
      %v9473 = vadd.f32 %v8814, 3.0
      %v9474 = vadd.f32 %v8818, 3.0
      %v9475 = vadd.f32 %v8822, 3.0
      %v9476 = vadd.f32 %v8826, 3.0
      %v9477 = vadd.f32 %v8830, 3.0
      %v9478 = vadd.f32 %v8834, 3.0
      %v9479 = vadd.f32 %v8838, 3.0
      %v9480 = vadd.f32 %v8842, 3.0
      %v9481 = vadd.f32 %v8846, 3.0
      %v9482 = vadd.f32 %v8850, 3.0
      %v9483 = vadd.f32 %v8854, 3.0
      %v9484 = vadd.f32 %v8858, 3.0
      %v9485 = vadd.f32 %v8862, 3.0
      %v9486 = vadd.f32 %v8866, 3.0
      %v9487 = vadd.f32 %v8870, 3.0
      %v9488 = vadd.f32 %v8874, 3.0
      %v9489 = vadd.f32 %v8878, 3.0
      %v9490 = vadd.f32 %v8882, 3.0
      %v9491 = vadd.f32 %v8886, 3.0
      %v9492 = vadd.f32 %v8890, 3.0
      %v9493 = vadd.f32 %v8894, 3.0
      %v9494 = vadd.f32 %v8898, 3.0
      %v9495 = vadd.f32 %v8902, 3.0
      %v9496 = vadd.f32 %v8906, 3.0
      %v9497 = vadd.f32 %v8910, 3.0
      %v9498 = vadd.f32 %v8914, 3.0
      %v9499 = vadd.f32 %v8918, 3.0
      %v9500 = vadd.f32 %v8922, 3.0
      %v9501 = vadd.f32 %v8926, 3.0
      %v9502 = vadd.f32 %v8930, 3.0
      %v9503 = vadd.f32 %v8934, 3.0
      %v9504 = vadd.f32 %v8938, 3.0
      %v9505 = vadd.f32 %v8942, 3.0
      %v9506 = vadd.f32 %v8946, 3.0
      %v9507 = vadd.f32 %v8950, 3.0
      %v9508 = vadd.f32 %v8954, 3.0
      %v9509 = vadd.f32 %v8958, 3.0
      %v9510 = vadd.f32 %v8962, 3.0
      %v9511 = vadd.f32 %v8966, 3.0
      %v9512 = vadd.f32 %v8970, 3.0
      %v9513 = vadd.f32 %v8974, 3.0
      %v9514 = vadd.f32 %v8978, 3.0
      %v9515 = vadd.f32 %v8982, 3.0
      %v9516 = vadd.f32 %v8986, 3.0
      %v9517 = vadd.f32 %v8990, 3.0
      %v9518 = vadd.f32 %v8994, 3.0
      %v9519 = vadd.f32 %v8998, 3.0
      %v9520 = vadd.f32 %v9002, 3.0
      %v9521 = vadd.f32 %v9006, 3.0
      %v9522 = vadd.f32 %v9010, 3.0
      %v9523 = vadd.f32 %v9014, 3.0
      %v9524 = vadd.f32 %v9018, 3.0
      %v9525 = vadd.f32 %v9022, 3.0
      %v9526 = vadd.f32 %v9026, 3.0
      %v9527 = vadd.f32 %v9030, 3.0
      %v9528 = vadd.f32 %v9034, 3.0
      %v9529 = vadd.f32 %v9038, 3.0
      %v9530 = vadd.f32 %v9042, 3.0
      %v9531 = vadd.f32 %v9046, 3.0
      %v9532 = vadd.f32 %v9050, 3.0
      %v9533 = vadd.f32 %v9054, 3.0
      %v9534 = vadd.f32 %v9058, 3.0
      %v9535 = vadd.f32 %v9062, 3.0
      %v9536 = vadd.f32 %v9066, 3.0
      %v9537 = vadd.f32 %v9070, 3.0
      %v9538 = vadd.f32 %v9074, 3.0
      %v9539 = vadd.f32 %v9078, 3.0
      %v9540 = vadd.f32 %v9082, 3.0
      %v9541 = vadd.f32 %v9086, 3.0
      %v9542 = vadd.f32 %v9090, 3.0
      %v9543 = vadd.f32 %v9094, 3.0
      %v9544 = vadd.f32 %v9098, 3.0
      %v9545 = vadd.f32 %v9102, 3.0
      %v9546 = vadd.f32 %v9106, 3.0
      %v9547 = vadd.f32 %v9110, 3.0
      %v9548 = vadd.f32 %v9114, 3.0
      %v9549 = vadd.f32 %v9118, 3.0
      %v9550 = vadd.f32 %v9122, 3.0
      %v9551 = vadd.f32 %v9126, 3.0
      %v9552 = vadd.f32 %v9130, 3.0
      %v9553 = vadd.f32 %v9134, 3.0
      %v9554 = vadd.f32 %v9138, 3.0
      %v9555 = vadd.f32 %v9142, 3.0
      %v9556 = vadd.f32 %v9146, 3.0
      %v9557 = vadd.f32 %v9150, 3.0
      %v9558 = vadd.f32 %v9154, 3.0
      %v9559 = vadd.f32 %v9158, 3.0
      %v9560 = vadd.f32 %v9162, 3.0
      %v9561 = vadd.f32 %v9166, 3.0
      %v9562 = vadd.f32 %v9170, 3.0
      %v9563 = vadd.f32 %v9174, 3.0
      %v9564 = vadd.f32 %v9178, 3.0
      %v9565 = vadd.f32 %v9182, 3.0
      %v9566 = vadd.f32 %v9186, 3.0
      %v9567 = vadd.f32 %v9190, 3.0
      %v9568 = vadd.f32 %v9194, 3.0
      %v9569 = vadd.f32 %v9198, 3.0
      %v9570 = vadd.f32 %v9202, 3.0
      %v9571 = vadd.f32 %v9206, 3.0
      %v9572 = vadd.f32 %v9210, 3.0
      %v9573 = vadd.f32 %v9214, 3.0
      %v9574 = vadd.f32 %v9218, 3.0
      %v9575 = vadd.f32 %v9222, 3.0
      %v9576 = vadd.f32 %v9226, 3.0
      %v9577 = vadd.f32 %v9230, 3.0
      %v9578 = vadd.f32 %v9234, 3.0
      %v9579 = vadd.f32 %v9238, 3.0
      %v9580 = vadd.f32 %v9242, 3.0
      %v9581 = vadd.f32 %v9246, 3.0
      %v9582 = vadd.f32 %v9250, 3.0
      %v9583 = vadd.f32 %v9254, 3.0
      %v9584 = vadd.f32 %v9258, 3.0
      %v9585 = vadd.f32 %v9262, 3.0
      %v9586 = vadd.f32 %v9266, 3.0
      %v9587 = vadd.f32 %v9270, 3.0
      %v9588 = vadd.f32 %v9274, 3.0
      %v9589 = vadd.f32 %v9278, 3.0
      %v9590 = vadd.f32 %v9282, 3.0
      %v9591 = vadd.f32 %v9286, 3.0
      %v9592 = vadd.f32 %v9290, 3.0
      %v9593 = vadd.f32 %v9294, 3.0
      %v9594 = vadd.f32 %v9298, 3.0
      %v9595 = vadd.f32 %v9302, 3.0
      %v9596 = vadd.f32 %v9306, 3.0
      %v9597 = vadd.f32 %v9310, 3.0
      %v9598 = vadd.f32 %v9314, 3.0
      %v9599 = vadd.f32 %v9318, 3.0
      %v9600 = vadd.f32 %v9322, 3.0
      %v9601 = vadd.f32 %v9326, 3.0
      %v9602 = vadd.f32 %v9330, 3.0
      %v9603 = vadd.f32 %v9334, 3.0
      %v9604 = vadd.f32 %v9338, 3.0
      %v9605 = vadd.f32 %v9342, 3.0
      %v9606 = vadd.f32 %v9346, 3.0
      %v9607 = vadd.f32 %v9350, 3.0
      %v9608 = vmax.f32 %v9352, 0.0
      %v9609 = vmax.f32 %v9353, 0.0
      %v9610 = vmax.f32 %v9354, 0.0
      %v9611 = vmax.f32 %v9355, 0.0
      %v9612 = vmax.f32 %v9356, 0.0
      %v9613 = vmax.f32 %v9357, 0.0
      %v9614 = vmax.f32 %v9358, 0.0
      %v9615 = vmax.f32 %v9359, 0.0
      %v9616 = vmax.f32 %v9360, 0.0
      %v9617 = vmax.f32 %v9361, 0.0
      %v9618 = vmax.f32 %v9362, 0.0
      %v9619 = vmax.f32 %v9363, 0.0
      %v9620 = vmax.f32 %v9364, 0.0
      %v9621 = vmax.f32 %v9365, 0.0
      %v9622 = vmax.f32 %v9366, 0.0
      %v9623 = vmax.f32 %v9367, 0.0
      %v9624 = vmax.f32 %v9368, 0.0
      %v9625 = vmax.f32 %v9369, 0.0
      %v9626 = vmax.f32 %v9370, 0.0
      %v9627 = vmax.f32 %v9371, 0.0
      %v9628 = vmax.f32 %v9372, 0.0
      %v9629 = vmax.f32 %v9373, 0.0
      %v9630 = vmax.f32 %v9374, 0.0
      %v9631 = vmax.f32 %v9375, 0.0
      %v9632 = vmax.f32 %v9376, 0.0
      %v9633 = vmax.f32 %v9377, 0.0
      %v9634 = vmax.f32 %v9378, 0.0
      %v9635 = vmax.f32 %v9379, 0.0
      %v9636 = vmax.f32 %v9380, 0.0
      %v9637 = vmax.f32 %v9381, 0.0
      %v9638 = vmax.f32 %v9382, 0.0
      %v9639 = vmax.f32 %v9383, 0.0
      %v9640 = vmax.f32 %v9384, 0.0
      %v9641 = vmax.f32 %v9385, 0.0
      %v9642 = vmax.f32 %v9386, 0.0
      %v9643 = vmax.f32 %v9387, 0.0
      %v9644 = vmax.f32 %v9388, 0.0
      %v9645 = vmax.f32 %v9389, 0.0
      %v9646 = vmax.f32 %v9390, 0.0
      %v9647 = vmax.f32 %v9391, 0.0
      %v9648 = vmax.f32 %v9392, 0.0
      %v9649 = vmax.f32 %v9393, 0.0
      %v9650 = vmax.f32 %v9394, 0.0
      %v9651 = vmax.f32 %v9395, 0.0
      %v9652 = vmax.f32 %v9396, 0.0
      %v9653 = vmax.f32 %v9397, 0.0
      %v9654 = vmax.f32 %v9398, 0.0
      %v9655 = vmax.f32 %v9399, 0.0
      %v9656 = vmax.f32 %v9400, 0.0
      %v9657 = vmax.f32 %v9401, 0.0
      %v9658 = vmax.f32 %v9402, 0.0
      %v9659 = vmax.f32 %v9403, 0.0
      %v9660 = vmax.f32 %v9404, 0.0
      %v9661 = vmax.f32 %v9405, 0.0
      %v9662 = vmax.f32 %v9406, 0.0
      %v9663 = vmax.f32 %v9407, 0.0
      %v9664 = vmax.f32 %v9408, 0.0
      %v9665 = vmax.f32 %v9409, 0.0
      %v9666 = vmax.f32 %v9410, 0.0
      %v9667 = vmax.f32 %v9411, 0.0
      %v9668 = vmax.f32 %v9412, 0.0
      %v9669 = vmax.f32 %v9413, 0.0
      %v9670 = vmax.f32 %v9414, 0.0
      %v9671 = vmax.f32 %v9415, 0.0
      %v9672 = vmax.f32 %v9416, 0.0
      %v9673 = vmax.f32 %v9417, 0.0
      %v9674 = vmax.f32 %v9418, 0.0
      %v9675 = vmax.f32 %v9419, 0.0
      %v9676 = vmax.f32 %v9420, 0.0
      %v9677 = vmax.f32 %v9421, 0.0
      %v9678 = vmax.f32 %v9422, 0.0
      %v9679 = vmax.f32 %v9423, 0.0
      %v9680 = vmax.f32 %v9424, 0.0
      %v9681 = vmax.f32 %v9425, 0.0
      %v9682 = vmax.f32 %v9426, 0.0
      %v9683 = vmax.f32 %v9427, 0.0
      %v9684 = vmax.f32 %v9428, 0.0
      %v9685 = vmax.f32 %v9429, 0.0
      %v9686 = vmax.f32 %v9430, 0.0
      %v9687 = vmax.f32 %v9431, 0.0
      %v9688 = vmax.f32 %v9432, 0.0
      %v9689 = vmax.f32 %v9433, 0.0
      %v9690 = vmax.f32 %v9434, 0.0
      %v9691 = vmax.f32 %v9435, 0.0
      %v9692 = vmax.f32 %v9436, 0.0
      %v9693 = vmax.f32 %v9437, 0.0
      %v9694 = vmax.f32 %v9438, 0.0
      %v9695 = vmax.f32 %v9439, 0.0
      %v9696 = vmax.f32 %v9440, 0.0
      %v9697 = vmax.f32 %v9441, 0.0
      %v9698 = vmax.f32 %v9442, 0.0
      %v9699 = vmax.f32 %v9443, 0.0
      %v9700 = vmax.f32 %v9444, 0.0
      %v9701 = vmax.f32 %v9445, 0.0
      %v9702 = vmax.f32 %v9446, 0.0
      %v9703 = vmax.f32 %v9447, 0.0
      %v9704 = vmax.f32 %v9448, 0.0
      %v9705 = vmax.f32 %v9449, 0.0
      %v9706 = vmax.f32 %v9450, 0.0
      %v9707 = vmax.f32 %v9451, 0.0
      %v9708 = vmax.f32 %v9452, 0.0
      %v9709 = vmax.f32 %v9453, 0.0
      %v9710 = vmax.f32 %v9454, 0.0
      %v9711 = vmax.f32 %v9455, 0.0
      %v9712 = vmax.f32 %v9456, 0.0
      %v9713 = vmax.f32 %v9457, 0.0
      %v9714 = vmax.f32 %v9458, 0.0
      %v9715 = vmax.f32 %v9459, 0.0
      %v9716 = vmax.f32 %v9460, 0.0
      %v9717 = vmax.f32 %v9461, 0.0
      %v9718 = vmax.f32 %v9462, 0.0
      %v9719 = vmax.f32 %v9463, 0.0
      %v9720 = vmax.f32 %v9464, 0.0
      %v9721 = vmax.f32 %v9465, 0.0
      %v9722 = vmax.f32 %v9466, 0.0
      %v9723 = vmax.f32 %v9467, 0.0
      %v9724 = vmax.f32 %v9468, 0.0
      %v9725 = vmax.f32 %v9469, 0.0
      %v9726 = vmax.f32 %v9470, 0.0
      %v9727 = vmax.f32 %v9471, 0.0
      %v9728 = vmax.f32 %v9472, 0.0
      %v9729 = vmax.f32 %v9473, 0.0
      %v9730 = vmax.f32 %v9474, 0.0
      %v9731 = vmax.f32 %v9475, 0.0
      %v9732 = vmax.f32 %v9476, 0.0
      %v9733 = vmax.f32 %v9477, 0.0
      %v9734 = vmax.f32 %v9478, 0.0
      %v9735 = vmax.f32 %v9479, 0.0
      %v9736 = vmax.f32 %v9480, 0.0
      %v9737 = vmax.f32 %v9481, 0.0
      %v9738 = vmax.f32 %v9482, 0.0
      %v9739 = vmax.f32 %v9483, 0.0
      %v9740 = vmax.f32 %v9484, 0.0
      %v9741 = vmax.f32 %v9485, 0.0
      %v9742 = vmax.f32 %v9486, 0.0
      %v9743 = vmax.f32 %v9487, 0.0
      %v9744 = vmax.f32 %v9488, 0.0
      %v9745 = vmax.f32 %v9489, 0.0
      %v9746 = vmax.f32 %v9490, 0.0
      %v9747 = vmax.f32 %v9491, 0.0
      %v9748 = vmax.f32 %v9492, 0.0
      %v9749 = vmax.f32 %v9493, 0.0
      %v9750 = vmax.f32 %v9494, 0.0
      %v9751 = vmax.f32 %v9495, 0.0
      %v9752 = vmax.f32 %v9496, 0.0
      %v9753 = vmax.f32 %v9497, 0.0
      %v9754 = vmax.f32 %v9498, 0.0
      %v9755 = vmax.f32 %v9499, 0.0
      %v9756 = vmax.f32 %v9500, 0.0
      %v9757 = vmax.f32 %v9501, 0.0
      %v9758 = vmax.f32 %v9502, 0.0
      %v9759 = vmax.f32 %v9503, 0.0
      %v9760 = vmax.f32 %v9504, 0.0
      %v9761 = vmax.f32 %v9505, 0.0
      %v9762 = vmax.f32 %v9506, 0.0
      %v9763 = vmax.f32 %v9507, 0.0
      %v9764 = vmax.f32 %v9508, 0.0
      %v9765 = vmax.f32 %v9509, 0.0
      %v9766 = vmax.f32 %v9510, 0.0
      %v9767 = vmax.f32 %v9511, 0.0
      %v9768 = vmax.f32 %v9512, 0.0
      %v9769 = vmax.f32 %v9513, 0.0
      %v9770 = vmax.f32 %v9514, 0.0
      %v9771 = vmax.f32 %v9515, 0.0
      %v9772 = vmax.f32 %v9516, 0.0
      %v9773 = vmax.f32 %v9517, 0.0
      %v9774 = vmax.f32 %v9518, 0.0
      %v9775 = vmax.f32 %v9519, 0.0
      %v9776 = vmax.f32 %v9520, 0.0
      %v9777 = vmax.f32 %v9521, 0.0
      %v9778 = vmax.f32 %v9522, 0.0
      %v9779 = vmax.f32 %v9523, 0.0
      %v9780 = vmax.f32 %v9524, 0.0
      %v9781 = vmax.f32 %v9525, 0.0
      %v9782 = vmax.f32 %v9526, 0.0
      %v9783 = vmax.f32 %v9527, 0.0
      %v9784 = vmax.f32 %v9528, 0.0
      %v9785 = vmax.f32 %v9529, 0.0
      %v9786 = vmax.f32 %v9530, 0.0
      %v9787 = vmax.f32 %v9531, 0.0
      %v9788 = vmax.f32 %v9532, 0.0
      %v9789 = vmax.f32 %v9533, 0.0
      %v9790 = vmax.f32 %v9534, 0.0
      %v9791 = vmax.f32 %v9535, 0.0
      %v9792 = vmax.f32 %v9536, 0.0
      %v9793 = vmax.f32 %v9537, 0.0
      %v9794 = vmax.f32 %v9538, 0.0
      %v9795 = vmax.f32 %v9539, 0.0
      %v9796 = vmax.f32 %v9540, 0.0
      %v9797 = vmax.f32 %v9541, 0.0
      %v9798 = vmax.f32 %v9542, 0.0
      %v9799 = vmax.f32 %v9543, 0.0
      %v9800 = vmax.f32 %v9544, 0.0
      %v9801 = vmax.f32 %v9545, 0.0
      %v9802 = vmax.f32 %v9546, 0.0
      %v9803 = vmax.f32 %v9547, 0.0
      %v9804 = vmax.f32 %v9548, 0.0
      %v9805 = vmax.f32 %v9549, 0.0
      %v9806 = vmax.f32 %v9550, 0.0
      %v9807 = vmax.f32 %v9551, 0.0
      %v9808 = vmax.f32 %v9552, 0.0
      %v9809 = vmax.f32 %v9553, 0.0
      %v9810 = vmax.f32 %v9554, 0.0
      %v9811 = vmax.f32 %v9555, 0.0
      %v9812 = vmax.f32 %v9556, 0.0
      %v9813 = vmax.f32 %v9557, 0.0
      %v9814 = vmax.f32 %v9558, 0.0
      %v9815 = vmax.f32 %v9559, 0.0
      %v9816 = vmax.f32 %v9560, 0.0
      %v9817 = vmax.f32 %v9561, 0.0
      %v9818 = vmax.f32 %v9562, 0.0
      %v9819 = vmax.f32 %v9563, 0.0
      %v9820 = vmax.f32 %v9564, 0.0
      %v9821 = vmax.f32 %v9565, 0.0
      %v9822 = vmax.f32 %v9566, 0.0
      %v9823 = vmax.f32 %v9567, 0.0
      %v9824 = vmax.f32 %v9568, 0.0
      %v9825 = vmax.f32 %v9569, 0.0
      %v9826 = vmax.f32 %v9570, 0.0
      %v9827 = vmax.f32 %v9571, 0.0
      %v9828 = vmax.f32 %v9572, 0.0
      %v9829 = vmax.f32 %v9573, 0.0
      %v9830 = vmax.f32 %v9574, 0.0
      %v9831 = vmax.f32 %v9575, 0.0
      %v9832 = vmax.f32 %v9576, 0.0
      %v9833 = vmax.f32 %v9577, 0.0
      %v9834 = vmax.f32 %v9578, 0.0
      %v9835 = vmax.f32 %v9579, 0.0
      %v9836 = vmax.f32 %v9580, 0.0
      %v9837 = vmax.f32 %v9581, 0.0
      %v9838 = vmax.f32 %v9582, 0.0
      %v9839 = vmax.f32 %v9583, 0.0
      %v9840 = vmax.f32 %v9584, 0.0
      %v9841 = vmax.f32 %v9585, 0.0
      %v9842 = vmax.f32 %v9586, 0.0
      %v9843 = vmax.f32 %v9587, 0.0
      %v9844 = vmax.f32 %v9588, 0.0
      %v9845 = vmax.f32 %v9589, 0.0
      %v9846 = vmax.f32 %v9590, 0.0
      %v9847 = vmax.f32 %v9591, 0.0
      %v9848 = vmax.f32 %v9592, 0.0
      %v9849 = vmax.f32 %v9593, 0.0
      %v9850 = vmax.f32 %v9594, 0.0
      %v9851 = vmax.f32 %v9595, 0.0
      %v9852 = vmax.f32 %v9596, 0.0
      %v9853 = vmax.f32 %v9597, 0.0
      %v9854 = vmax.f32 %v9598, 0.0
      %v9855 = vmax.f32 %v9599, 0.0
      %v9856 = vmax.f32 %v9600, 0.0
      %v9857 = vmax.f32 %v9601, 0.0
      %v9858 = vmax.f32 %v9602, 0.0
      %v9859 = vmax.f32 %v9603, 0.0
      %v9860 = vmax.f32 %v9604, 0.0
      %v9861 = vmax.f32 %v9605, 0.0
      %v9862 = vmax.f32 %v9606, 0.0
      %v9863 = vmax.f32 %v9607, 0.0
      %v9864 = vmin.f32 %v9608, 6.0
      %v9865 = vmin.f32 %v9609, 6.0
      %v9866 = vmin.f32 %v9610, 6.0
      %v9867 = vmin.f32 %v9611, 6.0
      %v9868 = vmin.f32 %v9612, 6.0
      %v9869 = vmin.f32 %v9613, 6.0
      %v9870 = vmin.f32 %v9614, 6.0
      %v9871 = vmin.f32 %v9615, 6.0
      %v9872 = vmin.f32 %v9616, 6.0
      %v9873 = vmin.f32 %v9617, 6.0
      %v9874 = vmin.f32 %v9618, 6.0
      %v9875 = vmin.f32 %v9619, 6.0
      %v9876 = vmin.f32 %v9620, 6.0
      %v9877 = vmin.f32 %v9621, 6.0
      %v9878 = vmin.f32 %v9622, 6.0
      %v9879 = vmin.f32 %v9623, 6.0
      %v9880 = vmin.f32 %v9624, 6.0
      %v9881 = vmin.f32 %v9625, 6.0
      %v9882 = vmin.f32 %v9626, 6.0
      %v9883 = vmin.f32 %v9627, 6.0
      %v9884 = vmin.f32 %v9628, 6.0
      %v9885 = vmin.f32 %v9629, 6.0
      %v9886 = vmin.f32 %v9630, 6.0
      %v9887 = vmin.f32 %v9631, 6.0
      %v9888 = vmin.f32 %v9632, 6.0
      %v9889 = vmin.f32 %v9633, 6.0
      %v9890 = vmin.f32 %v9634, 6.0
      %v9891 = vmin.f32 %v9635, 6.0
      %v9892 = vmin.f32 %v9636, 6.0
      %v9893 = vmin.f32 %v9637, 6.0
      %v9894 = vmin.f32 %v9638, 6.0
      %v9895 = vmin.f32 %v9639, 6.0
      %v9896 = vmin.f32 %v9640, 6.0
      %v9897 = vmin.f32 %v9641, 6.0
      %v9898 = vmin.f32 %v9642, 6.0
      %v9899 = vmin.f32 %v9643, 6.0
      %v9900 = vmin.f32 %v9644, 6.0
      %v9901 = vmin.f32 %v9645, 6.0
      %v9902 = vmin.f32 %v9646, 6.0
      %v9903 = vmin.f32 %v9647, 6.0
      %v9904 = vmin.f32 %v9648, 6.0
      %v9905 = vmin.f32 %v9649, 6.0
      %v9906 = vmin.f32 %v9650, 6.0
      %v9907 = vmin.f32 %v9651, 6.0
      %v9908 = vmin.f32 %v9652, 6.0
      %v9909 = vmin.f32 %v9653, 6.0
      %v9910 = vmin.f32 %v9654, 6.0
      %v9911 = vmin.f32 %v9655, 6.0
      %v9912 = vmin.f32 %v9656, 6.0
      %v9913 = vmin.f32 %v9657, 6.0
      %v9914 = vmin.f32 %v9658, 6.0
      %v9915 = vmin.f32 %v9659, 6.0
      %v9916 = vmin.f32 %v9660, 6.0
      %v9917 = vmin.f32 %v9661, 6.0
      %v9918 = vmin.f32 %v9662, 6.0
      %v9919 = vmin.f32 %v9663, 6.0
      %v9920 = vmin.f32 %v9664, 6.0
      %v9921 = vmin.f32 %v9665, 6.0
      %v9922 = vmin.f32 %v9666, 6.0
      %v9923 = vmin.f32 %v9667, 6.0
      %v9924 = vmin.f32 %v9668, 6.0
      %v9925 = vmin.f32 %v9669, 6.0
      %v9926 = vmin.f32 %v9670, 6.0
      %v9927 = vmin.f32 %v9671, 6.0
      %v9928 = vmin.f32 %v9672, 6.0
      %v9929 = vmin.f32 %v9673, 6.0
      %v9930 = vmin.f32 %v9674, 6.0
      %v9931 = vmin.f32 %v9675, 6.0
      %v9932 = vmin.f32 %v9676, 6.0
      %v9933 = vmin.f32 %v9677, 6.0
      %v9934 = vmin.f32 %v9678, 6.0
      %v9935 = vmin.f32 %v9679, 6.0
      %v9936 = vmin.f32 %v9680, 6.0
      %v9937 = vmin.f32 %v9681, 6.0
      %v9938 = vmin.f32 %v9682, 6.0
      %v9939 = vmin.f32 %v9683, 6.0
      %v9940 = vmin.f32 %v9684, 6.0
      %v9941 = vmin.f32 %v9685, 6.0
      %v9942 = vmin.f32 %v9686, 6.0
      %v9943 = vmin.f32 %v9687, 6.0
      %v9944 = vmin.f32 %v9688, 6.0
      %v9945 = vmin.f32 %v9689, 6.0
      %v9946 = vmin.f32 %v9690, 6.0
      %v9947 = vmin.f32 %v9691, 6.0
      %v9948 = vmin.f32 %v9692, 6.0
      %v9949 = vmin.f32 %v9693, 6.0
      %v9950 = vmin.f32 %v9694, 6.0
      %v9951 = vmin.f32 %v9695, 6.0
      %v9952 = vmin.f32 %v9696, 6.0
      %v9953 = vmin.f32 %v9697, 6.0
      %v9954 = vmin.f32 %v9698, 6.0
      %v9955 = vmin.f32 %v9699, 6.0
      %v9956 = vmin.f32 %v9700, 6.0
      %v9957 = vmin.f32 %v9701, 6.0
      %v9958 = vmin.f32 %v9702, 6.0
      %v9959 = vmin.f32 %v9703, 6.0
      %v9960 = vmin.f32 %v9704, 6.0
      %v9961 = vmin.f32 %v9705, 6.0
      %v9962 = vmin.f32 %v9706, 6.0
      %v9963 = vmin.f32 %v9707, 6.0
      %v9964 = vmin.f32 %v9708, 6.0
      %v9965 = vmin.f32 %v9709, 6.0
      %v9966 = vmin.f32 %v9710, 6.0
      %v9967 = vmin.f32 %v9711, 6.0
      %v9968 = vmin.f32 %v9712, 6.0
      %v9969 = vmin.f32 %v9713, 6.0
      %v9970 = vmin.f32 %v9714, 6.0
      %v9971 = vmin.f32 %v9715, 6.0
      %v9972 = vmin.f32 %v9716, 6.0
      %v9973 = vmin.f32 %v9717, 6.0
      %v9974 = vmin.f32 %v9718, 6.0
      %v9975 = vmin.f32 %v9719, 6.0
      %v9976 = vmin.f32 %v9720, 6.0
      %v9977 = vmin.f32 %v9721, 6.0
      %v9978 = vmin.f32 %v9722, 6.0
      %v9979 = vmin.f32 %v9723, 6.0
      %v9980 = vmin.f32 %v9724, 6.0
      %v9981 = vmin.f32 %v9725, 6.0
      %v9982 = vmin.f32 %v9726, 6.0
      %v9983 = vmin.f32 %v9727, 6.0
      %v9984 = vmin.f32 %v9728, 6.0
      %v9985 = vmin.f32 %v9729, 6.0
      %v9986 = vmin.f32 %v9730, 6.0
      %v9987 = vmin.f32 %v9731, 6.0
      %v9988 = vmin.f32 %v9732, 6.0
      %v9989 = vmin.f32 %v9733, 6.0
      %v9990 = vmin.f32 %v9734, 6.0
      %v9991 = vmin.f32 %v9735, 6.0
      %v9992 = vmin.f32 %v9736, 6.0
      %v9993 = vmin.f32 %v9737, 6.0
      %v9994 = vmin.f32 %v9738, 6.0
      %v9995 = vmin.f32 %v9739, 6.0
      %v9996 = vmin.f32 %v9740, 6.0
      %v9997 = vmin.f32 %v9741, 6.0
      %v9998 = vmin.f32 %v9742, 6.0
      %v9999 = vmin.f32 %v9743, 6.0
      %v10000 = vmin.f32 %v9744, 6.0
      %v10001 = vmin.f32 %v9745, 6.0
      %v10002 = vmin.f32 %v9746, 6.0
      %v10003 = vmin.f32 %v9747, 6.0
      %v10004 = vmin.f32 %v9748, 6.0
      %v10005 = vmin.f32 %v9749, 6.0
      %v10006 = vmin.f32 %v9750, 6.0
      %v10007 = vmin.f32 %v9751, 6.0
      %v10008 = vmin.f32 %v9752, 6.0
      %v10009 = vmin.f32 %v9753, 6.0
      %v10010 = vmin.f32 %v9754, 6.0
      %v10011 = vmin.f32 %v9755, 6.0
      %v10012 = vmin.f32 %v9756, 6.0
      %v10013 = vmin.f32 %v9757, 6.0
      %v10014 = vmin.f32 %v9758, 6.0
      %v10015 = vmin.f32 %v9759, 6.0
      %v10016 = vmin.f32 %v9760, 6.0
      %v10017 = vmin.f32 %v9761, 6.0
      %v10018 = vmin.f32 %v9762, 6.0
      %v10019 = vmin.f32 %v9763, 6.0
      %v10020 = vmin.f32 %v9764, 6.0
      %v10021 = vmin.f32 %v9765, 6.0
      %v10022 = vmin.f32 %v9766, 6.0
      %v10023 = vmin.f32 %v9767, 6.0
      %v10024 = vmin.f32 %v9768, 6.0
      %v10025 = vmin.f32 %v9769, 6.0
      %v10026 = vmin.f32 %v9770, 6.0
      %v10027 = vmin.f32 %v9771, 6.0
      %v10028 = vmin.f32 %v9772, 6.0
      %v10029 = vmin.f32 %v9773, 6.0
      %v10030 = vmin.f32 %v9774, 6.0
      %v10031 = vmin.f32 %v9775, 6.0
      %v10032 = vmin.f32 %v9776, 6.0
      %v10033 = vmin.f32 %v9777, 6.0
      %v10034 = vmin.f32 %v9778, 6.0
      %v10035 = vmin.f32 %v9779, 6.0
      %v10036 = vmin.f32 %v9780, 6.0
      %v10037 = vmin.f32 %v9781, 6.0
      %v10038 = vmin.f32 %v9782, 6.0
      %v10039 = vmin.f32 %v9783, 6.0
      %v10040 = vmin.f32 %v9784, 6.0
      %v10041 = vmin.f32 %v9785, 6.0
      %v10042 = vmin.f32 %v9786, 6.0
      %v10043 = vmin.f32 %v9787, 6.0
      %v10044 = vmin.f32 %v9788, 6.0
      %v10045 = vmin.f32 %v9789, 6.0
      %v10046 = vmin.f32 %v9790, 6.0
      %v10047 = vmin.f32 %v9791, 6.0
      %v10048 = vmin.f32 %v9792, 6.0
      %v10049 = vmin.f32 %v9793, 6.0
      %v10050 = vmin.f32 %v9794, 6.0
      %v10051 = vmin.f32 %v9795, 6.0
      %v10052 = vmin.f32 %v9796, 6.0
      %v10053 = vmin.f32 %v9797, 6.0
      %v10054 = vmin.f32 %v9798, 6.0
      %v10055 = vmin.f32 %v9799, 6.0
      %v10056 = vmin.f32 %v9800, 6.0
      %v10057 = vmin.f32 %v9801, 6.0
      %v10058 = vmin.f32 %v9802, 6.0
      %v10059 = vmin.f32 %v9803, 6.0
      %v10060 = vmin.f32 %v9804, 6.0
      %v10061 = vmin.f32 %v9805, 6.0
      %v10062 = vmin.f32 %v9806, 6.0
      %v10063 = vmin.f32 %v9807, 6.0
      %v10064 = vmin.f32 %v9808, 6.0
      %v10065 = vmin.f32 %v9809, 6.0
      %v10066 = vmin.f32 %v9810, 6.0
      %v10067 = vmin.f32 %v9811, 6.0
      %v10068 = vmin.f32 %v9812, 6.0
      %v10069 = vmin.f32 %v9813, 6.0
      %v10070 = vmin.f32 %v9814, 6.0
      %v10071 = vmin.f32 %v9815, 6.0
      %v10072 = vmin.f32 %v9816, 6.0
      %v10073 = vmin.f32 %v9817, 6.0
      %v10074 = vmin.f32 %v9818, 6.0
      %v10075 = vmin.f32 %v9819, 6.0
      %v10076 = vmin.f32 %v9820, 6.0
      %v10077 = vmin.f32 %v9821, 6.0
      %v10078 = vmin.f32 %v9822, 6.0
      %v10079 = vmin.f32 %v9823, 6.0
      %v10080 = vmin.f32 %v9824, 6.0
      %v10081 = vmin.f32 %v9825, 6.0
      %v10082 = vmin.f32 %v9826, 6.0
      %v10083 = vmin.f32 %v9827, 6.0
      %v10084 = vmin.f32 %v9828, 6.0
      %v10085 = vmin.f32 %v9829, 6.0
      %v10086 = vmin.f32 %v9830, 6.0
      %v10087 = vmin.f32 %v9831, 6.0
      %v10088 = vmin.f32 %v9832, 6.0
      %v10089 = vmin.f32 %v9833, 6.0
      %v10090 = vmin.f32 %v9834, 6.0
      %v10091 = vmin.f32 %v9835, 6.0
      %v10092 = vmin.f32 %v9836, 6.0
      %v10093 = vmin.f32 %v9837, 6.0
      %v10094 = vmin.f32 %v9838, 6.0
      %v10095 = vmin.f32 %v9839, 6.0
      %v10096 = vmin.f32 %v9840, 6.0
      %v10097 = vmin.f32 %v9841, 6.0
      %v10098 = vmin.f32 %v9842, 6.0
      %v10099 = vmin.f32 %v9843, 6.0
      %v10100 = vmin.f32 %v9844, 6.0
      %v10101 = vmin.f32 %v9845, 6.0
      %v10102 = vmin.f32 %v9846, 6.0
      %v10103 = vmin.f32 %v9847, 6.0
      %v10104 = vmin.f32 %v9848, 6.0
      %v10105 = vmin.f32 %v9849, 6.0
      %v10106 = vmin.f32 %v9850, 6.0
      %v10107 = vmin.f32 %v9851, 6.0
      %v10108 = vmin.f32 %v9852, 6.0
      %v10109 = vmin.f32 %v9853, 6.0
      %v10110 = vmin.f32 %v9854, 6.0
      %v10111 = vmin.f32 %v9855, 6.0
      %v10112 = vmin.f32 %v9856, 6.0
      %v10113 = vmin.f32 %v9857, 6.0
      %v10114 = vmin.f32 %v9858, 6.0
      %v10115 = vmin.f32 %v9859, 6.0
      %v10116 = vmin.f32 %v9860, 6.0
      %v10117 = vmin.f32 %v9861, 6.0
      %v10118 = vmin.f32 %v9862, 6.0
      %v10119 = vmin.f32 %v9863, 6.0
      %v10120 = vmul.f32 %v8330, %v9864
      %v10121 = vmul.f32 %v8334, %v9865
      %v10122 = vmul.f32 %v8338, %v9866
      %v10123 = vmul.f32 %v8342, %v9867
      %v10124 = vmul.f32 %v8346, %v9868
      %v10125 = vmul.f32 %v8350, %v9869
      %v10126 = vmul.f32 %v8354, %v9870
      %v10127 = vmul.f32 %v8358, %v9871
      %v10128 = vmul.f32 %v8362, %v9872
      %v10129 = vmul.f32 %v8366, %v9873
      %v10130 = vmul.f32 %v8370, %v9874
      %v10131 = vmul.f32 %v8374, %v9875
      %v10132 = vmul.f32 %v8378, %v9876
      %v10133 = vmul.f32 %v8382, %v9877
      %v10134 = vmul.f32 %v8386, %v9878
      %v10135 = vmul.f32 %v8390, %v9879
      %v10136 = vmul.f32 %v8394, %v9880
      %v10137 = vmul.f32 %v8398, %v9881
      %v10138 = vmul.f32 %v8402, %v9882
      %v10139 = vmul.f32 %v8406, %v9883
      %v10140 = vmul.f32 %v8410, %v9884
      %v10141 = vmul.f32 %v8414, %v9885
      %v10142 = vmul.f32 %v8418, %v9886
      %v10143 = vmul.f32 %v8422, %v9887
      %v10144 = vmul.f32 %v8426, %v9888
      %v10145 = vmul.f32 %v8430, %v9889
      %v10146 = vmul.f32 %v8434, %v9890
      %v10147 = vmul.f32 %v8438, %v9891
      %v10148 = vmul.f32 %v8442, %v9892
      %v10149 = vmul.f32 %v8446, %v9893
      %v10150 = vmul.f32 %v8450, %v9894
      %v10151 = vmul.f32 %v8454, %v9895
      %v10152 = vmul.f32 %v8458, %v9896
      %v10153 = vmul.f32 %v8462, %v9897
      %v10154 = vmul.f32 %v8466, %v9898
      %v10155 = vmul.f32 %v8470, %v9899
      %v10156 = vmul.f32 %v8474, %v9900
      %v10157 = vmul.f32 %v8478, %v9901
      %v10158 = vmul.f32 %v8482, %v9902
      %v10159 = vmul.f32 %v8486, %v9903
      %v10160 = vmul.f32 %v8490, %v9904
      %v10161 = vmul.f32 %v8494, %v9905
      %v10162 = vmul.f32 %v8498, %v9906
      %v10163 = vmul.f32 %v8502, %v9907
      %v10164 = vmul.f32 %v8506, %v9908
      %v10165 = vmul.f32 %v8510, %v9909
      %v10166 = vmul.f32 %v8514, %v9910
      %v10167 = vmul.f32 %v8518, %v9911
      %v10168 = vmul.f32 %v8522, %v9912
      %v10169 = vmul.f32 %v8526, %v9913
      %v10170 = vmul.f32 %v8530, %v9914
      %v10171 = vmul.f32 %v8534, %v9915
      %v10172 = vmul.f32 %v8538, %v9916
      %v10173 = vmul.f32 %v8542, %v9917
      %v10174 = vmul.f32 %v8546, %v9918
      %v10175 = vmul.f32 %v8550, %v9919
      %v10176 = vmul.f32 %v8554, %v9920
      %v10177 = vmul.f32 %v8558, %v9921
      %v10178 = vmul.f32 %v8562, %v9922
      %v10179 = vmul.f32 %v8566, %v9923
      %v10180 = vmul.f32 %v8570, %v9924
      %v10181 = vmul.f32 %v8574, %v9925
      %v10182 = vmul.f32 %v8578, %v9926
      %v10183 = vmul.f32 %v8582, %v9927
      %v10184 = vmul.f32 %v8586, %v9928
      %v10185 = vmul.f32 %v8590, %v9929
      %v10186 = vmul.f32 %v8594, %v9930
      %v10187 = vmul.f32 %v8598, %v9931
      %v10188 = vmul.f32 %v8602, %v9932
      %v10189 = vmul.f32 %v8606, %v9933
      %v10190 = vmul.f32 %v8610, %v9934
      %v10191 = vmul.f32 %v8614, %v9935
      %v10192 = vmul.f32 %v8618, %v9936
      %v10193 = vmul.f32 %v8622, %v9937
      %v10194 = vmul.f32 %v8626, %v9938
      %v10195 = vmul.f32 %v8630, %v9939
      %v10196 = vmul.f32 %v8634, %v9940
      %v10197 = vmul.f32 %v8638, %v9941
      %v10198 = vmul.f32 %v8642, %v9942
      %v10199 = vmul.f32 %v8646, %v9943
      %v10200 = vmul.f32 %v8650, %v9944
      %v10201 = vmul.f32 %v8654, %v9945
      %v10202 = vmul.f32 %v8658, %v9946
      %v10203 = vmul.f32 %v8662, %v9947
      %v10204 = vmul.f32 %v8666, %v9948
      %v10205 = vmul.f32 %v8670, %v9949
      %v10206 = vmul.f32 %v8674, %v9950
      %v10207 = vmul.f32 %v8678, %v9951
      %v10208 = vmul.f32 %v8682, %v9952
      %v10209 = vmul.f32 %v8686, %v9953
      %v10210 = vmul.f32 %v8690, %v9954
      %v10211 = vmul.f32 %v8694, %v9955
      %v10212 = vmul.f32 %v8698, %v9956
      %v10213 = vmul.f32 %v8702, %v9957
      %v10214 = vmul.f32 %v8706, %v9958
      %v10215 = vmul.f32 %v8710, %v9959
      %v10216 = vmul.f32 %v8714, %v9960
      %v10217 = vmul.f32 %v8718, %v9961
      %v10218 = vmul.f32 %v8722, %v9962
      %v10219 = vmul.f32 %v8726, %v9963
      %v10220 = vmul.f32 %v8730, %v9964
      %v10221 = vmul.f32 %v8734, %v9965
      %v10222 = vmul.f32 %v8738, %v9966
      %v10223 = vmul.f32 %v8742, %v9967
      %v10224 = vmul.f32 %v8746, %v9968
      %v10225 = vmul.f32 %v8750, %v9969
      %v10226 = vmul.f32 %v8754, %v9970
      %v10227 = vmul.f32 %v8758, %v9971
      %v10228 = vmul.f32 %v8762, %v9972
      %v10229 = vmul.f32 %v8766, %v9973
      %v10230 = vmul.f32 %v8770, %v9974
      %v10231 = vmul.f32 %v8774, %v9975
      %v10232 = vmul.f32 %v8778, %v9976
      %v10233 = vmul.f32 %v8782, %v9977
      %v10234 = vmul.f32 %v8786, %v9978
      %v10235 = vmul.f32 %v8790, %v9979
      %v10236 = vmul.f32 %v8794, %v9980
      %v10237 = vmul.f32 %v8798, %v9981
      %v10238 = vmul.f32 %v8802, %v9982
      %v10239 = vmul.f32 %v8806, %v9983
      %v10240 = vmul.f32 %v8810, %v9984
      %v10241 = vmul.f32 %v8814, %v9985
      %v10242 = vmul.f32 %v8818, %v9986
      %v10243 = vmul.f32 %v8822, %v9987
      %v10244 = vmul.f32 %v8826, %v9988
      %v10245 = vmul.f32 %v8830, %v9989
      %v10246 = vmul.f32 %v8834, %v9990
      %v10247 = vmul.f32 %v8838, %v9991
      %v10248 = vmul.f32 %v8842, %v9992
      %v10249 = vmul.f32 %v8846, %v9993
      %v10250 = vmul.f32 %v8850, %v9994
      %v10251 = vmul.f32 %v8854, %v9995
      %v10252 = vmul.f32 %v8858, %v9996
      %v10253 = vmul.f32 %v8862, %v9997
      %v10254 = vmul.f32 %v8866, %v9998
      %v10255 = vmul.f32 %v8870, %v9999
      %v10256 = vmul.f32 %v8874, %v10000
      %v10257 = vmul.f32 %v8878, %v10001
      %v10258 = vmul.f32 %v8882, %v10002
      %v10259 = vmul.f32 %v8886, %v10003
      %v10260 = vmul.f32 %v8890, %v10004
      %v10261 = vmul.f32 %v8894, %v10005
      %v10262 = vmul.f32 %v8898, %v10006
      %v10263 = vmul.f32 %v8902, %v10007
      %v10264 = vmul.f32 %v8906, %v10008
      %v10265 = vmul.f32 %v8910, %v10009
      %v10266 = vmul.f32 %v8914, %v10010
      %v10267 = vmul.f32 %v8918, %v10011
      %v10268 = vmul.f32 %v8922, %v10012
      %v10269 = vmul.f32 %v8926, %v10013
      %v10270 = vmul.f32 %v8930, %v10014
      %v10271 = vmul.f32 %v8934, %v10015
      %v10272 = vmul.f32 %v8938, %v10016
      %v10273 = vmul.f32 %v8942, %v10017
      %v10274 = vmul.f32 %v8946, %v10018
      %v10275 = vmul.f32 %v8950, %v10019
      %v10276 = vmul.f32 %v8954, %v10020
      %v10277 = vmul.f32 %v8958, %v10021
      %v10278 = vmul.f32 %v8962, %v10022
      %v10279 = vmul.f32 %v8966, %v10023
      %v10280 = vmul.f32 %v8970, %v10024
      %v10281 = vmul.f32 %v8974, %v10025
      %v10282 = vmul.f32 %v8978, %v10026
      %v10283 = vmul.f32 %v8982, %v10027
      %v10284 = vmul.f32 %v8986, %v10028
      %v10285 = vmul.f32 %v8990, %v10029
      %v10286 = vmul.f32 %v8994, %v10030
      %v10287 = vmul.f32 %v8998, %v10031
      %v10288 = vmul.f32 %v9002, %v10032
      %v10289 = vmul.f32 %v9006, %v10033
      %v10290 = vmul.f32 %v9010, %v10034
      %v10291 = vmul.f32 %v9014, %v10035
      %v10292 = vmul.f32 %v9018, %v10036
      %v10293 = vmul.f32 %v9022, %v10037
      %v10294 = vmul.f32 %v9026, %v10038
      %v10295 = vmul.f32 %v9030, %v10039
      %v10296 = vmul.f32 %v9034, %v10040
      %v10297 = vmul.f32 %v9038, %v10041
      %v10298 = vmul.f32 %v9042, %v10042
      %v10299 = vmul.f32 %v9046, %v10043
      %v10300 = vmul.f32 %v9050, %v10044
      %v10301 = vmul.f32 %v9054, %v10045
      %v10302 = vmul.f32 %v9058, %v10046
      %v10303 = vmul.f32 %v9062, %v10047
      %v10304 = vmul.f32 %v9066, %v10048
      %v10305 = vmul.f32 %v9070, %v10049
      %v10306 = vmul.f32 %v9074, %v10050
      %v10307 = vmul.f32 %v9078, %v10051
      %v10308 = vmul.f32 %v9082, %v10052
      %v10309 = vmul.f32 %v9086, %v10053
      %v10310 = vmul.f32 %v9090, %v10054
      %v10311 = vmul.f32 %v9094, %v10055
      %v10312 = vmul.f32 %v9098, %v10056
      %v10313 = vmul.f32 %v9102, %v10057
      %v10314 = vmul.f32 %v9106, %v10058
      %v10315 = vmul.f32 %v9110, %v10059
      %v10316 = vmul.f32 %v9114, %v10060
      %v10317 = vmul.f32 %v9118, %v10061
      %v10318 = vmul.f32 %v9122, %v10062
      %v10319 = vmul.f32 %v9126, %v10063
      %v10320 = vmul.f32 %v9130, %v10064
      %v10321 = vmul.f32 %v9134, %v10065
      %v10322 = vmul.f32 %v9138, %v10066
      %v10323 = vmul.f32 %v9142, %v10067
      %v10324 = vmul.f32 %v9146, %v10068
      %v10325 = vmul.f32 %v9150, %v10069
      %v10326 = vmul.f32 %v9154, %v10070
      %v10327 = vmul.f32 %v9158, %v10071
      %v10328 = vmul.f32 %v9162, %v10072
      %v10329 = vmul.f32 %v9166, %v10073
      %v10330 = vmul.f32 %v9170, %v10074
      %v10331 = vmul.f32 %v9174, %v10075
      %v10332 = vmul.f32 %v9178, %v10076
      %v10333 = vmul.f32 %v9182, %v10077
      %v10334 = vmul.f32 %v9186, %v10078
      %v10335 = vmul.f32 %v9190, %v10079
      %v10336 = vmul.f32 %v9194, %v10080
      %v10337 = vmul.f32 %v9198, %v10081
      %v10338 = vmul.f32 %v9202, %v10082
      %v10339 = vmul.f32 %v9206, %v10083
      %v10340 = vmul.f32 %v9210, %v10084
      %v10341 = vmul.f32 %v9214, %v10085
      %v10342 = vmul.f32 %v9218, %v10086
      %v10343 = vmul.f32 %v9222, %v10087
      %v10344 = vmul.f32 %v9226, %v10088
      %v10345 = vmul.f32 %v9230, %v10089
      %v10346 = vmul.f32 %v9234, %v10090
      %v10347 = vmul.f32 %v9238, %v10091
      %v10348 = vmul.f32 %v9242, %v10092
      %v10349 = vmul.f32 %v9246, %v10093
      %v10350 = vmul.f32 %v9250, %v10094
      %v10351 = vmul.f32 %v9254, %v10095
      %v10352 = vmul.f32 %v9258, %v10096
      %v10353 = vmul.f32 %v9262, %v10097
      %v10354 = vmul.f32 %v9266, %v10098
      %v10355 = vmul.f32 %v9270, %v10099
      %v10356 = vmul.f32 %v9274, %v10100
      %v10357 = vmul.f32 %v9278, %v10101
      %v10358 = vmul.f32 %v9282, %v10102
      %v10359 = vmul.f32 %v9286, %v10103
      %v10360 = vmul.f32 %v9290, %v10104
      %v10361 = vmul.f32 %v9294, %v10105
      %v10362 = vmul.f32 %v9298, %v10106
      %v10363 = vmul.f32 %v9302, %v10107
      %v10364 = vmul.f32 %v9306, %v10108
      %v10365 = vmul.f32 %v9310, %v10109
      %v10366 = vmul.f32 %v9314, %v10110
      %v10367 = vmul.f32 %v9318, %v10111
      %v10368 = vmul.f32 %v9322, %v10112
      %v10369 = vmul.f32 %v9326, %v10113
      %v10370 = vmul.f32 %v9330, %v10114
      %v10371 = vmul.f32 %v9334, %v10115
      %v10372 = vmul.f32 %v9338, %v10116
      %v10373 = vmul.f32 %v9342, %v10117
      %v10374 = vmul.f32 %v9346, %v10118
      %v10375 = vmul.f32 %v9350, %v10119
      %v10376 = vmul.f32 %v10120, 0.16666667
      %v10377 = vmul.f32 %v10121, 0.16666667
      %v10378 = vmul.f32 %v10122, 0.16666667
      %v10379 = vmul.f32 %v10123, 0.16666667
      %v10380 = vmul.f32 %v10124, 0.16666667
      %v10381 = vmul.f32 %v10125, 0.16666667
      %v10382 = vmul.f32 %v10126, 0.16666667
      %v10383 = vmul.f32 %v10127, 0.16666667
      %v10384 = vmul.f32 %v10128, 0.16666667
      %v10385 = vmul.f32 %v10129, 0.16666667
      %v10386 = vmul.f32 %v10130, 0.16666667
      %v10387 = vmul.f32 %v10131, 0.16666667
      %v10388 = vmul.f32 %v10132, 0.16666667
      %v10389 = vmul.f32 %v10133, 0.16666667
      %v10390 = vmul.f32 %v10134, 0.16666667
      %v10391 = vmul.f32 %v10135, 0.16666667
      %v10392 = vmul.f32 %v10136, 0.16666667
      %v10393 = vmul.f32 %v10137, 0.16666667
      %v10394 = vmul.f32 %v10138, 0.16666667
      %v10395 = vmul.f32 %v10139, 0.16666667
      %v10396 = vmul.f32 %v10140, 0.16666667
      %v10397 = vmul.f32 %v10141, 0.16666667
      %v10398 = vmul.f32 %v10142, 0.16666667
      %v10399 = vmul.f32 %v10143, 0.16666667
      %v10400 = vmul.f32 %v10144, 0.16666667
      %v10401 = vmul.f32 %v10145, 0.16666667
      %v10402 = vmul.f32 %v10146, 0.16666667
      %v10403 = vmul.f32 %v10147, 0.16666667
      %v10404 = vmul.f32 %v10148, 0.16666667
      %v10405 = vmul.f32 %v10149, 0.16666667
      %v10406 = vmul.f32 %v10150, 0.16666667
      %v10407 = vmul.f32 %v10151, 0.16666667
      %v10408 = vmul.f32 %v10152, 0.16666667
      %v10409 = vmul.f32 %v10153, 0.16666667
      %v10410 = vmul.f32 %v10154, 0.16666667
      %v10411 = vmul.f32 %v10155, 0.16666667
      %v10412 = vmul.f32 %v10156, 0.16666667
      %v10413 = vmul.f32 %v10157, 0.16666667
      %v10414 = vmul.f32 %v10158, 0.16666667
      %v10415 = vmul.f32 %v10159, 0.16666667
      %v10416 = vmul.f32 %v10160, 0.16666667
      %v10417 = vmul.f32 %v10161, 0.16666667
      %v10418 = vmul.f32 %v10162, 0.16666667
      %v10419 = vmul.f32 %v10163, 0.16666667
      %v10420 = vmul.f32 %v10164, 0.16666667
      %v10421 = vmul.f32 %v10165, 0.16666667
      %v10422 = vmul.f32 %v10166, 0.16666667
      %v10423 = vmul.f32 %v10167, 0.16666667
      %v10424 = vmul.f32 %v10168, 0.16666667
      %v10425 = vmul.f32 %v10169, 0.16666667
      %v10426 = vmul.f32 %v10170, 0.16666667
      %v10427 = vmul.f32 %v10171, 0.16666667
      %v10428 = vmul.f32 %v10172, 0.16666667
      %v10429 = vmul.f32 %v10173, 0.16666667
      %v10430 = vmul.f32 %v10174, 0.16666667
      %v10431 = vmul.f32 %v10175, 0.16666667
      %v10432 = vmul.f32 %v10176, 0.16666667
      %v10433 = vmul.f32 %v10177, 0.16666667
      %v10434 = vmul.f32 %v10178, 0.16666667
      %v10435 = vmul.f32 %v10179, 0.16666667
      %v10436 = vmul.f32 %v10180, 0.16666667
      %v10437 = vmul.f32 %v10181, 0.16666667
      %v10438 = vmul.f32 %v10182, 0.16666667
      %v10439 = vmul.f32 %v10183, 0.16666667
      %v10440 = vmul.f32 %v10184, 0.16666667
      %v10441 = vmul.f32 %v10185, 0.16666667
      %v10442 = vmul.f32 %v10186, 0.16666667
      %v10443 = vmul.f32 %v10187, 0.16666667
      %v10444 = vmul.f32 %v10188, 0.16666667
      %v10445 = vmul.f32 %v10189, 0.16666667
      %v10446 = vmul.f32 %v10190, 0.16666667
      %v10447 = vmul.f32 %v10191, 0.16666667
      %v10448 = vmul.f32 %v10192, 0.16666667
      %v10449 = vmul.f32 %v10193, 0.16666667
      %v10450 = vmul.f32 %v10194, 0.16666667
      %v10451 = vmul.f32 %v10195, 0.16666667
      %v10452 = vmul.f32 %v10196, 0.16666667
      %v10453 = vmul.f32 %v10197, 0.16666667
      %v10454 = vmul.f32 %v10198, 0.16666667
      %v10455 = vmul.f32 %v10199, 0.16666667
      %v10456 = vmul.f32 %v10200, 0.16666667
      %v10457 = vmul.f32 %v10201, 0.16666667
      %v10458 = vmul.f32 %v10202, 0.16666667
      %v10459 = vmul.f32 %v10203, 0.16666667
      %v10460 = vmul.f32 %v10204, 0.16666667
      %v10461 = vmul.f32 %v10205, 0.16666667
      %v10462 = vmul.f32 %v10206, 0.16666667
      %v10463 = vmul.f32 %v10207, 0.16666667
      %v10464 = vmul.f32 %v10208, 0.16666667
      %v10465 = vmul.f32 %v10209, 0.16666667
      %v10466 = vmul.f32 %v10210, 0.16666667
      %v10467 = vmul.f32 %v10211, 0.16666667
      %v10468 = vmul.f32 %v10212, 0.16666667
      %v10469 = vmul.f32 %v10213, 0.16666667
      %v10470 = vmul.f32 %v10214, 0.16666667
      %v10471 = vmul.f32 %v10215, 0.16666667
      %v10472 = vmul.f32 %v10216, 0.16666667
      %v10473 = vmul.f32 %v10217, 0.16666667
      %v10474 = vmul.f32 %v10218, 0.16666667
      %v10475 = vmul.f32 %v10219, 0.16666667
      %v10476 = vmul.f32 %v10220, 0.16666667
      %v10477 = vmul.f32 %v10221, 0.16666667
      %v10478 = vmul.f32 %v10222, 0.16666667
      %v10479 = vmul.f32 %v10223, 0.16666667
      %v10480 = vmul.f32 %v10224, 0.16666667
      %v10481 = vmul.f32 %v10225, 0.16666667
      %v10482 = vmul.f32 %v10226, 0.16666667
      %v10483 = vmul.f32 %v10227, 0.16666667
      %v10484 = vmul.f32 %v10228, 0.16666667
      %v10485 = vmul.f32 %v10229, 0.16666667
      %v10486 = vmul.f32 %v10230, 0.16666667
      %v10487 = vmul.f32 %v10231, 0.16666667
      %v10488 = vmul.f32 %v10232, 0.16666667
      %v10489 = vmul.f32 %v10233, 0.16666667
      %v10490 = vmul.f32 %v10234, 0.16666667
      %v10491 = vmul.f32 %v10235, 0.16666667
      %v10492 = vmul.f32 %v10236, 0.16666667
      %v10493 = vmul.f32 %v10237, 0.16666667
      %v10494 = vmul.f32 %v10238, 0.16666667
      %v10495 = vmul.f32 %v10239, 0.16666667
      %v10496 = vmul.f32 %v10240, 0.16666667
      %v10497 = vmul.f32 %v10241, 0.16666667
      %v10498 = vmul.f32 %v10242, 0.16666667
      %v10499 = vmul.f32 %v10243, 0.16666667
      %v10500 = vmul.f32 %v10244, 0.16666667
      %v10501 = vmul.f32 %v10245, 0.16666667
      %v10502 = vmul.f32 %v10246, 0.16666667
      %v10503 = vmul.f32 %v10247, 0.16666667
      %v10504 = vmul.f32 %v10248, 0.16666667
      %v10505 = vmul.f32 %v10249, 0.16666667
      %v10506 = vmul.f32 %v10250, 0.16666667
      %v10507 = vmul.f32 %v10251, 0.16666667
      %v10508 = vmul.f32 %v10252, 0.16666667
      %v10509 = vmul.f32 %v10253, 0.16666667
      %v10510 = vmul.f32 %v10254, 0.16666667
      %v10511 = vmul.f32 %v10255, 0.16666667
      %v10512 = vmul.f32 %v10256, 0.16666667
      %v10513 = vmul.f32 %v10257, 0.16666667
      %v10514 = vmul.f32 %v10258, 0.16666667
      %v10515 = vmul.f32 %v10259, 0.16666667
      %v10516 = vmul.f32 %v10260, 0.16666667
      %v10517 = vmul.f32 %v10261, 0.16666667
      %v10518 = vmul.f32 %v10262, 0.16666667
      %v10519 = vmul.f32 %v10263, 0.16666667
      %v10520 = vmul.f32 %v10264, 0.16666667
      %v10521 = vmul.f32 %v10265, 0.16666667
      %v10522 = vmul.f32 %v10266, 0.16666667
      %v10523 = vmul.f32 %v10267, 0.16666667
      %v10524 = vmul.f32 %v10268, 0.16666667
      %v10525 = vmul.f32 %v10269, 0.16666667
      %v10526 = vmul.f32 %v10270, 0.16666667
      %v10527 = vmul.f32 %v10271, 0.16666667
      %v10528 = vmul.f32 %v10272, 0.16666667
      %v10529 = vmul.f32 %v10273, 0.16666667
      %v10530 = vmul.f32 %v10274, 0.16666667
      %v10531 = vmul.f32 %v10275, 0.16666667
      %v10532 = vmul.f32 %v10276, 0.16666667
      %v10533 = vmul.f32 %v10277, 0.16666667
      %v10534 = vmul.f32 %v10278, 0.16666667
      %v10535 = vmul.f32 %v10279, 0.16666667
      %v10536 = vmul.f32 %v10280, 0.16666667
      %v10537 = vmul.f32 %v10281, 0.16666667
      %v10538 = vmul.f32 %v10282, 0.16666667
      %v10539 = vmul.f32 %v10283, 0.16666667
      %v10540 = vmul.f32 %v10284, 0.16666667
      %v10541 = vmul.f32 %v10285, 0.16666667
      %v10542 = vmul.f32 %v10286, 0.16666667
      %v10543 = vmul.f32 %v10287, 0.16666667
      %v10544 = vmul.f32 %v10288, 0.16666667
      %v10545 = vmul.f32 %v10289, 0.16666667
      %v10546 = vmul.f32 %v10290, 0.16666667
      %v10547 = vmul.f32 %v10291, 0.16666667
      %v10548 = vmul.f32 %v10292, 0.16666667
      %v10549 = vmul.f32 %v10293, 0.16666667
      %v10550 = vmul.f32 %v10294, 0.16666667
      %v10551 = vmul.f32 %v10295, 0.16666667
      %v10552 = vmul.f32 %v10296, 0.16666667
      %v10553 = vmul.f32 %v10297, 0.16666667
      %v10554 = vmul.f32 %v10298, 0.16666667
      %v10555 = vmul.f32 %v10299, 0.16666667
      %v10556 = vmul.f32 %v10300, 0.16666667
      %v10557 = vmul.f32 %v10301, 0.16666667
      %v10558 = vmul.f32 %v10302, 0.16666667
      %v10559 = vmul.f32 %v10303, 0.16666667
      %v10560 = vmul.f32 %v10304, 0.16666667
      %v10561 = vmul.f32 %v10305, 0.16666667
      %v10562 = vmul.f32 %v10306, 0.16666667
      %v10563 = vmul.f32 %v10307, 0.16666667
      %v10564 = vmul.f32 %v10308, 0.16666667
      %v10565 = vmul.f32 %v10309, 0.16666667
      %v10566 = vmul.f32 %v10310, 0.16666667
      %v10567 = vmul.f32 %v10311, 0.16666667
      %v10568 = vmul.f32 %v10312, 0.16666667
      %v10569 = vmul.f32 %v10313, 0.16666667
      %v10570 = vmul.f32 %v10314, 0.16666667
      %v10571 = vmul.f32 %v10315, 0.16666667
      %v10572 = vmul.f32 %v10316, 0.16666667
      %v10573 = vmul.f32 %v10317, 0.16666667
      %v10574 = vmul.f32 %v10318, 0.16666667
      %v10575 = vmul.f32 %v10319, 0.16666667
      %v10576 = vmul.f32 %v10320, 0.16666667
      %v10577 = vmul.f32 %v10321, 0.16666667
      %v10578 = vmul.f32 %v10322, 0.16666667
      %v10579 = vmul.f32 %v10323, 0.16666667
      %v10580 = vmul.f32 %v10324, 0.16666667
      %v10581 = vmul.f32 %v10325, 0.16666667
      %v10582 = vmul.f32 %v10326, 0.16666667
      %v10583 = vmul.f32 %v10327, 0.16666667
      %v10584 = vmul.f32 %v10328, 0.16666667
      %v10585 = vmul.f32 %v10329, 0.16666667
      %v10586 = vmul.f32 %v10330, 0.16666667
      %v10587 = vmul.f32 %v10331, 0.16666667
      %v10588 = vmul.f32 %v10332, 0.16666667
      %v10589 = vmul.f32 %v10333, 0.16666667
      %v10590 = vmul.f32 %v10334, 0.16666667
      %v10591 = vmul.f32 %v10335, 0.16666667
      %v10592 = vmul.f32 %v10336, 0.16666667
      %v10593 = vmul.f32 %v10337, 0.16666667
      %v10594 = vmul.f32 %v10338, 0.16666667
      %v10595 = vmul.f32 %v10339, 0.16666667
      %v10596 = vmul.f32 %v10340, 0.16666667
      %v10597 = vmul.f32 %v10341, 0.16666667
      %v10598 = vmul.f32 %v10342, 0.16666667
      %v10599 = vmul.f32 %v10343, 0.16666667
      %v10600 = vmul.f32 %v10344, 0.16666667
      %v10601 = vmul.f32 %v10345, 0.16666667
      %v10602 = vmul.f32 %v10346, 0.16666667
      %v10603 = vmul.f32 %v10347, 0.16666667
      %v10604 = vmul.f32 %v10348, 0.16666667
      %v10605 = vmul.f32 %v10349, 0.16666667
      %v10606 = vmul.f32 %v10350, 0.16666667
      %v10607 = vmul.f32 %v10351, 0.16666667
      %v10608 = vmul.f32 %v10352, 0.16666667
      %v10609 = vmul.f32 %v10353, 0.16666667
      %v10610 = vmul.f32 %v10354, 0.16666667
      %v10611 = vmul.f32 %v10355, 0.16666667
      %v10612 = vmul.f32 %v10356, 0.16666667
      %v10613 = vmul.f32 %v10357, 0.16666667
      %v10614 = vmul.f32 %v10358, 0.16666667
      %v10615 = vmul.f32 %v10359, 0.16666667
      %v10616 = vmul.f32 %v10360, 0.16666667
      %v10617 = vmul.f32 %v10361, 0.16666667
      %v10618 = vmul.f32 %v10362, 0.16666667
      %v10619 = vmul.f32 %v10363, 0.16666667
      %v10620 = vmul.f32 %v10364, 0.16666667
      %v10621 = vmul.f32 %v10365, 0.16666667
      %v10622 = vmul.f32 %v10366, 0.16666667
      %v10623 = vmul.f32 %v10367, 0.16666667
      %v10624 = vmul.f32 %v10368, 0.16666667
      %v10625 = vmul.f32 %v10369, 0.16666667
      %v10626 = vmul.f32 %v10370, 0.16666667
      %v10627 = vmul.f32 %v10371, 0.16666667
      %v10628 = vmul.f32 %v10372, 0.16666667
      %v10629 = vmul.f32 %v10373, 0.16666667
      %v10630 = vmul.f32 %v10374, 0.16666667
      %v10631 = vmul.f32 %v10375, 0.16666667
      %vm10632 = vcmask 7168
      %10633 = vst.msk [vmem:[%s173] sm:$0xff] %vm10632, %v10376
      %10634 = vst.msk [vmem:[%s173 + $0x8] sm:$0xff] %vm10632, %v10377
      %10635 = vst.msk [vmem:[%s173 + $0x10] sm:$0xff] %vm10632, %v10378
      %10636 = vst.msk [vmem:[%s173 + $0x18] sm:$0xff] %vm10632, %v10379
      %10637 = vst.msk [vmem:[%s173 + $0x20] sm:$0xff] %vm10632, %v10380
      %10638 = vst.msk [vmem:[%s173 + $0x28] sm:$0xff] %vm10632, %v10381
      %10639 = vst.msk [vmem:[%s173 + $0x30] sm:$0xff] %vm10632, %v10382
      %10640 = vst.msk [vmem:[%s173 + $0x38] sm:$0xff] %vm10632, %v10383
      %10641 = vst.msk [vmem:[%s173 + $0x40] sm:$0xff] %vm10632, %v10384
      %10642 = vst.msk [vmem:[%s173 + $0x48] sm:$0xff] %vm10632, %v10385
      %10643 = vst.msk [vmem:[%s173 + $0x50] sm:$0xff] %vm10632, %v10386
      %10644 = vst.msk [vmem:[%s173 + $0x58] sm:$0xff] %vm10632, %v10387
      %10645 = vst.msk [vmem:[%s173 + $0x60] sm:$0xff] %vm10632, %v10388
      %10646 = vst.msk [vmem:[%s173 + $0x68] sm:$0xff] %vm10632, %v10389
      %10647 = vst.msk [vmem:[%s173 + $0x70] sm:$0xff] %vm10632, %v10390
      %10648 = vst.msk [vmem:[%s173 + $0x78] sm:$0xff] %vm10632, %v10391
      %10649 = vst.msk [vmem:[%s173 + $0x80] sm:$0xff] %vm10632, %v10392
      %10650 = vst.msk [vmem:[%s173 + $0x88] sm:$0xff] %vm10632, %v10393
      %10651 = vst.msk [vmem:[%s173 + $0x90] sm:$0xff] %vm10632, %v10394
      %10652 = vst.msk [vmem:[%s173 + $0x98] sm:$0xff] %vm10632, %v10395
      %10653 = vst.msk [vmem:[%s173 + $0xa0] sm:$0xff] %vm10632, %v10396
      %10654 = vst.msk [vmem:[%s173 + $0xa8] sm:$0xff] %vm10632, %v10397
      %10655 = vst.msk [vmem:[%s173 + $0xb0] sm:$0xff] %vm10632, %v10398
      %10656 = vst.msk [vmem:[%s173 + $0xb8] sm:$0xff] %vm10632, %v10399
      %10657 = vst.msk [vmem:[%s173 + $0xc0] sm:$0xff] %vm10632, %v10400
      %10658 = vst.msk [vmem:[%s173 + $0xc8] sm:$0xff] %vm10632, %v10401
      %10659 = vst.msk [vmem:[%s173 + $0xd0] sm:$0xff] %vm10632, %v10402
      %10660 = vst.msk [vmem:[%s173 + $0xd8] sm:$0xff] %vm10632, %v10403
      %10661 = vst.msk [vmem:[%s173 + $0xe0] sm:$0xff] %vm10632, %v10404
      %10662 = vst.msk [vmem:[%s173 + $0xe8] sm:$0xff] %vm10632, %v10405
      %10663 = vst.msk [vmem:[%s173 + $0xf0] sm:$0xff] %vm10632, %v10406
      %10664 = vst.msk [vmem:[%s173 + $0xf8] sm:$0xff] %vm10632, %v10407
      %10665 = vst.msk [vmem:[%s173 + $0x100] sm:$0xff] %vm10632, %v10408
      %10666 = vst.msk [vmem:[%s173 + $0x108] sm:$0xff] %vm10632, %v10409
      %10667 = vst.msk [vmem:[%s173 + $0x110] sm:$0xff] %vm10632, %v10410
      %10668 = vst.msk [vmem:[%s173 + $0x118] sm:$0xff] %vm10632, %v10411
      %10669 = vst.msk [vmem:[%s173 + $0x120] sm:$0xff] %vm10632, %v10412
      %10670 = vst.msk [vmem:[%s173 + $0x128] sm:$0xff] %vm10632, %v10413
      %10671 = vst.msk [vmem:[%s173 + $0x130] sm:$0xff] %vm10632, %v10414
      %10672 = vst.msk [vmem:[%s173 + $0x138] sm:$0xff] %vm10632, %v10415
      %10673 = vst.msk [vmem:[%s173 + $0x140] sm:$0xff] %vm10632, %v10416
      %10674 = vst.msk [vmem:[%s173 + $0x148] sm:$0xff] %vm10632, %v10417
      %10675 = vst.msk [vmem:[%s173 + $0x150] sm:$0xff] %vm10632, %v10418
      %10676 = vst.msk [vmem:[%s173 + $0x158] sm:$0xff] %vm10632, %v10419
      %10677 = vst.msk [vmem:[%s173 + $0x160] sm:$0xff] %vm10632, %v10420
      %10678 = vst.msk [vmem:[%s173 + $0x168] sm:$0xff] %vm10632, %v10421
      %10679 = vst.msk [vmem:[%s173 + $0x170] sm:$0xff] %vm10632, %v10422
      %10680 = vst.msk [vmem:[%s173 + $0x178] sm:$0xff] %vm10632, %v10423
      %10681 = vst.msk [vmem:[%s173 + $0x180] sm:$0xff] %vm10632, %v10424
      %10682 = vst.msk [vmem:[%s173 + $0x188] sm:$0xff] %vm10632, %v10425
      %10683 = vst.msk [vmem:[%s173 + $0x190] sm:$0xff] %vm10632, %v10426
      %10684 = vst.msk [vmem:[%s173 + $0x198] sm:$0xff] %vm10632, %v10427
      %10685 = vst.msk [vmem:[%s173 + $0x1a0] sm:$0xff] %vm10632, %v10428
      %10686 = vst.msk [vmem:[%s173 + $0x1a8] sm:$0xff] %vm10632, %v10429
      %10687 = vst.msk [vmem:[%s173 + $0x1b0] sm:$0xff] %vm10632, %v10430
      %10688 = vst.msk [vmem:[%s173 + $0x1b8] sm:$0xff] %vm10632, %v10431
      %10689 = vst.msk [vmem:[%s173 + $0x1c0] sm:$0xff] %vm10632, %v10432
      %10690 = vst.msk [vmem:[%s173 + $0x1c8] sm:$0xff] %vm10632, %v10433
      %10691 = vst.msk [vmem:[%s173 + $0x1d0] sm:$0xff] %vm10632, %v10434
      %10692 = vst.msk [vmem:[%s173 + $0x1d8] sm:$0xff] %vm10632, %v10435
      %10693 = vst.msk [vmem:[%s173 + $0x1e0] sm:$0xff] %vm10632, %v10436
      %10694 = vst.msk [vmem:[%s173 + $0x1e8] sm:$0xff] %vm10632, %v10437
      %10695 = vst.msk [vmem:[%s173 + $0x1f0] sm:$0xff] %vm10632, %v10438
      %10696 = vst.msk [vmem:[%s173 + $0x1f8] sm:$0xff] %vm10632, %v10439
      %10697 = vst.msk [vmem:[%s173 + $0x200] sm:$0xff] %vm10632, %v10440
      %10698 = vst.msk [vmem:[%s173 + $0x208] sm:$0xff] %vm10632, %v10441
      %10699 = vst.msk [vmem:[%s173 + $0x210] sm:$0xff] %vm10632, %v10442
      %10700 = vst.msk [vmem:[%s173 + $0x218] sm:$0xff] %vm10632, %v10443
      %10701 = vst.msk [vmem:[%s173 + $0x220] sm:$0xff] %vm10632, %v10444
      %10702 = vst.msk [vmem:[%s173 + $0x228] sm:$0xff] %vm10632, %v10445
      %10703 = vst.msk [vmem:[%s173 + $0x230] sm:$0xff] %vm10632, %v10446
      %10704 = vst.msk [vmem:[%s173 + $0x238] sm:$0xff] %vm10632, %v10447
      %10705 = vst.msk [vmem:[%s173 + $0x240] sm:$0xff] %vm10632, %v10448
      %10706 = vst.msk [vmem:[%s173 + $0x248] sm:$0xff] %vm10632, %v10449
      %10707 = vst.msk [vmem:[%s173 + $0x250] sm:$0xff] %vm10632, %v10450
      %10708 = vst.msk [vmem:[%s173 + $0x258] sm:$0xff] %vm10632, %v10451
      %10709 = vst.msk [vmem:[%s173 + $0x260] sm:$0xff] %vm10632, %v10452
      %10710 = vst.msk [vmem:[%s173 + $0x268] sm:$0xff] %vm10632, %v10453
      %10711 = vst.msk [vmem:[%s173 + $0x270] sm:$0xff] %vm10632, %v10454
      %10712 = vst.msk [vmem:[%s173 + $0x278] sm:$0xff] %vm10632, %v10455
      %10713 = vst.msk [vmem:[%s173 + $0x280] sm:$0xff] %vm10632, %v10456
      %10714 = vst.msk [vmem:[%s173 + $0x288] sm:$0xff] %vm10632, %v10457
      %10715 = vst.msk [vmem:[%s173 + $0x290] sm:$0xff] %vm10632, %v10458
      %10716 = vst.msk [vmem:[%s173 + $0x298] sm:$0xff] %vm10632, %v10459
      %10717 = vst.msk [vmem:[%s173 + $0x2a0] sm:$0xff] %vm10632, %v10460
      %10718 = vst.msk [vmem:[%s173 + $0x2a8] sm:$0xff] %vm10632, %v10461
      %10719 = vst.msk [vmem:[%s173 + $0x2b0] sm:$0xff] %vm10632, %v10462
      %10720 = vst.msk [vmem:[%s173 + $0x2b8] sm:$0xff] %vm10632, %v10463
      %10721 = vst.msk [vmem:[%s173 + $0x2c0] sm:$0xff] %vm10632, %v10464
      %10722 = vst.msk [vmem:[%s173 + $0x2c8] sm:$0xff] %vm10632, %v10465
      %10723 = vst.msk [vmem:[%s173 + $0x2d0] sm:$0xff] %vm10632, %v10466
      %10724 = vst.msk [vmem:[%s173 + $0x2d8] sm:$0xff] %vm10632, %v10467
      %10725 = vst.msk [vmem:[%s173 + $0x2e0] sm:$0xff] %vm10632, %v10468
      %10726 = vst.msk [vmem:[%s173 + $0x2e8] sm:$0xff] %vm10632, %v10469
      %10727 = vst.msk [vmem:[%s173 + $0x2f0] sm:$0xff] %vm10632, %v10470
      %10728 = vst.msk [vmem:[%s173 + $0x2f8] sm:$0xff] %vm10632, %v10471
      %10729 = vst.msk [vmem:[%s173 + $0x300] sm:$0xff] %vm10632, %v10472
      %10730 = vst.msk [vmem:[%s173 + $0x308] sm:$0xff] %vm10632, %v10473
      %10731 = vst.msk [vmem:[%s173 + $0x310] sm:$0xff] %vm10632, %v10474
      %10732 = vst.msk [vmem:[%s173 + $0x318] sm:$0xff] %vm10632, %v10475
      %10733 = vst.msk [vmem:[%s173 + $0x320] sm:$0xff] %vm10632, %v10476
      %10734 = vst.msk [vmem:[%s173 + $0x328] sm:$0xff] %vm10632, %v10477
      %10735 = vst.msk [vmem:[%s173 + $0x330] sm:$0xff] %vm10632, %v10478
      %10736 = vst.msk [vmem:[%s173 + $0x338] sm:$0xff] %vm10632, %v10479
      %10737 = vst.msk [vmem:[%s173 + $0x340] sm:$0xff] %vm10632, %v10480
      %10738 = vst.msk [vmem:[%s173 + $0x348] sm:$0xff] %vm10632, %v10481
      %10739 = vst.msk [vmem:[%s173 + $0x350] sm:$0xff] %vm10632, %v10482
      %10740 = vst.msk [vmem:[%s173 + $0x358] sm:$0xff] %vm10632, %v10483
      %10741 = vst.msk [vmem:[%s173 + $0x360] sm:$0xff] %vm10632, %v10484
      %10742 = vst.msk [vmem:[%s173 + $0x368] sm:$0xff] %vm10632, %v10485
      %10743 = vst.msk [vmem:[%s173 + $0x370] sm:$0xff] %vm10632, %v10486
      %10744 = vst.msk [vmem:[%s173 + $0x378] sm:$0xff] %vm10632, %v10487
      %10745 = vst.msk [vmem:[%s173 + $0x380] sm:$0xff] %vm10632, %v10488
      %10746 = vst.msk [vmem:[%s173 + $0x388] sm:$0xff] %vm10632, %v10489
      %10747 = vst.msk [vmem:[%s173 + $0x390] sm:$0xff] %vm10632, %v10490
      %10748 = vst.msk [vmem:[%s173 + $0x398] sm:$0xff] %vm10632, %v10491
      %10749 = vst.msk [vmem:[%s173 + $0x3a0] sm:$0xff] %vm10632, %v10492
      %10750 = vst.msk [vmem:[%s173 + $0x3a8] sm:$0xff] %vm10632, %v10493
      %10751 = vst.msk [vmem:[%s173 + $0x3b0] sm:$0xff] %vm10632, %v10494
      %10752 = vst.msk [vmem:[%s173 + $0x3b8] sm:$0xff] %vm10632, %v10495
      %10753 = vst.msk [vmem:[%s173 + $0x3c0] sm:$0xff] %vm10632, %v10496
      %10754 = vst.msk [vmem:[%s173 + $0x3c8] sm:$0xff] %vm10632, %v10497
      %10755 = vst.msk [vmem:[%s173 + $0x3d0] sm:$0xff] %vm10632, %v10498
      %10756 = vst.msk [vmem:[%s173 + $0x3d8] sm:$0xff] %vm10632, %v10499
      %10757 = vst.msk [vmem:[%s173 + $0x3e0] sm:$0xff] %vm10632, %v10500
      %10758 = vst.msk [vmem:[%s173 + $0x3e8] sm:$0xff] %vm10632, %v10501
      %10759 = vst.msk [vmem:[%s173 + $0x3f0] sm:$0xff] %vm10632, %v10502
      %10760 = vst.msk [vmem:[%s173 + $0x3f8] sm:$0xff] %vm10632, %v10503
      %10761 = vst.msk [vmem:[%s173 + $0x400] sm:$0xff] %vm10632, %v10504
      %10762 = vst.msk [vmem:[%s173 + $0x408] sm:$0xff] %vm10632, %v10505
      %10763 = vst.msk [vmem:[%s173 + $0x410] sm:$0xff] %vm10632, %v10506
      %10764 = vst.msk [vmem:[%s173 + $0x418] sm:$0xff] %vm10632, %v10507
      %10765 = vst.msk [vmem:[%s173 + $0x420] sm:$0xff] %vm10632, %v10508
      %10766 = vst.msk [vmem:[%s173 + $0x428] sm:$0xff] %vm10632, %v10509
      %10767 = vst.msk [vmem:[%s173 + $0x430] sm:$0xff] %vm10632, %v10510
      %10768 = vst.msk [vmem:[%s173 + $0x438] sm:$0xff] %vm10632, %v10511
      %10769 = vst.msk [vmem:[%s173 + $0x440] sm:$0xff] %vm10632, %v10512
      %10770 = vst.msk [vmem:[%s173 + $0x448] sm:$0xff] %vm10632, %v10513
      %10771 = vst.msk [vmem:[%s173 + $0x450] sm:$0xff] %vm10632, %v10514
      %10772 = vst.msk [vmem:[%s173 + $0x458] sm:$0xff] %vm10632, %v10515
      %10773 = vst.msk [vmem:[%s173 + $0x460] sm:$0xff] %vm10632, %v10516
      %10774 = vst.msk [vmem:[%s173 + $0x468] sm:$0xff] %vm10632, %v10517
      %10775 = vst.msk [vmem:[%s173 + $0x470] sm:$0xff] %vm10632, %v10518
      %10776 = vst.msk [vmem:[%s173 + $0x478] sm:$0xff] %vm10632, %v10519
      %10777 = vst.msk [vmem:[%s173 + $0x480] sm:$0xff] %vm10632, %v10520
      %10778 = vst.msk [vmem:[%s173 + $0x488] sm:$0xff] %vm10632, %v10521
      %10779 = vst.msk [vmem:[%s173 + $0x490] sm:$0xff] %vm10632, %v10522
      %10780 = vst.msk [vmem:[%s173 + $0x498] sm:$0xff] %vm10632, %v10523
      %10781 = vst.msk [vmem:[%s173 + $0x4a0] sm:$0xff] %vm10632, %v10524
      %10782 = vst.msk [vmem:[%s173 + $0x4a8] sm:$0xff] %vm10632, %v10525
      %10783 = vst.msk [vmem:[%s173 + $0x4b0] sm:$0xff] %vm10632, %v10526
      %10784 = vst.msk [vmem:[%s173 + $0x4b8] sm:$0xff] %vm10632, %v10527
      %10785 = vst.msk [vmem:[%s173 + $0x4c0] sm:$0xff] %vm10632, %v10528
      %10786 = vst.msk [vmem:[%s173 + $0x4c8] sm:$0xff] %vm10632, %v10529
      %10787 = vst.msk [vmem:[%s173 + $0x4d0] sm:$0xff] %vm10632, %v10530
      %10788 = vst.msk [vmem:[%s173 + $0x4d8] sm:$0xff] %vm10632, %v10531
      %10789 = vst.msk [vmem:[%s173 + $0x4e0] sm:$0xff] %vm10632, %v10532
      %10790 = vst.msk [vmem:[%s173 + $0x4e8] sm:$0xff] %vm10632, %v10533
      %10791 = vst.msk [vmem:[%s173 + $0x4f0] sm:$0xff] %vm10632, %v10534
      %10792 = vst.msk [vmem:[%s173 + $0x4f8] sm:$0xff] %vm10632, %v10535
      %10793 = vst.msk [vmem:[%s173 + $0x500] sm:$0xff] %vm10632, %v10536
      %10794 = vst.msk [vmem:[%s173 + $0x508] sm:$0xff] %vm10632, %v10537
      %10795 = vst.msk [vmem:[%s173 + $0x510] sm:$0xff] %vm10632, %v10538
      %10796 = vst.msk [vmem:[%s173 + $0x518] sm:$0xff] %vm10632, %v10539
      %10797 = vst.msk [vmem:[%s173 + $0x520] sm:$0xff] %vm10632, %v10540
      %10798 = vst.msk [vmem:[%s173 + $0x528] sm:$0xff] %vm10632, %v10541
      %10799 = vst.msk [vmem:[%s173 + $0x530] sm:$0xff] %vm10632, %v10542
      %10800 = vst.msk [vmem:[%s173 + $0x538] sm:$0xff] %vm10632, %v10543
      %10801 = vst.msk [vmem:[%s173 + $0x540] sm:$0xff] %vm10632, %v10544
      %10802 = vst.msk [vmem:[%s173 + $0x548] sm:$0xff] %vm10632, %v10545
      %10803 = vst.msk [vmem:[%s173 + $0x550] sm:$0xff] %vm10632, %v10546
      %10804 = vst.msk [vmem:[%s173 + $0x558] sm:$0xff] %vm10632, %v10547
      %10805 = vst.msk [vmem:[%s173 + $0x560] sm:$0xff] %vm10632, %v10548
      %10806 = vst.msk [vmem:[%s173 + $0x568] sm:$0xff] %vm10632, %v10549
      %10807 = vst.msk [vmem:[%s173 + $0x570] sm:$0xff] %vm10632, %v10550
      %10808 = vst.msk [vmem:[%s173 + $0x578] sm:$0xff] %vm10632, %v10551
      %10809 = vst.msk [vmem:[%s173 + $0x580] sm:$0xff] %vm10632, %v10552
      %10810 = vst.msk [vmem:[%s173 + $0x588] sm:$0xff] %vm10632, %v10553
      %10811 = vst.msk [vmem:[%s173 + $0x590] sm:$0xff] %vm10632, %v10554
      %10812 = vst.msk [vmem:[%s173 + $0x598] sm:$0xff] %vm10632, %v10555
      %10813 = vst.msk [vmem:[%s173 + $0x5a0] sm:$0xff] %vm10632, %v10556
      %10814 = vst.msk [vmem:[%s173 + $0x5a8] sm:$0xff] %vm10632, %v10557
      %10815 = vst.msk [vmem:[%s173 + $0x5b0] sm:$0xff] %vm10632, %v10558
      %10816 = vst.msk [vmem:[%s173 + $0x5b8] sm:$0xff] %vm10632, %v10559
      %10817 = vst.msk [vmem:[%s173 + $0x5c0] sm:$0xff] %vm10632, %v10560
      %10818 = vst.msk [vmem:[%s173 + $0x5c8] sm:$0xff] %vm10632, %v10561
      %10819 = vst.msk [vmem:[%s173 + $0x5d0] sm:$0xff] %vm10632, %v10562
      %10820 = vst.msk [vmem:[%s173 + $0x5d8] sm:$0xff] %vm10632, %v10563
      %10821 = vst.msk [vmem:[%s173 + $0x5e0] sm:$0xff] %vm10632, %v10564
      %10822 = vst.msk [vmem:[%s173 + $0x5e8] sm:$0xff] %vm10632, %v10565
      %10823 = vst.msk [vmem:[%s173 + $0x5f0] sm:$0xff] %vm10632, %v10566
      %10824 = vst.msk [vmem:[%s173 + $0x5f8] sm:$0xff] %vm10632, %v10567
      %10825 = vst.msk [vmem:[%s173 + $0x600] sm:$0xff] %vm10632, %v10568
      %10826 = vst.msk [vmem:[%s173 + $0x608] sm:$0xff] %vm10632, %v10569
      %10827 = vst.msk [vmem:[%s173 + $0x610] sm:$0xff] %vm10632, %v10570
      %10828 = vst.msk [vmem:[%s173 + $0x618] sm:$0xff] %vm10632, %v10571
      %10829 = vst.msk [vmem:[%s173 + $0x620] sm:$0xff] %vm10632, %v10572
      %10830 = vst.msk [vmem:[%s173 + $0x628] sm:$0xff] %vm10632, %v10573
      %10831 = vst.msk [vmem:[%s173 + $0x630] sm:$0xff] %vm10632, %v10574
      %10832 = vst.msk [vmem:[%s173 + $0x638] sm:$0xff] %vm10632, %v10575
      %10833 = vst.msk [vmem:[%s173 + $0x640] sm:$0xff] %vm10632, %v10576
      %10834 = vst.msk [vmem:[%s173 + $0x648] sm:$0xff] %vm10632, %v10577
      %10835 = vst.msk [vmem:[%s173 + $0x650] sm:$0xff] %vm10632, %v10578
      %10836 = vst.msk [vmem:[%s173 + $0x658] sm:$0xff] %vm10632, %v10579
      %10837 = vst.msk [vmem:[%s173 + $0x660] sm:$0xff] %vm10632, %v10580
      %10838 = vst.msk [vmem:[%s173 + $0x668] sm:$0xff] %vm10632, %v10581
      %10839 = vst.msk [vmem:[%s173 + $0x670] sm:$0xff] %vm10632, %v10582
      %10840 = vst.msk [vmem:[%s173 + $0x678] sm:$0xff] %vm10632, %v10583
      %10841 = vst.msk [vmem:[%s173 + $0x680] sm:$0xff] %vm10632, %v10584
      %10842 = vst.msk [vmem:[%s173 + $0x688] sm:$0xff] %vm10632, %v10585
      %10843 = vst.msk [vmem:[%s173 + $0x690] sm:$0xff] %vm10632, %v10586
      %10844 = vst.msk [vmem:[%s173 + $0x698] sm:$0xff] %vm10632, %v10587
      %10845 = vst.msk [vmem:[%s173 + $0x6a0] sm:$0xff] %vm10632, %v10588
      %10846 = vst.msk [vmem:[%s173 + $0x6a8] sm:$0xff] %vm10632, %v10589
      %10847 = vst.msk [vmem:[%s173 + $0x6b0] sm:$0xff] %vm10632, %v10590
      %10848 = vst.msk [vmem:[%s173 + $0x6b8] sm:$0xff] %vm10632, %v10591
      %10849 = vst.msk [vmem:[%s173 + $0x6c0] sm:$0xff] %vm10632, %v10592
      %10850 = vst.msk [vmem:[%s173 + $0x6c8] sm:$0xff] %vm10632, %v10593
      %10851 = vst.msk [vmem:[%s173 + $0x6d0] sm:$0xff] %vm10632, %v10594
      %10852 = vst.msk [vmem:[%s173 + $0x6d8] sm:$0xff] %vm10632, %v10595
      %10853 = vst.msk [vmem:[%s173 + $0x6e0] sm:$0xff] %vm10632, %v10596
      %10854 = vst.msk [vmem:[%s173 + $0x6e8] sm:$0xff] %vm10632, %v10597
      %10855 = vst.msk [vmem:[%s173 + $0x6f0] sm:$0xff] %vm10632, %v10598
      %10856 = vst.msk [vmem:[%s173 + $0x6f8] sm:$0xff] %vm10632, %v10599
      %10857 = vst.msk [vmem:[%s173 + $0x700] sm:$0xff] %vm10632, %v10600
      %10858 = vst.msk [vmem:[%s173 + $0x708] sm:$0xff] %vm10632, %v10601
      %10859 = vst.msk [vmem:[%s173 + $0x710] sm:$0xff] %vm10632, %v10602
      %10860 = vst.msk [vmem:[%s173 + $0x718] sm:$0xff] %vm10632, %v10603
      %10861 = vst.msk [vmem:[%s173 + $0x720] sm:$0xff] %vm10632, %v10604
      %10862 = vst.msk [vmem:[%s173 + $0x728] sm:$0xff] %vm10632, %v10605
      %10863 = vst.msk [vmem:[%s173 + $0x730] sm:$0xff] %vm10632, %v10606
      %10864 = vst.msk [vmem:[%s173 + $0x738] sm:$0xff] %vm10632, %v10607
      %10865 = vst.msk [vmem:[%s173 + $0x740] sm:$0xff] %vm10632, %v10608
      %10866 = vst.msk [vmem:[%s173 + $0x748] sm:$0xff] %vm10632, %v10609
      %10867 = vst.msk [vmem:[%s173 + $0x750] sm:$0xff] %vm10632, %v10610
      %10868 = vst.msk [vmem:[%s173 + $0x758] sm:$0xff] %vm10632, %v10611
      %10869 = vst.msk [vmem:[%s173 + $0x760] sm:$0xff] %vm10632, %v10612
      %10870 = vst.msk [vmem:[%s173 + $0x768] sm:$0xff] %vm10632, %v10613
      %10871 = vst.msk [vmem:[%s173 + $0x770] sm:$0xff] %vm10632, %v10614
      %10872 = vst.msk [vmem:[%s173 + $0x778] sm:$0xff] %vm10632, %v10615
      %10873 = vst.msk [vmem:[%s173 + $0x780] sm:$0xff] %vm10632, %v10616
      %10874 = vst.msk [vmem:[%s173 + $0x788] sm:$0xff] %vm10632, %v10617
      %10875 = vst.msk [vmem:[%s173 + $0x790] sm:$0xff] %vm10632, %v10618
      %10876 = vst.msk [vmem:[%s173 + $0x798] sm:$0xff] %vm10632, %v10619
      %10877 = vst.msk [vmem:[%s173 + $0x7a0] sm:$0xff] %vm10632, %v10620
      %10878 = vst.msk [vmem:[%s173 + $0x7a8] sm:$0xff] %vm10632, %v10621
      %10879 = vst.msk [vmem:[%s173 + $0x7b0] sm:$0xff] %vm10632, %v10622
      %10880 = vst.msk [vmem:[%s173 + $0x7b8] sm:$0xff] %vm10632, %v10623
      %10881 = vst.msk [vmem:[%s173 + $0x7c0] sm:$0xff] %vm10632, %v10624
      %10882 = vst.msk [vmem:[%s173 + $0x7c8] sm:$0xff] %vm10632, %v10625
      %10883 = vst.msk [vmem:[%s173 + $0x7d0] sm:$0xff] %vm10632, %v10626
      %10884 = vst.msk [vmem:[%s173 + $0x7d8] sm:$0xff] %vm10632, %v10627
      %10885 = vst.msk [vmem:[%s173 + $0x7e0] sm:$0xff] %vm10632, %v10628
      %10886 = vst.msk [vmem:[%s173 + $0x7e8] sm:$0xff] %vm10632, %v10629
      %10887 = vst.msk [vmem:[%s173 + $0x7f0] sm:$0xff] %vm10632, %v10630
      %10888 = vst.msk [vmem:[%s173 + $0x7f8] sm:$0xff] %vm10632, %v10631
      %s10889 = smul.u32 256, %s15
      %p10890 = scmp.lt.s32.totalorder %s10889, 511
      %s10891 = scalar_select %p10890, %s10889, 511
      %s10892 = smul.addr %s10891, 8
      %s10893 = scalar_lea.vmem %s3, %s10892
      // Predicated region
      $region33: #{tpu_custom_call.1} parent=31 // pred_check
        %p10894 = pneg %p101
      $region34: #{tpu_custom_call.1} parent=31 // pred_check_branch
        %10896 = sbr.rel (%p10894) target = $region36
      $region35: #{tpu_custom_call.1} parent=31 // pred_region
        %s10897 = smul.u32 256, %s15
      $region36: #{tpu_custom_call.1} parent=31 // pred_fallthru
        _
    $region32: #{tpu_custom_call.1} parent=5 // pred_fallthru
      _
    %p10898 = scmp.le.s32.totalorder 2, %s10
    // Predicated region
    $region37: #{tpu_custom_call.1} parent=5 // pred_check
      %p10899 = pneg %p10898
    $region38: #{tpu_custom_call.1} parent=5 // pred_check_branch
      %10901 = sbr.rel (%p10899) target = $region40
    $region39: #{tpu_custom_call.1} parent=5 // pred_region
      %s10902 = ssub.s32 %s10, 2
      // Predicated region
      $region41: #{tpu_custom_call.1} parent=39 // pred_check
        %p10903 = pneg %p107
      $region42: #{tpu_custom_call.1} parent=39 // pred_check_branch
        %10905 = sbr.rel (%p10903) target = $region44
      $region43: #{tpu_custom_call.1} parent=39 // pred_region
        %s10906 = smul.u32 256, %s16
        %p10907 = scmp.lt.s32.totalorder %s10906, 511
        %s10908 = scalar_select %p10907, %s10906, 511
        %s10909 = smul.addr %s10908, 8
        %s10910 = scalar_lea.vmem %s3, %s10909
      $region44: #{tpu_custom_call.1} parent=39 // pred_fallthru
        _
    $region40: #{tpu_custom_call.1} parent=5 // pred_fallthru
      _
  $region6: #{tpu_custom_call.1} parent=0 // loop_footer
    %s14 = sadd.s32 1, %s10
  $region7: #{tpu_custom_call.1} parent=0 // loop_footer_branch
    %9 = sbr.rel target = $region3
  $region8: #{tpu_custom_call.1} parent=0 // loop_exit
    _

</llo_original>
